<compile_context>
chip_gen: v7x
topology: tpu7x:2x2x1
jax: 0.10.0
libtpu: 0.0.40
codegen_flags: <defaults>
</compile_context>

<pallas_src>
import math

import numpy as np
import jax
import jax.numpy as jnp
from jax import lax
from jax.experimental import pallas as pl
from jax.experimental.pallas import tpu as pltpu


# ----------------------------------------------------------------------------
# small helpers
# ----------------------------------------------------------------------------
def _cdiv(a, b):
    return -(-a // b)


def _round_up(n, m):
    return _cdiv(n, m) * m


def _split_tile(total, tile_max, align):
    """Balanced tiling: (tile, padded_total), tile % align == 0, small waste."""
    t_r = _round_up(max(int(total), 1), align)
    n = _cdiv(t_r, tile_max)
    tile = _round_up(_cdiv(t_r, n), align)
    return tile, tile * n


def _block_bytes(shape, dtype):
    """Generous VMEM footprint of one block (padded up to (16, 128) tiles)."""
    s = list(shape)
    if len(s) >= 1:
        s[-1] = _round_up(s[-1], 128)
    if len(s) >= 2:
        s[-2] = _round_up(s[-2], 16)
    n = 1
    for d in s:
        n *= int(d)
    return n * np.dtype(dtype).itemsize


def _vmem_limit_bytes(blocks):
    """blocks: iterable of (block_shape, dtype, n_buffers).

    Honest need (each pipelined block times its buffer count) plus fixed
    headroom for Mosaic-internal temporaries (matmul intermediates, casts),
    capped below v7x's 64 MiB physical VMEM per TensorCore.
    """
    need = sum(nbuf * _block_bytes(s, d) for s, d, nbuf in blocks)
    return int(min(need + (32 << 20), 56 << 20))


# ----------------------------------------------------------------------------
# gen_grid_up (deterministic, pure JAX — identical semantics to the PCN util)
# ----------------------------------------------------------------------------
def gen_grid_up(up_ratio, grid_size=0.2):
    sqrted = int(math.sqrt(up_ratio)) + 1
    num_x, num_y = 1, up_ratio
    for i in reversed(range(1, sqrted + 1)):
        if up_ratio % i == 0:
            num_x = i
            num_y = up_ratio // i
            break
    grid_x = jnp.linspace(-grid_size, grid_size, num_x)
    grid_y = jnp.linspace(-grid_size, grid_size, num_y)
    xg, yg = jnp.meshgrid(grid_x, grid_y, indexing="ij")
    grid = jnp.stack([xg, yg], axis=-1).reshape(-1, 2).T  # (2, up_ratio)
    return grid.astype(jnp.float32)


# ----------------------------------------------------------------------------
# Coarse branch, kernel A: fc1 -> relu -> fc2 -> relu, fused with conv1's
# global-feature projection g = x @ Wc1_global.  Grid = (batch tiles,).
# ----------------------------------------------------------------------------
def _coarse_hidden_kernel(x_ref, w1_ref, b1_ref, w2_ref, b2_ref, wg_ref,
                          h2_ref, g_ref):
    x = x_ref[...].astype(jnp.bfloat16)                  # bf16 MXU operands
    h1 = jnp.maximum(
        jnp.dot(x, w1_ref[...], preferred_element_type=jnp.float32)
        + b1_ref[...], 0.0)
    h2 = jnp.maximum(
        jnp.dot(h1.astype(jnp.bfloat16), w2_ref[...],
                preferred_element_type=jnp.float32) + b2_ref[...], 0.0)
    h2_ref[...] = h2.astype(jnp.bfloat16)                # consumed as bf16 by fc3
    g_ref[...] = jnp.dot(x, wg_ref[...], preferred_element_type=jnp.float32)


# ----------------------------------------------------------------------------
# Coarse branch, kernel B: fc3.  Grid = (batch tiles, output tiles), both
# axes "parallel" (v7x megacore splits fc3 across the two TensorCores).
# ----------------------------------------------------------------------------
def _fc3_kernel(h2_ref, w3_ref, b3_ref, out_ref):
    out_ref[...] = (jnp.dot(h2_ref[...], w3_ref[...],
                            preferred_element_type=jnp.float32) + b3_ref[...])


def coarse_branch_pallas(x, w1, b1, w2, b2, w3, b3, wg, *,
                         tb_max=256, td_max=2048):
    B, D = x.shape                      # D = 1024
    Dg = wg.shape[1]                    # 512
    Dout = w3.shape[1]                  # num_coarse * 3

    tb, Bpad = _split_tile(B, tb_max, 16)          # 16: safe for bf16 h2 tiles
    td, Dout_pad = _split_tile(Dout, td_max, 128)

    xp = jnp.pad(x, ((0, Bpad - B), (0, 0)))
    # bf16 weights: halves weight DMA + VMEM (biases / accumulation stay fp32)
    w1b = w1.astype(jnp.bfloat16)
    w2b = w2.astype(jnp.bfloat16)
    wgb = wg.astype(jnp.bfloat16)
    w3b = jnp.pad(w3, ((0, 0), (0, Dout_pad - Dout))).astype(jnp.bfloat16)
    b3p = jnp.pad(b3, ((0, 0), (0, Dout_pad - Dout)))

    # ---- kernel A: fc1/fc2 + g ----------------------------------------------
    blocks_a = [((tb, D), jnp.float32, 2), ((D, D), jnp.bfloat16, 2),
                ((1, D), jnp.float32, 2), ((D, D), jnp.bfloat16, 2),
                ((1, D), jnp.float32, 2), ((D, Dg), jnp.bfloat16, 2),
                ((tb, D), jnp.bfloat16, 2), ((tb, Dg), jnp.float32, 2)]
    flops_a = int(2 * Bpad * D * (2 * D + Dg))
    bytes_a = int(4 * Bpad * D + 2 * (2 * D * D + D * Dg)
                  + 2 * Bpad * D + 4 * Bpad * Dg + 8 * D)

    h2, g = pl.pallas_call(
        _coarse_hidden_kernel,
        out_shape=(jax.ShapeDtypeStruct((Bpad, D), jnp.bfloat16),
                   jax.ShapeDtypeStruct((Bpad, Dg), jnp.float32)),
        grid_spec=pltpu.PrefetchScalarGridSpec(
            num_scalar_prefetch=0,
            grid=(Bpad // tb,),
            in_specs=[
                pl.BlockSpec((tb, D), lambda i: (i, 0)),
                pl.BlockSpec((D, D), lambda i: (0, 0)),
                pl.BlockSpec((1, D), lambda i: (0, 0)),
                pl.BlockSpec((D, D), lambda i: (0, 0)),
                pl.BlockSpec((1, D), lambda i: (0, 0)),
                pl.BlockSpec((D, Dg), lambda i: (0, 0)),
            ],
            out_specs=[
                pl.BlockSpec((tb, D), lambda i: (i, 0)),
                pl.BlockSpec((tb, Dg), lambda i: (i, 0)),
            ],
        ),
        compiler_params=pltpu.CompilerParams(
            dimension_semantics=("parallel",),
            vmem_limit_bytes=_vmem_limit_bytes(blocks_a)),
        cost_estimate=pl.CostEstimate(flops=flops_a, transcendentals=0,
                                      bytes_accessed=bytes_a),
    )(xp, w1b, b1, w2b, b2, wgb)

    # ---- kernel B: fc3 --------------------------------------------------------
    blocks_b = [((tb, D), jnp.bfloat16, 2), ((D, td), jnp.bfloat16, 2),
                ((1, td), jnp.float32, 2), ((tb, td), jnp.float32, 2)]
    flops_b = int(2 * Bpad * D * Dout_pad)
    bytes_b = int(2 * Bpad * D + 2 * D * Dout_pad + 4 * Dout_pad
                  + 4 * Bpad * Dout_pad)

    coarse = pl.pallas_call(
        _fc3_kernel,
        out_shape=jax.ShapeDtypeStruct((Bpad, Dout_pad), jnp.float32),
        grid_spec=pltpu.PrefetchScalarGridSpec(
            num_scalar_prefetch=0,
            grid=(Bpad // tb, Dout_pad // td),
            in_specs=[
                pl.BlockSpec((tb, D), lambda i, j: (i, 0)),
                pl.BlockSpec((D, td), lambda i, j: (0, j)),
                pl.BlockSpec((1, td), lambda i, j: (0, j)),
            ],
            out_specs=pl.BlockSpec((tb, td), lambda i, j: (i, j)),
        ),
        compiler_params=pltpu.CompilerParams(
            dimension_semantics=("parallel", "parallel"),
            vmem_limit_bytes=_vmem_limit_bytes(blocks_b)),
        cost_estimate=pl.CostEstimate(flops=flops_b, transcendentals=0,
                                      bytes_accessed=bytes_b),
    )(h2, w3b, b3p)

    return coarse[:B, :Dout], g[:B]


# ----------------------------------------------------------------------------
# Fine branch.  Per point (row tile tn):
#   h1  = relu(small_feat @ Wc1_small + g + bc1)      (small_feat: 5+3pad ch)
#   h2  = relu(h1 @ Wc2 + bc2)
#   out = Wc3^T contracted with h2 + bc3 + center     -> emitted as (3, tn)
# Grid = (batch, row tiles), both parallel; weights and g stay resident.
# ----------------------------------------------------------------------------
def _fine_kernel(sf_ref, g_ref, cen_ref, w1_ref, b1_ref, w2_ref, b2_ref,
                 w3t_ref, b3_ref, out_ref):
    h = jnp.dot(sf_ref[...], w1_ref[...], preferred_element_type=jnp.float32)
    h = jnp.maximum(h + g_ref[...] + b1_ref[...], 0.0)           # (tn, 512)
    h = jnp.dot(h.astype(jnp.bfloat16), w2_ref[...],
                preferred_element_type=jnp.float32)
    h = jnp.maximum(h + b2_ref[...], 0.0)                        # (tn, 512)
    # Lane-dense (3, tn) result: contract the 512-axis of both operands
    # (A @ B^T form, same as q@k^T) — no in-kernel transpose, unmasked stores.
    res = lax.dot_general(w3t_ref[...], h.astype(jnp.bfloat16),
                          dimension_numbers=(((1,), (1,)), ((), ())),
                          preferred_element_type=jnp.float32)    # (3, tn)
    out_ref[...] = res + b3_ref[...] + cen_ref[...]


def fine_branch_pallas(sf, g, center_t, wc1, bc1, wc2, bc2, wc3, bc3, *,
                       tn_max=2048):
    B, nf, Cs = sf.shape                 # Cs = 8 (5 real channels + 3 zero pad)
    Ch = wc2.shape[0]                    # 512
    Co = wc3.shape[1]                    # 3

    # tn up to 2048 amortizes the ~0.35us per-grid-step overhead; a multiple
    # of 128 keeps both the (tn, Cs) input and the (Co, tn) lane-dense output
    # blocks layout-legal for any num_fine.
    tn, nf_pad = _split_tile(nf, tn_max, 128)

    sfp = jnp.pad(sf, ((0, 0), (0, nf_pad - nf), (0, 0)))
    cenp = jnp.pad(center_t, ((0, 0), (0, 0), (0, nf_pad - nf)))
    g3 = g[:, None, :]                                           # (B, 1, Ch)
    w1b = wc1.astype(jnp.bfloat16)                               # (Cs, Ch)
    w2b = wc2.astype(jnp.bfloat16)                               # (Ch, Ch)
    w3tb = wc3.T.astype(jnp.bfloat16)                            # (Co, Ch)
    b3c = jnp.reshape(bc3, (Co, 1))                              # (Co, 1)

    blocks = [((tn, Cs), jnp.bfloat16, 2), ((1, Ch), jnp.float32, 2),
              ((Co, tn), jnp.float32, 2), ((Cs, Ch), jnp.bfloat16, 2),
              ((1, Ch), jnp.float32, 2), ((Ch, Ch), jnp.bfloat16, 2),
              ((1, Ch), jnp.float32, 2), ((Co, Ch), jnp.bfloat16, 2),
              ((Co, 1), jnp.float32, 2), ((Co, tn), jnp.float32, 2)]

    n_rows = B * nf_pad
    flops = int(2 * n_rows * (Cs * Ch + Ch * Ch + Ch * Co))
    bytes_accessed = int(2 * n_rows * Cs + 8 * n_rows * Co + 4 * B * Ch
                         + 2 * (Cs * Ch + Ch * Ch + Co * Ch) + 8 * Ch + 4 * Co)

    out = pl.pallas_call(
        _fine_kernel,
        out_shape=jax.ShapeDtypeStruct((B, Co, nf_pad), jnp.float32),
        grid_spec=pltpu.PrefetchScalarGridSpec(
            num_scalar_prefetch=0,
            grid=(B, nf_pad // tn),
            in_specs=[
                pl.BlockSpec((None, tn, Cs), lambda b, i: (b, i, 0)),  # sf
                pl.BlockSpec((None, 1, Ch), lambda b, i: (b, 0, 0)),   # g
                pl.BlockSpec((None, Co, tn), lambda b, i: (b, 0, i)),  # center (NCW)
                pl.BlockSpec((Cs, Ch), lambda b, i: (0, 0)),           # Wc1 (padded)
                pl.BlockSpec((1, Ch), lambda b, i: (0, 0)),            # bc1
                pl.BlockSpec((Ch, Ch), lambda b, i: (0, 0)),           # Wc2
                pl.BlockSpec((1, Ch), lambda b, i: (0, 0)),            # bc2
                pl.BlockSpec((Co, Ch), lambda b, i: (0, 0)),           # Wc3^T
                pl.BlockSpec((Co, 1), lambda b, i: (0, 0)),            # bc3
            ],
            out_specs=pl.BlockSpec((None, Co, tn), lambda b, i: (b, 0, i)),
        ),
        compiler_params=pltpu.CompilerParams(
            dimension_semantics=("parallel", "parallel"),
            vmem_limit_bytes=_vmem_limit_bytes(blocks)),
        cost_estimate=pl.CostEstimate(flops=flops, transcendentals=0,
                                      bytes_accessed=bytes_accessed),
    )(sfp, g3, cenp, w1b, bc1, w2b, bc2, w3tb, b3c)
    return out[:, :, :nf]


# ----------------------------------------------------------------------------
# Parameter construction (deterministic, shapes from PCN_decoder.__init__)
# ----------------------------------------------------------------------------
def init_params(key, num_coarse, cat_feature_num, feat_dim=1024):
    ks = jax.random.split(key, 6)
    s = 0.02

    def w(k, shape):
        return (s * jax.random.normal(k, shape)).astype(jnp.float32)

    return {
        # fc weights stored as (in, out):  y = x @ W + b
        "w1": w(ks[0], (feat_dim, 1024)), "b1": jnp.zeros((1, 1024), jnp.float32),
        "w2": w(ks[1], (1024, 1024)),     "b2": jnp.zeros((1, 1024), jnp.float32),
        "w3": w(ks[2], (1024, num_coarse * 3)),
        "b3": jnp.zeros((1, num_coarse * 3), jnp.float32),
        # 1x1 conv weights stored as (in_channels, out_channels)
        "wc1": w(ks[3], (cat_feature_num, 512)), "bc1": jnp.zeros((1, 512), jnp.float32),
        "wc2": w(ks[4], (512, 512)),             "bc2": jnp.zeros((1, 512), jnp.float32),
        "wc3": w(ks[5], (512, 3)),               "bc3": jnp.zeros((1, 3), jnp.float32),
    }


# ----------------------------------------------------------------------------
# Full forward pass (Pallas kernels for the hot path, small JAX glue for layout)
# ----------------------------------------------------------------------------
def pcn_decoder_forward(x, params, grid, num_coarse, num_fine, scale):
    B, feat_dim = x.shape
    # Matches the PyTorch module's implicit assumption: grid width == scale
    # (i.e. scale is a power of two); the torch concat would shape-error too.
    assert grid.shape[1] * num_coarse == num_fine, "scale must be a power of two"

    # Split conv1: rows 0..4 -> grid(2)+point(3) channels, rows 5.. -> global.
    wc1_small = params["wc1"][:5]                      # (5, 512)
    wc1_global = params["wc1"][5:]                     # (feat_dim, 512)

    # ---- coarse branch (+ conv1 global projection g, fused) ------------------
    coarse_flat, g = coarse_branch_pallas(
        x, params["w1"], params["b1"], params["w2"], params["b2"],
        params["w3"], params["b3"], wc1_global)        # (B, nc*3), (B, 512)
    coarse = coarse_flat.reshape(B, 3, num_coarse)     # NCW, like torch .view

    # ---- tiny per-point glue (no 1029-wide concat, no per-point global feat) -
    center_t = jnp.repeat(coarse, scale, axis=2)                       # (B, 3, nf)
    pf_rows = jnp.repeat(jnp.transpose(coarse, (0, 2, 1)), scale, axis=1)  # (B, nf, 3)
    grid_rows = jnp.broadcast_to(jnp.tile(grid.T, (num_coarse, 1))[None],
                                 (B, num_fine, 2))                     # (B, nf, 2)
    # 5 real channels padded to 8 (lane-friendly); matching zero rows in Wc1.
    sf = jnp.concatenate([grid_rows, pf_rows,
                          jnp.zeros((B, num_fine, 3), jnp.float32)],
                         axis=-1).astype(jnp.bfloat16)                 # (B, nf, 8)
    wc1_small_p = jnp.pad(wc1_small, ((0, 3), (0, 0)))                 # (8, 512)

    # ---- fine branch: kernel writes (B, 3, num_fine) lane-dense directly -----
    fine = fine_branch_pallas(sf, g, center_t, wc1_small_p, params["bc1"],
                              params["wc2"], params["bc2"],
                              params["wc3"], params["bc3"])            # (B, 3, nf)
    return coarse, fine


# ----------------------------------------------------------------------------
# References for validation
# ----------------------------------------------------------------------------
def reference_forward_fp32(x, params, grid, num_coarse, num_fine, scale):
    """Straight fp32 transcription of the PyTorch module (unsplit conv1)."""
    B, feat_dim = x.shape
    h = jax.nn.relu(x @ params["w1"] + params["b1"])
    h = jax.nn.relu(h @ params["w2"] + params["b2"])
    coarse = (h @ params["w3"] + params["b3"]).reshape(B, 3, num_coarse)

    grid_feat = jnp.broadcast_to(jnp.tile(grid, (1, num_coarse))[None],
                                 (B, 2, num_fine))
    pf = jnp.transpose(coarse, (0, 2, 1))
    pf = jnp.repeat(pf[:, :, None, :], scale, axis=2).reshape(B, num_fine, 3)
    point_feat = jnp.transpose(pf, (0, 2, 1))
    global_feat = jnp.broadcast_to(x[:, :, None], (B, feat_dim, num_fine))
    feat = jnp.concatenate([grid_feat, point_feat, global_feat], axis=1)

    fr = jnp.transpose(feat, (0, 2, 1)).reshape(B * num_fine, -1)
    h = jax.nn.relu(fr @ params["wc1"] + params["bc1"])
    h = jax.nn.relu(h @ params["wc2"] + params["bc2"])
    fine_rows = h @ params["wc3"] + params["bc3"] + pf.reshape(B * num_fine, 3)
    fine = jnp.transpose(fine_rows.reshape(B, num_fine, 3), (0, 2, 1))
    return coarse, fine


def reference_forward_bf16(x, params, grid, num_coarse, num_fine, scale):
    """Reference with the same bf16 MXU-operand rounding as the kernels."""
    B, feat_dim = x.shape

    def bdot(a, b):
        return jnp.dot(a.astype(jnp.bfloat16), b.astype(jnp.bfloat16),
                       preferred_element_type=jnp.float32)

    h1 = jax.nn.relu(bdot(x, params["w1"]) + params["b1"])
    h2 = jax.nn.relu(bdot(h1, params["w2"]) + params["b2"])
    coarse = (bdot(h2, params["w3"]) + params["b3"]).reshape(B, 3, num_coarse)

    wc1_small, wc1_global = params["wc1"][:5], params["wc1"][5:]
    g = bdot(x, wc1_global)                                     # (B, 512)

    pf = jnp.transpose(coarse, (0, 2, 1))
    pf = jnp.repeat(pf[:, :, None, :], scale, axis=2).reshape(B, num_fine, 3)
    grid_rows = jnp.broadcast_to(jnp.tile(grid.T, (num_coarse, 1))[None],
                                 (B, num_fine, 2))
    sf = jnp.concatenate([grid_rows, pf], axis=-1)              # (B, nf, 5)

    h1c = jax.nn.relu(bdot(sf, wc1_small) + g[:, None, :] + params["bc1"])
    h2c = jax.nn.relu(bdot(h1c, params["wc2"]) + params["bc2"])
    fine_rows = bdot(h2c, params["wc3"]) + params["bc3"] + pf
    fine = jnp.transpose(fine_rows, (0, 2, 1))
    return coarse, fine


# ----------------------------------------------------------------------------
if __name__ == "__main__":
    # Small configuration consistent with the module:
    #   x: (B, 1024) global feature; num_fine = scale * num_coarse;
    #   cat_feature_num = 2 + 3 + 1024 = 1029.
    B = 2
    feat_dim = 1024
    num_coarse = 16
    scale = 4
    num_fine = scale * num_coarse
    cat_feature_num = 2 + 3 + feat_dim

    key = jax.random.PRNGKey(0)
    k_x, k_p = jax.random.split(key)
    x = jax.random.normal(k_x, (B, feat_dim), dtype=jnp.float32)

    params = init_params(k_p, num_coarse, cat_feature_num, feat_dim)
    grid = gen_grid_up(2 ** int(math.log2(scale)), 0.05)   # (2, scale)

    fwd = jax.jit(pcn_decoder_forward, static_argnums=(3, 4, 5))
    coarse, fine = fwd(x, params, grid, num_coarse, num_fine, scale)
    coarse, fine = jax.block_until_ready((coarse, fine))

    assert coarse.shape == (B, 3, num_coarse)
    assert fine.shape == (B, 3, num_fine)

    # Tight check against a reference with identical bf16 operand rounding.
    ref_cb, ref_fb = reference_forward_bf16(x, params, grid, num_coarse, num_fine, scale)
    assert float(jnp.max(jnp.abs(coarse - ref_cb))) < 2e-3, "coarse mismatch (bf16-matched)"
    assert float(jnp.max(jnp.abs(fine - ref_fb))) < 2e-3, "fine mismatch (bf16-matched)"

    # Loose sanity check against the full-fp32 PyTorch-equivalent reference
    # (difference is only the bf16 MXU operand rounding).
    ref_c32, ref_f32 = reference_forward_fp32(x, params, grid, num_coarse, num_fine, scale)
    assert float(jnp.max(jnp.abs(coarse - ref_c32))) < 5e-2, "coarse mismatch (fp32)"
    assert float(jnp.max(jnp.abs(fine - ref_f32))) < 5e-2, "fine mismatch (fp32)"

    print("KERNEL_OK")
</pallas_src>

<mosaic_0001>
module attributes {stable_mosaic.version = 11 : i64} {
  func.func @_coarse_hidden_kernel(%arg0: i32, %arg1: memref<16x1024xf32, #tpu.memory_space<vmem>>, %arg2: memref<1024x1024xbf16, #tpu.memory_space<vmem>>, %arg3: memref<1x1024xf32, #tpu.memory_space<vmem>>, %arg4: memref<1024x1024xbf16, #tpu.memory_space<vmem>>, %arg5: memref<1x1024xf32, #tpu.memory_space<vmem>>, %arg6: memref<1024x512xbf16, #tpu.memory_space<vmem>>, %arg7: memref<16x1024xbf16, #tpu.memory_space<vmem>>, %arg8: memref<16x512xf32, #tpu.memory_space<vmem>>) attributes {dimension_semantics = [#tpu.dimension_semantics<parallel>], iteration_bounds = array<i64: 1>, scalar_prefetch = 0 : i64, scratch_operands = 0 : i64, tpu.core_type = #tpu.core_type<tc>, window_params = [{transform_indices = @transform_0, window_bounds = array<i64: 16, 1024>}, {pipeline_mode = #tpu.pipeline_mode<synchronous>, transform_indices = @transform_1, window_bounds = array<i64: 1024, 1024>}, {pipeline_mode = #tpu.pipeline_mode<synchronous>, transform_indices = @transform_2, window_bounds = array<i64: 1, 1024>}, {pipeline_mode = #tpu.pipeline_mode<synchronous>, transform_indices = @transform_3, window_bounds = array<i64: 1024, 1024>}, {pipeline_mode = #tpu.pipeline_mode<synchronous>, transform_indices = @transform_4, window_bounds = array<i64: 1, 1024>}, {pipeline_mode = #tpu.pipeline_mode<synchronous>, transform_indices = @transform_5, window_bounds = array<i64: 1024, 512>}, {transform_indices = @transform_6, window_bounds = array<i64: 16, 1024>}, {transform_indices = @transform_7, window_bounds = array<i64: 16, 512>}]} {
    %c0 = arith.constant 0 : index
    %c0_0 = arith.constant 0 : index
    %0 = vector.load %arg1[%c0, %c0_0] : memref<16x1024xf32, #tpu.memory_space<vmem>>, vector<16x1024xf32>
    %1 = arith.truncf %0 : vector<16x1024xf32> to vector<16x1024xbf16>
    %c0_1 = arith.constant 0 : index
    %c0_2 = arith.constant 0 : index
    %2 = vector.load %arg2[%c0_1, %c0_2] : memref<1024x1024xbf16, #tpu.memory_space<vmem>>, vector<1024x1024xbf16>
    %cst = arith.constant dense<0.000000e+00> : vector<16x1024xf32>
    %3 = tpu.matmul %1, %2, %cst {dimension_numbers = #tpu.dot_dimension_numbers<[1], [0], [0], [1], [0, 0, 1, 1], [], []>} : vector<16x1024xbf16>, vector<1024x1024xbf16>, vector<16x1024xf32> -> vector<16x1024xf32>
    %c0_3 = arith.constant 0 : index
    %c0_4 = arith.constant 0 : index
    %4 = vector.load %arg3[%c0_3, %c0_4] : memref<1x1024xf32, #tpu.memory_space<vmem>>, vector<1x1024xf32>
    %5 = vector.broadcast %4 : vector<1x1024xf32> to vector<16x1024xf32>
    %6 = arith.addf %3, %5 : vector<16x1024xf32>
    %cst_5 = arith.constant 0.000000e+00 : f32
    %7 = vector.broadcast %cst_5 : f32 to vector<16x1024xf32>
    %8 = arith.maximumf %6, %7 : vector<16x1024xf32>
    %9 = arith.truncf %8 : vector<16x1024xf32> to vector<16x1024xbf16>
    %c0_6 = arith.constant 0 : index
    %c0_7 = arith.constant 0 : index
    %10 = vector.load %arg4[%c0_6, %c0_7] : memref<1024x1024xbf16, #tpu.memory_space<vmem>>, vector<1024x1024xbf16>
    %cst_8 = arith.constant dense<0.000000e+00> : vector<16x1024xf32>
    %11 = tpu.matmul %9, %10, %cst_8 {dimension_numbers = #tpu.dot_dimension_numbers<[1], [0], [0], [1], [0, 0, 1, 1], [], []>} : vector<16x1024xbf16>, vector<1024x1024xbf16>, vector<16x1024xf32> -> vector<16x1024xf32>
    %c0_9 = arith.constant 0 : index
    %c0_10 = arith.constant 0 : index
    %12 = vector.load %arg5[%c0_9, %c0_10] : memref<1x1024xf32, #tpu.memory_space<vmem>>, vector<1x1024xf32>
    %13 = vector.broadcast %12 : vector<1x1024xf32> to vector<16x1024xf32>
    %14 = arith.addf %11, %13 : vector<16x1024xf32>
    %cst_11 = arith.constant 0.000000e+00 : f32
    %15 = vector.broadcast %cst_11 : f32 to vector<16x1024xf32>
    %16 = arith.maximumf %14, %15 : vector<16x1024xf32>
    %17 = arith.truncf %16 : vector<16x1024xf32> to vector<16x1024xbf16>
    %c0_12 = arith.constant 0 : index
    %c0_13 = arith.constant 0 : index
    %18 = vector.load %arg7[%c0_12, %c0_13] : memref<16x1024xbf16, #tpu.memory_space<vmem>>, vector<16x1024xbf16>
    tpu.vector_store %arg7[%c0_12, %c0_13], %17 {strides = array<i32>} : memref<16x1024xbf16, #tpu.memory_space<vmem>>, vector<16x1024xbf16>,
    %c0_14 = arith.constant 0 : index
    %c0_15 = arith.constant 0 : index
    %19 = vector.load %arg6[%c0_14, %c0_15] : memref<1024x512xbf16, #tpu.memory_space<vmem>>, vector<1024x512xbf16>
    %cst_16 = arith.constant dense<0.000000e+00> : vector<16x512xf32>
    %20 = tpu.matmul %1, %19, %cst_16 {dimension_numbers = #tpu.dot_dimension_numbers<[1], [0], [0], [1], [0, 0, 1, 1], [], []>} : vector<16x1024xbf16>, vector<1024x512xbf16>, vector<16x512xf32> -> vector<16x512xf32>
    %c0_17 = arith.constant 0 : index
    %c0_18 = arith.constant 0 : index
    %21 = vector.load %arg8[%c0_17, %c0_18] : memref<16x512xf32, #tpu.memory_space<vmem>>, vector<16x512xf32>
    tpu.vector_store %arg8[%c0_17, %c0_18], %20 {strides = array<i32>} : memref<16x512xf32, #tpu.memory_space<vmem>>, vector<16x512xf32>,
    return
  }
  func.func @transform_0(%arg0: i32) -> (i32, i32) {
    %c0_i32 = arith.constant 0 : i32
    %c0_i32_0 = arith.constant 0 : i32
    return %arg0, %c0_i32 : i32, i32
  }
  func.func @transform_1(%arg0: i32) -> (i32, i32) {
    %c0_i32 = arith.constant 0 : i32
    %c0_i32_0 = arith.constant 0 : i32
    %c0_i32_1 = arith.constant 0 : i32
    return %c0_i32, %c0_i32_0 : i32, i32
  }
  func.func @transform_2(%arg0: i32) -> (i32, i32) {
    %c0_i32 = arith.constant 0 : i32
    %c0_i32_0 = arith.constant 0 : i32
    %c0_i32_1 = arith.constant 0 : i32
    return %c0_i32, %c0_i32_0 : i32, i32
  }
  func.func @transform_3(%arg0: i32) -> (i32, i32) {
    %c0_i32 = arith.constant 0 : i32
    %c0_i32_0 = arith.constant 0 : i32
    %c0_i32_1 = arith.constant 0 : i32
    return %c0_i32, %c0_i32_0 : i32, i32
  }
  func.func @transform_4(%arg0: i32) -> (i32, i32) {
    %c0_i32 = arith.constant 0 : i32
    %c0_i32_0 = arith.constant 0 : i32
    %c0_i32_1 = arith.constant 0 : i32
    return %c0_i32, %c0_i32_0 : i32, i32
  }
  func.func @transform_5(%arg0: i32) -> (i32, i32) {
    %c0_i32 = arith.constant 0 : i32
    %c0_i32_0 = arith.constant 0 : i32
    %c0_i32_1 = arith.constant 0 : i32
    return %c0_i32, %c0_i32_0 : i32, i32
  }
  func.func @transform_6(%arg0: i32) -> (i32, i32) {
    %c0_i32 = arith.constant 0 : i32
    %c0_i32_0 = arith.constant 0 : i32
    return %arg0, %c0_i32 : i32, i32
  }
  func.func @transform_7(%arg0: i32) -> (i32, i32) {
    %c0_i32 = arith.constant 0 : i32
    %c0_i32_0 = arith.constant 0 : i32
    return %arg0, %c0_i32 : i32, i32
  }
}

module attributes {stable_mosaic.version = 11 : i64} {
  func.func @_fc3_kernel(%arg0: i32, %arg1: i32, %arg2: memref<16x1024xbf16, #tpu.memory_space<vmem>>, %arg3: memref<1024x128xbf16, #tpu.memory_space<vmem>>, %arg4: memref<1x128xf32, #tpu.memory_space<vmem>>, %arg5: memref<16x128xf32, #tpu.memory_space<vmem>>) attributes {dimension_semantics = [#tpu.dimension_semantics<parallel>, #tpu.dimension_semantics<parallel>], iteration_bounds = array<i64: 1, 1>, scalar_prefetch = 0 : i64, scratch_operands = 0 : i64, tpu.core_type = #tpu.core_type<tc>, window_params = [{transform_indices = @transform_0, window_bounds = array<i64: 16, 1024>}, {transform_indices = @transform_1, window_bounds = array<i64: 1024, 128>}, {transform_indices = @transform_2, window_bounds = array<i64: 1, 128>}, {transform_indices = @transform_3, window_bounds = array<i64: 16, 128>}]} {
    %c0 = arith.constant 0 : index
    %c0_0 = arith.constant 0 : index
    %0 = vector.load %arg2[%c0, %c0_0] : memref<16x1024xbf16, #tpu.memory_space<vmem>>, vector<16x1024xbf16>
    %c0_1 = arith.constant 0 : index
    %c0_2 = arith.constant 0 : index
    %1 = vector.load %arg3[%c0_1, %c0_2] : memref<1024x128xbf16, #tpu.memory_space<vmem>>, vector<1024x128xbf16>
    %cst = arith.constant dense<0.000000e+00> : vector<16x128xf32>
    %2 = tpu.matmul %0, %1, %cst {dimension_numbers = #tpu.dot_dimension_numbers<[1], [0], [0], [1], [0, 0, 1, 1], [], []>} : vector<16x1024xbf16>, vector<1024x128xbf16>, vector<16x128xf32> -> vector<16x128xf32>
    %c0_3 = arith.constant 0 : index
    %c0_4 = arith.constant 0 : index
    %3 = vector.load %arg4[%c0_3, %c0_4] : memref<1x128xf32, #tpu.memory_space<vmem>>, vector<1x128xf32>
    %4 = vector.broadcast %3 : vector<1x128xf32> to vector<16x128xf32>
    %5 = arith.addf %2, %4 : vector<16x128xf32>
    %c0_5 = arith.constant 0 : index
    %c0_6 = arith.constant 0 : index
    %6 = vector.load %arg5[%c0_5, %c0_6] : memref<16x128xf32, #tpu.memory_space<vmem>>, vector<16x128xf32>
    tpu.vector_store %arg5[%c0_5, %c0_6], %5 {strides = array<i32>} : memref<16x128xf32, #tpu.memory_space<vmem>>, vector<16x128xf32>,
    return
  }
  func.func @transform_0(%arg0: i32, %arg1: i32) -> (i32, i32) {
    %c0_i32 = arith.constant 0 : i32
    %c0_i32_0 = arith.constant 0 : i32
    return %arg0, %c0_i32 : i32, i32
  }
  func.func @transform_1(%arg0: i32, %arg1: i32) -> (i32, i32) {
    %c0_i32 = arith.constant 0 : i32
    %c0_i32_0 = arith.constant 0 : i32
    return %c0_i32, %arg1 : i32, i32
  }
  func.func @transform_2(%arg0: i32, %arg1: i32) -> (i32, i32) {
    %c0_i32 = arith.constant 0 : i32
    %c0_i32_0 = arith.constant 0 : i32
    return %c0_i32, %arg1 : i32, i32
  }
  func.func @transform_3(%arg0: i32, %arg1: i32) -> (i32, i32) {
    %c0_i32 = arith.constant 0 : i32
    return %arg0, %arg1 : i32, i32
  }
}

module attributes {stable_mosaic.version = 11 : i64} {
  func.func @_fine_kernel(%arg0: i32, %arg1: i32, %arg2: memref<1x128x8xbf16, #tpu.memory_space<vmem>>, %arg3: memref<1x1x512xf32, #tpu.memory_space<vmem>>, %arg4: memref<1x3x128xf32, #tpu.memory_space<vmem>>, %arg5: memref<8x512xbf16, #tpu.memory_space<vmem>>, %arg6: memref<1x512xf32, #tpu.memory_space<vmem>>, %arg7: memref<512x512xbf16, #tpu.memory_space<vmem>>, %arg8: memref<1x512xf32, #tpu.memory_space<vmem>>, %arg9: memref<3x512xbf16, #tpu.memory_space<vmem>>, %arg10: memref<3x1xf32, #tpu.memory_space<vmem>>, %arg11: memref<1x3x128xf32, #tpu.memory_space<vmem>>) attributes {dimension_semantics = [#tpu.dimension_semantics<parallel>, #tpu.dimension_semantics<parallel>], iteration_bounds = array<i64: 2, 1>, scalar_prefetch = 0 : i64, scratch_operands = 0 : i64, tpu.core_type = #tpu.core_type<tc>, window_params = [{transform_indices = @transform_0, window_bounds = array<i64: 1, 128, 8>}, {transform_indices = @transform_1, window_bounds = array<i64: 1, 1, 512>}, {transform_indices = @transform_2, window_bounds = array<i64: 1, 3, 128>}, {pipeline_mode = #tpu.pipeline_mode<synchronous>, transform_indices = @transform_3, window_bounds = array<i64: 8, 512>}, {pipeline_mode = #tpu.pipeline_mode<synchronous>, transform_indices = @transform_4, window_bounds = array<i64: 1, 512>}, {pipeline_mode = #tpu.pipeline_mode<synchronous>, transform_indices = @transform_5, window_bounds = array<i64: 512, 512>}, {pipeline_mode = #tpu.pipeline_mode<synchronous>, transform_indices = @transform_6, window_bounds = array<i64: 1, 512>}, {pipeline_mode = #tpu.pipeline_mode<synchronous>, transform_indices = @transform_7, window_bounds = array<i64: 3, 512>}, {pipeline_mode = #tpu.pipeline_mode<synchronous>, transform_indices = @transform_8, window_bounds = array<i64: 3, 1>}, {transform_indices = @transform_9, window_bounds = array<i64: 1, 3, 128>}]} {
    %c0 = arith.constant 0 : index
    %c0_0 = arith.constant 0 : index
    %c0_1 = arith.constant 0 : index
    %0 = vector.load %arg2[%c0, %c0_0, %c0_1] : memref<1x128x8xbf16, #tpu.memory_space<vmem>>, vector<1x128x8xbf16>
    %1 = vector.shape_cast %0 : vector<1x128x8xbf16> to vector<128x8xbf16>
    %c0_2 = arith.constant 0 : index
    %c0_3 = arith.constant 0 : index
    %2 = vector.load %arg5[%c0_2, %c0_3] : memref<8x512xbf16, #tpu.memory_space<vmem>>, vector<8x512xbf16>
    %cst = arith.constant dense<0.000000e+00> : vector<128x512xf32>
    %3 = tpu.matmul %1, %2, %cst {dimension_numbers = #tpu.dot_dimension_numbers<[1], [0], [0], [1], [0, 0, 1, 1], [], []>} : vector<128x8xbf16>, vector<8x512xbf16>, vector<128x512xf32> -> vector<128x512xf32>
    %c0_4 = arith.constant 0 : index
    %c0_5 = arith.constant 0 : index
    %c0_6 = arith.constant 0 : index
    %4 = vector.load %arg3[%c0_4, %c0_5, %c0_6] : memref<1x1x512xf32, #tpu.memory_space<vmem>>, vector<1x1x512xf32>
    %5 = vector.shape_cast %4 : vector<1x1x512xf32> to vector<1x512xf32>
    %6 = vector.broadcast %5 : vector<1x512xf32> to vector<128x512xf32>
    %7 = arith.addf %3, %6 : vector<128x512xf32>
    %c0_7 = arith.constant 0 : index
    %c0_8 = arith.constant 0 : index
    %8 = vector.load %arg6[%c0_7, %c0_8] : memref<1x512xf32, #tpu.memory_space<vmem>>, vector<1x512xf32>
    %9 = vector.broadcast %8 : vector<1x512xf32> to vector<128x512xf32>
    %10 = arith.addf %7, %9 : vector<128x512xf32>
    %cst_9 = arith.constant 0.000000e+00 : f32
    %11 = vector.broadcast %cst_9 : f32 to vector<128x512xf32>
    %12 = arith.maximumf %10, %11 : vector<128x512xf32>
    %13 = arith.truncf %12 : vector<128x512xf32> to vector<128x512xbf16>
    %c0_10 = arith.constant 0 : index
    %c0_11 = arith.constant 0 : index
    %14 = vector.load %arg7[%c0_10, %c0_11] : memref<512x512xbf16, #tpu.memory_space<vmem>>, vector<512x512xbf16>
    %cst_12 = arith.constant dense<0.000000e+00> : vector<128x512xf32>
    %15 = tpu.matmul %13, %14, %cst_12 {dimension_numbers = #tpu.dot_dimension_numbers<[1], [0], [0], [1], [0, 0, 1, 1], [], []>} : vector<128x512xbf16>, vector<512x512xbf16>, vector<128x512xf32> -> vector<128x512xf32>
    %c0_13 = arith.constant 0 : index
    %c0_14 = arith.constant 0 : index
    %16 = vector.load %arg8[%c0_13, %c0_14] : memref<1x512xf32, #tpu.memory_space<vmem>>, vector<1x512xf32>
    %17 = vector.broadcast %16 : vector<1x512xf32> to vector<128x512xf32>
    %18 = arith.addf %15, %17 : vector<128x512xf32>
    %cst_15 = arith.constant 0.000000e+00 : f32
    %19 = vector.broadcast %cst_15 : f32 to vector<128x512xf32>
    %20 = arith.maximumf %18, %19 : vector<128x512xf32>
    %c0_16 = arith.constant 0 : index
    %c0_17 = arith.constant 0 : index
    %21 = vector.load %arg9[%c0_16, %c0_17] : memref<3x512xbf16, #tpu.memory_space<vmem>>, vector<3x512xbf16>
    %22 = arith.truncf %20 : vector<128x512xf32> to vector<128x512xbf16>
    %cst_18 = arith.constant dense<0.000000e+00> : vector<3x128xf32>
    %23 = tpu.matmul %21, %22, %cst_18 {dimension_numbers = #tpu.dot_dimension_numbers<[1], [1], [0], [0], [0, 0, 1, 0], [], []>} : vector<3x512xbf16>, vector<128x512xbf16>, vector<3x128xf32> -> vector<3x128xf32>
    %c0_19 = arith.constant 0 : index
    %c0_20 = arith.constant 0 : index
    %24 = vector.load %arg10[%c0_19, %c0_20] : memref<3x1xf32, #tpu.memory_space<vmem>>, vector<3x1xf32>
    %25 = vector.broadcast %24 : vector<3x1xf32> to vector<3x128xf32>
    %26 = arith.addf %23, %25 : vector<3x128xf32>
    %c0_21 = arith.constant 0 : index
    %c0_22 = arith.constant 0 : index
    %c0_23 = arith.constant 0 : index
    %27 = vector.load %arg4[%c0_21, %c0_22, %c0_23] : memref<1x3x128xf32, #tpu.memory_space<vmem>>, vector<1x3x128xf32>
    %28 = vector.shape_cast %27 : vector<1x3x128xf32> to vector<3x128xf32>
    %29 = arith.addf %26, %28 : vector<3x128xf32>
    %c0_24 = arith.constant 0 : index
    %c0_25 = arith.constant 0 : index
    %c0_26 = arith.constant 0 : index
    %30 = vector.load %arg11[%c0_24, %c0_25, %c0_26] : memref<1x3x128xf32, #tpu.memory_space<vmem>>, vector<1x3x128xf32>
    %31 = vector.shape_cast %30 : vector<1x3x128xf32> to vector<3x128xf32>
    %32 = vector.shape_cast %29 : vector<3x128xf32> to vector<1x3x128xf32>
    tpu.vector_store %arg11[%c0_24, %c0_25, %c0_26], %32 {strides = array<i32>} : memref<1x3x128xf32, #tpu.memory_space<vmem>>, vector<1x3x128xf32>,
    return
  }
  func.func @transform_0(%arg0: i32, %arg1: i32) -> (i32, i32, i32) {
    %c0_i32 = arith.constant 0 : i32
    %c0_i32_0 = arith.constant 0 : i32
    return %arg0, %arg1, %c0_i32 : i32, i32, i32
  }
  func.func @transform_1(%arg0: i32, %arg1: i32) -> (i32, i32, i32) {
    %c0_i32 = arith.constant 0 : i32
    %c0_i32_0 = arith.constant 0 : i32
    %c0_i32_1 = arith.constant 0 : i32
    return %arg0, %c0_i32, %c0_i32_0 : i32, i32, i32
  }
  func.func @transform_2(%arg0: i32, %arg1: i32) -> (i32, i32, i32) {
    %c0_i32 = arith.constant 0 : i32
    %c0_i32_0 = arith.constant 0 : i32
    return %arg0, %c0_i32, %arg1 : i32, i32, i32
  }
  func.func @transform_3(%arg0: i32, %arg1: i32) -> (i32, i32) {
    %c0_i32 = arith.constant 0 : i32
    %c0_i32_0 = arith.constant 0 : i32
    %c0_i32_1 = arith.constant 0 : i32
    return %c0_i32, %c0_i32_0 : i32, i32
  }
  func.func @transform_4(%arg0: i32, %arg1: i32) -> (i32, i32) {
    %c0_i32 = arith.constant 0 : i32
    %c0_i32_0 = arith.constant 0 : i32
    %c0_i32_1 = arith.constant 0 : i32
    return %c0_i32, %c0_i32_0 : i32, i32
  }
  func.func @transform_5(%arg0: i32, %arg1: i32) -> (i32, i32) {
    %c0_i32 = arith.constant 0 : i32
    %c0_i32_0 = arith.constant 0 : i32
    %c0_i32_1 = arith.constant 0 : i32
    return %c0_i32, %c0_i32_0 : i32, i32
  }
  func.func @transform_6(%arg0: i32, %arg1: i32) -> (i32, i32) {
    %c0_i32 = arith.constant 0 : i32
    %c0_i32_0 = arith.constant 0 : i32
    %c0_i32_1 = arith.constant 0 : i32
    return %c0_i32, %c0_i32_0 : i32, i32
  }
  func.func @transform_7(%arg0: i32, %arg1: i32) -> (i32, i32) {
    %c0_i32 = arith.constant 0 : i32
    %c0_i32_0 = arith.constant 0 : i32
    %c0_i32_1 = arith.constant 0 : i32
    return %c0_i32, %c0_i32_0 : i32, i32
  }
  func.func @transform_8(%arg0: i32, %arg1: i32) -> (i32, i32) {
    %c0_i32 = arith.constant 0 : i32
    %c0_i32_0 = arith.constant 0 : i32
    %c0_i32_1 = arith.constant 0 : i32
    return %c0_i32, %c0_i32_0 : i32, i32
  }
  func.func @transform_9(%arg0: i32, %arg1: i32) -> (i32, i32, i32) {
    %c0_i32 = arith.constant 0 : i32
    %c0_i32_0 = arith.constant 0 : i32
    return %arg0, %c0_i32, %arg1 : i32, i32, i32
  }
}

</mosaic_0001>

<llo_original>
// kernel: pcn_decoder_forward.3
$region0: #{pcn_decoder_forward.3}
  #allocation0 [shape = 'u32[]', space=smem, size = 0x4, offset = 0x4, fixed_abs, tag = 'smem constant byte address 0x4 - core index']
  #allocation1 [shape = 'u32[144,128]{1,0:T(1,128)}', space=vmem, size = 0x12000, scoped, tag = 'internal scratch']
  %s0 = inlined_call_operand.vmem [shape: f32[16,1024], index: 0, kind: input, shape index: {}]
  %s1 = inlined_call_operand.vmem [shape: bf16[1024,1024], index: 1, kind: input, shape index: {}]
  %s2 = inlined_call_operand.vmem [shape: f32[1,1024], index: 2, kind: input, shape index: {}]
  %s3 = inlined_call_operand.vmem [shape: bf16[1024,1024], index: 3, kind: input, shape index: {}]
  %s4 = inlined_call_operand.vmem [shape: f32[1,1024], index: 4, kind: input, shape index: {}]
  %s5 = inlined_call_operand.vmem [shape: bf16[1024,512], index: 5, kind: input, shape index: {}]
  %s6 = inlined_call_operand.vmem [shape: bf16[16,1024], index: 6, kind: output, shape index: {0}]
  %s7 = inlined_call_operand.vmem [shape: f32[16,512], index: 7, kind: output, shape index: {1}]
  %8 = xla_tuple %s6, %s7
  %s9 = sld [smem:[#allocation0]]
  $region42: #{pcn_decoder_forward.3} parent=0
    _
  %s11 = ssub.s32 1, %s9
  %s12 = scalar_select 0, %s11, %s9
  // Predicated region
  $region2: #{pcn_decoder_forward.3} parent=0 // pred_check
    _
  $region3: #{pcn_decoder_forward.3} parent=0 // pred_check_branch
    %14 = sbr.rel (0) target = $region5
  $region4: #{pcn_decoder_forward.3} parent=0 // pred_region
    _
  $region5: #{pcn_decoder_forward.3} parent=0 // pred_fallthru
    _
  // Predicated region
  $region6: #{pcn_decoder_forward.3} parent=0 // pred_check
    _
  $region7: #{pcn_decoder_forward.3} parent=0 // pred_check_branch
    %16 = sbr.rel (0) target = $region9
  $region8: #{pcn_decoder_forward.3} parent=0 // pred_region
    _
  $region9: #{pcn_decoder_forward.3} parent=0 // pred_fallthru
    _
  // Predicated region
  $region10: #{pcn_decoder_forward.3} parent=0 // pred_check
    _
  $region11: #{pcn_decoder_forward.3} parent=0 // pred_check_branch
    %18 = sbr.rel (0) target = $region13
  $region12: #{pcn_decoder_forward.3} parent=0 // pred_region
    _
  $region13: #{pcn_decoder_forward.3} parent=0 // pred_fallthru
    _
  // Predicated region
  $region14: #{pcn_decoder_forward.3} parent=0 // pred_check
    _
  $region15: #{pcn_decoder_forward.3} parent=0 // pred_check_branch
    %20 = sbr.rel (0) target = $region17
  $region16: #{pcn_decoder_forward.3} parent=0 // pred_region
    _
  $region17: #{pcn_decoder_forward.3} parent=0 // pred_fallthru
    _
  // Predicated region
  $region18: #{pcn_decoder_forward.3} parent=0 // pred_check
    _
  $region19: #{pcn_decoder_forward.3} parent=0 // pred_check_branch
    %22 = sbr.rel (0) target = $region21
  $region20: #{pcn_decoder_forward.3} parent=0 // pred_region
    _
  $region21: #{pcn_decoder_forward.3} parent=0 // pred_fallthru
    _
  // Predicated region
  $region22: #{pcn_decoder_forward.3} parent=0 // pred_check
    _
  $region23: #{pcn_decoder_forward.3} parent=0 // pred_check_branch
    %24 = sbr.rel (0) target = $region25
  $region24: #{pcn_decoder_forward.3} parent=0 // pred_region
    _
  $region25: #{pcn_decoder_forward.3} parent=0 // pred_fallthru
    _
  %v25 = vld [vmem:[%s0] sm:$0xff]
  %v26 = vld [vmem:[%s0 + $0x8] sm:$0xff]
  %v27 = vld [vmem:[%s0 + $0x10] sm:$0xff]
  %v28 = vld [vmem:[%s0 + $0x18] sm:$0xff]
  %v29 = vld [vmem:[%s0 + $0x20] sm:$0xff]
  %v30 = vld [vmem:[%s0 + $0x28] sm:$0xff]
  %v31 = vld [vmem:[%s0 + $0x30] sm:$0xff]
  %v32 = vld [vmem:[%s0 + $0x38] sm:$0xff]
  %v33 = vld [vmem:[%s0 + $0x40] sm:$0xff]
  %v34 = vld [vmem:[%s0 + $0x48] sm:$0xff]
  %v35 = vld [vmem:[%s0 + $0x50] sm:$0xff]
  %v36 = vld [vmem:[%s0 + $0x58] sm:$0xff]
  %v37 = vld [vmem:[%s0 + $0x60] sm:$0xff]
  %v38 = vld [vmem:[%s0 + $0x68] sm:$0xff]
  %v39 = vld [vmem:[%s0 + $0x70] sm:$0xff]
  %v40 = vld [vmem:[%s0 + $0x78] sm:$0xff]
  %v41 = vpack.c.bf16 %v33, %v25
  %v42 = vpack.c.bf16 %v34, %v26
  %v43 = vpack.c.bf16 %v35, %v27
  %v44 = vpack.c.bf16 %v36, %v28
  %v45 = vpack.c.bf16 %v37, %v29
  %v46 = vpack.c.bf16 %v38, %v30
  %v47 = vpack.c.bf16 %v39, %v31
  %v48 = vpack.c.bf16 %v40, %v32
  %v49 = vld [vmem:[%s1] sm:$0xff]
  %v50 = vld [vmem:[%s1 + $0x8] sm:$0xff]
  %v51 = vld [vmem:[%s1 + $0x10] sm:$0xff]
  %v52 = vld [vmem:[%s1 + $0x18] sm:$0xff]
  %v53 = vld [vmem:[%s1 + $0x20] sm:$0xff]
  %v54 = vld [vmem:[%s1 + $0x28] sm:$0xff]
  %v55 = vld [vmem:[%s1 + $0x30] sm:$0xff]
  %v56 = vld [vmem:[%s1 + $0x38] sm:$0xff]
  %v57 = vld [vmem:[%s1 + $0x40] sm:$0xff]
  %v58 = vld [vmem:[%s1 + $0x48] sm:$0xff]
  %v59 = vld [vmem:[%s1 + $0x50] sm:$0xff]
  %v60 = vld [vmem:[%s1 + $0x58] sm:$0xff]
  %v61 = vld [vmem:[%s1 + $0x60] sm:$0xff]
  %v62 = vld [vmem:[%s1 + $0x68] sm:$0xff]
  %v63 = vld [vmem:[%s1 + $0x70] sm:$0xff]
  %v64 = vld [vmem:[%s1 + $0x78] sm:$0xff]
  %v65 = vld [vmem:[%s1 + $0x80] sm:$0xff]
  %v66 = vld [vmem:[%s1 + $0x88] sm:$0xff]
  %v67 = vld [vmem:[%s1 + $0x90] sm:$0xff]
  %v68 = vld [vmem:[%s1 + $0x98] sm:$0xff]
  %v69 = vld [vmem:[%s1 + $0xa0] sm:$0xff]
  %v70 = vld [vmem:[%s1 + $0xa8] sm:$0xff]
  %v71 = vld [vmem:[%s1 + $0xb0] sm:$0xff]
  %v72 = vld [vmem:[%s1 + $0xb8] sm:$0xff]
  %v73 = vld [vmem:[%s1 + $0xc0] sm:$0xff]
  %v74 = vld [vmem:[%s1 + $0xc8] sm:$0xff]
  %v75 = vld [vmem:[%s1 + $0xd0] sm:$0xff]
  %v76 = vld [vmem:[%s1 + $0xd8] sm:$0xff]
  %v77 = vld [vmem:[%s1 + $0xe0] sm:$0xff]
  %v78 = vld [vmem:[%s1 + $0xe8] sm:$0xff]
  %v79 = vld [vmem:[%s1 + $0xf0] sm:$0xff]
  %v80 = vld [vmem:[%s1 + $0xf8] sm:$0xff]
  %v81 = vld [vmem:[%s1 + $0x100] sm:$0xff]
  %v82 = vld [vmem:[%s1 + $0x108] sm:$0xff]
  %v83 = vld [vmem:[%s1 + $0x110] sm:$0xff]
  %v84 = vld [vmem:[%s1 + $0x118] sm:$0xff]
  %v85 = vld [vmem:[%s1 + $0x120] sm:$0xff]
  %v86 = vld [vmem:[%s1 + $0x128] sm:$0xff]
  %v87 = vld [vmem:[%s1 + $0x130] sm:$0xff]
  %v88 = vld [vmem:[%s1 + $0x138] sm:$0xff]
  %v89 = vld [vmem:[%s1 + $0x140] sm:$0xff]
  %v90 = vld [vmem:[%s1 + $0x148] sm:$0xff]
  %v91 = vld [vmem:[%s1 + $0x150] sm:$0xff]
  %v92 = vld [vmem:[%s1 + $0x158] sm:$0xff]
  %v93 = vld [vmem:[%s1 + $0x160] sm:$0xff]
  %v94 = vld [vmem:[%s1 + $0x168] sm:$0xff]
  %v95 = vld [vmem:[%s1 + $0x170] sm:$0xff]
  %v96 = vld [vmem:[%s1 + $0x178] sm:$0xff]
  %v97 = vld [vmem:[%s1 + $0x180] sm:$0xff]
  %v98 = vld [vmem:[%s1 + $0x188] sm:$0xff]
  %v99 = vld [vmem:[%s1 + $0x190] sm:$0xff]
  %v100 = vld [vmem:[%s1 + $0x198] sm:$0xff]
  %v101 = vld [vmem:[%s1 + $0x1a0] sm:$0xff]
  %v102 = vld [vmem:[%s1 + $0x1a8] sm:$0xff]
  %v103 = vld [vmem:[%s1 + $0x1b0] sm:$0xff]
  %v104 = vld [vmem:[%s1 + $0x1b8] sm:$0xff]
  %v105 = vld [vmem:[%s1 + $0x1c0] sm:$0xff]
  %v106 = vld [vmem:[%s1 + $0x1c8] sm:$0xff]
  %v107 = vld [vmem:[%s1 + $0x1d0] sm:$0xff]
  %v108 = vld [vmem:[%s1 + $0x1d8] sm:$0xff]
  %v109 = vld [vmem:[%s1 + $0x1e0] sm:$0xff]
  %v110 = vld [vmem:[%s1 + $0x1e8] sm:$0xff]
  %v111 = vld [vmem:[%s1 + $0x1f0] sm:$0xff]
  %v112 = vld [vmem:[%s1 + $0x1f8] sm:$0xff]
  %v113 = vld [vmem:[%s1 + $0x200] sm:$0xff]
  %v114 = vld [vmem:[%s1 + $0x208] sm:$0xff]
  %v115 = vld [vmem:[%s1 + $0x210] sm:$0xff]
  %v116 = vld [vmem:[%s1 + $0x218] sm:$0xff]
  %v117 = vld [vmem:[%s1 + $0x220] sm:$0xff]
  %v118 = vld [vmem:[%s1 + $0x228] sm:$0xff]
  %v119 = vld [vmem:[%s1 + $0x230] sm:$0xff]
  %v120 = vld [vmem:[%s1 + $0x238] sm:$0xff]
  %v121 = vld [vmem:[%s1 + $0x240] sm:$0xff]
  %v122 = vld [vmem:[%s1 + $0x248] sm:$0xff]
  %v123 = vld [vmem:[%s1 + $0x250] sm:$0xff]
  %v124 = vld [vmem:[%s1 + $0x258] sm:$0xff]
  %v125 = vld [vmem:[%s1 + $0x260] sm:$0xff]
  %v126 = vld [vmem:[%s1 + $0x268] sm:$0xff]
  %v127 = vld [vmem:[%s1 + $0x270] sm:$0xff]
  %v128 = vld [vmem:[%s1 + $0x278] sm:$0xff]
  %v129 = vld [vmem:[%s1 + $0x280] sm:$0xff]
  %v130 = vld [vmem:[%s1 + $0x288] sm:$0xff]
  %v131 = vld [vmem:[%s1 + $0x290] sm:$0xff]
  %v132 = vld [vmem:[%s1 + $0x298] sm:$0xff]
  %v133 = vld [vmem:[%s1 + $0x2a0] sm:$0xff]
  %v134 = vld [vmem:[%s1 + $0x2a8] sm:$0xff]
  %v135 = vld [vmem:[%s1 + $0x2b0] sm:$0xff]
  %v136 = vld [vmem:[%s1 + $0x2b8] sm:$0xff]
  %v137 = vld [vmem:[%s1 + $0x2c0] sm:$0xff]
  %v138 = vld [vmem:[%s1 + $0x2c8] sm:$0xff]
  %v139 = vld [vmem:[%s1 + $0x2d0] sm:$0xff]
  %v140 = vld [vmem:[%s1 + $0x2d8] sm:$0xff]
  %v141 = vld [vmem:[%s1 + $0x2e0] sm:$0xff]
  %v142 = vld [vmem:[%s1 + $0x2e8] sm:$0xff]
  %v143 = vld [vmem:[%s1 + $0x2f0] sm:$0xff]
  %v144 = vld [vmem:[%s1 + $0x2f8] sm:$0xff]
  %v145 = vld [vmem:[%s1 + $0x300] sm:$0xff]
  %v146 = vld [vmem:[%s1 + $0x308] sm:$0xff]
  %v147 = vld [vmem:[%s1 + $0x310] sm:$0xff]
  %v148 = vld [vmem:[%s1 + $0x318] sm:$0xff]
  %v149 = vld [vmem:[%s1 + $0x320] sm:$0xff]
  %v150 = vld [vmem:[%s1 + $0x328] sm:$0xff]
  %v151 = vld [vmem:[%s1 + $0x330] sm:$0xff]
  %v152 = vld [vmem:[%s1 + $0x338] sm:$0xff]
  %v153 = vld [vmem:[%s1 + $0x340] sm:$0xff]
  %v154 = vld [vmem:[%s1 + $0x348] sm:$0xff]
  %v155 = vld [vmem:[%s1 + $0x350] sm:$0xff]
  %v156 = vld [vmem:[%s1 + $0x358] sm:$0xff]
  %v157 = vld [vmem:[%s1 + $0x360] sm:$0xff]
  %v158 = vld [vmem:[%s1 + $0x368] sm:$0xff]
  %v159 = vld [vmem:[%s1 + $0x370] sm:$0xff]
  %v160 = vld [vmem:[%s1 + $0x378] sm:$0xff]
  %v161 = vld [vmem:[%s1 + $0x380] sm:$0xff]
  %v162 = vld [vmem:[%s1 + $0x388] sm:$0xff]
  %v163 = vld [vmem:[%s1 + $0x390] sm:$0xff]
  %v164 = vld [vmem:[%s1 + $0x398] sm:$0xff]
  %v165 = vld [vmem:[%s1 + $0x3a0] sm:$0xff]
  %v166 = vld [vmem:[%s1 + $0x3a8] sm:$0xff]
  %v167 = vld [vmem:[%s1 + $0x3b0] sm:$0xff]
  %v168 = vld [vmem:[%s1 + $0x3b8] sm:$0xff]
  %v169 = vld [vmem:[%s1 + $0x3c0] sm:$0xff]
  %v170 = vld [vmem:[%s1 + $0x3c8] sm:$0xff]
  %v171 = vld [vmem:[%s1 + $0x3d0] sm:$0xff]
  %v172 = vld [vmem:[%s1 + $0x3d8] sm:$0xff]
  %v173 = vld [vmem:[%s1 + $0x3e0] sm:$0xff]
  %v174 = vld [vmem:[%s1 + $0x3e8] sm:$0xff]
  %v175 = vld [vmem:[%s1 + $0x3f0] sm:$0xff]
  %v176 = vld [vmem:[%s1 + $0x3f8] sm:$0xff]
  %v177 = vld [vmem:[%s1 + $0x400] sm:$0xff]
  %v178 = vld [vmem:[%s1 + $0x408] sm:$0xff]
  %v179 = vld [vmem:[%s1 + $0x410] sm:$0xff]
  %v180 = vld [vmem:[%s1 + $0x418] sm:$0xff]
  %v181 = vld [vmem:[%s1 + $0x420] sm:$0xff]
  %v182 = vld [vmem:[%s1 + $0x428] sm:$0xff]
  %v183 = vld [vmem:[%s1 + $0x430] sm:$0xff]
  %v184 = vld [vmem:[%s1 + $0x438] sm:$0xff]
  %v185 = vld [vmem:[%s1 + $0x440] sm:$0xff]
  %v186 = vld [vmem:[%s1 + $0x448] sm:$0xff]
  %v187 = vld [vmem:[%s1 + $0x450] sm:$0xff]
  %v188 = vld [vmem:[%s1 + $0x458] sm:$0xff]
  %v189 = vld [vmem:[%s1 + $0x460] sm:$0xff]
  %v190 = vld [vmem:[%s1 + $0x468] sm:$0xff]
  %v191 = vld [vmem:[%s1 + $0x470] sm:$0xff]
  %v192 = vld [vmem:[%s1 + $0x478] sm:$0xff]
  %v193 = vld [vmem:[%s1 + $0x480] sm:$0xff]
  %v194 = vld [vmem:[%s1 + $0x488] sm:$0xff]
  %v195 = vld [vmem:[%s1 + $0x490] sm:$0xff]
  %v196 = vld [vmem:[%s1 + $0x498] sm:$0xff]
  %v197 = vld [vmem:[%s1 + $0x4a0] sm:$0xff]
  %v198 = vld [vmem:[%s1 + $0x4a8] sm:$0xff]
  %v199 = vld [vmem:[%s1 + $0x4b0] sm:$0xff]
  %v200 = vld [vmem:[%s1 + $0x4b8] sm:$0xff]
  %v201 = vld [vmem:[%s1 + $0x4c0] sm:$0xff]
  %v202 = vld [vmem:[%s1 + $0x4c8] sm:$0xff]
  %v203 = vld [vmem:[%s1 + $0x4d0] sm:$0xff]
  %v204 = vld [vmem:[%s1 + $0x4d8] sm:$0xff]
  %v205 = vld [vmem:[%s1 + $0x4e0] sm:$0xff]
  %v206 = vld [vmem:[%s1 + $0x4e8] sm:$0xff]
  %v207 = vld [vmem:[%s1 + $0x4f0] sm:$0xff]
  %v208 = vld [vmem:[%s1 + $0x4f8] sm:$0xff]
  %v209 = vld [vmem:[%s1 + $0x500] sm:$0xff]
  %v210 = vld [vmem:[%s1 + $0x508] sm:$0xff]
  %v211 = vld [vmem:[%s1 + $0x510] sm:$0xff]
  %v212 = vld [vmem:[%s1 + $0x518] sm:$0xff]
  %v213 = vld [vmem:[%s1 + $0x520] sm:$0xff]
  %v214 = vld [vmem:[%s1 + $0x528] sm:$0xff]
  %v215 = vld [vmem:[%s1 + $0x530] sm:$0xff]
  %v216 = vld [vmem:[%s1 + $0x538] sm:$0xff]
  %v217 = vld [vmem:[%s1 + $0x540] sm:$0xff]
  %v218 = vld [vmem:[%s1 + $0x548] sm:$0xff]
  %v219 = vld [vmem:[%s1 + $0x550] sm:$0xff]
  %v220 = vld [vmem:[%s1 + $0x558] sm:$0xff]
  %v221 = vld [vmem:[%s1 + $0x560] sm:$0xff]
  %v222 = vld [vmem:[%s1 + $0x568] sm:$0xff]
  %v223 = vld [vmem:[%s1 + $0x570] sm:$0xff]
  %v224 = vld [vmem:[%s1 + $0x578] sm:$0xff]
  %v225 = vld [vmem:[%s1 + $0x580] sm:$0xff]
  %v226 = vld [vmem:[%s1 + $0x588] sm:$0xff]
  %v227 = vld [vmem:[%s1 + $0x590] sm:$0xff]
  %v228 = vld [vmem:[%s1 + $0x598] sm:$0xff]
  %v229 = vld [vmem:[%s1 + $0x5a0] sm:$0xff]
  %v230 = vld [vmem:[%s1 + $0x5a8] sm:$0xff]
  %v231 = vld [vmem:[%s1 + $0x5b0] sm:$0xff]
  %v232 = vld [vmem:[%s1 + $0x5b8] sm:$0xff]
  %v233 = vld [vmem:[%s1 + $0x5c0] sm:$0xff]
  %v234 = vld [vmem:[%s1 + $0x5c8] sm:$0xff]
  %v235 = vld [vmem:[%s1 + $0x5d0] sm:$0xff]
  %v236 = vld [vmem:[%s1 + $0x5d8] sm:$0xff]
  %v237 = vld [vmem:[%s1 + $0x5e0] sm:$0xff]
  %v238 = vld [vmem:[%s1 + $0x5e8] sm:$0xff]
  %v239 = vld [vmem:[%s1 + $0x5f0] sm:$0xff]
  %v240 = vld [vmem:[%s1 + $0x5f8] sm:$0xff]
  %v241 = vld [vmem:[%s1 + $0x600] sm:$0xff]
  %v242 = vld [vmem:[%s1 + $0x608] sm:$0xff]
  %v243 = vld [vmem:[%s1 + $0x610] sm:$0xff]
  %v244 = vld [vmem:[%s1 + $0x618] sm:$0xff]
  %v245 = vld [vmem:[%s1 + $0x620] sm:$0xff]
  %v246 = vld [vmem:[%s1 + $0x628] sm:$0xff]
  %v247 = vld [vmem:[%s1 + $0x630] sm:$0xff]
  %v248 = vld [vmem:[%s1 + $0x638] sm:$0xff]
  %v249 = vld [vmem:[%s1 + $0x640] sm:$0xff]
  %v250 = vld [vmem:[%s1 + $0x648] sm:$0xff]
  %v251 = vld [vmem:[%s1 + $0x650] sm:$0xff]
  %v252 = vld [vmem:[%s1 + $0x658] sm:$0xff]
  %v253 = vld [vmem:[%s1 + $0x660] sm:$0xff]
  %v254 = vld [vmem:[%s1 + $0x668] sm:$0xff]
  %v255 = vld [vmem:[%s1 + $0x670] sm:$0xff]
  %v256 = vld [vmem:[%s1 + $0x678] sm:$0xff]
  %v257 = vld [vmem:[%s1 + $0x680] sm:$0xff]
  %v258 = vld [vmem:[%s1 + $0x688] sm:$0xff]
  %v259 = vld [vmem:[%s1 + $0x690] sm:$0xff]
  %v260 = vld [vmem:[%s1 + $0x698] sm:$0xff]
  %v261 = vld [vmem:[%s1 + $0x6a0] sm:$0xff]
  %v262 = vld [vmem:[%s1 + $0x6a8] sm:$0xff]
  %v263 = vld [vmem:[%s1 + $0x6b0] sm:$0xff]
  %v264 = vld [vmem:[%s1 + $0x6b8] sm:$0xff]
  %v265 = vld [vmem:[%s1 + $0x6c0] sm:$0xff]
  %v266 = vld [vmem:[%s1 + $0x6c8] sm:$0xff]
  %v267 = vld [vmem:[%s1 + $0x6d0] sm:$0xff]
  %v268 = vld [vmem:[%s1 + $0x6d8] sm:$0xff]
  %v269 = vld [vmem:[%s1 + $0x6e0] sm:$0xff]
  %v270 = vld [vmem:[%s1 + $0x6e8] sm:$0xff]
  %v271 = vld [vmem:[%s1 + $0x6f0] sm:$0xff]
  %v272 = vld [vmem:[%s1 + $0x6f8] sm:$0xff]
  %v273 = vld [vmem:[%s1 + $0x700] sm:$0xff]
  %v274 = vld [vmem:[%s1 + $0x708] sm:$0xff]
  %v275 = vld [vmem:[%s1 + $0x710] sm:$0xff]
  %v276 = vld [vmem:[%s1 + $0x718] sm:$0xff]
  %v277 = vld [vmem:[%s1 + $0x720] sm:$0xff]
  %v278 = vld [vmem:[%s1 + $0x728] sm:$0xff]
  %v279 = vld [vmem:[%s1 + $0x730] sm:$0xff]
  %v280 = vld [vmem:[%s1 + $0x738] sm:$0xff]
  %v281 = vld [vmem:[%s1 + $0x740] sm:$0xff]
  %v282 = vld [vmem:[%s1 + $0x748] sm:$0xff]
  %v283 = vld [vmem:[%s1 + $0x750] sm:$0xff]
  %v284 = vld [vmem:[%s1 + $0x758] sm:$0xff]
  %v285 = vld [vmem:[%s1 + $0x760] sm:$0xff]
  %v286 = vld [vmem:[%s1 + $0x768] sm:$0xff]
  %v287 = vld [vmem:[%s1 + $0x770] sm:$0xff]
  %v288 = vld [vmem:[%s1 + $0x778] sm:$0xff]
  %v289 = vld [vmem:[%s1 + $0x780] sm:$0xff]
  %v290 = vld [vmem:[%s1 + $0x788] sm:$0xff]
  %v291 = vld [vmem:[%s1 + $0x790] sm:$0xff]
  %v292 = vld [vmem:[%s1 + $0x798] sm:$0xff]
  %v293 = vld [vmem:[%s1 + $0x7a0] sm:$0xff]
  %v294 = vld [vmem:[%s1 + $0x7a8] sm:$0xff]
  %v295 = vld [vmem:[%s1 + $0x7b0] sm:$0xff]
  %v296 = vld [vmem:[%s1 + $0x7b8] sm:$0xff]
  %v297 = vld [vmem:[%s1 + $0x7c0] sm:$0xff]
  %v298 = vld [vmem:[%s1 + $0x7c8] sm:$0xff]
  %v299 = vld [vmem:[%s1 + $0x7d0] sm:$0xff]
  %v300 = vld [vmem:[%s1 + $0x7d8] sm:$0xff]
  %v301 = vld [vmem:[%s1 + $0x7e0] sm:$0xff]
  %v302 = vld [vmem:[%s1 + $0x7e8] sm:$0xff]
  %v303 = vld [vmem:[%s1 + $0x7f0] sm:$0xff]
  %v304 = vld [vmem:[%s1 + $0x7f8] sm:$0xff]
  %v305 = vld [vmem:[%s1 + $0x800] sm:$0xff]
  %v306 = vld [vmem:[%s1 + $0x808] sm:$0xff]
  %v307 = vld [vmem:[%s1 + $0x810] sm:$0xff]
  %v308 = vld [vmem:[%s1 + $0x818] sm:$0xff]
  %v309 = vld [vmem:[%s1 + $0x820] sm:$0xff]
  %v310 = vld [vmem:[%s1 + $0x828] sm:$0xff]
  %v311 = vld [vmem:[%s1 + $0x830] sm:$0xff]
  %v312 = vld [vmem:[%s1 + $0x838] sm:$0xff]
  %v313 = vld [vmem:[%s1 + $0x840] sm:$0xff]
  %v314 = vld [vmem:[%s1 + $0x848] sm:$0xff]
  %v315 = vld [vmem:[%s1 + $0x850] sm:$0xff]
  %v316 = vld [vmem:[%s1 + $0x858] sm:$0xff]
  %v317 = vld [vmem:[%s1 + $0x860] sm:$0xff]
  %v318 = vld [vmem:[%s1 + $0x868] sm:$0xff]
  %v319 = vld [vmem:[%s1 + $0x870] sm:$0xff]
  %v320 = vld [vmem:[%s1 + $0x878] sm:$0xff]
  %v321 = vld [vmem:[%s1 + $0x880] sm:$0xff]
  %v322 = vld [vmem:[%s1 + $0x888] sm:$0xff]
  %v323 = vld [vmem:[%s1 + $0x890] sm:$0xff]
  %v324 = vld [vmem:[%s1 + $0x898] sm:$0xff]
  %v325 = vld [vmem:[%s1 + $0x8a0] sm:$0xff]
  %v326 = vld [vmem:[%s1 + $0x8a8] sm:$0xff]
  %v327 = vld [vmem:[%s1 + $0x8b0] sm:$0xff]
  %v328 = vld [vmem:[%s1 + $0x8b8] sm:$0xff]
  %v329 = vld [vmem:[%s1 + $0x8c0] sm:$0xff]
  %v330 = vld [vmem:[%s1 + $0x8c8] sm:$0xff]
  %v331 = vld [vmem:[%s1 + $0x8d0] sm:$0xff]
  %v332 = vld [vmem:[%s1 + $0x8d8] sm:$0xff]
  %v333 = vld [vmem:[%s1 + $0x8e0] sm:$0xff]
  %v334 = vld [vmem:[%s1 + $0x8e8] sm:$0xff]
  %v335 = vld [vmem:[%s1 + $0x8f0] sm:$0xff]
  %v336 = vld [vmem:[%s1 + $0x8f8] sm:$0xff]
  %v337 = vld [vmem:[%s1 + $0x900] sm:$0xff]
  %v338 = vld [vmem:[%s1 + $0x908] sm:$0xff]
  %v339 = vld [vmem:[%s1 + $0x910] sm:$0xff]
  %v340 = vld [vmem:[%s1 + $0x918] sm:$0xff]
  %v341 = vld [vmem:[%s1 + $0x920] sm:$0xff]
  %v342 = vld [vmem:[%s1 + $0x928] sm:$0xff]
  %v343 = vld [vmem:[%s1 + $0x930] sm:$0xff]
  %v344 = vld [vmem:[%s1 + $0x938] sm:$0xff]
  %v345 = vld [vmem:[%s1 + $0x940] sm:$0xff]
  %v346 = vld [vmem:[%s1 + $0x948] sm:$0xff]
  %v347 = vld [vmem:[%s1 + $0x950] sm:$0xff]
  %v348 = vld [vmem:[%s1 + $0x958] sm:$0xff]
  %v349 = vld [vmem:[%s1 + $0x960] sm:$0xff]
  %v350 = vld [vmem:[%s1 + $0x968] sm:$0xff]
  %v351 = vld [vmem:[%s1 + $0x970] sm:$0xff]
  %v352 = vld [vmem:[%s1 + $0x978] sm:$0xff]
  %v353 = vld [vmem:[%s1 + $0x980] sm:$0xff]
  %v354 = vld [vmem:[%s1 + $0x988] sm:$0xff]
  %v355 = vld [vmem:[%s1 + $0x990] sm:$0xff]
  %v356 = vld [vmem:[%s1 + $0x998] sm:$0xff]
  %v357 = vld [vmem:[%s1 + $0x9a0] sm:$0xff]
  %v358 = vld [vmem:[%s1 + $0x9a8] sm:$0xff]
  %v359 = vld [vmem:[%s1 + $0x9b0] sm:$0xff]
  %v360 = vld [vmem:[%s1 + $0x9b8] sm:$0xff]
  %v361 = vld [vmem:[%s1 + $0x9c0] sm:$0xff]
  %v362 = vld [vmem:[%s1 + $0x9c8] sm:$0xff]
  %v363 = vld [vmem:[%s1 + $0x9d0] sm:$0xff]
  %v364 = vld [vmem:[%s1 + $0x9d8] sm:$0xff]
  %v365 = vld [vmem:[%s1 + $0x9e0] sm:$0xff]
  %v366 = vld [vmem:[%s1 + $0x9e8] sm:$0xff]
  %v367 = vld [vmem:[%s1 + $0x9f0] sm:$0xff]
  %v368 = vld [vmem:[%s1 + $0x9f8] sm:$0xff]
  %v369 = vld [vmem:[%s1 + $0xa00] sm:$0xff]
  %v370 = vld [vmem:[%s1 + $0xa08] sm:$0xff]
  %v371 = vld [vmem:[%s1 + $0xa10] sm:$0xff]
  %v372 = vld [vmem:[%s1 + $0xa18] sm:$0xff]
  %v373 = vld [vmem:[%s1 + $0xa20] sm:$0xff]
  %v374 = vld [vmem:[%s1 + $0xa28] sm:$0xff]
  %v375 = vld [vmem:[%s1 + $0xa30] sm:$0xff]
  %v376 = vld [vmem:[%s1 + $0xa38] sm:$0xff]
  %v377 = vld [vmem:[%s1 + $0xa40] sm:$0xff]
  %v378 = vld [vmem:[%s1 + $0xa48] sm:$0xff]
  %v379 = vld [vmem:[%s1 + $0xa50] sm:$0xff]
  %v380 = vld [vmem:[%s1 + $0xa58] sm:$0xff]
  %v381 = vld [vmem:[%s1 + $0xa60] sm:$0xff]
  %v382 = vld [vmem:[%s1 + $0xa68] sm:$0xff]
  %v383 = vld [vmem:[%s1 + $0xa70] sm:$0xff]
  %v384 = vld [vmem:[%s1 + $0xa78] sm:$0xff]
  %v385 = vld [vmem:[%s1 + $0xa80] sm:$0xff]
  %v386 = vld [vmem:[%s1 + $0xa88] sm:$0xff]
  %v387 = vld [vmem:[%s1 + $0xa90] sm:$0xff]
  %v388 = vld [vmem:[%s1 + $0xa98] sm:$0xff]
  %v389 = vld [vmem:[%s1 + $0xaa0] sm:$0xff]
  %v390 = vld [vmem:[%s1 + $0xaa8] sm:$0xff]
  %v391 = vld [vmem:[%s1 + $0xab0] sm:$0xff]
  %v392 = vld [vmem:[%s1 + $0xab8] sm:$0xff]
  %v393 = vld [vmem:[%s1 + $0xac0] sm:$0xff]
  %v394 = vld [vmem:[%s1 + $0xac8] sm:$0xff]
  %v395 = vld [vmem:[%s1 + $0xad0] sm:$0xff]
  %v396 = vld [vmem:[%s1 + $0xad8] sm:$0xff]
  %v397 = vld [vmem:[%s1 + $0xae0] sm:$0xff]
  %v398 = vld [vmem:[%s1 + $0xae8] sm:$0xff]
  %v399 = vld [vmem:[%s1 + $0xaf0] sm:$0xff]
  %v400 = vld [vmem:[%s1 + $0xaf8] sm:$0xff]
  %v401 = vld [vmem:[%s1 + $0xb00] sm:$0xff]
  %v402 = vld [vmem:[%s1 + $0xb08] sm:$0xff]
  %v403 = vld [vmem:[%s1 + $0xb10] sm:$0xff]
  %v404 = vld [vmem:[%s1 + $0xb18] sm:$0xff]
  %v405 = vld [vmem:[%s1 + $0xb20] sm:$0xff]
  %v406 = vld [vmem:[%s1 + $0xb28] sm:$0xff]
  %v407 = vld [vmem:[%s1 + $0xb30] sm:$0xff]
  %v408 = vld [vmem:[%s1 + $0xb38] sm:$0xff]
  %v409 = vld [vmem:[%s1 + $0xb40] sm:$0xff]
  %v410 = vld [vmem:[%s1 + $0xb48] sm:$0xff]
  %v411 = vld [vmem:[%s1 + $0xb50] sm:$0xff]
  %v412 = vld [vmem:[%s1 + $0xb58] sm:$0xff]
  %v413 = vld [vmem:[%s1 + $0xb60] sm:$0xff]
  %v414 = vld [vmem:[%s1 + $0xb68] sm:$0xff]
  %v415 = vld [vmem:[%s1 + $0xb70] sm:$0xff]
  %v416 = vld [vmem:[%s1 + $0xb78] sm:$0xff]
  %v417 = vld [vmem:[%s1 + $0xb80] sm:$0xff]
  %v418 = vld [vmem:[%s1 + $0xb88] sm:$0xff]
  %v419 = vld [vmem:[%s1 + $0xb90] sm:$0xff]
  %v420 = vld [vmem:[%s1 + $0xb98] sm:$0xff]
  %v421 = vld [vmem:[%s1 + $0xba0] sm:$0xff]
  %v422 = vld [vmem:[%s1 + $0xba8] sm:$0xff]
  %v423 = vld [vmem:[%s1 + $0xbb0] sm:$0xff]
  %v424 = vld [vmem:[%s1 + $0xbb8] sm:$0xff]
  %v425 = vld [vmem:[%s1 + $0xbc0] sm:$0xff]
  %v426 = vld [vmem:[%s1 + $0xbc8] sm:$0xff]
  %v427 = vld [vmem:[%s1 + $0xbd0] sm:$0xff]
  %v428 = vld [vmem:[%s1 + $0xbd8] sm:$0xff]
  %v429 = vld [vmem:[%s1 + $0xbe0] sm:$0xff]
  %v430 = vld [vmem:[%s1 + $0xbe8] sm:$0xff]
  %v431 = vld [vmem:[%s1 + $0xbf0] sm:$0xff]
  %v432 = vld [vmem:[%s1 + $0xbf8] sm:$0xff]
  %v433 = vld [vmem:[%s1 + $0xc00] sm:$0xff]
  %v434 = vld [vmem:[%s1 + $0xc08] sm:$0xff]
  %v435 = vld [vmem:[%s1 + $0xc10] sm:$0xff]
  %v436 = vld [vmem:[%s1 + $0xc18] sm:$0xff]
  %v437 = vld [vmem:[%s1 + $0xc20] sm:$0xff]
  %v438 = vld [vmem:[%s1 + $0xc28] sm:$0xff]
  %v439 = vld [vmem:[%s1 + $0xc30] sm:$0xff]
  %v440 = vld [vmem:[%s1 + $0xc38] sm:$0xff]
  %v441 = vld [vmem:[%s1 + $0xc40] sm:$0xff]
  %v442 = vld [vmem:[%s1 + $0xc48] sm:$0xff]
  %v443 = vld [vmem:[%s1 + $0xc50] sm:$0xff]
  %v444 = vld [vmem:[%s1 + $0xc58] sm:$0xff]
  %v445 = vld [vmem:[%s1 + $0xc60] sm:$0xff]
  %v446 = vld [vmem:[%s1 + $0xc68] sm:$0xff]
  %v447 = vld [vmem:[%s1 + $0xc70] sm:$0xff]
  %v448 = vld [vmem:[%s1 + $0xc78] sm:$0xff]
  %v449 = vld [vmem:[%s1 + $0xc80] sm:$0xff]
  %v450 = vld [vmem:[%s1 + $0xc88] sm:$0xff]
  %v451 = vld [vmem:[%s1 + $0xc90] sm:$0xff]
  %v452 = vld [vmem:[%s1 + $0xc98] sm:$0xff]
  %v453 = vld [vmem:[%s1 + $0xca0] sm:$0xff]
  %v454 = vld [vmem:[%s1 + $0xca8] sm:$0xff]
  %v455 = vld [vmem:[%s1 + $0xcb0] sm:$0xff]
  %v456 = vld [vmem:[%s1 + $0xcb8] sm:$0xff]
  %v457 = vld [vmem:[%s1 + $0xcc0] sm:$0xff]
  %v458 = vld [vmem:[%s1 + $0xcc8] sm:$0xff]
  %v459 = vld [vmem:[%s1 + $0xcd0] sm:$0xff]
  %v460 = vld [vmem:[%s1 + $0xcd8] sm:$0xff]
  %v461 = vld [vmem:[%s1 + $0xce0] sm:$0xff]
  %v462 = vld [vmem:[%s1 + $0xce8] sm:$0xff]
  %v463 = vld [vmem:[%s1 + $0xcf0] sm:$0xff]
  %v464 = vld [vmem:[%s1 + $0xcf8] sm:$0xff]
  %v465 = vld [vmem:[%s1 + $0xd00] sm:$0xff]
  %v466 = vld [vmem:[%s1 + $0xd08] sm:$0xff]
  %v467 = vld [vmem:[%s1 + $0xd10] sm:$0xff]
  %v468 = vld [vmem:[%s1 + $0xd18] sm:$0xff]
  %v469 = vld [vmem:[%s1 + $0xd20] sm:$0xff]
  %v470 = vld [vmem:[%s1 + $0xd28] sm:$0xff]
  %v471 = vld [vmem:[%s1 + $0xd30] sm:$0xff]
  %v472 = vld [vmem:[%s1 + $0xd38] sm:$0xff]
  %v473 = vld [vmem:[%s1 + $0xd40] sm:$0xff]
  %v474 = vld [vmem:[%s1 + $0xd48] sm:$0xff]
  %v475 = vld [vmem:[%s1 + $0xd50] sm:$0xff]
  %v476 = vld [vmem:[%s1 + $0xd58] sm:$0xff]
  %v477 = vld [vmem:[%s1 + $0xd60] sm:$0xff]
  %v478 = vld [vmem:[%s1 + $0xd68] sm:$0xff]
  %v479 = vld [vmem:[%s1 + $0xd70] sm:$0xff]
  %v480 = vld [vmem:[%s1 + $0xd78] sm:$0xff]
  %v481 = vld [vmem:[%s1 + $0xd80] sm:$0xff]
  %v482 = vld [vmem:[%s1 + $0xd88] sm:$0xff]
  %v483 = vld [vmem:[%s1 + $0xd90] sm:$0xff]
  %v484 = vld [vmem:[%s1 + $0xd98] sm:$0xff]
  %v485 = vld [vmem:[%s1 + $0xda0] sm:$0xff]
  %v486 = vld [vmem:[%s1 + $0xda8] sm:$0xff]
  %v487 = vld [vmem:[%s1 + $0xdb0] sm:$0xff]
  %v488 = vld [vmem:[%s1 + $0xdb8] sm:$0xff]
  %v489 = vld [vmem:[%s1 + $0xdc0] sm:$0xff]
  %v490 = vld [vmem:[%s1 + $0xdc8] sm:$0xff]
  %v491 = vld [vmem:[%s1 + $0xdd0] sm:$0xff]
  %v492 = vld [vmem:[%s1 + $0xdd8] sm:$0xff]
  %v493 = vld [vmem:[%s1 + $0xde0] sm:$0xff]
  %v494 = vld [vmem:[%s1 + $0xde8] sm:$0xff]
  %v495 = vld [vmem:[%s1 + $0xdf0] sm:$0xff]
  %v496 = vld [vmem:[%s1 + $0xdf8] sm:$0xff]
  %v497 = vld [vmem:[%s1 + $0xe00] sm:$0xff]
  %v498 = vld [vmem:[%s1 + $0xe08] sm:$0xff]
  %v499 = vld [vmem:[%s1 + $0xe10] sm:$0xff]
  %v500 = vld [vmem:[%s1 + $0xe18] sm:$0xff]
  %v501 = vld [vmem:[%s1 + $0xe20] sm:$0xff]
  %v502 = vld [vmem:[%s1 + $0xe28] sm:$0xff]
  %v503 = vld [vmem:[%s1 + $0xe30] sm:$0xff]
  %v504 = vld [vmem:[%s1 + $0xe38] sm:$0xff]
  %v505 = vld [vmem:[%s1 + $0xe40] sm:$0xff]
  %v506 = vld [vmem:[%s1 + $0xe48] sm:$0xff]
  %v507 = vld [vmem:[%s1 + $0xe50] sm:$0xff]
  %v508 = vld [vmem:[%s1 + $0xe58] sm:$0xff]
  %v509 = vld [vmem:[%s1 + $0xe60] sm:$0xff]
  %v510 = vld [vmem:[%s1 + $0xe68] sm:$0xff]
  %v511 = vld [vmem:[%s1 + $0xe70] sm:$0xff]
  %v512 = vld [vmem:[%s1 + $0xe78] sm:$0xff]
  %v513 = vld [vmem:[%s1 + $0xe80] sm:$0xff]
  %v514 = vld [vmem:[%s1 + $0xe88] sm:$0xff]
  %v515 = vld [vmem:[%s1 + $0xe90] sm:$0xff]
  %v516 = vld [vmem:[%s1 + $0xe98] sm:$0xff]
  %v517 = vld [vmem:[%s1 + $0xea0] sm:$0xff]
  %v518 = vld [vmem:[%s1 + $0xea8] sm:$0xff]
  %v519 = vld [vmem:[%s1 + $0xeb0] sm:$0xff]
  %v520 = vld [vmem:[%s1 + $0xeb8] sm:$0xff]
  %v521 = vld [vmem:[%s1 + $0xec0] sm:$0xff]
  %v522 = vld [vmem:[%s1 + $0xec8] sm:$0xff]
  %v523 = vld [vmem:[%s1 + $0xed0] sm:$0xff]
  %v524 = vld [vmem:[%s1 + $0xed8] sm:$0xff]
  %v525 = vld [vmem:[%s1 + $0xee0] sm:$0xff]
  %v526 = vld [vmem:[%s1 + $0xee8] sm:$0xff]
  %v527 = vld [vmem:[%s1 + $0xef0] sm:$0xff]
  %v528 = vld [vmem:[%s1 + $0xef8] sm:$0xff]
  %v529 = vld [vmem:[%s1 + $0xf00] sm:$0xff]
  %v530 = vld [vmem:[%s1 + $0xf08] sm:$0xff]
  %v531 = vld [vmem:[%s1 + $0xf10] sm:$0xff]
  %v532 = vld [vmem:[%s1 + $0xf18] sm:$0xff]
  %v533 = vld [vmem:[%s1 + $0xf20] sm:$0xff]
  %v534 = vld [vmem:[%s1 + $0xf28] sm:$0xff]
  %v535 = vld [vmem:[%s1 + $0xf30] sm:$0xff]
  %v536 = vld [vmem:[%s1 + $0xf38] sm:$0xff]
  %v537 = vld [vmem:[%s1 + $0xf40] sm:$0xff]
  %v538 = vld [vmem:[%s1 + $0xf48] sm:$0xff]
  %v539 = vld [vmem:[%s1 + $0xf50] sm:$0xff]
  %v540 = vld [vmem:[%s1 + $0xf58] sm:$0xff]
  %v541 = vld [vmem:[%s1 + $0xf60] sm:$0xff]
  %v542 = vld [vmem:[%s1 + $0xf68] sm:$0xff]
  %v543 = vld [vmem:[%s1 + $0xf70] sm:$0xff]
  %v544 = vld [vmem:[%s1 + $0xf78] sm:$0xff]
  %v545 = vld [vmem:[%s1 + $0xf80] sm:$0xff]
  %v546 = vld [vmem:[%s1 + $0xf88] sm:$0xff]
  %v547 = vld [vmem:[%s1 + $0xf90] sm:$0xff]
  %v548 = vld [vmem:[%s1 + $0xf98] sm:$0xff]
  %v549 = vld [vmem:[%s1 + $0xfa0] sm:$0xff]
  %v550 = vld [vmem:[%s1 + $0xfa8] sm:$0xff]
  %v551 = vld [vmem:[%s1 + $0xfb0] sm:$0xff]
  %v552 = vld [vmem:[%s1 + $0xfb8] sm:$0xff]
  %v553 = vld [vmem:[%s1 + $0xfc0] sm:$0xff]
  %v554 = vld [vmem:[%s1 + $0xfc8] sm:$0xff]
  %v555 = vld [vmem:[%s1 + $0xfd0] sm:$0xff]
  %v556 = vld [vmem:[%s1 + $0xfd8] sm:$0xff]
  %v557 = vld [vmem:[%s1 + $0xfe0] sm:$0xff]
  %v558 = vld [vmem:[%s1 + $0xfe8] sm:$0xff]
  %v559 = vld [vmem:[%s1 + $0xff0] sm:$0xff]
  %v560 = vld [vmem:[%s1 + $0xff8] sm:$0xff]
  %v561 = vld [vmem:[%s2] sm:$0xff]
  %v563 = vlaneseq
  %v564 = vshrl.u32 %v563, 7
  %v565 = vsub.s32 0, %v564
  %v566 = vrot.slane %v561, %v565
  %v567 = vlaneseq
  %v568 = vshrl.u32 %v567, 7
  %v569 = vsub.s32 1, %v568
  %v570 = vrot.slane %v561, %v569
  %v571 = vlaneseq
  %v572 = vshrl.u32 %v571, 7
  %v573 = vsub.s32 2, %v572
  %v574 = vrot.slane %v561, %v573
  %v575 = vlaneseq
  %v576 = vshrl.u32 %v575, 7
  %v577 = vsub.s32 3, %v576
  %v578 = vrot.slane %v561, %v577
  %v579 = vlaneseq
  %v580 = vshrl.u32 %v579, 7
  %v581 = vsub.s32 4, %v580
  %v582 = vrot.slane %v561, %v581
  %v583 = vlaneseq
  %v584 = vshrl.u32 %v583, 7
  %v585 = vsub.s32 5, %v584
  %v586 = vrot.slane %v561, %v585
  %v587 = vlaneseq
  %v588 = vshrl.u32 %v587, 7
  %v589 = vsub.s32 6, %v588
  %v590 = vrot.slane %v561, %v589
  %v591 = vlaneseq
  %v592 = vshrl.u32 %v591, 7
  %v593 = vsub.s32 7, %v592
  %v594 = vrot.slane %v561, %v593
  %v1115 = vunpack.c.l.b16 %v49
  %v1116 = vunpack.c.h.b16 %v49
  %v1117 = vunpack.c.l.b16 %v50
  %v1118 = vunpack.c.h.b16 %v50
  %v1119 = vunpack.c.l.b16 %v51
  %v1120 = vunpack.c.h.b16 %v51
  %v1121 = vunpack.c.l.b16 %v52
  %v1122 = vunpack.c.h.b16 %v52
  %v1123 = vunpack.c.l.b16 %v53
  %v1124 = vunpack.c.h.b16 %v53
  %v1125 = vunpack.c.l.b16 %v54
  %v1126 = vunpack.c.h.b16 %v54
  %v1127 = vunpack.c.l.b16 %v55
  %v1128 = vunpack.c.h.b16 %v55
  %v1129 = vunpack.c.l.b16 %v56
  %v1130 = vunpack.c.h.b16 %v56
  %v1131 = vunpack.c.l.b16 %v57
  %v1132 = vunpack.c.h.b16 %v57
  %v1133 = vunpack.c.l.b16 %v58
  %v1134 = vunpack.c.h.b16 %v58
  %v1135 = vunpack.c.l.b16 %v59
  %v1136 = vunpack.c.h.b16 %v59
  %v1137 = vunpack.c.l.b16 %v60
  %v1138 = vunpack.c.h.b16 %v60
  %v1139 = vunpack.c.l.b16 %v61
  %v1140 = vunpack.c.h.b16 %v61
  %v1141 = vunpack.c.l.b16 %v62
  %v1142 = vunpack.c.h.b16 %v62
  %v1143 = vunpack.c.l.b16 %v63
  %v1144 = vunpack.c.h.b16 %v63
  %v1145 = vunpack.c.l.b16 %v64
  %v1146 = vunpack.c.h.b16 %v64
  %v1147 = vunpack.c.l.b16 %v65
  %v1148 = vunpack.c.h.b16 %v65
  %v1149 = vunpack.c.l.b16 %v66
  %v1150 = vunpack.c.h.b16 %v66
  %v1151 = vunpack.c.l.b16 %v67
  %v1152 = vunpack.c.h.b16 %v67
  %v1153 = vunpack.c.l.b16 %v68
  %v1154 = vunpack.c.h.b16 %v68
  %v1155 = vunpack.c.l.b16 %v69
  %v1156 = vunpack.c.h.b16 %v69
  %v1157 = vunpack.c.l.b16 %v70
  %v1158 = vunpack.c.h.b16 %v70
  %v1159 = vunpack.c.l.b16 %v71
  %v1160 = vunpack.c.h.b16 %v71
  %v1161 = vunpack.c.l.b16 %v72
  %v1162 = vunpack.c.h.b16 %v72
  %v1163 = vunpack.c.l.b16 %v73
  %v1164 = vunpack.c.h.b16 %v73
  %v1165 = vunpack.c.l.b16 %v74
  %v1166 = vunpack.c.h.b16 %v74
  %v1167 = vunpack.c.l.b16 %v75
  %v1168 = vunpack.c.h.b16 %v75
  %v1169 = vunpack.c.l.b16 %v76
  %v1170 = vunpack.c.h.b16 %v76
  %v1171 = vunpack.c.l.b16 %v77
  %v1172 = vunpack.c.h.b16 %v77
  %v1173 = vunpack.c.l.b16 %v78
  %v1174 = vunpack.c.h.b16 %v78
  %v1175 = vunpack.c.l.b16 %v79
  %v1176 = vunpack.c.h.b16 %v79
  %v1177 = vunpack.c.l.b16 %v80
  %v1178 = vunpack.c.h.b16 %v80
  %v1179 = vunpack.c.l.b16 %v81
  %v1180 = vunpack.c.h.b16 %v81
  %v1181 = vunpack.c.l.b16 %v82
  %v1182 = vunpack.c.h.b16 %v82
  %v1183 = vunpack.c.l.b16 %v83
  %v1184 = vunpack.c.h.b16 %v83
  %v1185 = vunpack.c.l.b16 %v84
  %v1186 = vunpack.c.h.b16 %v84
  %v1187 = vunpack.c.l.b16 %v85
  %v1188 = vunpack.c.h.b16 %v85
  %v1189 = vunpack.c.l.b16 %v86
  %v1190 = vunpack.c.h.b16 %v86
  %v1191 = vunpack.c.l.b16 %v87
  %v1192 = vunpack.c.h.b16 %v87
  %v1193 = vunpack.c.l.b16 %v88
  %v1194 = vunpack.c.h.b16 %v88
  %v1195 = vunpack.c.l.b16 %v89
  %v1196 = vunpack.c.h.b16 %v89
  %v1197 = vunpack.c.l.b16 %v90
  %v1198 = vunpack.c.h.b16 %v90
  %v1199 = vunpack.c.l.b16 %v91
  %v1200 = vunpack.c.h.b16 %v91
  %v1201 = vunpack.c.l.b16 %v92
  %v1202 = vunpack.c.h.b16 %v92
  %v1203 = vunpack.c.l.b16 %v93
  %v1204 = vunpack.c.h.b16 %v93
  %v1205 = vunpack.c.l.b16 %v94
  %v1206 = vunpack.c.h.b16 %v94
  %v1207 = vunpack.c.l.b16 %v95
  %v1208 = vunpack.c.h.b16 %v95
  %v1209 = vunpack.c.l.b16 %v96
  %v1210 = vunpack.c.h.b16 %v96
  %v1211 = vunpack.c.l.b16 %v97
  %v1212 = vunpack.c.h.b16 %v97
  %v1213 = vunpack.c.l.b16 %v98
  %v1214 = vunpack.c.h.b16 %v98
  %v1215 = vunpack.c.l.b16 %v99
  %v1216 = vunpack.c.h.b16 %v99
  %v1217 = vunpack.c.l.b16 %v100
  %v1218 = vunpack.c.h.b16 %v100
  %v1219 = vunpack.c.l.b16 %v101
  %v1220 = vunpack.c.h.b16 %v101
  %v1221 = vunpack.c.l.b16 %v102
  %v1222 = vunpack.c.h.b16 %v102
  %v1223 = vunpack.c.l.b16 %v103
  %v1224 = vunpack.c.h.b16 %v103
  %v1225 = vunpack.c.l.b16 %v104
  %v1226 = vunpack.c.h.b16 %v104
  %v1227 = vunpack.c.l.b16 %v105
  %v1228 = vunpack.c.h.b16 %v105
  %v1229 = vunpack.c.l.b16 %v106
  %v1230 = vunpack.c.h.b16 %v106
  %v1231 = vunpack.c.l.b16 %v107
  %v1232 = vunpack.c.h.b16 %v107
  %v1233 = vunpack.c.l.b16 %v108
  %v1234 = vunpack.c.h.b16 %v108
  %v1235 = vunpack.c.l.b16 %v109
  %v1236 = vunpack.c.h.b16 %v109
  %v1237 = vunpack.c.l.b16 %v110
  %v1238 = vunpack.c.h.b16 %v110
  %v1239 = vunpack.c.l.b16 %v111
  %v1240 = vunpack.c.h.b16 %v111
  %v1241 = vunpack.c.l.b16 %v112
  %v1242 = vunpack.c.h.b16 %v112
  %v1243 = vunpack.c.l.b16 %v113
  %v1244 = vunpack.c.h.b16 %v113
  %v1245 = vunpack.c.l.b16 %v114
  %v1246 = vunpack.c.h.b16 %v114
  %v1247 = vunpack.c.l.b16 %v115
  %v1248 = vunpack.c.h.b16 %v115
  %v1249 = vunpack.c.l.b16 %v116
  %v1250 = vunpack.c.h.b16 %v116
  %v1251 = vunpack.c.l.b16 %v117
  %v1252 = vunpack.c.h.b16 %v117
  %v1253 = vunpack.c.l.b16 %v118
  %v1254 = vunpack.c.h.b16 %v118
  %v1255 = vunpack.c.l.b16 %v119
  %v1256 = vunpack.c.h.b16 %v119
  %v1257 = vunpack.c.l.b16 %v120
  %v1258 = vunpack.c.h.b16 %v120
  %v1259 = vunpack.c.l.b16 %v121
  %v1260 = vunpack.c.h.b16 %v121
  %v1261 = vunpack.c.l.b16 %v122
  %v1262 = vunpack.c.h.b16 %v122
  %v1263 = vunpack.c.l.b16 %v123
  %v1264 = vunpack.c.h.b16 %v123
  %v1265 = vunpack.c.l.b16 %v124
  %v1266 = vunpack.c.h.b16 %v124
  %v1267 = vunpack.c.l.b16 %v125
  %v1268 = vunpack.c.h.b16 %v125
  %v1269 = vunpack.c.l.b16 %v126
  %v1270 = vunpack.c.h.b16 %v126
  %v1271 = vunpack.c.l.b16 %v127
  %v1272 = vunpack.c.h.b16 %v127
  %v1273 = vunpack.c.l.b16 %v128
  %v1274 = vunpack.c.h.b16 %v128
  %v1275 = vunpack.c.l.b16 %v129
  %v1276 = vunpack.c.h.b16 %v129
  %v1277 = vunpack.c.l.b16 %v130
  %v1278 = vunpack.c.h.b16 %v130
  %v1279 = vunpack.c.l.b16 %v131
  %v1280 = vunpack.c.h.b16 %v131
  %v1281 = vunpack.c.l.b16 %v132
  %v1282 = vunpack.c.h.b16 %v132
  %v1283 = vunpack.c.l.b16 %v133
  %v1284 = vunpack.c.h.b16 %v133
  %v1285 = vunpack.c.l.b16 %v134
  %v1286 = vunpack.c.h.b16 %v134
  %v1287 = vunpack.c.l.b16 %v135
  %v1288 = vunpack.c.h.b16 %v135
  %v1289 = vunpack.c.l.b16 %v136
  %v1290 = vunpack.c.h.b16 %v136
  %v1291 = vunpack.c.l.b16 %v137
  %v1292 = vunpack.c.h.b16 %v137
  %v1293 = vunpack.c.l.b16 %v138
  %v1294 = vunpack.c.h.b16 %v138
  %v1295 = vunpack.c.l.b16 %v139
  %v1296 = vunpack.c.h.b16 %v139
  %v1297 = vunpack.c.l.b16 %v140
  %v1298 = vunpack.c.h.b16 %v140
  %v1299 = vunpack.c.l.b16 %v141
  %v1300 = vunpack.c.h.b16 %v141
  %v1301 = vunpack.c.l.b16 %v142
  %v1302 = vunpack.c.h.b16 %v142
  %v1303 = vunpack.c.l.b16 %v143
  %v1304 = vunpack.c.h.b16 %v143
  %v1305 = vunpack.c.l.b16 %v144
  %v1306 = vunpack.c.h.b16 %v144
  %v1307 = vunpack.c.l.b16 %v145
  %v1308 = vunpack.c.h.b16 %v145
  %v1309 = vunpack.c.l.b16 %v146
  %v1310 = vunpack.c.h.b16 %v146
  %v1311 = vunpack.c.l.b16 %v147
  %v1312 = vunpack.c.h.b16 %v147
  %v1313 = vunpack.c.l.b16 %v148
  %v1314 = vunpack.c.h.b16 %v148
  %v1315 = vunpack.c.l.b16 %v149
  %v1316 = vunpack.c.h.b16 %v149
  %v1317 = vunpack.c.l.b16 %v150
  %v1318 = vunpack.c.h.b16 %v150
  %v1319 = vunpack.c.l.b16 %v151
  %v1320 = vunpack.c.h.b16 %v151
  %v1321 = vunpack.c.l.b16 %v152
  %v1322 = vunpack.c.h.b16 %v152
  %v1323 = vunpack.c.l.b16 %v153
  %v1324 = vunpack.c.h.b16 %v153
  %v1325 = vunpack.c.l.b16 %v154
  %v1326 = vunpack.c.h.b16 %v154
  %v1327 = vunpack.c.l.b16 %v155
  %v1328 = vunpack.c.h.b16 %v155
  %v1329 = vunpack.c.l.b16 %v156
  %v1330 = vunpack.c.h.b16 %v156
  %v1331 = vunpack.c.l.b16 %v157
  %v1332 = vunpack.c.h.b16 %v157
  %v1333 = vunpack.c.l.b16 %v158
  %v1334 = vunpack.c.h.b16 %v158
  %v1335 = vunpack.c.l.b16 %v159
  %v1336 = vunpack.c.h.b16 %v159
  %v1337 = vunpack.c.l.b16 %v160
  %v1338 = vunpack.c.h.b16 %v160
  %v1339 = vunpack.c.l.b16 %v161
  %v1340 = vunpack.c.h.b16 %v161
  %v1341 = vunpack.c.l.b16 %v162
  %v1342 = vunpack.c.h.b16 %v162
  %v1343 = vunpack.c.l.b16 %v163
  %v1344 = vunpack.c.h.b16 %v163
  %v1345 = vunpack.c.l.b16 %v164
  %v1346 = vunpack.c.h.b16 %v164
  %v1347 = vunpack.c.l.b16 %v165
  %v1348 = vunpack.c.h.b16 %v165
  %v1349 = vunpack.c.l.b16 %v166
  %v1350 = vunpack.c.h.b16 %v166
  %v1351 = vunpack.c.l.b16 %v167
  %v1352 = vunpack.c.h.b16 %v167
  %v1353 = vunpack.c.l.b16 %v168
  %v1354 = vunpack.c.h.b16 %v168
  %v1355 = vunpack.c.l.b16 %v169
  %v1356 = vunpack.c.h.b16 %v169
  %v1357 = vunpack.c.l.b16 %v170
  %v1358 = vunpack.c.h.b16 %v170
  %v1359 = vunpack.c.l.b16 %v171
  %v1360 = vunpack.c.h.b16 %v171
  %v1361 = vunpack.c.l.b16 %v172
  %v1362 = vunpack.c.h.b16 %v172
  %v1363 = vunpack.c.l.b16 %v173
  %v1364 = vunpack.c.h.b16 %v173
  %v1365 = vunpack.c.l.b16 %v174
  %v1366 = vunpack.c.h.b16 %v174
  %v1367 = vunpack.c.l.b16 %v175
  %v1368 = vunpack.c.h.b16 %v175
  %v1369 = vunpack.c.l.b16 %v176
  %v1370 = vunpack.c.h.b16 %v176
  %v1371 = vunpack.c.l.b16 %v177
  %v1372 = vunpack.c.h.b16 %v177
  %v1373 = vunpack.c.l.b16 %v178
  %v1374 = vunpack.c.h.b16 %v178
  %v1375 = vunpack.c.l.b16 %v179
  %v1376 = vunpack.c.h.b16 %v179
  %v1377 = vunpack.c.l.b16 %v180
  %v1378 = vunpack.c.h.b16 %v180
  %v1379 = vunpack.c.l.b16 %v181
  %v1380 = vunpack.c.h.b16 %v181
  %v1381 = vunpack.c.l.b16 %v182
  %v1382 = vunpack.c.h.b16 %v182
  %v1383 = vunpack.c.l.b16 %v183
  %v1384 = vunpack.c.h.b16 %v183
  %v1385 = vunpack.c.l.b16 %v184
  %v1386 = vunpack.c.h.b16 %v184
  %v1387 = vunpack.c.l.b16 %v185
  %v1388 = vunpack.c.h.b16 %v185
  %v1389 = vunpack.c.l.b16 %v186
  %v1390 = vunpack.c.h.b16 %v186
  %v1391 = vunpack.c.l.b16 %v187
  %v1392 = vunpack.c.h.b16 %v187
  %v1393 = vunpack.c.l.b16 %v188
  %v1394 = vunpack.c.h.b16 %v188
  %v1395 = vunpack.c.l.b16 %v189
  %v1396 = vunpack.c.h.b16 %v189
  %v1397 = vunpack.c.l.b16 %v190
  %v1398 = vunpack.c.h.b16 %v190
  %v1399 = vunpack.c.l.b16 %v191
  %v1400 = vunpack.c.h.b16 %v191
  %v1401 = vunpack.c.l.b16 %v192
  %v1402 = vunpack.c.h.b16 %v192
  %v1403 = vunpack.c.l.b16 %v193
  %v1404 = vunpack.c.h.b16 %v193
  %v1405 = vunpack.c.l.b16 %v194
  %v1406 = vunpack.c.h.b16 %v194
  %v1407 = vunpack.c.l.b16 %v195
  %v1408 = vunpack.c.h.b16 %v195
  %v1409 = vunpack.c.l.b16 %v196
  %v1410 = vunpack.c.h.b16 %v196
  %v1411 = vunpack.c.l.b16 %v197
  %v1412 = vunpack.c.h.b16 %v197
  %v1413 = vunpack.c.l.b16 %v198
  %v1414 = vunpack.c.h.b16 %v198
  %v1415 = vunpack.c.l.b16 %v199
  %v1416 = vunpack.c.h.b16 %v199
  %v1417 = vunpack.c.l.b16 %v200
  %v1418 = vunpack.c.h.b16 %v200
  %v1419 = vunpack.c.l.b16 %v201
  %v1420 = vunpack.c.h.b16 %v201
  %v1421 = vunpack.c.l.b16 %v202
  %v1422 = vunpack.c.h.b16 %v202
  %v1423 = vunpack.c.l.b16 %v203
  %v1424 = vunpack.c.h.b16 %v203
  %v1425 = vunpack.c.l.b16 %v204
  %v1426 = vunpack.c.h.b16 %v204
  %v1427 = vunpack.c.l.b16 %v205
  %v1428 = vunpack.c.h.b16 %v205
  %v1429 = vunpack.c.l.b16 %v206
  %v1430 = vunpack.c.h.b16 %v206
  %v1431 = vunpack.c.l.b16 %v207
  %v1432 = vunpack.c.h.b16 %v207
  %v1433 = vunpack.c.l.b16 %v208
  %v1434 = vunpack.c.h.b16 %v208
  %v1435 = vunpack.c.l.b16 %v209
  %v1436 = vunpack.c.h.b16 %v209
  %v1437 = vunpack.c.l.b16 %v210
  %v1438 = vunpack.c.h.b16 %v210
  %v1439 = vunpack.c.l.b16 %v211
  %v1440 = vunpack.c.h.b16 %v211
  %v1441 = vunpack.c.l.b16 %v212
  %v1442 = vunpack.c.h.b16 %v212
  %v1443 = vunpack.c.l.b16 %v213
  %v1444 = vunpack.c.h.b16 %v213
  %v1445 = vunpack.c.l.b16 %v214
  %v1446 = vunpack.c.h.b16 %v214
  %v1447 = vunpack.c.l.b16 %v215
  %v1448 = vunpack.c.h.b16 %v215
  %v1449 = vunpack.c.l.b16 %v216
  %v1450 = vunpack.c.h.b16 %v216
  %v1451 = vunpack.c.l.b16 %v217
  %v1452 = vunpack.c.h.b16 %v217
  %v1453 = vunpack.c.l.b16 %v218
  %v1454 = vunpack.c.h.b16 %v218
  %v1455 = vunpack.c.l.b16 %v219
  %v1456 = vunpack.c.h.b16 %v219
  %v1457 = vunpack.c.l.b16 %v220
  %v1458 = vunpack.c.h.b16 %v220
  %v1459 = vunpack.c.l.b16 %v221
  %v1460 = vunpack.c.h.b16 %v221
  %v1461 = vunpack.c.l.b16 %v222
  %v1462 = vunpack.c.h.b16 %v222
  %v1463 = vunpack.c.l.b16 %v223
  %v1464 = vunpack.c.h.b16 %v223
  %v1465 = vunpack.c.l.b16 %v224
  %v1466 = vunpack.c.h.b16 %v224
  %v1467 = vunpack.c.l.b16 %v225
  %v1468 = vunpack.c.h.b16 %v225
  %v1469 = vunpack.c.l.b16 %v226
  %v1470 = vunpack.c.h.b16 %v226
  %v1471 = vunpack.c.l.b16 %v227
  %v1472 = vunpack.c.h.b16 %v227
  %v1473 = vunpack.c.l.b16 %v228
  %v1474 = vunpack.c.h.b16 %v228
  %v1475 = vunpack.c.l.b16 %v229
  %v1476 = vunpack.c.h.b16 %v229
  %v1477 = vunpack.c.l.b16 %v230
  %v1478 = vunpack.c.h.b16 %v230
  %v1479 = vunpack.c.l.b16 %v231
  %v1480 = vunpack.c.h.b16 %v231
  %v1481 = vunpack.c.l.b16 %v232
  %v1482 = vunpack.c.h.b16 %v232
  %v1483 = vunpack.c.l.b16 %v233
  %v1484 = vunpack.c.h.b16 %v233
  %v1485 = vunpack.c.l.b16 %v234
  %v1486 = vunpack.c.h.b16 %v234
  %v1487 = vunpack.c.l.b16 %v235
  %v1488 = vunpack.c.h.b16 %v235
  %v1489 = vunpack.c.l.b16 %v236
  %v1490 = vunpack.c.h.b16 %v236
  %v1491 = vunpack.c.l.b16 %v237
  %v1492 = vunpack.c.h.b16 %v237
  %v1493 = vunpack.c.l.b16 %v238
  %v1494 = vunpack.c.h.b16 %v238
  %v1495 = vunpack.c.l.b16 %v239
  %v1496 = vunpack.c.h.b16 %v239
  %v1497 = vunpack.c.l.b16 %v240
  %v1498 = vunpack.c.h.b16 %v240
  %v1499 = vunpack.c.l.b16 %v241
  %v1500 = vunpack.c.h.b16 %v241
  %v1501 = vunpack.c.l.b16 %v242
  %v1502 = vunpack.c.h.b16 %v242
  %v1503 = vunpack.c.l.b16 %v243
  %v1504 = vunpack.c.h.b16 %v243
  %v1505 = vunpack.c.l.b16 %v244
  %v1506 = vunpack.c.h.b16 %v244
  %v1507 = vunpack.c.l.b16 %v245
  %v1508 = vunpack.c.h.b16 %v245
  %v1509 = vunpack.c.l.b16 %v246
  %v1510 = vunpack.c.h.b16 %v246
  %v1511 = vunpack.c.l.b16 %v247
  %v1512 = vunpack.c.h.b16 %v247
  %v1513 = vunpack.c.l.b16 %v248
  %v1514 = vunpack.c.h.b16 %v248
  %v1515 = vunpack.c.l.b16 %v249
  %v1516 = vunpack.c.h.b16 %v249
  %v1517 = vunpack.c.l.b16 %v250
  %v1518 = vunpack.c.h.b16 %v250
  %v1519 = vunpack.c.l.b16 %v251
  %v1520 = vunpack.c.h.b16 %v251
  %v1521 = vunpack.c.l.b16 %v252
  %v1522 = vunpack.c.h.b16 %v252
  %v1523 = vunpack.c.l.b16 %v253
  %v1524 = vunpack.c.h.b16 %v253
  %v1525 = vunpack.c.l.b16 %v254
  %v1526 = vunpack.c.h.b16 %v254
  %v1527 = vunpack.c.l.b16 %v255
  %v1528 = vunpack.c.h.b16 %v255
  %v1529 = vunpack.c.l.b16 %v256
  %v1530 = vunpack.c.h.b16 %v256
  %v1531 = vunpack.c.l.b16 %v257
  %v1532 = vunpack.c.h.b16 %v257
  %v1533 = vunpack.c.l.b16 %v258
  %v1534 = vunpack.c.h.b16 %v258
  %v1535 = vunpack.c.l.b16 %v259
  %v1536 = vunpack.c.h.b16 %v259
  %v1537 = vunpack.c.l.b16 %v260
  %v1538 = vunpack.c.h.b16 %v260
  %v1539 = vunpack.c.l.b16 %v261
  %v1540 = vunpack.c.h.b16 %v261
  %v1541 = vunpack.c.l.b16 %v262
  %v1542 = vunpack.c.h.b16 %v262
  %v1543 = vunpack.c.l.b16 %v263
  %v1544 = vunpack.c.h.b16 %v263
  %v1545 = vunpack.c.l.b16 %v264
  %v1546 = vunpack.c.h.b16 %v264
  %v1547 = vunpack.c.l.b16 %v265
  %v1548 = vunpack.c.h.b16 %v265
  %v1549 = vunpack.c.l.b16 %v266
  %v1550 = vunpack.c.h.b16 %v266
  %v1551 = vunpack.c.l.b16 %v267
  %v1552 = vunpack.c.h.b16 %v267
  %v1553 = vunpack.c.l.b16 %v268
  %v1554 = vunpack.c.h.b16 %v268
  %v1555 = vunpack.c.l.b16 %v269
  %v1556 = vunpack.c.h.b16 %v269
  %v1557 = vunpack.c.l.b16 %v270
  %v1558 = vunpack.c.h.b16 %v270
  %v1559 = vunpack.c.l.b16 %v271
  %v1560 = vunpack.c.h.b16 %v271
  %v1561 = vunpack.c.l.b16 %v272
  %v1562 = vunpack.c.h.b16 %v272
  %v1563 = vunpack.c.l.b16 %v273
  %v1564 = vunpack.c.h.b16 %v273
  %v1565 = vunpack.c.l.b16 %v274
  %v1566 = vunpack.c.h.b16 %v274
  %v1567 = vunpack.c.l.b16 %v275
  %v1568 = vunpack.c.h.b16 %v275
  %v1569 = vunpack.c.l.b16 %v276
  %v1570 = vunpack.c.h.b16 %v276
  %v1571 = vunpack.c.l.b16 %v277
  %v1572 = vunpack.c.h.b16 %v277
  %v1573 = vunpack.c.l.b16 %v278
  %v1574 = vunpack.c.h.b16 %v278
  %v1575 = vunpack.c.l.b16 %v279
  %v1576 = vunpack.c.h.b16 %v279
  %v1577 = vunpack.c.l.b16 %v280
  %v1578 = vunpack.c.h.b16 %v280
  %v1579 = vunpack.c.l.b16 %v281
  %v1580 = vunpack.c.h.b16 %v281
  %v1581 = vunpack.c.l.b16 %v282
  %v1582 = vunpack.c.h.b16 %v282
  %v1583 = vunpack.c.l.b16 %v283
  %v1584 = vunpack.c.h.b16 %v283
  %v1585 = vunpack.c.l.b16 %v284
  %v1586 = vunpack.c.h.b16 %v284
  %v1587 = vunpack.c.l.b16 %v285
  %v1588 = vunpack.c.h.b16 %v285
  %v1589 = vunpack.c.l.b16 %v286
  %v1590 = vunpack.c.h.b16 %v286
  %v1591 = vunpack.c.l.b16 %v287
  %v1592 = vunpack.c.h.b16 %v287
  %v1593 = vunpack.c.l.b16 %v288
  %v1594 = vunpack.c.h.b16 %v288
  %v1595 = vunpack.c.l.b16 %v289
  %v1596 = vunpack.c.h.b16 %v289
  %v1597 = vunpack.c.l.b16 %v290
  %v1598 = vunpack.c.h.b16 %v290
  %v1599 = vunpack.c.l.b16 %v291
  %v1600 = vunpack.c.h.b16 %v291
  %v1601 = vunpack.c.l.b16 %v292
  %v1602 = vunpack.c.h.b16 %v292
  %v1603 = vunpack.c.l.b16 %v293
  %v1604 = vunpack.c.h.b16 %v293
  %v1605 = vunpack.c.l.b16 %v294
  %v1606 = vunpack.c.h.b16 %v294
  %v1607 = vunpack.c.l.b16 %v295
  %v1608 = vunpack.c.h.b16 %v295
  %v1609 = vunpack.c.l.b16 %v296
  %v1610 = vunpack.c.h.b16 %v296
  %v1611 = vunpack.c.l.b16 %v297
  %v1612 = vunpack.c.h.b16 %v297
  %v1613 = vunpack.c.l.b16 %v298
  %v1614 = vunpack.c.h.b16 %v298
  %v1615 = vunpack.c.l.b16 %v299
  %v1616 = vunpack.c.h.b16 %v299
  %v1617 = vunpack.c.l.b16 %v300
  %v1618 = vunpack.c.h.b16 %v300
  %v1619 = vunpack.c.l.b16 %v301
  %v1620 = vunpack.c.h.b16 %v301
  %v1621 = vunpack.c.l.b16 %v302
  %v1622 = vunpack.c.h.b16 %v302
  %v1623 = vunpack.c.l.b16 %v303
  %v1624 = vunpack.c.h.b16 %v303
  %v1625 = vunpack.c.l.b16 %v304
  %v1626 = vunpack.c.h.b16 %v304
  %v1627 = vunpack.c.l.b16 %v305
  %v1628 = vunpack.c.h.b16 %v305
  %v1629 = vunpack.c.l.b16 %v306
  %v1630 = vunpack.c.h.b16 %v306
  %v1631 = vunpack.c.l.b16 %v307
  %v1632 = vunpack.c.h.b16 %v307
  %v1633 = vunpack.c.l.b16 %v308
  %v1634 = vunpack.c.h.b16 %v308
  %v1635 = vunpack.c.l.b16 %v309
  %v1636 = vunpack.c.h.b16 %v309
  %v1637 = vunpack.c.l.b16 %v310
  %v1638 = vunpack.c.h.b16 %v310
  %v1639 = vunpack.c.l.b16 %v311
  %v1640 = vunpack.c.h.b16 %v311
  %v1641 = vunpack.c.l.b16 %v312
  %v1642 = vunpack.c.h.b16 %v312
  %v1643 = vunpack.c.l.b16 %v313
  %v1644 = vunpack.c.h.b16 %v313
  %v1645 = vunpack.c.l.b16 %v314
  %v1646 = vunpack.c.h.b16 %v314
  %v1647 = vunpack.c.l.b16 %v315
  %v1648 = vunpack.c.h.b16 %v315
  %v1649 = vunpack.c.l.b16 %v316
  %v1650 = vunpack.c.h.b16 %v316
  %v1651 = vunpack.c.l.b16 %v317
  %v1652 = vunpack.c.h.b16 %v317
  %v1653 = vunpack.c.l.b16 %v318
  %v1654 = vunpack.c.h.b16 %v318
  %v1655 = vunpack.c.l.b16 %v319
  %v1656 = vunpack.c.h.b16 %v319
  %v1657 = vunpack.c.l.b16 %v320
  %v1658 = vunpack.c.h.b16 %v320
  %v1659 = vunpack.c.l.b16 %v321
  %v1660 = vunpack.c.h.b16 %v321
  %v1661 = vunpack.c.l.b16 %v322
  %v1662 = vunpack.c.h.b16 %v322
  %v1663 = vunpack.c.l.b16 %v323
  %v1664 = vunpack.c.h.b16 %v323
  %v1665 = vunpack.c.l.b16 %v324
  %v1666 = vunpack.c.h.b16 %v324
  %v1667 = vunpack.c.l.b16 %v325
  %v1668 = vunpack.c.h.b16 %v325
  %v1669 = vunpack.c.l.b16 %v326
  %v1670 = vunpack.c.h.b16 %v326
  %v1671 = vunpack.c.l.b16 %v327
  %v1672 = vunpack.c.h.b16 %v327
  %v1673 = vunpack.c.l.b16 %v328
  %v1674 = vunpack.c.h.b16 %v328
  %v1675 = vunpack.c.l.b16 %v329
  %v1676 = vunpack.c.h.b16 %v329
  %v1677 = vunpack.c.l.b16 %v330
  %v1678 = vunpack.c.h.b16 %v330
  %v1679 = vunpack.c.l.b16 %v331
  %v1680 = vunpack.c.h.b16 %v331
  %v1681 = vunpack.c.l.b16 %v332
  %v1682 = vunpack.c.h.b16 %v332
  %v1683 = vunpack.c.l.b16 %v333
  %v1684 = vunpack.c.h.b16 %v333
  %v1685 = vunpack.c.l.b16 %v334
  %v1686 = vunpack.c.h.b16 %v334
  %v1687 = vunpack.c.l.b16 %v335
  %v1688 = vunpack.c.h.b16 %v335
  %v1689 = vunpack.c.l.b16 %v336
  %v1690 = vunpack.c.h.b16 %v336
  %v1691 = vunpack.c.l.b16 %v337
  %v1692 = vunpack.c.h.b16 %v337
  %v1693 = vunpack.c.l.b16 %v338
  %v1694 = vunpack.c.h.b16 %v338
  %v1695 = vunpack.c.l.b16 %v339
  %v1696 = vunpack.c.h.b16 %v339
  %v1697 = vunpack.c.l.b16 %v340
  %v1698 = vunpack.c.h.b16 %v340
  %v1699 = vunpack.c.l.b16 %v341
  %v1700 = vunpack.c.h.b16 %v341
  %v1701 = vunpack.c.l.b16 %v342
  %v1702 = vunpack.c.h.b16 %v342
  %v1703 = vunpack.c.l.b16 %v343
  %v1704 = vunpack.c.h.b16 %v343
  %v1705 = vunpack.c.l.b16 %v344
  %v1706 = vunpack.c.h.b16 %v344
  %v1707 = vunpack.c.l.b16 %v345
  %v1708 = vunpack.c.h.b16 %v345
  %v1709 = vunpack.c.l.b16 %v346
  %v1710 = vunpack.c.h.b16 %v346
  %v1711 = vunpack.c.l.b16 %v347
  %v1712 = vunpack.c.h.b16 %v347
  %v1713 = vunpack.c.l.b16 %v348
  %v1714 = vunpack.c.h.b16 %v348
  %v1715 = vunpack.c.l.b16 %v349
  %v1716 = vunpack.c.h.b16 %v349
  %v1717 = vunpack.c.l.b16 %v350
  %v1718 = vunpack.c.h.b16 %v350
  %v1719 = vunpack.c.l.b16 %v351
  %v1720 = vunpack.c.h.b16 %v351
  %v1721 = vunpack.c.l.b16 %v352
  %v1722 = vunpack.c.h.b16 %v352
  %v1723 = vunpack.c.l.b16 %v353
  %v1724 = vunpack.c.h.b16 %v353
  %v1725 = vunpack.c.l.b16 %v354
  %v1726 = vunpack.c.h.b16 %v354
  %v1727 = vunpack.c.l.b16 %v355
  %v1728 = vunpack.c.h.b16 %v355
  %v1729 = vunpack.c.l.b16 %v356
  %v1730 = vunpack.c.h.b16 %v356
  %v1731 = vunpack.c.l.b16 %v357
  %v1732 = vunpack.c.h.b16 %v357
  %v1733 = vunpack.c.l.b16 %v358
  %v1734 = vunpack.c.h.b16 %v358
  %v1735 = vunpack.c.l.b16 %v359
  %v1736 = vunpack.c.h.b16 %v359
  %v1737 = vunpack.c.l.b16 %v360
  %v1738 = vunpack.c.h.b16 %v360
  %v1739 = vunpack.c.l.b16 %v361
  %v1740 = vunpack.c.h.b16 %v361
  %v1741 = vunpack.c.l.b16 %v362
  %v1742 = vunpack.c.h.b16 %v362
  %v1743 = vunpack.c.l.b16 %v363
  %v1744 = vunpack.c.h.b16 %v363
  %v1745 = vunpack.c.l.b16 %v364
  %v1746 = vunpack.c.h.b16 %v364
  %v1747 = vunpack.c.l.b16 %v365
  %v1748 = vunpack.c.h.b16 %v365
  %v1749 = vunpack.c.l.b16 %v366
  %v1750 = vunpack.c.h.b16 %v366
  %v1751 = vunpack.c.l.b16 %v367
  %v1752 = vunpack.c.h.b16 %v367
  %v1753 = vunpack.c.l.b16 %v368
  %v1754 = vunpack.c.h.b16 %v368
  %v1755 = vunpack.c.l.b16 %v369
  %v1756 = vunpack.c.h.b16 %v369
  %v1757 = vunpack.c.l.b16 %v370
  %v1758 = vunpack.c.h.b16 %v370
  %v1759 = vunpack.c.l.b16 %v371
  %v1760 = vunpack.c.h.b16 %v371
  %v1761 = vunpack.c.l.b16 %v372
  %v1762 = vunpack.c.h.b16 %v372
  %v1763 = vunpack.c.l.b16 %v373
  %v1764 = vunpack.c.h.b16 %v373
  %v1765 = vunpack.c.l.b16 %v374
  %v1766 = vunpack.c.h.b16 %v374
  %v1767 = vunpack.c.l.b16 %v375
  %v1768 = vunpack.c.h.b16 %v375
  %v1769 = vunpack.c.l.b16 %v376
  %v1770 = vunpack.c.h.b16 %v376
  %v1771 = vunpack.c.l.b16 %v377
  %v1772 = vunpack.c.h.b16 %v377
  %v1773 = vunpack.c.l.b16 %v378
  %v1774 = vunpack.c.h.b16 %v378
  %v1775 = vunpack.c.l.b16 %v379
  %v1776 = vunpack.c.h.b16 %v379
  %v1777 = vunpack.c.l.b16 %v380
  %v1778 = vunpack.c.h.b16 %v380
  %v1779 = vunpack.c.l.b16 %v381
  %v1780 = vunpack.c.h.b16 %v381
  %v1781 = vunpack.c.l.b16 %v382
  %v1782 = vunpack.c.h.b16 %v382
  %v1783 = vunpack.c.l.b16 %v383
  %v1784 = vunpack.c.h.b16 %v383
  %v1785 = vunpack.c.l.b16 %v384
  %v1786 = vunpack.c.h.b16 %v384
  %v1787 = vunpack.c.l.b16 %v385
  %v1788 = vunpack.c.h.b16 %v385
  %v1789 = vunpack.c.l.b16 %v386
  %v1790 = vunpack.c.h.b16 %v386
  %v1791 = vunpack.c.l.b16 %v387
  %v1792 = vunpack.c.h.b16 %v387
  %v1793 = vunpack.c.l.b16 %v388
  %v1794 = vunpack.c.h.b16 %v388
  %v1795 = vunpack.c.l.b16 %v389
  %v1796 = vunpack.c.h.b16 %v389
  %v1797 = vunpack.c.l.b16 %v390
  %v1798 = vunpack.c.h.b16 %v390
  %v1799 = vunpack.c.l.b16 %v391
  %v1800 = vunpack.c.h.b16 %v391
  %v1801 = vunpack.c.l.b16 %v392
  %v1802 = vunpack.c.h.b16 %v392
  %v1803 = vunpack.c.l.b16 %v393
  %v1804 = vunpack.c.h.b16 %v393
  %v1805 = vunpack.c.l.b16 %v394
  %v1806 = vunpack.c.h.b16 %v394
  %v1807 = vunpack.c.l.b16 %v395
  %v1808 = vunpack.c.h.b16 %v395
  %v1809 = vunpack.c.l.b16 %v396
  %v1810 = vunpack.c.h.b16 %v396
  %v1811 = vunpack.c.l.b16 %v397
  %v1812 = vunpack.c.h.b16 %v397
  %v1813 = vunpack.c.l.b16 %v398
  %v1814 = vunpack.c.h.b16 %v398
  %v1815 = vunpack.c.l.b16 %v399
  %v1816 = vunpack.c.h.b16 %v399
  %v1817 = vunpack.c.l.b16 %v400
  %v1818 = vunpack.c.h.b16 %v400
  %v1819 = vunpack.c.l.b16 %v401
  %v1820 = vunpack.c.h.b16 %v401
  %v1821 = vunpack.c.l.b16 %v402
  %v1822 = vunpack.c.h.b16 %v402
  %v1823 = vunpack.c.l.b16 %v403
  %v1824 = vunpack.c.h.b16 %v403
  %v1825 = vunpack.c.l.b16 %v404
  %v1826 = vunpack.c.h.b16 %v404
  %v1827 = vunpack.c.l.b16 %v405
  %v1828 = vunpack.c.h.b16 %v405
  %v1829 = vunpack.c.l.b16 %v406
  %v1830 = vunpack.c.h.b16 %v406
  %v1831 = vunpack.c.l.b16 %v407
  %v1832 = vunpack.c.h.b16 %v407
  %v1833 = vunpack.c.l.b16 %v408
  %v1834 = vunpack.c.h.b16 %v408
  %v1835 = vunpack.c.l.b16 %v409
  %v1836 = vunpack.c.h.b16 %v409
  %v1837 = vunpack.c.l.b16 %v410
  %v1838 = vunpack.c.h.b16 %v410
  %v1839 = vunpack.c.l.b16 %v411
  %v1840 = vunpack.c.h.b16 %v411
  %v1841 = vunpack.c.l.b16 %v412
  %v1842 = vunpack.c.h.b16 %v412
  %v1843 = vunpack.c.l.b16 %v413
  %v1844 = vunpack.c.h.b16 %v413
  %v1845 = vunpack.c.l.b16 %v414
  %v1846 = vunpack.c.h.b16 %v414
  %v1847 = vunpack.c.l.b16 %v415
  %v1848 = vunpack.c.h.b16 %v415
  %v1849 = vunpack.c.l.b16 %v416
  %v1850 = vunpack.c.h.b16 %v416
  %v1851 = vunpack.c.l.b16 %v417
  %v1852 = vunpack.c.h.b16 %v417
  %v1853 = vunpack.c.l.b16 %v418
  %v1854 = vunpack.c.h.b16 %v418
  %v1855 = vunpack.c.l.b16 %v419
  %v1856 = vunpack.c.h.b16 %v419
  %v1857 = vunpack.c.l.b16 %v420
  %v1858 = vunpack.c.h.b16 %v420
  %v1859 = vunpack.c.l.b16 %v421
  %v1860 = vunpack.c.h.b16 %v421
  %v1861 = vunpack.c.l.b16 %v422
  %v1862 = vunpack.c.h.b16 %v422
  %v1863 = vunpack.c.l.b16 %v423
  %v1864 = vunpack.c.h.b16 %v423
  %v1865 = vunpack.c.l.b16 %v424
  %v1866 = vunpack.c.h.b16 %v424
  %v1867 = vunpack.c.l.b16 %v425
  %v1868 = vunpack.c.h.b16 %v425
  %v1869 = vunpack.c.l.b16 %v426
  %v1870 = vunpack.c.h.b16 %v426
  %v1871 = vunpack.c.l.b16 %v427
  %v1872 = vunpack.c.h.b16 %v427
  %v1873 = vunpack.c.l.b16 %v428
  %v1874 = vunpack.c.h.b16 %v428
  %v1875 = vunpack.c.l.b16 %v429
  %v1876 = vunpack.c.h.b16 %v429
  %v1877 = vunpack.c.l.b16 %v430
  %v1878 = vunpack.c.h.b16 %v430
  %v1879 = vunpack.c.l.b16 %v431
  %v1880 = vunpack.c.h.b16 %v431
  %v1881 = vunpack.c.l.b16 %v432
  %v1882 = vunpack.c.h.b16 %v432
  %v1883 = vunpack.c.l.b16 %v433
  %v1884 = vunpack.c.h.b16 %v433
  %v1885 = vunpack.c.l.b16 %v434
  %v1886 = vunpack.c.h.b16 %v434
  %v1887 = vunpack.c.l.b16 %v435
  %v1888 = vunpack.c.h.b16 %v435
  %v1889 = vunpack.c.l.b16 %v436
  %v1890 = vunpack.c.h.b16 %v436
  %v1891 = vunpack.c.l.b16 %v437
  %v1892 = vunpack.c.h.b16 %v437
  %v1893 = vunpack.c.l.b16 %v438
  %v1894 = vunpack.c.h.b16 %v438
  %v1895 = vunpack.c.l.b16 %v439
  %v1896 = vunpack.c.h.b16 %v439
  %v1897 = vunpack.c.l.b16 %v440
  %v1898 = vunpack.c.h.b16 %v440
  %v1899 = vunpack.c.l.b16 %v441
  %v1900 = vunpack.c.h.b16 %v441
  %v1901 = vunpack.c.l.b16 %v442
  %v1902 = vunpack.c.h.b16 %v442
  %v1903 = vunpack.c.l.b16 %v443
  %v1904 = vunpack.c.h.b16 %v443
  %v1905 = vunpack.c.l.b16 %v444
  %v1906 = vunpack.c.h.b16 %v444
  %v1907 = vunpack.c.l.b16 %v445
  %v1908 = vunpack.c.h.b16 %v445
  %v1909 = vunpack.c.l.b16 %v446
  %v1910 = vunpack.c.h.b16 %v446
  %v1911 = vunpack.c.l.b16 %v447
  %v1912 = vunpack.c.h.b16 %v447
  %v1913 = vunpack.c.l.b16 %v448
  %v1914 = vunpack.c.h.b16 %v448
  %v1915 = vunpack.c.l.b16 %v449
  %v1916 = vunpack.c.h.b16 %v449
  %v1917 = vunpack.c.l.b16 %v450
  %v1918 = vunpack.c.h.b16 %v450
  %v1919 = vunpack.c.l.b16 %v451
  %v1920 = vunpack.c.h.b16 %v451
  %v1921 = vunpack.c.l.b16 %v452
  %v1922 = vunpack.c.h.b16 %v452
  %v1923 = vunpack.c.l.b16 %v453
  %v1924 = vunpack.c.h.b16 %v453
  %v1925 = vunpack.c.l.b16 %v454
  %v1926 = vunpack.c.h.b16 %v454
  %v1927 = vunpack.c.l.b16 %v455
  %v1928 = vunpack.c.h.b16 %v455
  %v1929 = vunpack.c.l.b16 %v456
  %v1930 = vunpack.c.h.b16 %v456
  %v1931 = vunpack.c.l.b16 %v457
  %v1932 = vunpack.c.h.b16 %v457
  %v1933 = vunpack.c.l.b16 %v458
  %v1934 = vunpack.c.h.b16 %v458
  %v1935 = vunpack.c.l.b16 %v459
  %v1936 = vunpack.c.h.b16 %v459
  %v1937 = vunpack.c.l.b16 %v460
  %v1938 = vunpack.c.h.b16 %v460
  %v1939 = vunpack.c.l.b16 %v461
  %v1940 = vunpack.c.h.b16 %v461
  %v1941 = vunpack.c.l.b16 %v462
  %v1942 = vunpack.c.h.b16 %v462
  %v1943 = vunpack.c.l.b16 %v463
  %v1944 = vunpack.c.h.b16 %v463
  %v1945 = vunpack.c.l.b16 %v464
  %v1946 = vunpack.c.h.b16 %v464
  %v1947 = vunpack.c.l.b16 %v465
  %v1948 = vunpack.c.h.b16 %v465
  %v1949 = vunpack.c.l.b16 %v466
  %v1950 = vunpack.c.h.b16 %v466
  %v1951 = vunpack.c.l.b16 %v467
  %v1952 = vunpack.c.h.b16 %v467
  %v1953 = vunpack.c.l.b16 %v468
  %v1954 = vunpack.c.h.b16 %v468
  %v1955 = vunpack.c.l.b16 %v469
  %v1956 = vunpack.c.h.b16 %v469
  %v1957 = vunpack.c.l.b16 %v470
  %v1958 = vunpack.c.h.b16 %v470
  %v1959 = vunpack.c.l.b16 %v471
  %v1960 = vunpack.c.h.b16 %v471
  %v1961 = vunpack.c.l.b16 %v472
  %v1962 = vunpack.c.h.b16 %v472
  %v1963 = vunpack.c.l.b16 %v473
  %v1964 = vunpack.c.h.b16 %v473
  %v1965 = vunpack.c.l.b16 %v474
  %v1966 = vunpack.c.h.b16 %v474
  %v1967 = vunpack.c.l.b16 %v475
  %v1968 = vunpack.c.h.b16 %v475
  %v1969 = vunpack.c.l.b16 %v476
  %v1970 = vunpack.c.h.b16 %v476
  %v1971 = vunpack.c.l.b16 %v477
  %v1972 = vunpack.c.h.b16 %v477
  %v1973 = vunpack.c.l.b16 %v478
  %v1974 = vunpack.c.h.b16 %v478
  %v1975 = vunpack.c.l.b16 %v479
  %v1976 = vunpack.c.h.b16 %v479
  %v1977 = vunpack.c.l.b16 %v480
  %v1978 = vunpack.c.h.b16 %v480
  %v1979 = vunpack.c.l.b16 %v481
  %v1980 = vunpack.c.h.b16 %v481
  %v1981 = vunpack.c.l.b16 %v482
  %v1982 = vunpack.c.h.b16 %v482
  %v1983 = vunpack.c.l.b16 %v483
  %v1984 = vunpack.c.h.b16 %v483
  %v1985 = vunpack.c.l.b16 %v484
  %v1986 = vunpack.c.h.b16 %v484
  %v1987 = vunpack.c.l.b16 %v485
  %v1988 = vunpack.c.h.b16 %v485
  %v1989 = vunpack.c.l.b16 %v486
  %v1990 = vunpack.c.h.b16 %v486
  %v1991 = vunpack.c.l.b16 %v487
  %v1992 = vunpack.c.h.b16 %v487
  %v1993 = vunpack.c.l.b16 %v488
  %v1994 = vunpack.c.h.b16 %v488
  %v1995 = vunpack.c.l.b16 %v489
  %v1996 = vunpack.c.h.b16 %v489
  %v1997 = vunpack.c.l.b16 %v490
  %v1998 = vunpack.c.h.b16 %v490
  %v1999 = vunpack.c.l.b16 %v491
  %v2000 = vunpack.c.h.b16 %v491
  %v2001 = vunpack.c.l.b16 %v492
  %v2002 = vunpack.c.h.b16 %v492
  %v2003 = vunpack.c.l.b16 %v493
  %v2004 = vunpack.c.h.b16 %v493
  %v2005 = vunpack.c.l.b16 %v494
  %v2006 = vunpack.c.h.b16 %v494
  %v2007 = vunpack.c.l.b16 %v495
  %v2008 = vunpack.c.h.b16 %v495
  %v2009 = vunpack.c.l.b16 %v496
  %v2010 = vunpack.c.h.b16 %v496
  %v2011 = vunpack.c.l.b16 %v497
  %v2012 = vunpack.c.h.b16 %v497
  %v2013 = vunpack.c.l.b16 %v498
  %v2014 = vunpack.c.h.b16 %v498
  %v2015 = vunpack.c.l.b16 %v499
  %v2016 = vunpack.c.h.b16 %v499
  %v2017 = vunpack.c.l.b16 %v500
  %v2018 = vunpack.c.h.b16 %v500
  %v2019 = vunpack.c.l.b16 %v501
  %v2020 = vunpack.c.h.b16 %v501
  %v2021 = vunpack.c.l.b16 %v502
  %v2022 = vunpack.c.h.b16 %v502
  %v2023 = vunpack.c.l.b16 %v503
  %v2024 = vunpack.c.h.b16 %v503
  %v2025 = vunpack.c.l.b16 %v504
  %v2026 = vunpack.c.h.b16 %v504
  %v2027 = vunpack.c.l.b16 %v505
  %v2028 = vunpack.c.h.b16 %v505
  %v2029 = vunpack.c.l.b16 %v506
  %v2030 = vunpack.c.h.b16 %v506
  %v2031 = vunpack.c.l.b16 %v507
  %v2032 = vunpack.c.h.b16 %v507
  %v2033 = vunpack.c.l.b16 %v508
  %v2034 = vunpack.c.h.b16 %v508
  %v2035 = vunpack.c.l.b16 %v509
  %v2036 = vunpack.c.h.b16 %v509
  %v2037 = vunpack.c.l.b16 %v510
  %v2038 = vunpack.c.h.b16 %v510
  %v2039 = vunpack.c.l.b16 %v511
  %v2040 = vunpack.c.h.b16 %v511
  %v2041 = vunpack.c.l.b16 %v512
  %v2042 = vunpack.c.h.b16 %v512
  %v2043 = vunpack.c.l.b16 %v513
  %v2044 = vunpack.c.h.b16 %v513
  %v2045 = vunpack.c.l.b16 %v514
  %v2046 = vunpack.c.h.b16 %v514
  %v2047 = vunpack.c.l.b16 %v515
  %v2048 = vunpack.c.h.b16 %v515
  %v2049 = vunpack.c.l.b16 %v516
  %v2050 = vunpack.c.h.b16 %v516
  %v2051 = vunpack.c.l.b16 %v517
  %v2052 = vunpack.c.h.b16 %v517
  %v2053 = vunpack.c.l.b16 %v518
  %v2054 = vunpack.c.h.b16 %v518
  %v2055 = vunpack.c.l.b16 %v519
  %v2056 = vunpack.c.h.b16 %v519
  %v2057 = vunpack.c.l.b16 %v520
  %v2058 = vunpack.c.h.b16 %v520
  %v2059 = vunpack.c.l.b16 %v521
  %v2060 = vunpack.c.h.b16 %v521
  %v2061 = vunpack.c.l.b16 %v522
  %v2062 = vunpack.c.h.b16 %v522
  %v2063 = vunpack.c.l.b16 %v523
  %v2064 = vunpack.c.h.b16 %v523
  %v2065 = vunpack.c.l.b16 %v524
  %v2066 = vunpack.c.h.b16 %v524
  %v2067 = vunpack.c.l.b16 %v525
  %v2068 = vunpack.c.h.b16 %v525
  %v2069 = vunpack.c.l.b16 %v526
  %v2070 = vunpack.c.h.b16 %v526
  %v2071 = vunpack.c.l.b16 %v527
  %v2072 = vunpack.c.h.b16 %v527
  %v2073 = vunpack.c.l.b16 %v528
  %v2074 = vunpack.c.h.b16 %v528
  %v2075 = vunpack.c.l.b16 %v529
  %v2076 = vunpack.c.h.b16 %v529
  %v2077 = vunpack.c.l.b16 %v530
  %v2078 = vunpack.c.h.b16 %v530
  %v2079 = vunpack.c.l.b16 %v531
  %v2080 = vunpack.c.h.b16 %v531
  %v2081 = vunpack.c.l.b16 %v532
  %v2082 = vunpack.c.h.b16 %v532
  %v2083 = vunpack.c.l.b16 %v533
  %v2084 = vunpack.c.h.b16 %v533
  %v2085 = vunpack.c.l.b16 %v534
  %v2086 = vunpack.c.h.b16 %v534
  %v2087 = vunpack.c.l.b16 %v535
  %v2088 = vunpack.c.h.b16 %v535
  %v2089 = vunpack.c.l.b16 %v536
  %v2090 = vunpack.c.h.b16 %v536
  %v2091 = vunpack.c.l.b16 %v537
  %v2092 = vunpack.c.h.b16 %v537
  %v2093 = vunpack.c.l.b16 %v538
  %v2094 = vunpack.c.h.b16 %v538
  %v2095 = vunpack.c.l.b16 %v539
  %v2096 = vunpack.c.h.b16 %v539
  %v2097 = vunpack.c.l.b16 %v540
  %v2098 = vunpack.c.h.b16 %v540
  %v2099 = vunpack.c.l.b16 %v541
  %v2100 = vunpack.c.h.b16 %v541
  %v2101 = vunpack.c.l.b16 %v542
  %v2102 = vunpack.c.h.b16 %v542
  %v2103 = vunpack.c.l.b16 %v543
  %v2104 = vunpack.c.h.b16 %v543
  %v2105 = vunpack.c.l.b16 %v544
  %v2106 = vunpack.c.h.b16 %v544
  %v2107 = vunpack.c.l.b16 %v545
  %v2108 = vunpack.c.h.b16 %v545
  %v2109 = vunpack.c.l.b16 %v546
  %v2110 = vunpack.c.h.b16 %v546
  %v2111 = vunpack.c.l.b16 %v547
  %v2112 = vunpack.c.h.b16 %v547
  %v2113 = vunpack.c.l.b16 %v548
  %v2114 = vunpack.c.h.b16 %v548
  %v2115 = vunpack.c.l.b16 %v549
  %v2116 = vunpack.c.h.b16 %v549
  %v2117 = vunpack.c.l.b16 %v550
  %v2118 = vunpack.c.h.b16 %v550
  %v2119 = vunpack.c.l.b16 %v551
  %v2120 = vunpack.c.h.b16 %v551
  %v2121 = vunpack.c.l.b16 %v552
  %v2122 = vunpack.c.h.b16 %v552
  %v2123 = vunpack.c.l.b16 %v553
  %v2124 = vunpack.c.h.b16 %v553
  %v2125 = vunpack.c.l.b16 %v554
  %v2126 = vunpack.c.h.b16 %v554
  %v2127 = vunpack.c.l.b16 %v555
  %v2128 = vunpack.c.h.b16 %v555
  %v2129 = vunpack.c.l.b16 %v556
  %v2130 = vunpack.c.h.b16 %v556
  %v2131 = vunpack.c.l.b16 %v557
  %v2132 = vunpack.c.h.b16 %v557
  %v2133 = vunpack.c.l.b16 %v558
  %v2134 = vunpack.c.h.b16 %v558
  %v2135 = vunpack.c.l.b16 %v559
  %v2136 = vunpack.c.h.b16 %v559
  %v2137 = vunpack.c.l.b16 %v560
  %v2138 = vunpack.c.h.b16 %v560
  %v2139 = vpack.c.b16 %v1123, %v1115
  %v2140 = vpack.c.b16 %v1124, %v1116
  %v2141 = vpack.c.b16 %v1125, %v1117
  %v2142 = vpack.c.b16 %v1126, %v1118
  %v2143 = vpack.c.b16 %v1127, %v1119
  %v2144 = vpack.c.b16 %v1128, %v1120
  %v2145 = vpack.c.b16 %v1129, %v1121
  %v2146 = vpack.c.b16 %v1130, %v1122
  %v2147 = vpack.c.b16 %v1139, %v1131
  %v2148 = vpack.c.b16 %v1140, %v1132
  %v2149 = vpack.c.b16 %v1141, %v1133
  %v2150 = vpack.c.b16 %v1142, %v1134
  %v2151 = vpack.c.b16 %v1143, %v1135
  %v2152 = vpack.c.b16 %v1144, %v1136
  %v2153 = vpack.c.b16 %v1145, %v1137
  %v2154 = vpack.c.b16 %v1146, %v1138
  %v2155 = vpack.c.b16 %v1155, %v1147
  %v2156 = vpack.c.b16 %v1156, %v1148
  %v2157 = vpack.c.b16 %v1157, %v1149
  %v2158 = vpack.c.b16 %v1158, %v1150
  %v2159 = vpack.c.b16 %v1159, %v1151
  %v2160 = vpack.c.b16 %v1160, %v1152
  %v2161 = vpack.c.b16 %v1161, %v1153
  %v2162 = vpack.c.b16 %v1162, %v1154
  %v2163 = vpack.c.b16 %v1171, %v1163
  %v2164 = vpack.c.b16 %v1172, %v1164
  %v2165 = vpack.c.b16 %v1173, %v1165
  %v2166 = vpack.c.b16 %v1174, %v1166
  %v2167 = vpack.c.b16 %v1175, %v1167
  %v2168 = vpack.c.b16 %v1176, %v1168
  %v2169 = vpack.c.b16 %v1177, %v1169
  %v2170 = vpack.c.b16 %v1178, %v1170
  %v2171 = vpack.c.b16 %v1187, %v1179
  %v2172 = vpack.c.b16 %v1188, %v1180
  %v2173 = vpack.c.b16 %v1189, %v1181
  %v2174 = vpack.c.b16 %v1190, %v1182
  %v2175 = vpack.c.b16 %v1191, %v1183
  %v2176 = vpack.c.b16 %v1192, %v1184
  %v2177 = vpack.c.b16 %v1193, %v1185
  %v2178 = vpack.c.b16 %v1194, %v1186
  %v2179 = vpack.c.b16 %v1203, %v1195
  %v2180 = vpack.c.b16 %v1204, %v1196
  %v2181 = vpack.c.b16 %v1205, %v1197
  %v2182 = vpack.c.b16 %v1206, %v1198
  %v2183 = vpack.c.b16 %v1207, %v1199
  %v2184 = vpack.c.b16 %v1208, %v1200
  %v2185 = vpack.c.b16 %v1209, %v1201
  %v2186 = vpack.c.b16 %v1210, %v1202
  %v2187 = vpack.c.b16 %v1219, %v1211
  %v2188 = vpack.c.b16 %v1220, %v1212
  %v2189 = vpack.c.b16 %v1221, %v1213
  %v2190 = vpack.c.b16 %v1222, %v1214
  %v2191 = vpack.c.b16 %v1223, %v1215
  %v2192 = vpack.c.b16 %v1224, %v1216
  %v2193 = vpack.c.b16 %v1225, %v1217
  %v2194 = vpack.c.b16 %v1226, %v1218
  %v2195 = vpack.c.b16 %v1235, %v1227
  %v2196 = vpack.c.b16 %v1236, %v1228
  %v2197 = vpack.c.b16 %v1237, %v1229
  %v2198 = vpack.c.b16 %v1238, %v1230
  %v2199 = vpack.c.b16 %v1239, %v1231
  %v2200 = vpack.c.b16 %v1240, %v1232
  %v2201 = vpack.c.b16 %v1241, %v1233
  %v2202 = vpack.c.b16 %v1242, %v1234
  %v2203 = vpack.c.b16 %v1251, %v1243
  %v2204 = vpack.c.b16 %v1252, %v1244
  %v2205 = vpack.c.b16 %v1253, %v1245
  %v2206 = vpack.c.b16 %v1254, %v1246
  %v2207 = vpack.c.b16 %v1255, %v1247
  %v2208 = vpack.c.b16 %v1256, %v1248
  %v2209 = vpack.c.b16 %v1257, %v1249
  %v2210 = vpack.c.b16 %v1258, %v1250
  %v2211 = vpack.c.b16 %v1267, %v1259
  %v2212 = vpack.c.b16 %v1268, %v1260
  %v2213 = vpack.c.b16 %v1269, %v1261
  %v2214 = vpack.c.b16 %v1270, %v1262
  %v2215 = vpack.c.b16 %v1271, %v1263
  %v2216 = vpack.c.b16 %v1272, %v1264
  %v2217 = vpack.c.b16 %v1273, %v1265
  %v2218 = vpack.c.b16 %v1274, %v1266
  %v2219 = vpack.c.b16 %v1283, %v1275
  %v2220 = vpack.c.b16 %v1284, %v1276
  %v2221 = vpack.c.b16 %v1285, %v1277
  %v2222 = vpack.c.b16 %v1286, %v1278
  %v2223 = vpack.c.b16 %v1287, %v1279
  %v2224 = vpack.c.b16 %v1288, %v1280
  %v2225 = vpack.c.b16 %v1289, %v1281
  %v2226 = vpack.c.b16 %v1290, %v1282
  %v2227 = vpack.c.b16 %v1299, %v1291
  %v2228 = vpack.c.b16 %v1300, %v1292
  %v2229 = vpack.c.b16 %v1301, %v1293
  %v2230 = vpack.c.b16 %v1302, %v1294
  %v2231 = vpack.c.b16 %v1303, %v1295
  %v2232 = vpack.c.b16 %v1304, %v1296
  %v2233 = vpack.c.b16 %v1305, %v1297
  %v2234 = vpack.c.b16 %v1306, %v1298
  %v2235 = vpack.c.b16 %v1315, %v1307
  %v2236 = vpack.c.b16 %v1316, %v1308
  %v2237 = vpack.c.b16 %v1317, %v1309
  %v2238 = vpack.c.b16 %v1318, %v1310
  %v2239 = vpack.c.b16 %v1319, %v1311
  %v2240 = vpack.c.b16 %v1320, %v1312
  %v2241 = vpack.c.b16 %v1321, %v1313
  %v2242 = vpack.c.b16 %v1322, %v1314
  %v2243 = vpack.c.b16 %v1331, %v1323
  %v2244 = vpack.c.b16 %v1332, %v1324
  %v2245 = vpack.c.b16 %v1333, %v1325
  %v2246 = vpack.c.b16 %v1334, %v1326
  %v2247 = vpack.c.b16 %v1335, %v1327
  %v2248 = vpack.c.b16 %v1336, %v1328
  %v2249 = vpack.c.b16 %v1337, %v1329
  %v2250 = vpack.c.b16 %v1338, %v1330
  %v2251 = vpack.c.b16 %v1347, %v1339
  %v2252 = vpack.c.b16 %v1348, %v1340
  %v2253 = vpack.c.b16 %v1349, %v1341
  %v2254 = vpack.c.b16 %v1350, %v1342
  %v2255 = vpack.c.b16 %v1351, %v1343
  %v2256 = vpack.c.b16 %v1352, %v1344
  %v2257 = vpack.c.b16 %v1353, %v1345
  %v2258 = vpack.c.b16 %v1354, %v1346
  %v2259 = vpack.c.b16 %v1363, %v1355
  %v2260 = vpack.c.b16 %v1364, %v1356
  %v2261 = vpack.c.b16 %v1365, %v1357
  %v2262 = vpack.c.b16 %v1366, %v1358
  %v2263 = vpack.c.b16 %v1367, %v1359
  %v2264 = vpack.c.b16 %v1368, %v1360
  %v2265 = vpack.c.b16 %v1369, %v1361
  %v2266 = vpack.c.b16 %v1370, %v1362
  %v2267 = vpack.c.b16 %v1379, %v1371
  %v2268 = vpack.c.b16 %v1380, %v1372
  %v2269 = vpack.c.b16 %v1381, %v1373
  %v2270 = vpack.c.b16 %v1382, %v1374
  %v2271 = vpack.c.b16 %v1383, %v1375
  %v2272 = vpack.c.b16 %v1384, %v1376
  %v2273 = vpack.c.b16 %v1385, %v1377
  %v2274 = vpack.c.b16 %v1386, %v1378
  %v2275 = vpack.c.b16 %v1395, %v1387
  %v2276 = vpack.c.b16 %v1396, %v1388
  %v2277 = vpack.c.b16 %v1397, %v1389
  %v2278 = vpack.c.b16 %v1398, %v1390
  %v2279 = vpack.c.b16 %v1399, %v1391
  %v2280 = vpack.c.b16 %v1400, %v1392
  %v2281 = vpack.c.b16 %v1401, %v1393
  %v2282 = vpack.c.b16 %v1402, %v1394
  %v2283 = vpack.c.b16 %v1411, %v1403
  %v2284 = vpack.c.b16 %v1412, %v1404
  %v2285 = vpack.c.b16 %v1413, %v1405
  %v2286 = vpack.c.b16 %v1414, %v1406
  %v2287 = vpack.c.b16 %v1415, %v1407
  %v2288 = vpack.c.b16 %v1416, %v1408
  %v2289 = vpack.c.b16 %v1417, %v1409
  %v2290 = vpack.c.b16 %v1418, %v1410
  %v2291 = vpack.c.b16 %v1427, %v1419
  %v2292 = vpack.c.b16 %v1428, %v1420
  %v2293 = vpack.c.b16 %v1429, %v1421
  %v2294 = vpack.c.b16 %v1430, %v1422
  %v2295 = vpack.c.b16 %v1431, %v1423
  %v2296 = vpack.c.b16 %v1432, %v1424
  %v2297 = vpack.c.b16 %v1433, %v1425
  %v2298 = vpack.c.b16 %v1434, %v1426
  %v2299 = vpack.c.b16 %v1443, %v1435
  %v2300 = vpack.c.b16 %v1444, %v1436
  %v2301 = vpack.c.b16 %v1445, %v1437
  %v2302 = vpack.c.b16 %v1446, %v1438
  %v2303 = vpack.c.b16 %v1447, %v1439
  %v2304 = vpack.c.b16 %v1448, %v1440
  %v2305 = vpack.c.b16 %v1449, %v1441
  %v2306 = vpack.c.b16 %v1450, %v1442
  %v2307 = vpack.c.b16 %v1459, %v1451
  %v2308 = vpack.c.b16 %v1460, %v1452
  %v2309 = vpack.c.b16 %v1461, %v1453
  %v2310 = vpack.c.b16 %v1462, %v1454
  %v2311 = vpack.c.b16 %v1463, %v1455
  %v2312 = vpack.c.b16 %v1464, %v1456
  %v2313 = vpack.c.b16 %v1465, %v1457
  %v2314 = vpack.c.b16 %v1466, %v1458
  %v2315 = vpack.c.b16 %v1475, %v1467
  %v2316 = vpack.c.b16 %v1476, %v1468
  %v2317 = vpack.c.b16 %v1477, %v1469
  %v2318 = vpack.c.b16 %v1478, %v1470
  %v2319 = vpack.c.b16 %v1479, %v1471
  %v2320 = vpack.c.b16 %v1480, %v1472
  %v2321 = vpack.c.b16 %v1481, %v1473
  %v2322 = vpack.c.b16 %v1482, %v1474
  %v2323 = vpack.c.b16 %v1491, %v1483
  %v2324 = vpack.c.b16 %v1492, %v1484
  %v2325 = vpack.c.b16 %v1493, %v1485
  %v2326 = vpack.c.b16 %v1494, %v1486
  %v2327 = vpack.c.b16 %v1495, %v1487
  %v2328 = vpack.c.b16 %v1496, %v1488
  %v2329 = vpack.c.b16 %v1497, %v1489
  %v2330 = vpack.c.b16 %v1498, %v1490
  %v2331 = vpack.c.b16 %v1507, %v1499
  %v2332 = vpack.c.b16 %v1508, %v1500
  %v2333 = vpack.c.b16 %v1509, %v1501
  %v2334 = vpack.c.b16 %v1510, %v1502
  %v2335 = vpack.c.b16 %v1511, %v1503
  %v2336 = vpack.c.b16 %v1512, %v1504
  %v2337 = vpack.c.b16 %v1513, %v1505
  %v2338 = vpack.c.b16 %v1514, %v1506
  %v2339 = vpack.c.b16 %v1523, %v1515
  %v2340 = vpack.c.b16 %v1524, %v1516
  %v2341 = vpack.c.b16 %v1525, %v1517
  %v2342 = vpack.c.b16 %v1526, %v1518
  %v2343 = vpack.c.b16 %v1527, %v1519
  %v2344 = vpack.c.b16 %v1528, %v1520
  %v2345 = vpack.c.b16 %v1529, %v1521
  %v2346 = vpack.c.b16 %v1530, %v1522
  %v2347 = vpack.c.b16 %v1539, %v1531
  %v2348 = vpack.c.b16 %v1540, %v1532
  %v2349 = vpack.c.b16 %v1541, %v1533
  %v2350 = vpack.c.b16 %v1542, %v1534
  %v2351 = vpack.c.b16 %v1543, %v1535
  %v2352 = vpack.c.b16 %v1544, %v1536
  %v2353 = vpack.c.b16 %v1545, %v1537
  %v2354 = vpack.c.b16 %v1546, %v1538
  %v2355 = vpack.c.b16 %v1555, %v1547
  %v2356 = vpack.c.b16 %v1556, %v1548
  %v2357 = vpack.c.b16 %v1557, %v1549
  %v2358 = vpack.c.b16 %v1558, %v1550
  %v2359 = vpack.c.b16 %v1559, %v1551
  %v2360 = vpack.c.b16 %v1560, %v1552
  %v2361 = vpack.c.b16 %v1561, %v1553
  %v2362 = vpack.c.b16 %v1562, %v1554
  %v2363 = vpack.c.b16 %v1571, %v1563
  %v2364 = vpack.c.b16 %v1572, %v1564
  %v2365 = vpack.c.b16 %v1573, %v1565
  %v2366 = vpack.c.b16 %v1574, %v1566
  %v2367 = vpack.c.b16 %v1575, %v1567
  %v2368 = vpack.c.b16 %v1576, %v1568
  %v2369 = vpack.c.b16 %v1577, %v1569
  %v2370 = vpack.c.b16 %v1578, %v1570
  %v2371 = vpack.c.b16 %v1587, %v1579
  %v2372 = vpack.c.b16 %v1588, %v1580
  %v2373 = vpack.c.b16 %v1589, %v1581
  %v2374 = vpack.c.b16 %v1590, %v1582
  %v2375 = vpack.c.b16 %v1591, %v1583
  %v2376 = vpack.c.b16 %v1592, %v1584
  %v2377 = vpack.c.b16 %v1593, %v1585
  %v2378 = vpack.c.b16 %v1594, %v1586
  %v2379 = vpack.c.b16 %v1603, %v1595
  %v2380 = vpack.c.b16 %v1604, %v1596
  %v2381 = vpack.c.b16 %v1605, %v1597
  %v2382 = vpack.c.b16 %v1606, %v1598
  %v2383 = vpack.c.b16 %v1607, %v1599
  %v2384 = vpack.c.b16 %v1608, %v1600
  %v2385 = vpack.c.b16 %v1609, %v1601
  %v2386 = vpack.c.b16 %v1610, %v1602
  %v2387 = vpack.c.b16 %v1619, %v1611
  %v2388 = vpack.c.b16 %v1620, %v1612
  %v2389 = vpack.c.b16 %v1621, %v1613
  %v2390 = vpack.c.b16 %v1622, %v1614
  %v2391 = vpack.c.b16 %v1623, %v1615
  %v2392 = vpack.c.b16 %v1624, %v1616
  %v2393 = vpack.c.b16 %v1625, %v1617
  %v2394 = vpack.c.b16 %v1626, %v1618
  %v2395 = vpack.c.b16 %v1635, %v1627
  %v2396 = vpack.c.b16 %v1636, %v1628
  %v2397 = vpack.c.b16 %v1637, %v1629
  %v2398 = vpack.c.b16 %v1638, %v1630
  %v2399 = vpack.c.b16 %v1639, %v1631
  %v2400 = vpack.c.b16 %v1640, %v1632
  %v2401 = vpack.c.b16 %v1641, %v1633
  %v2402 = vpack.c.b16 %v1642, %v1634
  %v2403 = vpack.c.b16 %v1651, %v1643
  %v2404 = vpack.c.b16 %v1652, %v1644
  %v2405 = vpack.c.b16 %v1653, %v1645
  %v2406 = vpack.c.b16 %v1654, %v1646
  %v2407 = vpack.c.b16 %v1655, %v1647
  %v2408 = vpack.c.b16 %v1656, %v1648
  %v2409 = vpack.c.b16 %v1657, %v1649
  %v2410 = vpack.c.b16 %v1658, %v1650
  %v2411 = vpack.c.b16 %v1667, %v1659
  %v2412 = vpack.c.b16 %v1668, %v1660
  %v2413 = vpack.c.b16 %v1669, %v1661
  %v2414 = vpack.c.b16 %v1670, %v1662
  %v2415 = vpack.c.b16 %v1671, %v1663
  %v2416 = vpack.c.b16 %v1672, %v1664
  %v2417 = vpack.c.b16 %v1673, %v1665
  %v2418 = vpack.c.b16 %v1674, %v1666
  %v2419 = vpack.c.b16 %v1683, %v1675
  %v2420 = vpack.c.b16 %v1684, %v1676
  %v2421 = vpack.c.b16 %v1685, %v1677
  %v2422 = vpack.c.b16 %v1686, %v1678
  %v2423 = vpack.c.b16 %v1687, %v1679
  %v2424 = vpack.c.b16 %v1688, %v1680
  %v2425 = vpack.c.b16 %v1689, %v1681
  %v2426 = vpack.c.b16 %v1690, %v1682
  %v2427 = vpack.c.b16 %v1699, %v1691
  %v2428 = vpack.c.b16 %v1700, %v1692
  %v2429 = vpack.c.b16 %v1701, %v1693
  %v2430 = vpack.c.b16 %v1702, %v1694
  %v2431 = vpack.c.b16 %v1703, %v1695
  %v2432 = vpack.c.b16 %v1704, %v1696
  %v2433 = vpack.c.b16 %v1705, %v1697
  %v2434 = vpack.c.b16 %v1706, %v1698
  %v2435 = vpack.c.b16 %v1715, %v1707
  %v2436 = vpack.c.b16 %v1716, %v1708
  %v2437 = vpack.c.b16 %v1717, %v1709
  %v2438 = vpack.c.b16 %v1718, %v1710
  %v2439 = vpack.c.b16 %v1719, %v1711
  %v2440 = vpack.c.b16 %v1720, %v1712
  %v2441 = vpack.c.b16 %v1721, %v1713
  %v2442 = vpack.c.b16 %v1722, %v1714
  %v2443 = vpack.c.b16 %v1731, %v1723
  %v2444 = vpack.c.b16 %v1732, %v1724
  %v2445 = vpack.c.b16 %v1733, %v1725
  %v2446 = vpack.c.b16 %v1734, %v1726
  %v2447 = vpack.c.b16 %v1735, %v1727
  %v2448 = vpack.c.b16 %v1736, %v1728
  %v2449 = vpack.c.b16 %v1737, %v1729
  %v2450 = vpack.c.b16 %v1738, %v1730
  %v2451 = vpack.c.b16 %v1747, %v1739
  %v2452 = vpack.c.b16 %v1748, %v1740
  %v2453 = vpack.c.b16 %v1749, %v1741
  %v2454 = vpack.c.b16 %v1750, %v1742
  %v2455 = vpack.c.b16 %v1751, %v1743
  %v2456 = vpack.c.b16 %v1752, %v1744
  %v2457 = vpack.c.b16 %v1753, %v1745
  %v2458 = vpack.c.b16 %v1754, %v1746
  %v2459 = vpack.c.b16 %v1763, %v1755
  %v2460 = vpack.c.b16 %v1764, %v1756
  %v2461 = vpack.c.b16 %v1765, %v1757
  %v2462 = vpack.c.b16 %v1766, %v1758
  %v2463 = vpack.c.b16 %v1767, %v1759
  %v2464 = vpack.c.b16 %v1768, %v1760
  %v2465 = vpack.c.b16 %v1769, %v1761
  %v2466 = vpack.c.b16 %v1770, %v1762
  %v2467 = vpack.c.b16 %v1779, %v1771
  %v2468 = vpack.c.b16 %v1780, %v1772
  %v2469 = vpack.c.b16 %v1781, %v1773
  %v2470 = vpack.c.b16 %v1782, %v1774
  %v2471 = vpack.c.b16 %v1783, %v1775
  %v2472 = vpack.c.b16 %v1784, %v1776
  %v2473 = vpack.c.b16 %v1785, %v1777
  %v2474 = vpack.c.b16 %v1786, %v1778
  %v2475 = vpack.c.b16 %v1795, %v1787
  %v2476 = vpack.c.b16 %v1796, %v1788
  %v2477 = vpack.c.b16 %v1797, %v1789
  %v2478 = vpack.c.b16 %v1798, %v1790
  %v2479 = vpack.c.b16 %v1799, %v1791
  %v2480 = vpack.c.b16 %v1800, %v1792
  %v2481 = vpack.c.b16 %v1801, %v1793
  %v2482 = vpack.c.b16 %v1802, %v1794
  %v2483 = vpack.c.b16 %v1811, %v1803
  %v2484 = vpack.c.b16 %v1812, %v1804
  %v2485 = vpack.c.b16 %v1813, %v1805
  %v2486 = vpack.c.b16 %v1814, %v1806
  %v2487 = vpack.c.b16 %v1815, %v1807
  %v2488 = vpack.c.b16 %v1816, %v1808
  %v2489 = vpack.c.b16 %v1817, %v1809
  %v2490 = vpack.c.b16 %v1818, %v1810
  %v2491 = vpack.c.b16 %v1827, %v1819
  %v2492 = vpack.c.b16 %v1828, %v1820
  %v2493 = vpack.c.b16 %v1829, %v1821
  %v2494 = vpack.c.b16 %v1830, %v1822
  %v2495 = vpack.c.b16 %v1831, %v1823
  %v2496 = vpack.c.b16 %v1832, %v1824
  %v2497 = vpack.c.b16 %v1833, %v1825
  %v2498 = vpack.c.b16 %v1834, %v1826
  %v2499 = vpack.c.b16 %v1843, %v1835
  %v2500 = vpack.c.b16 %v1844, %v1836
  %v2501 = vpack.c.b16 %v1845, %v1837
  %v2502 = vpack.c.b16 %v1846, %v1838
  %v2503 = vpack.c.b16 %v1847, %v1839
  %v2504 = vpack.c.b16 %v1848, %v1840
  %v2505 = vpack.c.b16 %v1849, %v1841
  %v2506 = vpack.c.b16 %v1850, %v1842
  %v2507 = vpack.c.b16 %v1859, %v1851
  %v2508 = vpack.c.b16 %v1860, %v1852
  %v2509 = vpack.c.b16 %v1861, %v1853
  %v2510 = vpack.c.b16 %v1862, %v1854
  %v2511 = vpack.c.b16 %v1863, %v1855
  %v2512 = vpack.c.b16 %v1864, %v1856
  %v2513 = vpack.c.b16 %v1865, %v1857
  %v2514 = vpack.c.b16 %v1866, %v1858
  %v2515 = vpack.c.b16 %v1875, %v1867
  %v2516 = vpack.c.b16 %v1876, %v1868
  %v2517 = vpack.c.b16 %v1877, %v1869
  %v2518 = vpack.c.b16 %v1878, %v1870
  %v2519 = vpack.c.b16 %v1879, %v1871
  %v2520 = vpack.c.b16 %v1880, %v1872
  %v2521 = vpack.c.b16 %v1881, %v1873
  %v2522 = vpack.c.b16 %v1882, %v1874
  %v2523 = vpack.c.b16 %v1891, %v1883
  %v2524 = vpack.c.b16 %v1892, %v1884
  %v2525 = vpack.c.b16 %v1893, %v1885
  %v2526 = vpack.c.b16 %v1894, %v1886
  %v2527 = vpack.c.b16 %v1895, %v1887
  %v2528 = vpack.c.b16 %v1896, %v1888
  %v2529 = vpack.c.b16 %v1897, %v1889
  %v2530 = vpack.c.b16 %v1898, %v1890
  %v2531 = vpack.c.b16 %v1907, %v1899
  %v2532 = vpack.c.b16 %v1908, %v1900
  %v2533 = vpack.c.b16 %v1909, %v1901
  %v2534 = vpack.c.b16 %v1910, %v1902
  %v2535 = vpack.c.b16 %v1911, %v1903
  %v2536 = vpack.c.b16 %v1912, %v1904
  %v2537 = vpack.c.b16 %v1913, %v1905
  %v2538 = vpack.c.b16 %v1914, %v1906
  %v2539 = vpack.c.b16 %v1923, %v1915
  %v2540 = vpack.c.b16 %v1924, %v1916
  %v2541 = vpack.c.b16 %v1925, %v1917
  %v2542 = vpack.c.b16 %v1926, %v1918
  %v2543 = vpack.c.b16 %v1927, %v1919
  %v2544 = vpack.c.b16 %v1928, %v1920
  %v2545 = vpack.c.b16 %v1929, %v1921
  %v2546 = vpack.c.b16 %v1930, %v1922
  %v2547 = vpack.c.b16 %v1939, %v1931
  %v2548 = vpack.c.b16 %v1940, %v1932
  %v2549 = vpack.c.b16 %v1941, %v1933
  %v2550 = vpack.c.b16 %v1942, %v1934
  %v2551 = vpack.c.b16 %v1943, %v1935
  %v2552 = vpack.c.b16 %v1944, %v1936
  %v2553 = vpack.c.b16 %v1945, %v1937
  %v2554 = vpack.c.b16 %v1946, %v1938
  %v2555 = vpack.c.b16 %v1955, %v1947
  %v2556 = vpack.c.b16 %v1956, %v1948
  %v2557 = vpack.c.b16 %v1957, %v1949
  %v2558 = vpack.c.b16 %v1958, %v1950
  %v2559 = vpack.c.b16 %v1959, %v1951
  %v2560 = vpack.c.b16 %v1960, %v1952
  %v2561 = vpack.c.b16 %v1961, %v1953
  %v2562 = vpack.c.b16 %v1962, %v1954
  %v2563 = vpack.c.b16 %v1971, %v1963
  %v2564 = vpack.c.b16 %v1972, %v1964
  %v2565 = vpack.c.b16 %v1973, %v1965
  %v2566 = vpack.c.b16 %v1974, %v1966
  %v2567 = vpack.c.b16 %v1975, %v1967
  %v2568 = vpack.c.b16 %v1976, %v1968
  %v2569 = vpack.c.b16 %v1977, %v1969
  %v2570 = vpack.c.b16 %v1978, %v1970
  %v2571 = vpack.c.b16 %v1987, %v1979
  %v2572 = vpack.c.b16 %v1988, %v1980
  %v2573 = vpack.c.b16 %v1989, %v1981
  %v2574 = vpack.c.b16 %v1990, %v1982
  %v2575 = vpack.c.b16 %v1991, %v1983
  %v2576 = vpack.c.b16 %v1992, %v1984
  %v2577 = vpack.c.b16 %v1993, %v1985
  %v2578 = vpack.c.b16 %v1994, %v1986
  %v2579 = vpack.c.b16 %v2003, %v1995
  %v2580 = vpack.c.b16 %v2004, %v1996
  %v2581 = vpack.c.b16 %v2005, %v1997
  %v2582 = vpack.c.b16 %v2006, %v1998
  %v2583 = vpack.c.b16 %v2007, %v1999
  %v2584 = vpack.c.b16 %v2008, %v2000
  %v2585 = vpack.c.b16 %v2009, %v2001
  %v2586 = vpack.c.b16 %v2010, %v2002
  %v2587 = vpack.c.b16 %v2019, %v2011
  %v2588 = vpack.c.b16 %v2020, %v2012
  %v2589 = vpack.c.b16 %v2021, %v2013
  %v2590 = vpack.c.b16 %v2022, %v2014
  %v2591 = vpack.c.b16 %v2023, %v2015
  %v2592 = vpack.c.b16 %v2024, %v2016
  %v2593 = vpack.c.b16 %v2025, %v2017
  %v2594 = vpack.c.b16 %v2026, %v2018
  %v2595 = vpack.c.b16 %v2035, %v2027
  %v2596 = vpack.c.b16 %v2036, %v2028
  %v2597 = vpack.c.b16 %v2037, %v2029
  %v2598 = vpack.c.b16 %v2038, %v2030
  %v2599 = vpack.c.b16 %v2039, %v2031
  %v2600 = vpack.c.b16 %v2040, %v2032
  %v2601 = vpack.c.b16 %v2041, %v2033
  %v2602 = vpack.c.b16 %v2042, %v2034
  %v2603 = vpack.c.b16 %v2051, %v2043
  %v2604 = vpack.c.b16 %v2052, %v2044
  %v2605 = vpack.c.b16 %v2053, %v2045
  %v2606 = vpack.c.b16 %v2054, %v2046
  %v2607 = vpack.c.b16 %v2055, %v2047
  %v2608 = vpack.c.b16 %v2056, %v2048
  %v2609 = vpack.c.b16 %v2057, %v2049
  %v2610 = vpack.c.b16 %v2058, %v2050
  %v2611 = vpack.c.b16 %v2067, %v2059
  %v2612 = vpack.c.b16 %v2068, %v2060
  %v2613 = vpack.c.b16 %v2069, %v2061
  %v2614 = vpack.c.b16 %v2070, %v2062
  %v2615 = vpack.c.b16 %v2071, %v2063
  %v2616 = vpack.c.b16 %v2072, %v2064
  %v2617 = vpack.c.b16 %v2073, %v2065
  %v2618 = vpack.c.b16 %v2074, %v2066
  %v2619 = vpack.c.b16 %v2083, %v2075
  %v2620 = vpack.c.b16 %v2084, %v2076
  %v2621 = vpack.c.b16 %v2085, %v2077
  %v2622 = vpack.c.b16 %v2086, %v2078
  %v2623 = vpack.c.b16 %v2087, %v2079
  %v2624 = vpack.c.b16 %v2088, %v2080
  %v2625 = vpack.c.b16 %v2089, %v2081
  %v2626 = vpack.c.b16 %v2090, %v2082
  %v2627 = vpack.c.b16 %v2099, %v2091
  %v2628 = vpack.c.b16 %v2100, %v2092
  %v2629 = vpack.c.b16 %v2101, %v2093
  %v2630 = vpack.c.b16 %v2102, %v2094
  %v2631 = vpack.c.b16 %v2103, %v2095
  %v2632 = vpack.c.b16 %v2104, %v2096
  %v2633 = vpack.c.b16 %v2105, %v2097
  %v2634 = vpack.c.b16 %v2106, %v2098
  %v2635 = vpack.c.b16 %v2115, %v2107
  %v2636 = vpack.c.b16 %v2116, %v2108
  %v2637 = vpack.c.b16 %v2117, %v2109
  %v2638 = vpack.c.b16 %v2118, %v2110
  %v2639 = vpack.c.b16 %v2119, %v2111
  %v2640 = vpack.c.b16 %v2120, %v2112
  %v2641 = vpack.c.b16 %v2121, %v2113
  %v2642 = vpack.c.b16 %v2122, %v2114
  %v2643 = vpack.c.b16 %v2131, %v2123
  %v2644 = vpack.c.b16 %v2132, %v2124
  %v2645 = vpack.c.b16 %v2133, %v2125
  %v2646 = vpack.c.b16 %v2134, %v2126
  %v2647 = vpack.c.b16 %v2135, %v2127
  %v2648 = vpack.c.b16 %v2136, %v2128
  %v2649 = vpack.c.b16 %v2137, %v2129
  %v2650 = vpack.c.b16 %v2138, %v2130
  %3163 = vmatprep.subr.bf16.mxu0 %v2140
  %3164 = vmatpush1.bf16.msra.mxu0 %v2139
  %3165 = vmatprep.subr.bf16.mxu0 %v2148
  %3166 = vmatpush1.bf16.msra.mxu0 %v2147
  %3167 = vmatprep.subr.bf16.mxu0 %v2156
  %3168 = vmatpush1.bf16.msra.mxu0 %v2155
  %3169 = vmatprep.subr.bf16.mxu0 %v2164
  %3170 = vmatpush1.bf16.msra.mxu0 %v2163
  %3171 = vmatprep.subr.bf16.mxu0 %v2172
  %3172 = vmatpush1.bf16.msra.mxu0 %v2171
  %3173 = vmatprep.subr.bf16.mxu0 %v2180
  %3174 = vmatpush1.bf16.msra.mxu0 %v2179
  %3175 = vmatprep.subr.bf16.mxu0 %v2188
  %3176 = vmatpush1.bf16.msra.mxu0 %v2187
  %3177 = vmatprep.subr.bf16.mxu0 %v2196
  %3178 = vmatpush1.bf16.msra.mxu0 %v2195
  %3179 = vmatprep.subr.bf16.mxu0 %v2204
  %3180 = vmatpush1.bf16.msra.mxu0 %v2203
  %3181 = vmatprep.subr.bf16.mxu0 %v2212
  %3182 = vmatpush1.bf16.msra.mxu0 %v2211
  %3183 = vmatprep.subr.bf16.mxu0 %v2220
  %3184 = vmatpush1.bf16.msra.mxu0 %v2219
  %3185 = vmatprep.subr.bf16.mxu0 %v2228
  %3186 = vmatpush1.bf16.msra.mxu0 %v2227
  %3187 = vmatprep.subr.bf16.mxu0 %v2236
  %3188 = vmatpush1.bf16.msra.mxu0 %v2235
  %3189 = vmatprep.subr.bf16.mxu0 %v2244
  %3190 = vmatpush1.bf16.msra.mxu0 %v2243
  %3191 = vmatprep.subr.bf16.mxu0 %v2252
  %3192 = vmatpush1.bf16.msra.mxu0 %v2251
  %3193 = vmatprep.subr.bf16.mxu0 %v2260
  %3194 = vmatpush1.bf16.msra.mxu0 %v2259
  %3195 = vmatprep.mubr.bf16.mxu0 %v42
  %3196 = vmatmul.mubr.bf16.gmra.mrb[0].mxu0 %v41
  %v3197 = vpop.f32.mrb[0].mxu0
  %v3198 = vadd.f32 %v566, %v3197
  %v3199 = vpop.f32.mrb[0].mxu0
  %v3200 = vadd.f32 %v570, %v3199
  %v3201 = vpop.f32.mrb[0].mxu0
  %v3202 = vadd.f32 %v566, %v3201
  %v3203 = vpop.f32.mrb[0].mxu0
  %v3204 = vadd.f32 %v570, %v3203
  %3205 = vdwg.mxu0
  %3206 = vmatprep.subr.bf16.mxu0 %v2268
  %3207 = vmatpush1.bf16.msra.mxu0 %v2267
  %3208 = vmatprep.subr.bf16.mxu0 %v2276
  %3209 = vmatpush1.bf16.msra.mxu0 %v2275
  %3210 = vmatprep.subr.bf16.mxu0 %v2284
  %3211 = vmatpush1.bf16.msra.mxu0 %v2283
  %3212 = vmatprep.subr.bf16.mxu0 %v2292
  %3213 = vmatpush1.bf16.msra.mxu0 %v2291
  %3214 = vmatprep.subr.bf16.mxu0 %v2300
  %3215 = vmatpush1.bf16.msra.mxu0 %v2299
  %3216 = vmatprep.subr.bf16.mxu0 %v2308
  %3217 = vmatpush1.bf16.msra.mxu0 %v2307
  %3218 = vmatprep.subr.bf16.mxu0 %v2316
  %3219 = vmatpush1.bf16.msra.mxu0 %v2315
  %3220 = vmatprep.subr.bf16.mxu0 %v2324
  %3221 = vmatpush1.bf16.msra.mxu0 %v2323
  %3222 = vmatprep.subr.bf16.mxu0 %v2332
  %3223 = vmatpush1.bf16.msra.mxu0 %v2331
  %3224 = vmatprep.subr.bf16.mxu0 %v2340
  %3225 = vmatpush1.bf16.msra.mxu0 %v2339
  %3226 = vmatprep.subr.bf16.mxu0 %v2348
  %3227 = vmatpush1.bf16.msra.mxu0 %v2347
  %3228 = vmatprep.subr.bf16.mxu0 %v2356
  %3229 = vmatpush1.bf16.msra.mxu0 %v2355
  %3230 = vmatprep.subr.bf16.mxu0 %v2364
  %3231 = vmatpush1.bf16.msra.mxu0 %v2363
  %3232 = vmatprep.subr.bf16.mxu0 %v2372
  %3233 = vmatpush1.bf16.msra.mxu0 %v2371
  %3234 = vmatprep.subr.bf16.mxu0 %v2380
  %3235 = vmatpush1.bf16.msra.mxu0 %v2379
  %3236 = vmatprep.subr.bf16.mxu0 %v2388
  %3237 = vmatpush1.bf16.msra.mxu0 %v2387
  %3238 = vmatprep.mubr.bf16.mxu0 %v44
  %3239 = vmatmul.mubr.bf16.gmra.mrb[0].mxu0 %v43
  %v3240 = vpop.f32.mrb[0].mxu0
  %v3241 = vadd.f32 %v3198, %v3240
  %v3242 = vpop.f32.mrb[0].mxu0
  %v3243 = vadd.f32 %v3200, %v3242
  %v3244 = vpop.f32.mrb[0].mxu0
  %v3245 = vadd.f32 %v3202, %v3244
  %v3246 = vpop.f32.mrb[0].mxu0
  %v3247 = vadd.f32 %v3204, %v3246
  %3248 = vdwg.mxu0
  %3249 = vmatprep.subr.bf16.mxu0 %v2396
  %3250 = vmatpush1.bf16.msra.mxu0 %v2395
  %3251 = vmatprep.subr.bf16.mxu0 %v2404
  %3252 = vmatpush1.bf16.msra.mxu0 %v2403
  %3253 = vmatprep.subr.bf16.mxu0 %v2412
  %3254 = vmatpush1.bf16.msra.mxu0 %v2411
  %3255 = vmatprep.subr.bf16.mxu0 %v2420
  %3256 = vmatpush1.bf16.msra.mxu0 %v2419
  %3257 = vmatprep.subr.bf16.mxu0 %v2428
  %3258 = vmatpush1.bf16.msra.mxu0 %v2427
  %3259 = vmatprep.subr.bf16.mxu0 %v2436
  %3260 = vmatpush1.bf16.msra.mxu0 %v2435
  %3261 = vmatprep.subr.bf16.mxu0 %v2444
  %3262 = vmatpush1.bf16.msra.mxu0 %v2443
  %3263 = vmatprep.subr.bf16.mxu0 %v2452
  %3264 = vmatpush1.bf16.msra.mxu0 %v2451
  %3265 = vmatprep.subr.bf16.mxu0 %v2460
  %3266 = vmatpush1.bf16.msra.mxu0 %v2459
  %3267 = vmatprep.subr.bf16.mxu0 %v2468
  %3268 = vmatpush1.bf16.msra.mxu0 %v2467
  %3269 = vmatprep.subr.bf16.mxu0 %v2476
  %3270 = vmatpush1.bf16.msra.mxu0 %v2475
  %3271 = vmatprep.subr.bf16.mxu0 %v2484
  %3272 = vmatpush1.bf16.msra.mxu0 %v2483
  %3273 = vmatprep.subr.bf16.mxu0 %v2492
  %3274 = vmatpush1.bf16.msra.mxu0 %v2491
  %3275 = vmatprep.subr.bf16.mxu0 %v2500
  %3276 = vmatpush1.bf16.msra.mxu0 %v2499
  %3277 = vmatprep.subr.bf16.mxu0 %v2508
  %3278 = vmatpush1.bf16.msra.mxu0 %v2507
  %3279 = vmatprep.subr.bf16.mxu0 %v2516
  %3280 = vmatpush1.bf16.msra.mxu0 %v2515
  %3281 = vmatprep.mubr.bf16.mxu0 %v46
  %3282 = vmatmul.mubr.bf16.gmra.mrb[0].mxu0 %v45
  %v3283 = vpop.f32.mrb[0].mxu0
  %v3284 = vadd.f32 %v3241, %v3283
  %v3285 = vpop.f32.mrb[0].mxu0
  %v3286 = vadd.f32 %v3243, %v3285
  %v3287 = vpop.f32.mrb[0].mxu0
  %v3288 = vadd.f32 %v3245, %v3287
  %v3289 = vpop.f32.mrb[0].mxu0
  %v3290 = vadd.f32 %v3247, %v3289
  %3291 = vdwg.mxu0
  %3292 = vmatprep.subr.bf16.mxu0 %v2524
  %3293 = vmatpush1.bf16.msra.mxu0 %v2523
  %3294 = vmatprep.subr.bf16.mxu0 %v2532
  %3295 = vmatpush1.bf16.msra.mxu0 %v2531
  %3296 = vmatprep.subr.bf16.mxu0 %v2540
  %3297 = vmatpush1.bf16.msra.mxu0 %v2539
  %3298 = vmatprep.subr.bf16.mxu0 %v2548
  %3299 = vmatpush1.bf16.msra.mxu0 %v2547
  %3300 = vmatprep.subr.bf16.mxu0 %v2556
  %3301 = vmatpush1.bf16.msra.mxu0 %v2555
  %3302 = vmatprep.subr.bf16.mxu0 %v2564
  %3303 = vmatpush1.bf16.msra.mxu0 %v2563
  %3304 = vmatprep.subr.bf16.mxu0 %v2572
  %3305 = vmatpush1.bf16.msra.mxu0 %v2571
  %3306 = vmatprep.subr.bf16.mxu0 %v2580
  %3307 = vmatpush1.bf16.msra.mxu0 %v2579
  %3308 = vmatprep.subr.bf16.mxu0 %v2588
  %3309 = vmatpush1.bf16.msra.mxu0 %v2587
  %3310 = vmatprep.subr.bf16.mxu0 %v2596
  %3311 = vmatpush1.bf16.msra.mxu0 %v2595
  %3312 = vmatprep.subr.bf16.mxu0 %v2604
  %3313 = vmatpush1.bf16.msra.mxu0 %v2603
  %3314 = vmatprep.subr.bf16.mxu0 %v2612
  %3315 = vmatpush1.bf16.msra.mxu0 %v2611
  %3316 = vmatprep.subr.bf16.mxu0 %v2620
  %3317 = vmatpush1.bf16.msra.mxu0 %v2619
  %3318 = vmatprep.subr.bf16.mxu0 %v2628
  %3319 = vmatpush1.bf16.msra.mxu0 %v2627
  %3320 = vmatprep.subr.bf16.mxu0 %v2636
  %3321 = vmatpush1.bf16.msra.mxu0 %v2635
  %3322 = vmatprep.subr.bf16.mxu0 %v2644
  %3323 = vmatpush1.bf16.msra.mxu0 %v2643
  %3324 = vmatprep.mubr.bf16.mxu0 %v48
  %3325 = vmatmul.mubr.bf16.gmra.mrb[0].mxu0 %v47
  %v3326 = vpop.f32.mrb[0].mxu0
  %v3327 = vadd.f32 %v3284, %v3326
  %v3328 = vpop.f32.mrb[0].mxu0
  %v3329 = vadd.f32 %v3286, %v3328
  %v3330 = vpop.f32.mrb[0].mxu0
  %v3331 = vadd.f32 %v3288, %v3330
  %v3332 = vpop.f32.mrb[0].mxu0
  %v3333 = vadd.f32 %v3290, %v3332
  %3334 = vdwg.mxu0
  %3335 = vmatprep.subr.bf16.mxu0 %v2142
  %3336 = vmatpush1.bf16.msra.mxu0 %v2141
  %3337 = vmatprep.subr.bf16.mxu0 %v2150
  %3338 = vmatpush1.bf16.msra.mxu0 %v2149
  %3339 = vmatprep.subr.bf16.mxu0 %v2158
  %3340 = vmatpush1.bf16.msra.mxu0 %v2157
  %3341 = vmatprep.subr.bf16.mxu0 %v2166
  %3342 = vmatpush1.bf16.msra.mxu0 %v2165
  %3343 = vmatprep.subr.bf16.mxu0 %v2174
  %3344 = vmatpush1.bf16.msra.mxu0 %v2173
  %3345 = vmatprep.subr.bf16.mxu0 %v2182
  %3346 = vmatpush1.bf16.msra.mxu0 %v2181
  %3347 = vmatprep.subr.bf16.mxu0 %v2190
  %3348 = vmatpush1.bf16.msra.mxu0 %v2189
  %3349 = vmatprep.subr.bf16.mxu0 %v2198
  %3350 = vmatpush1.bf16.msra.mxu0 %v2197
  %3351 = vmatprep.subr.bf16.mxu0 %v2206
  %3352 = vmatpush1.bf16.msra.mxu0 %v2205
  %3353 = vmatprep.subr.bf16.mxu0 %v2214
  %3354 = vmatpush1.bf16.msra.mxu0 %v2213
  %3355 = vmatprep.subr.bf16.mxu0 %v2222
  %3356 = vmatpush1.bf16.msra.mxu0 %v2221
  %3357 = vmatprep.subr.bf16.mxu0 %v2230
  %3358 = vmatpush1.bf16.msra.mxu0 %v2229
  %3359 = vmatprep.subr.bf16.mxu0 %v2238
  %3360 = vmatpush1.bf16.msra.mxu0 %v2237
  %3361 = vmatprep.subr.bf16.mxu0 %v2246
  %3362 = vmatpush1.bf16.msra.mxu0 %v2245
  %3363 = vmatprep.subr.bf16.mxu0 %v2254
  %3364 = vmatpush1.bf16.msra.mxu0 %v2253
  %3365 = vmatprep.subr.bf16.mxu0 %v2262
  %3366 = vmatpush1.bf16.msra.mxu0 %v2261
  %3367 = vmatprep.mubr.bf16.mxu0 %v42
  %3368 = vmatmul.mubr.bf16.gmra.mrb[0].mxu0 %v41
  %v3369 = vpop.f32.mrb[0].mxu0
  %v3370 = vadd.f32 %v574, %v3369
  %v3371 = vpop.f32.mrb[0].mxu0
  %v3372 = vadd.f32 %v578, %v3371
  %v3373 = vpop.f32.mrb[0].mxu0
  %v3374 = vadd.f32 %v574, %v3373
  %v3375 = vpop.f32.mrb[0].mxu0
  %v3376 = vadd.f32 %v578, %v3375
  %3377 = vdwg.mxu0
  %3378 = vmatprep.subr.bf16.mxu0 %v2270
  %3379 = vmatpush1.bf16.msra.mxu0 %v2269
  %3380 = vmatprep.subr.bf16.mxu0 %v2278
  %3381 = vmatpush1.bf16.msra.mxu0 %v2277
  %3382 = vmatprep.subr.bf16.mxu0 %v2286
  %3383 = vmatpush1.bf16.msra.mxu0 %v2285
  %3384 = vmatprep.subr.bf16.mxu0 %v2294
  %3385 = vmatpush1.bf16.msra.mxu0 %v2293
  %3386 = vmatprep.subr.bf16.mxu0 %v2302
  %3387 = vmatpush1.bf16.msra.mxu0 %v2301
  %3388 = vmatprep.subr.bf16.mxu0 %v2310
  %3389 = vmatpush1.bf16.msra.mxu0 %v2309
  %3390 = vmatprep.subr.bf16.mxu0 %v2318
  %3391 = vmatpush1.bf16.msra.mxu0 %v2317
  %3392 = vmatprep.subr.bf16.mxu0 %v2326
  %3393 = vmatpush1.bf16.msra.mxu0 %v2325
  %3394 = vmatprep.subr.bf16.mxu0 %v2334
  %3395 = vmatpush1.bf16.msra.mxu0 %v2333
  %3396 = vmatprep.subr.bf16.mxu0 %v2342
  %3397 = vmatpush1.bf16.msra.mxu0 %v2341
  %3398 = vmatprep.subr.bf16.mxu0 %v2350
  %3399 = vmatpush1.bf16.msra.mxu0 %v2349
  %3400 = vmatprep.subr.bf16.mxu0 %v2358
  %3401 = vmatpush1.bf16.msra.mxu0 %v2357
  %3402 = vmatprep.subr.bf16.mxu0 %v2366
  %3403 = vmatpush1.bf16.msra.mxu0 %v2365
  %3404 = vmatprep.subr.bf16.mxu0 %v2374
  %3405 = vmatpush1.bf16.msra.mxu0 %v2373
  %3406 = vmatprep.subr.bf16.mxu0 %v2382
  %3407 = vmatpush1.bf16.msra.mxu0 %v2381
  %3408 = vmatprep.subr.bf16.mxu0 %v2390
  %3409 = vmatpush1.bf16.msra.mxu0 %v2389
  %3410 = vmatprep.mubr.bf16.mxu0 %v44
  %3411 = vmatmul.mubr.bf16.gmra.mrb[0].mxu0 %v43
  %v3412 = vpop.f32.mrb[0].mxu0
  %v3413 = vadd.f32 %v3370, %v3412
  %v3414 = vpop.f32.mrb[0].mxu0
  %v3415 = vadd.f32 %v3372, %v3414
  %v3416 = vpop.f32.mrb[0].mxu0
  %v3417 = vadd.f32 %v3374, %v3416
  %v3418 = vpop.f32.mrb[0].mxu0
  %v3419 = vadd.f32 %v3376, %v3418
  %3420 = vdwg.mxu0
  %3421 = vmatprep.subr.bf16.mxu0 %v2398
  %3422 = vmatpush1.bf16.msra.mxu0 %v2397
  %3423 = vmatprep.subr.bf16.mxu0 %v2406
  %3424 = vmatpush1.bf16.msra.mxu0 %v2405
  %3425 = vmatprep.subr.bf16.mxu0 %v2414
  %3426 = vmatpush1.bf16.msra.mxu0 %v2413
  %3427 = vmatprep.subr.bf16.mxu0 %v2422
  %3428 = vmatpush1.bf16.msra.mxu0 %v2421
  %3429 = vmatprep.subr.bf16.mxu0 %v2430
  %3430 = vmatpush1.bf16.msra.mxu0 %v2429
  %3431 = vmatprep.subr.bf16.mxu0 %v2438
  %3432 = vmatpush1.bf16.msra.mxu0 %v2437
  %3433 = vmatprep.subr.bf16.mxu0 %v2446
  %3434 = vmatpush1.bf16.msra.mxu0 %v2445
  %3435 = vmatprep.subr.bf16.mxu0 %v2454
  %3436 = vmatpush1.bf16.msra.mxu0 %v2453
  %3437 = vmatprep.subr.bf16.mxu0 %v2462
  %3438 = vmatpush1.bf16.msra.mxu0 %v2461
  %3439 = vmatprep.subr.bf16.mxu0 %v2470
  %3440 = vmatpush1.bf16.msra.mxu0 %v2469
  %3441 = vmatprep.subr.bf16.mxu0 %v2478
  %3442 = vmatpush1.bf16.msra.mxu0 %v2477
  %3443 = vmatprep.subr.bf16.mxu0 %v2486
  %3444 = vmatpush1.bf16.msra.mxu0 %v2485
  %3445 = vmatprep.subr.bf16.mxu0 %v2494
  %3446 = vmatpush1.bf16.msra.mxu0 %v2493
  %3447 = vmatprep.subr.bf16.mxu0 %v2502
  %3448 = vmatpush1.bf16.msra.mxu0 %v2501
  %3449 = vmatprep.subr.bf16.mxu0 %v2510
  %3450 = vmatpush1.bf16.msra.mxu0 %v2509
  %3451 = vmatprep.subr.bf16.mxu0 %v2518
  %3452 = vmatpush1.bf16.msra.mxu0 %v2517
  %3453 = vmatprep.mubr.bf16.mxu0 %v46
  %3454 = vmatmul.mubr.bf16.gmra.mrb[0].mxu0 %v45
  %v3455 = vpop.f32.mrb[0].mxu0
  %v3456 = vadd.f32 %v3413, %v3455
  %v3457 = vpop.f32.mrb[0].mxu0
  %v3458 = vadd.f32 %v3415, %v3457
  %v3459 = vpop.f32.mrb[0].mxu0
  %v3460 = vadd.f32 %v3417, %v3459
  %v3461 = vpop.f32.mrb[0].mxu0
  %v3462 = vadd.f32 %v3419, %v3461
  %3463 = vdwg.mxu0
  %3464 = vmatprep.subr.bf16.mxu0 %v2526
  %3465 = vmatpush1.bf16.msra.mxu0 %v2525
  %3466 = vmatprep.subr.bf16.mxu0 %v2534
  %3467 = vmatpush1.bf16.msra.mxu0 %v2533
  %3468 = vmatprep.subr.bf16.mxu0 %v2542
  %3469 = vmatpush1.bf16.msra.mxu0 %v2541
  %3470 = vmatprep.subr.bf16.mxu0 %v2550
  %3471 = vmatpush1.bf16.msra.mxu0 %v2549
  %3472 = vmatprep.subr.bf16.mxu0 %v2558
  %3473 = vmatpush1.bf16.msra.mxu0 %v2557
  %3474 = vmatprep.subr.bf16.mxu0 %v2566
  %3475 = vmatpush1.bf16.msra.mxu0 %v2565
  %3476 = vmatprep.subr.bf16.mxu0 %v2574
  %3477 = vmatpush1.bf16.msra.mxu0 %v2573
  %3478 = vmatprep.subr.bf16.mxu0 %v2582
  %3479 = vmatpush1.bf16.msra.mxu0 %v2581
  %3480 = vmatprep.subr.bf16.mxu0 %v2590
  %3481 = vmatpush1.bf16.msra.mxu0 %v2589
  %3482 = vmatprep.subr.bf16.mxu0 %v2598
  %3483 = vmatpush1.bf16.msra.mxu0 %v2597
  %3484 = vmatprep.subr.bf16.mxu0 %v2606
  %3485 = vmatpush1.bf16.msra.mxu0 %v2605
  %3486 = vmatprep.subr.bf16.mxu0 %v2614
  %3487 = vmatpush1.bf16.msra.mxu0 %v2613
  %3488 = vmatprep.subr.bf16.mxu0 %v2622
  %3489 = vmatpush1.bf16.msra.mxu0 %v2621
  %3490 = vmatprep.subr.bf16.mxu0 %v2630
  %3491 = vmatpush1.bf16.msra.mxu0 %v2629
  %3492 = vmatprep.subr.bf16.mxu0 %v2638
  %3493 = vmatpush1.bf16.msra.mxu0 %v2637
  %3494 = vmatprep.subr.bf16.mxu0 %v2646
  %3495 = vmatpush1.bf16.msra.mxu0 %v2645
  %3496 = vmatprep.mubr.bf16.mxu0 %v48
  %3497 = vmatmul.mubr.bf16.gmra.mrb[0].mxu0 %v47
  %v3498 = vpop.f32.mrb[0].mxu0
  %v3499 = vadd.f32 %v3456, %v3498
  %v3500 = vpop.f32.mrb[0].mxu0
  %v3501 = vadd.f32 %v3458, %v3500
  %v3502 = vpop.f32.mrb[0].mxu0
  %v3503 = vadd.f32 %v3460, %v3502
  %v3504 = vpop.f32.mrb[0].mxu0
  %v3505 = vadd.f32 %v3462, %v3504
  %3506 = vdwg.mxu0
  %3507 = vmatprep.subr.bf16.mxu0 %v2144
  %3508 = vmatpush1.bf16.msra.mxu0 %v2143
  %3509 = vmatprep.subr.bf16.mxu0 %v2152
  %3510 = vmatpush1.bf16.msra.mxu0 %v2151
  %3511 = vmatprep.subr.bf16.mxu0 %v2160
  %3512 = vmatpush1.bf16.msra.mxu0 %v2159
  %3513 = vmatprep.subr.bf16.mxu0 %v2168
  %3514 = vmatpush1.bf16.msra.mxu0 %v2167
  %3515 = vmatprep.subr.bf16.mxu0 %v2176
  %3516 = vmatpush1.bf16.msra.mxu0 %v2175
  %3517 = vmatprep.subr.bf16.mxu0 %v2184
  %3518 = vmatpush1.bf16.msra.mxu0 %v2183
  %3519 = vmatprep.subr.bf16.mxu0 %v2192
  %3520 = vmatpush1.bf16.msra.mxu0 %v2191
  %3521 = vmatprep.subr.bf16.mxu0 %v2200
  %3522 = vmatpush1.bf16.msra.mxu0 %v2199
  %3523 = vmatprep.subr.bf16.mxu0 %v2208
  %3524 = vmatpush1.bf16.msra.mxu0 %v2207
  %3525 = vmatprep.subr.bf16.mxu0 %v2216
  %3526 = vmatpush1.bf16.msra.mxu0 %v2215
  %3527 = vmatprep.subr.bf16.mxu0 %v2224
  %3528 = vmatpush1.bf16.msra.mxu0 %v2223
  %3529 = vmatprep.subr.bf16.mxu0 %v2232
  %3530 = vmatpush1.bf16.msra.mxu0 %v2231
  %3531 = vmatprep.subr.bf16.mxu0 %v2240
  %3532 = vmatpush1.bf16.msra.mxu0 %v2239
  %3533 = vmatprep.subr.bf16.mxu0 %v2248
  %3534 = vmatpush1.bf16.msra.mxu0 %v2247
  %3535 = vmatprep.subr.bf16.mxu0 %v2256
  %3536 = vmatpush1.bf16.msra.mxu0 %v2255
  %3537 = vmatprep.subr.bf16.mxu0 %v2264
  %3538 = vmatpush1.bf16.msra.mxu0 %v2263
  %3539 = vmatprep.mubr.bf16.mxu0 %v42
  %3540 = vmatmul.mubr.bf16.gmra.mrb[0].mxu0 %v41
  %v3541 = vpop.f32.mrb[0].mxu0
  %v3542 = vadd.f32 %v582, %v3541
  %v3543 = vpop.f32.mrb[0].mxu0
  %v3544 = vadd.f32 %v586, %v3543
  %v3545 = vpop.f32.mrb[0].mxu0
  %v3546 = vadd.f32 %v582, %v3545
  %v3547 = vpop.f32.mrb[0].mxu0
  %v3548 = vadd.f32 %v586, %v3547
  %3549 = vdwg.mxu0
  %3550 = vmatprep.subr.bf16.mxu0 %v2272
  %3551 = vmatpush1.bf16.msra.mxu0 %v2271
  %3552 = vmatprep.subr.bf16.mxu0 %v2280
  %3553 = vmatpush1.bf16.msra.mxu0 %v2279
  %3554 = vmatprep.subr.bf16.mxu0 %v2288
  %3555 = vmatpush1.bf16.msra.mxu0 %v2287
  %3556 = vmatprep.subr.bf16.mxu0 %v2296
  %3557 = vmatpush1.bf16.msra.mxu0 %v2295
  %3558 = vmatprep.subr.bf16.mxu0 %v2304
  %3559 = vmatpush1.bf16.msra.mxu0 %v2303
  %3560 = vmatprep.subr.bf16.mxu0 %v2312
  %3561 = vmatpush1.bf16.msra.mxu0 %v2311
  %3562 = vmatprep.subr.bf16.mxu0 %v2320
  %3563 = vmatpush1.bf16.msra.mxu0 %v2319
  %3564 = vmatprep.subr.bf16.mxu0 %v2328
  %3565 = vmatpush1.bf16.msra.mxu0 %v2327
  %3566 = vmatprep.subr.bf16.mxu0 %v2336
  %3567 = vmatpush1.bf16.msra.mxu0 %v2335
  %3568 = vmatprep.subr.bf16.mxu0 %v2344
  %3569 = vmatpush1.bf16.msra.mxu0 %v2343
  %3570 = vmatprep.subr.bf16.mxu0 %v2352
  %3571 = vmatpush1.bf16.msra.mxu0 %v2351
  %3572 = vmatprep.subr.bf16.mxu0 %v2360
  %3573 = vmatpush1.bf16.msra.mxu0 %v2359
  %3574 = vmatprep.subr.bf16.mxu0 %v2368
  %3575 = vmatpush1.bf16.msra.mxu0 %v2367
  %3576 = vmatprep.subr.bf16.mxu0 %v2376
  %3577 = vmatpush1.bf16.msra.mxu0 %v2375
  %3578 = vmatprep.subr.bf16.mxu0 %v2384
  %3579 = vmatpush1.bf16.msra.mxu0 %v2383
  %3580 = vmatprep.subr.bf16.mxu0 %v2392
  %3581 = vmatpush1.bf16.msra.mxu0 %v2391
  %3582 = vmatprep.mubr.bf16.mxu0 %v44
  %3583 = vmatmul.mubr.bf16.gmra.mrb[0].mxu0 %v43
  %v3584 = vpop.f32.mrb[0].mxu0
  %v3585 = vadd.f32 %v3542, %v3584
  %v3586 = vpop.f32.mrb[0].mxu0
  %v3587 = vadd.f32 %v3544, %v3586
  %v3588 = vpop.f32.mrb[0].mxu0
  %v3589 = vadd.f32 %v3546, %v3588
  %v3590 = vpop.f32.mrb[0].mxu0
  %v3591 = vadd.f32 %v3548, %v3590
  %3592 = vdwg.mxu0
  %3593 = vmatprep.subr.bf16.mxu0 %v2400
  %3594 = vmatpush1.bf16.msra.mxu0 %v2399
  %3595 = vmatprep.subr.bf16.mxu0 %v2408
  %3596 = vmatpush1.bf16.msra.mxu0 %v2407
  %3597 = vmatprep.subr.bf16.mxu0 %v2416
  %3598 = vmatpush1.bf16.msra.mxu0 %v2415
  %3599 = vmatprep.subr.bf16.mxu0 %v2424
  %3600 = vmatpush1.bf16.msra.mxu0 %v2423
  %3601 = vmatprep.subr.bf16.mxu0 %v2432
  %3602 = vmatpush1.bf16.msra.mxu0 %v2431
  %3603 = vmatprep.subr.bf16.mxu0 %v2440
  %3604 = vmatpush1.bf16.msra.mxu0 %v2439
  %3605 = vmatprep.subr.bf16.mxu0 %v2448
  %3606 = vmatpush1.bf16.msra.mxu0 %v2447
  %3607 = vmatprep.subr.bf16.mxu0 %v2456
  %3608 = vmatpush1.bf16.msra.mxu0 %v2455
  %3609 = vmatprep.subr.bf16.mxu0 %v2464
  %3610 = vmatpush1.bf16.msra.mxu0 %v2463
  %3611 = vmatprep.subr.bf16.mxu0 %v2472
  %3612 = vmatpush1.bf16.msra.mxu0 %v2471
  %3613 = vmatprep.subr.bf16.mxu0 %v2480
  %3614 = vmatpush1.bf16.msra.mxu0 %v2479
  %3615 = vmatprep.subr.bf16.mxu0 %v2488
  %3616 = vmatpush1.bf16.msra.mxu0 %v2487
  %3617 = vmatprep.subr.bf16.mxu0 %v2496
  %3618 = vmatpush1.bf16.msra.mxu0 %v2495
  %3619 = vmatprep.subr.bf16.mxu0 %v2504
  %3620 = vmatpush1.bf16.msra.mxu0 %v2503
  %3621 = vmatprep.subr.bf16.mxu0 %v2512
  %3622 = vmatpush1.bf16.msra.mxu0 %v2511
  %3623 = vmatprep.subr.bf16.mxu0 %v2520
  %3624 = vmatpush1.bf16.msra.mxu0 %v2519
  %3625 = vmatprep.mubr.bf16.mxu0 %v46
  %3626 = vmatmul.mubr.bf16.gmra.mrb[0].mxu0 %v45
  %v3627 = vpop.f32.mrb[0].mxu0
  %v3628 = vadd.f32 %v3585, %v3627
  %v3629 = vpop.f32.mrb[0].mxu0
  %v3630 = vadd.f32 %v3587, %v3629
  %v3631 = vpop.f32.mrb[0].mxu0
  %v3632 = vadd.f32 %v3589, %v3631
  %v3633 = vpop.f32.mrb[0].mxu0
  %v3634 = vadd.f32 %v3591, %v3633
  %3635 = vdwg.mxu0
  %3636 = vmatprep.subr.bf16.mxu0 %v2528
  %3637 = vmatpush1.bf16.msra.mxu0 %v2527
  %3638 = vmatprep.subr.bf16.mxu0 %v2536
  %3639 = vmatpush1.bf16.msra.mxu0 %v2535
  %3640 = vmatprep.subr.bf16.mxu0 %v2544
  %3641 = vmatpush1.bf16.msra.mxu0 %v2543
  %3642 = vmatprep.subr.bf16.mxu0 %v2552
  %3643 = vmatpush1.bf16.msra.mxu0 %v2551
  %3644 = vmatprep.subr.bf16.mxu0 %v2560
  %3645 = vmatpush1.bf16.msra.mxu0 %v2559
  %3646 = vmatprep.subr.bf16.mxu0 %v2568
  %3647 = vmatpush1.bf16.msra.mxu0 %v2567
  %3648 = vmatprep.subr.bf16.mxu0 %v2576
  %3649 = vmatpush1.bf16.msra.mxu0 %v2575
  %3650 = vmatprep.subr.bf16.mxu0 %v2584
  %3651 = vmatpush1.bf16.msra.mxu0 %v2583
  %3652 = vmatprep.subr.bf16.mxu0 %v2592
  %3653 = vmatpush1.bf16.msra.mxu0 %v2591
  %3654 = vmatprep.subr.bf16.mxu0 %v2600
  %3655 = vmatpush1.bf16.msra.mxu0 %v2599
  %3656 = vmatprep.subr.bf16.mxu0 %v2608
  %3657 = vmatpush1.bf16.msra.mxu0 %v2607
  %3658 = vmatprep.subr.bf16.mxu0 %v2616
  %3659 = vmatpush1.bf16.msra.mxu0 %v2615
  %3660 = vmatprep.subr.bf16.mxu0 %v2624
  %3661 = vmatpush1.bf16.msra.mxu0 %v2623
  %3662 = vmatprep.subr.bf16.mxu0 %v2632
  %3663 = vmatpush1.bf16.msra.mxu0 %v2631
  %3664 = vmatprep.subr.bf16.mxu0 %v2640
  %3665 = vmatpush1.bf16.msra.mxu0 %v2639
  %3666 = vmatprep.subr.bf16.mxu0 %v2648
  %3667 = vmatpush1.bf16.msra.mxu0 %v2647
  %3668 = vmatprep.mubr.bf16.mxu0 %v48
  %3669 = vmatmul.mubr.bf16.gmra.mrb[0].mxu0 %v47
  %v3670 = vpop.f32.mrb[0].mxu0
  %v3671 = vadd.f32 %v3628, %v3670
  %v3672 = vpop.f32.mrb[0].mxu0
  %v3673 = vadd.f32 %v3630, %v3672
  %v3674 = vpop.f32.mrb[0].mxu0
  %v3675 = vadd.f32 %v3632, %v3674
  %v3676 = vpop.f32.mrb[0].mxu0
  %v3677 = vadd.f32 %v3634, %v3676
  %3678 = vdwg.mxu0
  %3679 = vmatprep.subr.bf16.mxu0 %v2146
  %3680 = vmatpush1.bf16.msra.mxu0 %v2145
  %3681 = vmatprep.subr.bf16.mxu0 %v2154
  %3682 = vmatpush1.bf16.msra.mxu0 %v2153
  %3683 = vmatprep.subr.bf16.mxu0 %v2162
  %3684 = vmatpush1.bf16.msra.mxu0 %v2161
  %3685 = vmatprep.subr.bf16.mxu0 %v2170
  %3686 = vmatpush1.bf16.msra.mxu0 %v2169
  %3687 = vmatprep.subr.bf16.mxu0 %v2178
  %3688 = vmatpush1.bf16.msra.mxu0 %v2177
  %3689 = vmatprep.subr.bf16.mxu0 %v2186
  %3690 = vmatpush1.bf16.msra.mxu0 %v2185
  %3691 = vmatprep.subr.bf16.mxu0 %v2194
  %3692 = vmatpush1.bf16.msra.mxu0 %v2193
  %3693 = vmatprep.subr.bf16.mxu0 %v2202
  %3694 = vmatpush1.bf16.msra.mxu0 %v2201
  %3695 = vmatprep.subr.bf16.mxu0 %v2210
  %3696 = vmatpush1.bf16.msra.mxu0 %v2209
  %3697 = vmatprep.subr.bf16.mxu0 %v2218
  %3698 = vmatpush1.bf16.msra.mxu0 %v2217
  %3699 = vmatprep.subr.bf16.mxu0 %v2226
  %3700 = vmatpush1.bf16.msra.mxu0 %v2225
  %3701 = vmatprep.subr.bf16.mxu0 %v2234
  %3702 = vmatpush1.bf16.msra.mxu0 %v2233
  %3703 = vmatprep.subr.bf16.mxu0 %v2242
  %3704 = vmatpush1.bf16.msra.mxu0 %v2241
  %3705 = vmatprep.subr.bf16.mxu0 %v2250
  %3706 = vmatpush1.bf16.msra.mxu0 %v2249
  %3707 = vmatprep.subr.bf16.mxu0 %v2258
  %3708 = vmatpush1.bf16.msra.mxu0 %v2257
  %3709 = vmatprep.subr.bf16.mxu0 %v2266
  %3710 = vmatpush1.bf16.msra.mxu0 %v2265
  %3711 = vmatprep.mubr.bf16.mxu0 %v42
  %3712 = vmatmul.mubr.bf16.gmra.mrb[0].mxu0 %v41
  %v3713 = vpop.f32.mrb[0].mxu0
  %v3714 = vadd.f32 %v590, %v3713
  %v3715 = vpop.f32.mrb[0].mxu0
  %v3716 = vadd.f32 %v594, %v3715
  %v3717 = vpop.f32.mrb[0].mxu0
  %v3718 = vadd.f32 %v590, %v3717
  %v3719 = vpop.f32.mrb[0].mxu0
  %v3720 = vadd.f32 %v594, %v3719
  %3721 = vdwg.mxu0
  %3722 = vmatprep.subr.bf16.mxu0 %v2274
  %3723 = vmatpush1.bf16.msra.mxu0 %v2273
  %3724 = vmatprep.subr.bf16.mxu0 %v2282
  %3725 = vmatpush1.bf16.msra.mxu0 %v2281
  %3726 = vmatprep.subr.bf16.mxu0 %v2290
  %3727 = vmatpush1.bf16.msra.mxu0 %v2289
  %3728 = vmatprep.subr.bf16.mxu0 %v2298
  %3729 = vmatpush1.bf16.msra.mxu0 %v2297
  %3730 = vmatprep.subr.bf16.mxu0 %v2306
  %3731 = vmatpush1.bf16.msra.mxu0 %v2305
  %3732 = vmatprep.subr.bf16.mxu0 %v2314
  %3733 = vmatpush1.bf16.msra.mxu0 %v2313
  %3734 = vmatprep.subr.bf16.mxu0 %v2322
  %3735 = vmatpush1.bf16.msra.mxu0 %v2321
  %3736 = vmatprep.subr.bf16.mxu0 %v2330
  %3737 = vmatpush1.bf16.msra.mxu0 %v2329
  %3738 = vmatprep.subr.bf16.mxu0 %v2338
  %3739 = vmatpush1.bf16.msra.mxu0 %v2337
  %3740 = vmatprep.subr.bf16.mxu0 %v2346
  %3741 = vmatpush1.bf16.msra.mxu0 %v2345
  %3742 = vmatprep.subr.bf16.mxu0 %v2354
  %3743 = vmatpush1.bf16.msra.mxu0 %v2353
  %3744 = vmatprep.subr.bf16.mxu0 %v2362
  %3745 = vmatpush1.bf16.msra.mxu0 %v2361
  %3746 = vmatprep.subr.bf16.mxu0 %v2370
  %3747 = vmatpush1.bf16.msra.mxu0 %v2369
  %3748 = vmatprep.subr.bf16.mxu0 %v2378
  %3749 = vmatpush1.bf16.msra.mxu0 %v2377
  %3750 = vmatprep.subr.bf16.mxu0 %v2386
  %3751 = vmatpush1.bf16.msra.mxu0 %v2385
  %3752 = vmatprep.subr.bf16.mxu0 %v2394
  %3753 = vmatpush1.bf16.msra.mxu0 %v2393
  %3754 = vmatprep.mubr.bf16.mxu0 %v44
  %3755 = vmatmul.mubr.bf16.gmra.mrb[0].mxu0 %v43
  %v3756 = vpop.f32.mrb[0].mxu0
  %v3757 = vadd.f32 %v3714, %v3756
  %v3758 = vpop.f32.mrb[0].mxu0
  %v3759 = vadd.f32 %v3716, %v3758
  %v3760 = vpop.f32.mrb[0].mxu0
  %v3761 = vadd.f32 %v3718, %v3760
  %v3762 = vpop.f32.mrb[0].mxu0
  %v3763 = vadd.f32 %v3720, %v3762
  %3764 = vdwg.mxu0
  %3765 = vmatprep.subr.bf16.mxu0 %v2402
  %3766 = vmatpush1.bf16.msra.mxu0 %v2401
  %3767 = vmatprep.subr.bf16.mxu0 %v2410
  %3768 = vmatpush1.bf16.msra.mxu0 %v2409
  %3769 = vmatprep.subr.bf16.mxu0 %v2418
  %3770 = vmatpush1.bf16.msra.mxu0 %v2417
  %3771 = vmatprep.subr.bf16.mxu0 %v2426
  %3772 = vmatpush1.bf16.msra.mxu0 %v2425
  %3773 = vmatprep.subr.bf16.mxu0 %v2434
  %3774 = vmatpush1.bf16.msra.mxu0 %v2433
  %3775 = vmatprep.subr.bf16.mxu0 %v2442
  %3776 = vmatpush1.bf16.msra.mxu0 %v2441
  %3777 = vmatprep.subr.bf16.mxu0 %v2450
  %3778 = vmatpush1.bf16.msra.mxu0 %v2449
  %3779 = vmatprep.subr.bf16.mxu0 %v2458
  %3780 = vmatpush1.bf16.msra.mxu0 %v2457
  %3781 = vmatprep.subr.bf16.mxu0 %v2466
  %3782 = vmatpush1.bf16.msra.mxu0 %v2465
  %3783 = vmatprep.subr.bf16.mxu0 %v2474
  %3784 = vmatpush1.bf16.msra.mxu0 %v2473
  %3785 = vmatprep.subr.bf16.mxu0 %v2482
  %3786 = vmatpush1.bf16.msra.mxu0 %v2481
  %3787 = vmatprep.subr.bf16.mxu0 %v2490
  %3788 = vmatpush1.bf16.msra.mxu0 %v2489
  %3789 = vmatprep.subr.bf16.mxu0 %v2498
  %3790 = vmatpush1.bf16.msra.mxu0 %v2497
  %3791 = vmatprep.subr.bf16.mxu0 %v2506
  %3792 = vmatpush1.bf16.msra.mxu0 %v2505
  %3793 = vmatprep.subr.bf16.mxu0 %v2514
  %3794 = vmatpush1.bf16.msra.mxu0 %v2513
  %3795 = vmatprep.subr.bf16.mxu0 %v2522
  %3796 = vmatpush1.bf16.msra.mxu0 %v2521
  %3797 = vmatprep.mubr.bf16.mxu0 %v46
  %3798 = vmatmul.mubr.bf16.gmra.mrb[0].mxu0 %v45
  %v3799 = vpop.f32.mrb[0].mxu0
  %v3800 = vadd.f32 %v3757, %v3799
  %v3801 = vpop.f32.mrb[0].mxu0
  %v3802 = vadd.f32 %v3759, %v3801
  %v3803 = vpop.f32.mrb[0].mxu0
  %v3804 = vadd.f32 %v3761, %v3803
  %v3805 = vpop.f32.mrb[0].mxu0
  %v3806 = vadd.f32 %v3763, %v3805
  %3807 = vdwg.mxu0
  %3808 = vmatprep.subr.bf16.mxu0 %v2530
  %3809 = vmatpush1.bf16.msra.mxu0 %v2529
  %3810 = vmatprep.subr.bf16.mxu0 %v2538
  %3811 = vmatpush1.bf16.msra.mxu0 %v2537
  %3812 = vmatprep.subr.bf16.mxu0 %v2546
  %3813 = vmatpush1.bf16.msra.mxu0 %v2545
  %3814 = vmatprep.subr.bf16.mxu0 %v2554
  %3815 = vmatpush1.bf16.msra.mxu0 %v2553
  %3816 = vmatprep.subr.bf16.mxu0 %v2562
  %3817 = vmatpush1.bf16.msra.mxu0 %v2561
  %3818 = vmatprep.subr.bf16.mxu0 %v2570
  %3819 = vmatpush1.bf16.msra.mxu0 %v2569
  %3820 = vmatprep.subr.bf16.mxu0 %v2578
  %3821 = vmatpush1.bf16.msra.mxu0 %v2577
  %3822 = vmatprep.subr.bf16.mxu0 %v2586
  %3823 = vmatpush1.bf16.msra.mxu0 %v2585
  %3824 = vmatprep.subr.bf16.mxu0 %v2594
  %3825 = vmatpush1.bf16.msra.mxu0 %v2593
  %3826 = vmatprep.subr.bf16.mxu0 %v2602
  %3827 = vmatpush1.bf16.msra.mxu0 %v2601
  %3828 = vmatprep.subr.bf16.mxu0 %v2610
  %3829 = vmatpush1.bf16.msra.mxu0 %v2609
  %3830 = vmatprep.subr.bf16.mxu0 %v2618
  %3831 = vmatpush1.bf16.msra.mxu0 %v2617
  %3832 = vmatprep.subr.bf16.mxu0 %v2626
  %3833 = vmatpush1.bf16.msra.mxu0 %v2625
  %3834 = vmatprep.subr.bf16.mxu0 %v2634
  %3835 = vmatpush1.bf16.msra.mxu0 %v2633
  %3836 = vmatprep.subr.bf16.mxu0 %v2642
  %3837 = vmatpush1.bf16.msra.mxu0 %v2641
  %3838 = vmatprep.subr.bf16.mxu0 %v2650
  %3839 = vmatpush1.bf16.msra.mxu0 %v2649
  %3840 = vmatprep.mubr.bf16.mxu0 %v48
  %3841 = vmatmul.mubr.bf16.gmra.mrb[0].mxu0 %v47
  %v3842 = vpop.f32.mrb[0].mxu0
  %v3843 = vadd.f32 %v3800, %v3842
  %v3844 = vpop.f32.mrb[0].mxu0
  %v3845 = vadd.f32 %v3802, %v3844
  %v3846 = vpop.f32.mrb[0].mxu0
  %v3847 = vadd.f32 %v3804, %v3846
  %v3848 = vpop.f32.mrb[0].mxu0
  %v3849 = vadd.f32 %v3806, %v3848
  %3850 = vdwg.mxu0
  %v3851 = vmax.f32 %v3327, 0.0
  %v3852 = vmax.f32 %v3329, 0.0
  %v3853 = vmax.f32 %v3499, 0.0
  %v3854 = vmax.f32 %v3501, 0.0
  %v3855 = vmax.f32 %v3671, 0.0
  %v3856 = vmax.f32 %v3673, 0.0
  %v3857 = vmax.f32 %v3843, 0.0
  %v3858 = vmax.f32 %v3845, 0.0
  %v3859 = vmax.f32 %v3331, 0.0
  %v3860 = vmax.f32 %v3333, 0.0
  %v3861 = vmax.f32 %v3503, 0.0
  %v3862 = vmax.f32 %v3505, 0.0
  %v3863 = vmax.f32 %v3675, 0.0
  %v3864 = vmax.f32 %v3677, 0.0
  %v3865 = vmax.f32 %v3847, 0.0
  %v3866 = vmax.f32 %v3849, 0.0
  %v3867 = vpack.c.bf16 %v3859, %v3851
  %v3868 = vpack.c.bf16 %v3860, %v3852
  %v3869 = vpack.c.bf16 %v3861, %v3853
  %v3870 = vpack.c.bf16 %v3862, %v3854
  %v3871 = vpack.c.bf16 %v3863, %v3855
  %v3872 = vpack.c.bf16 %v3864, %v3856
  %v3873 = vpack.c.bf16 %v3865, %v3857
  %v3874 = vpack.c.bf16 %v3866, %v3858
  %v3875 = vld [vmem:[%s3] sm:$0xff]
  %v3876 = vld [vmem:[%s3 + $0x8] sm:$0xff]
  %v3877 = vld [vmem:[%s3 + $0x10] sm:$0xff]
  %v3878 = vld [vmem:[%s3 + $0x18] sm:$0xff]
  %v3879 = vld [vmem:[%s3 + $0x20] sm:$0xff]
  %v3880 = vld [vmem:[%s3 + $0x28] sm:$0xff]
  %v3881 = vld [vmem:[%s3 + $0x30] sm:$0xff]
  %v3882 = vld [vmem:[%s3 + $0x38] sm:$0xff]
  %v3883 = vld [vmem:[%s3 + $0x40] sm:$0xff]
  %v3884 = vld [vmem:[%s3 + $0x48] sm:$0xff]
  %v3885 = vld [vmem:[%s3 + $0x50] sm:$0xff]
  %v3886 = vld [vmem:[%s3 + $0x58] sm:$0xff]
  %v3887 = vld [vmem:[%s3 + $0x60] sm:$0xff]
  %v3888 = vld [vmem:[%s3 + $0x68] sm:$0xff]
  %v3889 = vld [vmem:[%s3 + $0x70] sm:$0xff]
  %v3890 = vld [vmem:[%s3 + $0x78] sm:$0xff]
  %v3891 = vld [vmem:[%s3 + $0x80] sm:$0xff]
  %v3892 = vld [vmem:[%s3 + $0x88] sm:$0xff]
  %v3893 = vld [vmem:[%s3 + $0x90] sm:$0xff]
  %v3894 = vld [vmem:[%s3 + $0x98] sm:$0xff]
  %v3895 = vld [vmem:[%s3 + $0xa0] sm:$0xff]
  %v3896 = vld [vmem:[%s3 + $0xa8] sm:$0xff]
  %v3897 = vld [vmem:[%s3 + $0xb0] sm:$0xff]
  %v3898 = vld [vmem:[%s3 + $0xb8] sm:$0xff]
  %v3899 = vld [vmem:[%s3 + $0xc0] sm:$0xff]
  %v3900 = vld [vmem:[%s3 + $0xc8] sm:$0xff]
  %v3901 = vld [vmem:[%s3 + $0xd0] sm:$0xff]
  %v3902 = vld [vmem:[%s3 + $0xd8] sm:$0xff]
  %v3903 = vld [vmem:[%s3 + $0xe0] sm:$0xff]
  %v3904 = vld [vmem:[%s3 + $0xe8] sm:$0xff]
  %v3905 = vld [vmem:[%s3 + $0xf0] sm:$0xff]
  %v3906 = vld [vmem:[%s3 + $0xf8] sm:$0xff]
  %v3907 = vld [vmem:[%s3 + $0x100] sm:$0xff]
  %v3908 = vld [vmem:[%s3 + $0x108] sm:$0xff]
  %v3909 = vld [vmem:[%s3 + $0x110] sm:$0xff]
  %v3910 = vld [vmem:[%s3 + $0x118] sm:$0xff]
  %v3911 = vld [vmem:[%s3 + $0x120] sm:$0xff]
  %v3912 = vld [vmem:[%s3 + $0x128] sm:$0xff]
  %v3913 = vld [vmem:[%s3 + $0x130] sm:$0xff]
  %v3914 = vld [vmem:[%s3 + $0x138] sm:$0xff]
  %v3915 = vld [vmem:[%s3 + $0x140] sm:$0xff]
  %v3916 = vld [vmem:[%s3 + $0x148] sm:$0xff]
  %v3917 = vld [vmem:[%s3 + $0x150] sm:$0xff]
  %v3918 = vld [vmem:[%s3 + $0x158] sm:$0xff]
  %v3919 = vld [vmem:[%s3 + $0x160] sm:$0xff]
  %v3920 = vld [vmem:[%s3 + $0x168] sm:$0xff]
  %v3921 = vld [vmem:[%s3 + $0x170] sm:$0xff]
  %v3922 = vld [vmem:[%s3 + $0x178] sm:$0xff]
  %v3923 = vld [vmem:[%s3 + $0x180] sm:$0xff]
  %v3924 = vld [vmem:[%s3 + $0x188] sm:$0xff]
  %v3925 = vld [vmem:[%s3 + $0x190] sm:$0xff]
  %v3926 = vld [vmem:[%s3 + $0x198] sm:$0xff]
  %v3927 = vld [vmem:[%s3 + $0x1a0] sm:$0xff]
  %v3928 = vld [vmem:[%s3 + $0x1a8] sm:$0xff]
  %v3929 = vld [vmem:[%s3 + $0x1b0] sm:$0xff]
  %v3930 = vld [vmem:[%s3 + $0x1b8] sm:$0xff]
  %v3931 = vld [vmem:[%s3 + $0x1c0] sm:$0xff]
  %v3932 = vld [vmem:[%s3 + $0x1c8] sm:$0xff]
  %v3933 = vld [vmem:[%s3 + $0x1d0] sm:$0xff]
  %v3934 = vld [vmem:[%s3 + $0x1d8] sm:$0xff]
  %v3935 = vld [vmem:[%s3 + $0x1e0] sm:$0xff]
  %v3936 = vld [vmem:[%s3 + $0x1e8] sm:$0xff]
  %v3937 = vld [vmem:[%s3 + $0x1f0] sm:$0xff]
  %v3938 = vld [vmem:[%s3 + $0x1f8] sm:$0xff]
  %v3939 = vld [vmem:[%s3 + $0x200] sm:$0xff]
  %v3940 = vld [vmem:[%s3 + $0x208] sm:$0xff]
  %v3941 = vld [vmem:[%s3 + $0x210] sm:$0xff]
  %v3942 = vld [vmem:[%s3 + $0x218] sm:$0xff]
  %v3943 = vld [vmem:[%s3 + $0x220] sm:$0xff]
  %v3944 = vld [vmem:[%s3 + $0x228] sm:$0xff]
  %v3945 = vld [vmem:[%s3 + $0x230] sm:$0xff]
  %v3946 = vld [vmem:[%s3 + $0x238] sm:$0xff]
  %v3947 = vld [vmem:[%s3 + $0x240] sm:$0xff]
  %v3948 = vld [vmem:[%s3 + $0x248] sm:$0xff]
  %v3949 = vld [vmem:[%s3 + $0x250] sm:$0xff]
  %v3950 = vld [vmem:[%s3 + $0x258] sm:$0xff]
  %v3951 = vld [vmem:[%s3 + $0x260] sm:$0xff]
  %v3952 = vld [vmem:[%s3 + $0x268] sm:$0xff]
  %v3953 = vld [vmem:[%s3 + $0x270] sm:$0xff]
  %v3954 = vld [vmem:[%s3 + $0x278] sm:$0xff]
  %v3955 = vld [vmem:[%s3 + $0x280] sm:$0xff]
  %v3956 = vld [vmem:[%s3 + $0x288] sm:$0xff]
  %v3957 = vld [vmem:[%s3 + $0x290] sm:$0xff]
  %v3958 = vld [vmem:[%s3 + $0x298] sm:$0xff]
  %v3959 = vld [vmem:[%s3 + $0x2a0] sm:$0xff]
  %v3960 = vld [vmem:[%s3 + $0x2a8] sm:$0xff]
  %v3961 = vld [vmem:[%s3 + $0x2b0] sm:$0xff]
  %v3962 = vld [vmem:[%s3 + $0x2b8] sm:$0xff]
  %v3963 = vld [vmem:[%s3 + $0x2c0] sm:$0xff]
  %v3964 = vld [vmem:[%s3 + $0x2c8] sm:$0xff]
  %v3965 = vld [vmem:[%s3 + $0x2d0] sm:$0xff]
  %v3966 = vld [vmem:[%s3 + $0x2d8] sm:$0xff]
  %v3967 = vld [vmem:[%s3 + $0x2e0] sm:$0xff]
  %v3968 = vld [vmem:[%s3 + $0x2e8] sm:$0xff]
  %v3969 = vld [vmem:[%s3 + $0x2f0] sm:$0xff]
  %v3970 = vld [vmem:[%s3 + $0x2f8] sm:$0xff]
  %v3971 = vld [vmem:[%s3 + $0x300] sm:$0xff]
  %v3972 = vld [vmem:[%s3 + $0x308] sm:$0xff]
  %v3973 = vld [vmem:[%s3 + $0x310] sm:$0xff]
  %v3974 = vld [vmem:[%s3 + $0x318] sm:$0xff]
  %v3975 = vld [vmem:[%s3 + $0x320] sm:$0xff]
  %v3976 = vld [vmem:[%s3 + $0x328] sm:$0xff]
  %v3977 = vld [vmem:[%s3 + $0x330] sm:$0xff]
  %v3978 = vld [vmem:[%s3 + $0x338] sm:$0xff]
  %v3979 = vld [vmem:[%s3 + $0x340] sm:$0xff]
  %v3980 = vld [vmem:[%s3 + $0x348] sm:$0xff]
  %v3981 = vld [vmem:[%s3 + $0x350] sm:$0xff]
  %v3982 = vld [vmem:[%s3 + $0x358] sm:$0xff]
  %v3983 = vld [vmem:[%s3 + $0x360] sm:$0xff]
  %v3984 = vld [vmem:[%s3 + $0x368] sm:$0xff]
  %v3985 = vld [vmem:[%s3 + $0x370] sm:$0xff]
  %v3986 = vld [vmem:[%s3 + $0x378] sm:$0xff]
  %v3987 = vld [vmem:[%s3 + $0x380] sm:$0xff]
  %v3988 = vld [vmem:[%s3 + $0x388] sm:$0xff]
  %v3989 = vld [vmem:[%s3 + $0x390] sm:$0xff]
  %v3990 = vld [vmem:[%s3 + $0x398] sm:$0xff]
  %v3991 = vld [vmem:[%s3 + $0x3a0] sm:$0xff]
  %v3992 = vld [vmem:[%s3 + $0x3a8] sm:$0xff]
  %v3993 = vld [vmem:[%s3 + $0x3b0] sm:$0xff]
  %v3994 = vld [vmem:[%s3 + $0x3b8] sm:$0xff]
  %v3995 = vld [vmem:[%s3 + $0x3c0] sm:$0xff]
  %v3996 = vld [vmem:[%s3 + $0x3c8] sm:$0xff]
  %v3997 = vld [vmem:[%s3 + $0x3d0] sm:$0xff]
  %v3998 = vld [vmem:[%s3 + $0x3d8] sm:$0xff]
  %v3999 = vld [vmem:[%s3 + $0x3e0] sm:$0xff]
  %v4000 = vld [vmem:[%s3 + $0x3e8] sm:$0xff]
  %v4001 = vld [vmem:[%s3 + $0x3f0] sm:$0xff]
  %v4002 = vld [vmem:[%s3 + $0x3f8] sm:$0xff]
  %v4003 = vld [vmem:[%s3 + $0x400] sm:$0xff]
  %v4004 = vld [vmem:[%s3 + $0x408] sm:$0xff]
  %v4005 = vld [vmem:[%s3 + $0x410] sm:$0xff]
  %v4006 = vld [vmem:[%s3 + $0x418] sm:$0xff]
  %v4007 = vld [vmem:[%s3 + $0x420] sm:$0xff]
  %v4008 = vld [vmem:[%s3 + $0x428] sm:$0xff]
  %v4009 = vld [vmem:[%s3 + $0x430] sm:$0xff]
  %v4010 = vld [vmem:[%s3 + $0x438] sm:$0xff]
  %v4011 = vld [vmem:[%s3 + $0x440] sm:$0xff]
  %v4012 = vld [vmem:[%s3 + $0x448] sm:$0xff]
  %v4013 = vld [vmem:[%s3 + $0x450] sm:$0xff]
  %v4014 = vld [vmem:[%s3 + $0x458] sm:$0xff]
  %v4015 = vld [vmem:[%s3 + $0x460] sm:$0xff]
  %v4016 = vld [vmem:[%s3 + $0x468] sm:$0xff]
  %v4017 = vld [vmem:[%s3 + $0x470] sm:$0xff]
  %v4018 = vld [vmem:[%s3 + $0x478] sm:$0xff]
  %v4019 = vld [vmem:[%s3 + $0x480] sm:$0xff]
  %v4020 = vld [vmem:[%s3 + $0x488] sm:$0xff]
  %v4021 = vld [vmem:[%s3 + $0x490] sm:$0xff]
  %v4022 = vld [vmem:[%s3 + $0x498] sm:$0xff]
  %v4023 = vld [vmem:[%s3 + $0x4a0] sm:$0xff]
  %v4024 = vld [vmem:[%s3 + $0x4a8] sm:$0xff]
  %v4025 = vld [vmem:[%s3 + $0x4b0] sm:$0xff]
  %v4026 = vld [vmem:[%s3 + $0x4b8] sm:$0xff]
  %v4027 = vld [vmem:[%s3 + $0x4c0] sm:$0xff]
  %v4028 = vld [vmem:[%s3 + $0x4c8] sm:$0xff]
  %v4029 = vld [vmem:[%s3 + $0x4d0] sm:$0xff]
  %v4030 = vld [vmem:[%s3 + $0x4d8] sm:$0xff]
  %v4031 = vld [vmem:[%s3 + $0x4e0] sm:$0xff]
  %v4032 = vld [vmem:[%s3 + $0x4e8] sm:$0xff]
  %v4033 = vld [vmem:[%s3 + $0x4f0] sm:$0xff]
  %v4034 = vld [vmem:[%s3 + $0x4f8] sm:$0xff]
  %v4035 = vld [vmem:[%s3 + $0x500] sm:$0xff]
  %v4036 = vld [vmem:[%s3 + $0x508] sm:$0xff]
  %v4037 = vld [vmem:[%s3 + $0x510] sm:$0xff]
  %v4038 = vld [vmem:[%s3 + $0x518] sm:$0xff]
  %v4039 = vld [vmem:[%s3 + $0x520] sm:$0xff]
  %v4040 = vld [vmem:[%s3 + $0x528] sm:$0xff]
  %v4041 = vld [vmem:[%s3 + $0x530] sm:$0xff]
  %v4042 = vld [vmem:[%s3 + $0x538] sm:$0xff]
  %v4043 = vld [vmem:[%s3 + $0x540] sm:$0xff]
  %v4044 = vld [vmem:[%s3 + $0x548] sm:$0xff]
  %v4045 = vld [vmem:[%s3 + $0x550] sm:$0xff]
  %v4046 = vld [vmem:[%s3 + $0x558] sm:$0xff]
  %v4047 = vld [vmem:[%s3 + $0x560] sm:$0xff]
  %v4048 = vld [vmem:[%s3 + $0x568] sm:$0xff]
  %v4049 = vld [vmem:[%s3 + $0x570] sm:$0xff]
  %v4050 = vld [vmem:[%s3 + $0x578] sm:$0xff]
  %v4051 = vld [vmem:[%s3 + $0x580] sm:$0xff]
  %v4052 = vld [vmem:[%s3 + $0x588] sm:$0xff]
  %v4053 = vld [vmem:[%s3 + $0x590] sm:$0xff]
  %v4054 = vld [vmem:[%s3 + $0x598] sm:$0xff]
  %v4055 = vld [vmem:[%s3 + $0x5a0] sm:$0xff]
  %v4056 = vld [vmem:[%s3 + $0x5a8] sm:$0xff]
  %v4057 = vld [vmem:[%s3 + $0x5b0] sm:$0xff]
  %v4058 = vld [vmem:[%s3 + $0x5b8] sm:$0xff]
  %v4059 = vld [vmem:[%s3 + $0x5c0] sm:$0xff]
  %v4060 = vld [vmem:[%s3 + $0x5c8] sm:$0xff]
  %v4061 = vld [vmem:[%s3 + $0x5d0] sm:$0xff]
  %v4062 = vld [vmem:[%s3 + $0x5d8] sm:$0xff]
  %v4063 = vld [vmem:[%s3 + $0x5e0] sm:$0xff]
  %v4064 = vld [vmem:[%s3 + $0x5e8] sm:$0xff]
  %v4065 = vld [vmem:[%s3 + $0x5f0] sm:$0xff]
  %v4066 = vld [vmem:[%s3 + $0x5f8] sm:$0xff]
  %v4067 = vld [vmem:[%s3 + $0x600] sm:$0xff]
  %v4068 = vld [vmem:[%s3 + $0x608] sm:$0xff]
  %v4069 = vld [vmem:[%s3 + $0x610] sm:$0xff]
  %v4070 = vld [vmem:[%s3 + $0x618] sm:$0xff]
  %v4071 = vld [vmem:[%s3 + $0x620] sm:$0xff]
  %v4072 = vld [vmem:[%s3 + $0x628] sm:$0xff]
  %v4073 = vld [vmem:[%s3 + $0x630] sm:$0xff]
  %v4074 = vld [vmem:[%s3 + $0x638] sm:$0xff]
  %v4075 = vld [vmem:[%s3 + $0x640] sm:$0xff]
  %v4076 = vld [vmem:[%s3 + $0x648] sm:$0xff]
  %v4077 = vld [vmem:[%s3 + $0x650] sm:$0xff]
  %v4078 = vld [vmem:[%s3 + $0x658] sm:$0xff]
  %v4079 = vld [vmem:[%s3 + $0x660] sm:$0xff]
  %v4080 = vld [vmem:[%s3 + $0x668] sm:$0xff]
  %v4081 = vld [vmem:[%s3 + $0x670] sm:$0xff]
  %v4082 = vld [vmem:[%s3 + $0x678] sm:$0xff]
  %v4083 = vld [vmem:[%s3 + $0x680] sm:$0xff]
  %v4084 = vld [vmem:[%s3 + $0x688] sm:$0xff]
  %v4085 = vld [vmem:[%s3 + $0x690] sm:$0xff]
  %v4086 = vld [vmem:[%s3 + $0x698] sm:$0xff]
  %v4087 = vld [vmem:[%s3 + $0x6a0] sm:$0xff]
  %v4088 = vld [vmem:[%s3 + $0x6a8] sm:$0xff]
  %v4089 = vld [vmem:[%s3 + $0x6b0] sm:$0xff]
  %v4090 = vld [vmem:[%s3 + $0x6b8] sm:$0xff]
  %v4091 = vld [vmem:[%s3 + $0x6c0] sm:$0xff]
  %v4092 = vld [vmem:[%s3 + $0x6c8] sm:$0xff]
  %v4093 = vld [vmem:[%s3 + $0x6d0] sm:$0xff]
  %v4094 = vld [vmem:[%s3 + $0x6d8] sm:$0xff]
  %v4095 = vld [vmem:[%s3 + $0x6e0] sm:$0xff]
  %v4096 = vld [vmem:[%s3 + $0x6e8] sm:$0xff]
  %v4097 = vld [vmem:[%s3 + $0x6f0] sm:$0xff]
  %v4098 = vld [vmem:[%s3 + $0x6f8] sm:$0xff]
  %v4099 = vld [vmem:[%s3 + $0x700] sm:$0xff]
  %v4100 = vld [vmem:[%s3 + $0x708] sm:$0xff]
  %v4101 = vld [vmem:[%s3 + $0x710] sm:$0xff]
  %v4102 = vld [vmem:[%s3 + $0x718] sm:$0xff]
  %v4103 = vld [vmem:[%s3 + $0x720] sm:$0xff]
  %v4104 = vld [vmem:[%s3 + $0x728] sm:$0xff]
  %v4105 = vld [vmem:[%s3 + $0x730] sm:$0xff]
  %v4106 = vld [vmem:[%s3 + $0x738] sm:$0xff]
  %v4107 = vld [vmem:[%s3 + $0x740] sm:$0xff]
  %v4108 = vld [vmem:[%s3 + $0x748] sm:$0xff]
  %v4109 = vld [vmem:[%s3 + $0x750] sm:$0xff]
  %v4110 = vld [vmem:[%s3 + $0x758] sm:$0xff]
  %v4111 = vld [vmem:[%s3 + $0x760] sm:$0xff]
  %v4112 = vld [vmem:[%s3 + $0x768] sm:$0xff]
  %v4113 = vld [vmem:[%s3 + $0x770] sm:$0xff]
  %v4114 = vld [vmem:[%s3 + $0x778] sm:$0xff]
  %v4115 = vld [vmem:[%s3 + $0x780] sm:$0xff]
  %v4116 = vld [vmem:[%s3 + $0x788] sm:$0xff]
  %v4117 = vld [vmem:[%s3 + $0x790] sm:$0xff]
  %v4118 = vld [vmem:[%s3 + $0x798] sm:$0xff]
  %v4119 = vld [vmem:[%s3 + $0x7a0] sm:$0xff]
  %v4120 = vld [vmem:[%s3 + $0x7a8] sm:$0xff]
  %v4121 = vld [vmem:[%s3 + $0x7b0] sm:$0xff]
  %v4122 = vld [vmem:[%s3 + $0x7b8] sm:$0xff]
  %v4123 = vld [vmem:[%s3 + $0x7c0] sm:$0xff]
  %v4124 = vld [vmem:[%s3 + $0x7c8] sm:$0xff]
  %v4125 = vld [vmem:[%s3 + $0x7d0] sm:$0xff]
  %v4126 = vld [vmem:[%s3 + $0x7d8] sm:$0xff]
  %v4127 = vld [vmem:[%s3 + $0x7e0] sm:$0xff]
  %v4128 = vld [vmem:[%s3 + $0x7e8] sm:$0xff]
  %v4129 = vld [vmem:[%s3 + $0x7f0] sm:$0xff]
  %v4130 = vld [vmem:[%s3 + $0x7f8] sm:$0xff]
  %v4131 = vld [vmem:[%s3 + $0x800] sm:$0xff]
  %v4132 = vld [vmem:[%s3 + $0x808] sm:$0xff]
  %v4133 = vld [vmem:[%s3 + $0x810] sm:$0xff]
  %v4134 = vld [vmem:[%s3 + $0x818] sm:$0xff]
  %v4135 = vld [vmem:[%s3 + $0x820] sm:$0xff]
  %v4136 = vld [vmem:[%s3 + $0x828] sm:$0xff]
  %v4137 = vld [vmem:[%s3 + $0x830] sm:$0xff]
  %v4138 = vld [vmem:[%s3 + $0x838] sm:$0xff]
  %v4139 = vld [vmem:[%s3 + $0x840] sm:$0xff]
  %v4140 = vld [vmem:[%s3 + $0x848] sm:$0xff]
  %v4141 = vld [vmem:[%s3 + $0x850] sm:$0xff]
  %v4142 = vld [vmem:[%s3 + $0x858] sm:$0xff]
  %v4143 = vld [vmem:[%s3 + $0x860] sm:$0xff]
  %v4144 = vld [vmem:[%s3 + $0x868] sm:$0xff]
  %v4145 = vld [vmem:[%s3 + $0x870] sm:$0xff]
  %v4146 = vld [vmem:[%s3 + $0x878] sm:$0xff]
  %v4147 = vld [vmem:[%s3 + $0x880] sm:$0xff]
  %v4148 = vld [vmem:[%s3 + $0x888] sm:$0xff]
  %v4149 = vld [vmem:[%s3 + $0x890] sm:$0xff]
  %v4150 = vld [vmem:[%s3 + $0x898] sm:$0xff]
  %v4151 = vld [vmem:[%s3 + $0x8a0] sm:$0xff]
  %v4152 = vld [vmem:[%s3 + $0x8a8] sm:$0xff]
  %v4153 = vld [vmem:[%s3 + $0x8b0] sm:$0xff]
  %v4154 = vld [vmem:[%s3 + $0x8b8] sm:$0xff]
  %v4155 = vld [vmem:[%s3 + $0x8c0] sm:$0xff]
  %v4156 = vld [vmem:[%s3 + $0x8c8] sm:$0xff]
  %v4157 = vld [vmem:[%s3 + $0x8d0] sm:$0xff]
  %v4158 = vld [vmem:[%s3 + $0x8d8] sm:$0xff]
  %v4159 = vld [vmem:[%s3 + $0x8e0] sm:$0xff]
  %v4160 = vld [vmem:[%s3 + $0x8e8] sm:$0xff]
  %v4161 = vld [vmem:[%s3 + $0x8f0] sm:$0xff]
  %v4162 = vld [vmem:[%s3 + $0x8f8] sm:$0xff]
  %v4163 = vld [vmem:[%s3 + $0x900] sm:$0xff]
  %v4164 = vld [vmem:[%s3 + $0x908] sm:$0xff]
  %v4165 = vld [vmem:[%s3 + $0x910] sm:$0xff]
  %v4166 = vld [vmem:[%s3 + $0x918] sm:$0xff]
  %v4167 = vld [vmem:[%s3 + $0x920] sm:$0xff]
  %v4168 = vld [vmem:[%s3 + $0x928] sm:$0xff]
  %v4169 = vld [vmem:[%s3 + $0x930] sm:$0xff]
  %v4170 = vld [vmem:[%s3 + $0x938] sm:$0xff]
  %v4171 = vld [vmem:[%s3 + $0x940] sm:$0xff]
  %v4172 = vld [vmem:[%s3 + $0x948] sm:$0xff]
  %v4173 = vld [vmem:[%s3 + $0x950] sm:$0xff]
  %v4174 = vld [vmem:[%s3 + $0x958] sm:$0xff]
  %v4175 = vld [vmem:[%s3 + $0x960] sm:$0xff]
  %v4176 = vld [vmem:[%s3 + $0x968] sm:$0xff]
  %v4177 = vld [vmem:[%s3 + $0x970] sm:$0xff]
  %v4178 = vld [vmem:[%s3 + $0x978] sm:$0xff]
  %v4179 = vld [vmem:[%s3 + $0x980] sm:$0xff]
  %v4180 = vld [vmem:[%s3 + $0x988] sm:$0xff]
  %v4181 = vld [vmem:[%s3 + $0x990] sm:$0xff]
  %v4182 = vld [vmem:[%s3 + $0x998] sm:$0xff]
  %v4183 = vld [vmem:[%s3 + $0x9a0] sm:$0xff]
  %v4184 = vld [vmem:[%s3 + $0x9a8] sm:$0xff]
  %v4185 = vld [vmem:[%s3 + $0x9b0] sm:$0xff]
  %v4186 = vld [vmem:[%s3 + $0x9b8] sm:$0xff]
  %v4187 = vld [vmem:[%s3 + $0x9c0] sm:$0xff]
  %v4188 = vld [vmem:[%s3 + $0x9c8] sm:$0xff]
  %v4189 = vld [vmem:[%s3 + $0x9d0] sm:$0xff]
  %v4190 = vld [vmem:[%s3 + $0x9d8] sm:$0xff]
  %v4191 = vld [vmem:[%s3 + $0x9e0] sm:$0xff]
  %v4192 = vld [vmem:[%s3 + $0x9e8] sm:$0xff]
  %v4193 = vld [vmem:[%s3 + $0x9f0] sm:$0xff]
  %v4194 = vld [vmem:[%s3 + $0x9f8] sm:$0xff]
  %v4195 = vld [vmem:[%s3 + $0xa00] sm:$0xff]
  %v4196 = vld [vmem:[%s3 + $0xa08] sm:$0xff]
  %v4197 = vld [vmem:[%s3 + $0xa10] sm:$0xff]
  %v4198 = vld [vmem:[%s3 + $0xa18] sm:$0xff]
  %v4199 = vld [vmem:[%s3 + $0xa20] sm:$0xff]
  %v4200 = vld [vmem:[%s3 + $0xa28] sm:$0xff]
  %v4201 = vld [vmem:[%s3 + $0xa30] sm:$0xff]
  %v4202 = vld [vmem:[%s3 + $0xa38] sm:$0xff]
  %v4203 = vld [vmem:[%s3 + $0xa40] sm:$0xff]
  %v4204 = vld [vmem:[%s3 + $0xa48] sm:$0xff]
  %v4205 = vld [vmem:[%s3 + $0xa50] sm:$0xff]
  %v4206 = vld [vmem:[%s3 + $0xa58] sm:$0xff]
  %v4207 = vld [vmem:[%s3 + $0xa60] sm:$0xff]
  %v4208 = vld [vmem:[%s3 + $0xa68] sm:$0xff]
  %v4209 = vld [vmem:[%s3 + $0xa70] sm:$0xff]
  %v4210 = vld [vmem:[%s3 + $0xa78] sm:$0xff]
  %v4211 = vld [vmem:[%s3 + $0xa80] sm:$0xff]
  %v4212 = vld [vmem:[%s3 + $0xa88] sm:$0xff]
  %v4213 = vld [vmem:[%s3 + $0xa90] sm:$0xff]
  %v4214 = vld [vmem:[%s3 + $0xa98] sm:$0xff]
  %v4215 = vld [vmem:[%s3 + $0xaa0] sm:$0xff]
  %v4216 = vld [vmem:[%s3 + $0xaa8] sm:$0xff]
  %v4217 = vld [vmem:[%s3 + $0xab0] sm:$0xff]
  %v4218 = vld [vmem:[%s3 + $0xab8] sm:$0xff]
  %v4219 = vld [vmem:[%s3 + $0xac0] sm:$0xff]
  %v4220 = vld [vmem:[%s3 + $0xac8] sm:$0xff]
  %v4221 = vld [vmem:[%s3 + $0xad0] sm:$0xff]
  %v4222 = vld [vmem:[%s3 + $0xad8] sm:$0xff]
  %v4223 = vld [vmem:[%s3 + $0xae0] sm:$0xff]
  %v4224 = vld [vmem:[%s3 + $0xae8] sm:$0xff]
  %v4225 = vld [vmem:[%s3 + $0xaf0] sm:$0xff]
  %v4226 = vld [vmem:[%s3 + $0xaf8] sm:$0xff]
  %v4227 = vld [vmem:[%s3 + $0xb00] sm:$0xff]
  %v4228 = vld [vmem:[%s3 + $0xb08] sm:$0xff]
  %v4229 = vld [vmem:[%s3 + $0xb10] sm:$0xff]
  %v4230 = vld [vmem:[%s3 + $0xb18] sm:$0xff]
  %v4231 = vld [vmem:[%s3 + $0xb20] sm:$0xff]
  %v4232 = vld [vmem:[%s3 + $0xb28] sm:$0xff]
  %v4233 = vld [vmem:[%s3 + $0xb30] sm:$0xff]
  %v4234 = vld [vmem:[%s3 + $0xb38] sm:$0xff]
  %v4235 = vld [vmem:[%s3 + $0xb40] sm:$0xff]
  %v4236 = vld [vmem:[%s3 + $0xb48] sm:$0xff]
  %v4237 = vld [vmem:[%s3 + $0xb50] sm:$0xff]
  %v4238 = vld [vmem:[%s3 + $0xb58] sm:$0xff]
  %v4239 = vld [vmem:[%s3 + $0xb60] sm:$0xff]
  %v4240 = vld [vmem:[%s3 + $0xb68] sm:$0xff]
  %v4241 = vld [vmem:[%s3 + $0xb70] sm:$0xff]
  %v4242 = vld [vmem:[%s3 + $0xb78] sm:$0xff]
  %v4243 = vld [vmem:[%s3 + $0xb80] sm:$0xff]
  %v4244 = vld [vmem:[%s3 + $0xb88] sm:$0xff]
  %v4245 = vld [vmem:[%s3 + $0xb90] sm:$0xff]
  %v4246 = vld [vmem:[%s3 + $0xb98] sm:$0xff]
  %v4247 = vld [vmem:[%s3 + $0xba0] sm:$0xff]
  %v4248 = vld [vmem:[%s3 + $0xba8] sm:$0xff]
  %v4249 = vld [vmem:[%s3 + $0xbb0] sm:$0xff]
  %v4250 = vld [vmem:[%s3 + $0xbb8] sm:$0xff]
  %v4251 = vld [vmem:[%s3 + $0xbc0] sm:$0xff]
  %v4252 = vld [vmem:[%s3 + $0xbc8] sm:$0xff]
  %v4253 = vld [vmem:[%s3 + $0xbd0] sm:$0xff]
  %v4254 = vld [vmem:[%s3 + $0xbd8] sm:$0xff]
  %v4255 = vld [vmem:[%s3 + $0xbe0] sm:$0xff]
  %v4256 = vld [vmem:[%s3 + $0xbe8] sm:$0xff]
  %v4257 = vld [vmem:[%s3 + $0xbf0] sm:$0xff]
  %v4258 = vld [vmem:[%s3 + $0xbf8] sm:$0xff]
  %v4259 = vld [vmem:[%s3 + $0xc00] sm:$0xff]
  %v4260 = vld [vmem:[%s3 + $0xc08] sm:$0xff]
  %v4261 = vld [vmem:[%s3 + $0xc10] sm:$0xff]
  %v4262 = vld [vmem:[%s3 + $0xc18] sm:$0xff]
  %v4263 = vld [vmem:[%s3 + $0xc20] sm:$0xff]
  %v4264 = vld [vmem:[%s3 + $0xc28] sm:$0xff]
  %v4265 = vld [vmem:[%s3 + $0xc30] sm:$0xff]
  %v4266 = vld [vmem:[%s3 + $0xc38] sm:$0xff]
  %v4267 = vld [vmem:[%s3 + $0xc40] sm:$0xff]
  %v4268 = vld [vmem:[%s3 + $0xc48] sm:$0xff]
  %v4269 = vld [vmem:[%s3 + $0xc50] sm:$0xff]
  %v4270 = vld [vmem:[%s3 + $0xc58] sm:$0xff]
  %v4271 = vld [vmem:[%s3 + $0xc60] sm:$0xff]
  %v4272 = vld [vmem:[%s3 + $0xc68] sm:$0xff]
  %v4273 = vld [vmem:[%s3 + $0xc70] sm:$0xff]
  %v4274 = vld [vmem:[%s3 + $0xc78] sm:$0xff]
  %v4275 = vld [vmem:[%s3 + $0xc80] sm:$0xff]
  %v4276 = vld [vmem:[%s3 + $0xc88] sm:$0xff]
  %v4277 = vld [vmem:[%s3 + $0xc90] sm:$0xff]
  %v4278 = vld [vmem:[%s3 + $0xc98] sm:$0xff]
  %v4279 = vld [vmem:[%s3 + $0xca0] sm:$0xff]
  %v4280 = vld [vmem:[%s3 + $0xca8] sm:$0xff]
  %v4281 = vld [vmem:[%s3 + $0xcb0] sm:$0xff]
  %v4282 = vld [vmem:[%s3 + $0xcb8] sm:$0xff]
  %v4283 = vld [vmem:[%s3 + $0xcc0] sm:$0xff]
  %v4284 = vld [vmem:[%s3 + $0xcc8] sm:$0xff]
  %v4285 = vld [vmem:[%s3 + $0xcd0] sm:$0xff]
  %v4286 = vld [vmem:[%s3 + $0xcd8] sm:$0xff]
  %v4287 = vld [vmem:[%s3 + $0xce0] sm:$0xff]
  %v4288 = vld [vmem:[%s3 + $0xce8] sm:$0xff]
  %v4289 = vld [vmem:[%s3 + $0xcf0] sm:$0xff]
  %v4290 = vld [vmem:[%s3 + $0xcf8] sm:$0xff]
  %v4291 = vld [vmem:[%s3 + $0xd00] sm:$0xff]
  %v4292 = vld [vmem:[%s3 + $0xd08] sm:$0xff]
  %v4293 = vld [vmem:[%s3 + $0xd10] sm:$0xff]
  %v4294 = vld [vmem:[%s3 + $0xd18] sm:$0xff]
  %v4295 = vld [vmem:[%s3 + $0xd20] sm:$0xff]
  %v4296 = vld [vmem:[%s3 + $0xd28] sm:$0xff]
  %v4297 = vld [vmem:[%s3 + $0xd30] sm:$0xff]
  %v4298 = vld [vmem:[%s3 + $0xd38] sm:$0xff]
  %v4299 = vld [vmem:[%s3 + $0xd40] sm:$0xff]
  %v4300 = vld [vmem:[%s3 + $0xd48] sm:$0xff]
  %v4301 = vld [vmem:[%s3 + $0xd50] sm:$0xff]
  %v4302 = vld [vmem:[%s3 + $0xd58] sm:$0xff]
  %v4303 = vld [vmem:[%s3 + $0xd60] sm:$0xff]
  %v4304 = vld [vmem:[%s3 + $0xd68] sm:$0xff]
  %v4305 = vld [vmem:[%s3 + $0xd70] sm:$0xff]
  %v4306 = vld [vmem:[%s3 + $0xd78] sm:$0xff]
  %v4307 = vld [vmem:[%s3 + $0xd80] sm:$0xff]
  %v4308 = vld [vmem:[%s3 + $0xd88] sm:$0xff]
  %v4309 = vld [vmem:[%s3 + $0xd90] sm:$0xff]
  %v4310 = vld [vmem:[%s3 + $0xd98] sm:$0xff]
  %v4311 = vld [vmem:[%s3 + $0xda0] sm:$0xff]
  %v4312 = vld [vmem:[%s3 + $0xda8] sm:$0xff]
  %v4313 = vld [vmem:[%s3 + $0xdb0] sm:$0xff]
  %v4314 = vld [vmem:[%s3 + $0xdb8] sm:$0xff]
  %v4315 = vld [vmem:[%s3 + $0xdc0] sm:$0xff]
  %v4316 = vld [vmem:[%s3 + $0xdc8] sm:$0xff]
  %v4317 = vld [vmem:[%s3 + $0xdd0] sm:$0xff]
  %v4318 = vld [vmem:[%s3 + $0xdd8] sm:$0xff]
  %v4319 = vld [vmem:[%s3 + $0xde0] sm:$0xff]
  %v4320 = vld [vmem:[%s3 + $0xde8] sm:$0xff]
  %v4321 = vld [vmem:[%s3 + $0xdf0] sm:$0xff]
  %v4322 = vld [vmem:[%s3 + $0xdf8] sm:$0xff]
  %v4323 = vld [vmem:[%s3 + $0xe00] sm:$0xff]
  %v4324 = vld [vmem:[%s3 + $0xe08] sm:$0xff]
  %v4325 = vld [vmem:[%s3 + $0xe10] sm:$0xff]
  %v4326 = vld [vmem:[%s3 + $0xe18] sm:$0xff]
  %v4327 = vld [vmem:[%s3 + $0xe20] sm:$0xff]
  %v4328 = vld [vmem:[%s3 + $0xe28] sm:$0xff]
  %v4329 = vld [vmem:[%s3 + $0xe30] sm:$0xff]
  %v4330 = vld [vmem:[%s3 + $0xe38] sm:$0xff]
  %v4331 = vld [vmem:[%s3 + $0xe40] sm:$0xff]
  %v4332 = vld [vmem:[%s3 + $0xe48] sm:$0xff]
  %v4333 = vld [vmem:[%s3 + $0xe50] sm:$0xff]
  %v4334 = vld [vmem:[%s3 + $0xe58] sm:$0xff]
  %v4335 = vld [vmem:[%s3 + $0xe60] sm:$0xff]
  %v4336 = vld [vmem:[%s3 + $0xe68] sm:$0xff]
  %v4337 = vld [vmem:[%s3 + $0xe70] sm:$0xff]
  %v4338 = vld [vmem:[%s3 + $0xe78] sm:$0xff]
  %v4339 = vld [vmem:[%s3 + $0xe80] sm:$0xff]
  %v4340 = vld [vmem:[%s3 + $0xe88] sm:$0xff]
  %v4341 = vld [vmem:[%s3 + $0xe90] sm:$0xff]
  %v4342 = vld [vmem:[%s3 + $0xe98] sm:$0xff]
  %v4343 = vld [vmem:[%s3 + $0xea0] sm:$0xff]
  %v4344 = vld [vmem:[%s3 + $0xea8] sm:$0xff]
  %v4345 = vld [vmem:[%s3 + $0xeb0] sm:$0xff]
  %v4346 = vld [vmem:[%s3 + $0xeb8] sm:$0xff]
  %v4347 = vld [vmem:[%s3 + $0xec0] sm:$0xff]
  %v4348 = vld [vmem:[%s3 + $0xec8] sm:$0xff]
  %v4349 = vld [vmem:[%s3 + $0xed0] sm:$0xff]
  %v4350 = vld [vmem:[%s3 + $0xed8] sm:$0xff]
  %v4351 = vld [vmem:[%s3 + $0xee0] sm:$0xff]
  %v4352 = vld [vmem:[%s3 + $0xee8] sm:$0xff]
  %v4353 = vld [vmem:[%s3 + $0xef0] sm:$0xff]
  %v4354 = vld [vmem:[%s3 + $0xef8] sm:$0xff]
  %v4355 = vld [vmem:[%s3 + $0xf00] sm:$0xff]
  %v4356 = vld [vmem:[%s3 + $0xf08] sm:$0xff]
  %v4357 = vld [vmem:[%s3 + $0xf10] sm:$0xff]
  %v4358 = vld [vmem:[%s3 + $0xf18] sm:$0xff]
  %v4359 = vld [vmem:[%s3 + $0xf20] sm:$0xff]
  %v4360 = vld [vmem:[%s3 + $0xf28] sm:$0xff]
  %v4361 = vld [vmem:[%s3 + $0xf30] sm:$0xff]
  %v4362 = vld [vmem:[%s3 + $0xf38] sm:$0xff]
  %v4363 = vld [vmem:[%s3 + $0xf40] sm:$0xff]
  %v4364 = vld [vmem:[%s3 + $0xf48] sm:$0xff]
  %v4365 = vld [vmem:[%s3 + $0xf50] sm:$0xff]
  %v4366 = vld [vmem:[%s3 + $0xf58] sm:$0xff]
  %v4367 = vld [vmem:[%s3 + $0xf60] sm:$0xff]
  %v4368 = vld [vmem:[%s3 + $0xf68] sm:$0xff]
  %v4369 = vld [vmem:[%s3 + $0xf70] sm:$0xff]
  %v4370 = vld [vmem:[%s3 + $0xf78] sm:$0xff]
  %v4371 = vld [vmem:[%s3 + $0xf80] sm:$0xff]
  %v4372 = vld [vmem:[%s3 + $0xf88] sm:$0xff]
  %v4373 = vld [vmem:[%s3 + $0xf90] sm:$0xff]
  %v4374 = vld [vmem:[%s3 + $0xf98] sm:$0xff]
  %v4375 = vld [vmem:[%s3 + $0xfa0] sm:$0xff]
  %v4376 = vld [vmem:[%s3 + $0xfa8] sm:$0xff]
  %v4377 = vld [vmem:[%s3 + $0xfb0] sm:$0xff]
  %v4378 = vld [vmem:[%s3 + $0xfb8] sm:$0xff]
  %v4379 = vld [vmem:[%s3 + $0xfc0] sm:$0xff]
  %v4380 = vld [vmem:[%s3 + $0xfc8] sm:$0xff]
  %v4381 = vld [vmem:[%s3 + $0xfd0] sm:$0xff]
  %v4382 = vld [vmem:[%s3 + $0xfd8] sm:$0xff]
  %v4383 = vld [vmem:[%s3 + $0xfe0] sm:$0xff]
  %v4384 = vld [vmem:[%s3 + $0xfe8] sm:$0xff]
  %v4385 = vld [vmem:[%s3 + $0xff0] sm:$0xff]
  %v4386 = vld [vmem:[%s3 + $0xff8] sm:$0xff]
  %v4387 = vld [vmem:[%s4] sm:$0xff]
  %v4389 = vlaneseq
  %v4390 = vshrl.u32 %v4389, 7
  %v4391 = vsub.s32 0, %v4390
  %v4392 = vrot.slane %v4387, %v4391
  %v4393 = vlaneseq
  %v4394 = vshrl.u32 %v4393, 7
  %v4395 = vsub.s32 1, %v4394
  %v4396 = vrot.slane %v4387, %v4395
  %v4397 = vlaneseq
  %v4398 = vshrl.u32 %v4397, 7
  %v4399 = vsub.s32 2, %v4398
  %v4400 = vrot.slane %v4387, %v4399
  %v4401 = vlaneseq
  %v4402 = vshrl.u32 %v4401, 7
  %v4403 = vsub.s32 3, %v4402
  %v4404 = vrot.slane %v4387, %v4403
  %v4405 = vlaneseq
  %v4406 = vshrl.u32 %v4405, 7
  %v4407 = vsub.s32 4, %v4406
  %v4408 = vrot.slane %v4387, %v4407
  %v4409 = vlaneseq
  %v4410 = vshrl.u32 %v4409, 7
  %v4411 = vsub.s32 5, %v4410
  %v4412 = vrot.slane %v4387, %v4411
  %v4413 = vlaneseq
  %v4414 = vshrl.u32 %v4413, 7
  %v4415 = vsub.s32 6, %v4414
  %v4416 = vrot.slane %v4387, %v4415
  %v4417 = vlaneseq
  %v4418 = vshrl.u32 %v4417, 7
  %v4419 = vsub.s32 7, %v4418
  %v4420 = vrot.slane %v4387, %v4419
  %v4941 = vunpack.c.l.b16 %v3875
  %v4942 = vunpack.c.h.b16 %v3875
  %v4943 = vunpack.c.l.b16 %v3876
  %v4944 = vunpack.c.h.b16 %v3876
  %v4945 = vunpack.c.l.b16 %v3877
  %v4946 = vunpack.c.h.b16 %v3877
  %v4947 = vunpack.c.l.b16 %v3878
  %v4948 = vunpack.c.h.b16 %v3878
  %v4949 = vunpack.c.l.b16 %v3879
  %v4950 = vunpack.c.h.b16 %v3879
  %v4951 = vunpack.c.l.b16 %v3880
  %v4952 = vunpack.c.h.b16 %v3880
  %v4953 = vunpack.c.l.b16 %v3881
  %v4954 = vunpack.c.h.b16 %v3881
  %v4955 = vunpack.c.l.b16 %v3882
  %v4956 = vunpack.c.h.b16 %v3882
  %v4957 = vunpack.c.l.b16 %v3883
  %v4958 = vunpack.c.h.b16 %v3883
  %v4959 = vunpack.c.l.b16 %v3884
  %v4960 = vunpack.c.h.b16 %v3884
  %v4961 = vunpack.c.l.b16 %v3885
  %v4962 = vunpack.c.h.b16 %v3885
  %v4963 = vunpack.c.l.b16 %v3886
  %v4964 = vunpack.c.h.b16 %v3886
  %v4965 = vunpack.c.l.b16 %v3887
  %v4966 = vunpack.c.h.b16 %v3887
  %v4967 = vunpack.c.l.b16 %v3888
  %v4968 = vunpack.c.h.b16 %v3888
  %v4969 = vunpack.c.l.b16 %v3889
  %v4970 = vunpack.c.h.b16 %v3889
  %v4971 = vunpack.c.l.b16 %v3890
  %v4972 = vunpack.c.h.b16 %v3890
  %v4973 = vunpack.c.l.b16 %v3891
  %v4974 = vunpack.c.h.b16 %v3891
  %v4975 = vunpack.c.l.b16 %v3892
  %v4976 = vunpack.c.h.b16 %v3892
  %v4977 = vunpack.c.l.b16 %v3893
  %v4978 = vunpack.c.h.b16 %v3893
  %v4979 = vunpack.c.l.b16 %v3894
  %v4980 = vunpack.c.h.b16 %v3894
  %v4981 = vunpack.c.l.b16 %v3895
  %v4982 = vunpack.c.h.b16 %v3895
  %v4983 = vunpack.c.l.b16 %v3896
  %v4984 = vunpack.c.h.b16 %v3896
  %v4985 = vunpack.c.l.b16 %v3897
  %v4986 = vunpack.c.h.b16 %v3897
  %v4987 = vunpack.c.l.b16 %v3898
  %v4988 = vunpack.c.h.b16 %v3898
  %v4989 = vunpack.c.l.b16 %v3899
  %v4990 = vunpack.c.h.b16 %v3899
  %v4991 = vunpack.c.l.b16 %v3900
  %v4992 = vunpack.c.h.b16 %v3900
  %v4993 = vunpack.c.l.b16 %v3901
  %v4994 = vunpack.c.h.b16 %v3901
  %v4995 = vunpack.c.l.b16 %v3902
  %v4996 = vunpack.c.h.b16 %v3902
  %v4997 = vunpack.c.l.b16 %v3903
  %v4998 = vunpack.c.h.b16 %v3903
  %v4999 = vunpack.c.l.b16 %v3904
  %v5000 = vunpack.c.h.b16 %v3904
  %v5001 = vunpack.c.l.b16 %v3905
  %v5002 = vunpack.c.h.b16 %v3905
  %v5003 = vunpack.c.l.b16 %v3906
  %v5004 = vunpack.c.h.b16 %v3906
  %v5005 = vunpack.c.l.b16 %v3907
  %v5006 = vunpack.c.h.b16 %v3907
  %v5007 = vunpack.c.l.b16 %v3908
  %v5008 = vunpack.c.h.b16 %v3908
  %v5009 = vunpack.c.l.b16 %v3909
  %v5010 = vunpack.c.h.b16 %v3909
  %v5011 = vunpack.c.l.b16 %v3910
  %v5012 = vunpack.c.h.b16 %v3910
  %v5013 = vunpack.c.l.b16 %v3911
  %v5014 = vunpack.c.h.b16 %v3911
  %v5015 = vunpack.c.l.b16 %v3912
  %v5016 = vunpack.c.h.b16 %v3912
  %v5017 = vunpack.c.l.b16 %v3913
  %v5018 = vunpack.c.h.b16 %v3913
  %v5019 = vunpack.c.l.b16 %v3914
  %v5020 = vunpack.c.h.b16 %v3914
  %v5021 = vunpack.c.l.b16 %v3915
  %v5022 = vunpack.c.h.b16 %v3915
  %v5023 = vunpack.c.l.b16 %v3916
  %v5024 = vunpack.c.h.b16 %v3916
  %v5025 = vunpack.c.l.b16 %v3917
  %v5026 = vunpack.c.h.b16 %v3917
  %v5027 = vunpack.c.l.b16 %v3918
  %v5028 = vunpack.c.h.b16 %v3918
  %v5029 = vunpack.c.l.b16 %v3919
  %v5030 = vunpack.c.h.b16 %v3919
  %v5031 = vunpack.c.l.b16 %v3920
  %v5032 = vunpack.c.h.b16 %v3920
  %v5033 = vunpack.c.l.b16 %v3921
  %v5034 = vunpack.c.h.b16 %v3921
  %v5035 = vunpack.c.l.b16 %v3922
  %v5036 = vunpack.c.h.b16 %v3922
  %v5037 = vunpack.c.l.b16 %v3923
  %v5038 = vunpack.c.h.b16 %v3923
  %v5039 = vunpack.c.l.b16 %v3924
  %v5040 = vunpack.c.h.b16 %v3924
  %v5041 = vunpack.c.l.b16 %v3925
  %v5042 = vunpack.c.h.b16 %v3925
  %v5043 = vunpack.c.l.b16 %v3926
  %v5044 = vunpack.c.h.b16 %v3926
  %v5045 = vunpack.c.l.b16 %v3927
  %v5046 = vunpack.c.h.b16 %v3927
  %v5047 = vunpack.c.l.b16 %v3928
  %v5048 = vunpack.c.h.b16 %v3928
  %v5049 = vunpack.c.l.b16 %v3929
  %v5050 = vunpack.c.h.b16 %v3929
  %v5051 = vunpack.c.l.b16 %v3930
  %v5052 = vunpack.c.h.b16 %v3930
  %v5053 = vunpack.c.l.b16 %v3931
  %v5054 = vunpack.c.h.b16 %v3931
  %v5055 = vunpack.c.l.b16 %v3932
  %v5056 = vunpack.c.h.b16 %v3932
  %v5057 = vunpack.c.l.b16 %v3933
  %v5058 = vunpack.c.h.b16 %v3933
  %v5059 = vunpack.c.l.b16 %v3934
  %v5060 = vunpack.c.h.b16 %v3934
  %v5061 = vunpack.c.l.b16 %v3935
  %v5062 = vunpack.c.h.b16 %v3935
  %v5063 = vunpack.c.l.b16 %v3936
  %v5064 = vunpack.c.h.b16 %v3936
  %v5065 = vunpack.c.l.b16 %v3937
  %v5066 = vunpack.c.h.b16 %v3937
  %v5067 = vunpack.c.l.b16 %v3938
  %v5068 = vunpack.c.h.b16 %v3938
  %v5069 = vunpack.c.l.b16 %v3939
  %v5070 = vunpack.c.h.b16 %v3939
  %v5071 = vunpack.c.l.b16 %v3940
  %v5072 = vunpack.c.h.b16 %v3940
  %v5073 = vunpack.c.l.b16 %v3941
  %v5074 = vunpack.c.h.b16 %v3941
  %v5075 = vunpack.c.l.b16 %v3942
  %v5076 = vunpack.c.h.b16 %v3942
  %v5077 = vunpack.c.l.b16 %v3943
  %v5078 = vunpack.c.h.b16 %v3943
  %v5079 = vunpack.c.l.b16 %v3944
  %v5080 = vunpack.c.h.b16 %v3944
  %v5081 = vunpack.c.l.b16 %v3945
  %v5082 = vunpack.c.h.b16 %v3945
  %v5083 = vunpack.c.l.b16 %v3946
  %v5084 = vunpack.c.h.b16 %v3946
  %v5085 = vunpack.c.l.b16 %v3947
  %v5086 = vunpack.c.h.b16 %v3947
  %v5087 = vunpack.c.l.b16 %v3948
  %v5088 = vunpack.c.h.b16 %v3948
  %v5089 = vunpack.c.l.b16 %v3949
  %v5090 = vunpack.c.h.b16 %v3949
  %v5091 = vunpack.c.l.b16 %v3950
  %v5092 = vunpack.c.h.b16 %v3950
  %v5093 = vunpack.c.l.b16 %v3951
  %v5094 = vunpack.c.h.b16 %v3951
  %v5095 = vunpack.c.l.b16 %v3952
  %v5096 = vunpack.c.h.b16 %v3952
  %v5097 = vunpack.c.l.b16 %v3953
  %v5098 = vunpack.c.h.b16 %v3953
  %v5099 = vunpack.c.l.b16 %v3954
  %v5100 = vunpack.c.h.b16 %v3954
  %v5101 = vunpack.c.l.b16 %v3955
  %v5102 = vunpack.c.h.b16 %v3955
  %v5103 = vunpack.c.l.b16 %v3956
  %v5104 = vunpack.c.h.b16 %v3956
  %v5105 = vunpack.c.l.b16 %v3957
  %v5106 = vunpack.c.h.b16 %v3957
  %v5107 = vunpack.c.l.b16 %v3958
  %v5108 = vunpack.c.h.b16 %v3958
  %v5109 = vunpack.c.l.b16 %v3959
  %v5110 = vunpack.c.h.b16 %v3959
  %v5111 = vunpack.c.l.b16 %v3960
  %v5112 = vunpack.c.h.b16 %v3960
  %v5113 = vunpack.c.l.b16 %v3961
  %v5114 = vunpack.c.h.b16 %v3961
  %v5115 = vunpack.c.l.b16 %v3962
  %v5116 = vunpack.c.h.b16 %v3962
  %v5117 = vunpack.c.l.b16 %v3963
  %v5118 = vunpack.c.h.b16 %v3963
  %v5119 = vunpack.c.l.b16 %v3964
  %v5120 = vunpack.c.h.b16 %v3964
  %v5121 = vunpack.c.l.b16 %v3965
  %v5122 = vunpack.c.h.b16 %v3965
  %v5123 = vunpack.c.l.b16 %v3966
  %v5124 = vunpack.c.h.b16 %v3966
  %v5125 = vunpack.c.l.b16 %v3967
  %v5126 = vunpack.c.h.b16 %v3967
  %v5127 = vunpack.c.l.b16 %v3968
  %v5128 = vunpack.c.h.b16 %v3968
  %v5129 = vunpack.c.l.b16 %v3969
  %v5130 = vunpack.c.h.b16 %v3969
  %v5131 = vunpack.c.l.b16 %v3970
  %v5132 = vunpack.c.h.b16 %v3970
  %v5133 = vunpack.c.l.b16 %v3971
  %v5134 = vunpack.c.h.b16 %v3971
  %v5135 = vunpack.c.l.b16 %v3972
  %v5136 = vunpack.c.h.b16 %v3972
  %v5137 = vunpack.c.l.b16 %v3973
  %v5138 = vunpack.c.h.b16 %v3973
  %v5139 = vunpack.c.l.b16 %v3974
  %v5140 = vunpack.c.h.b16 %v3974
  %v5141 = vunpack.c.l.b16 %v3975
  %v5142 = vunpack.c.h.b16 %v3975
  %v5143 = vunpack.c.l.b16 %v3976
  %v5144 = vunpack.c.h.b16 %v3976
  %v5145 = vunpack.c.l.b16 %v3977
  %v5146 = vunpack.c.h.b16 %v3977
  %v5147 = vunpack.c.l.b16 %v3978
  %v5148 = vunpack.c.h.b16 %v3978
  %v5149 = vunpack.c.l.b16 %v3979
  %v5150 = vunpack.c.h.b16 %v3979
  %v5151 = vunpack.c.l.b16 %v3980
  %v5152 = vunpack.c.h.b16 %v3980
  %v5153 = vunpack.c.l.b16 %v3981
  %v5154 = vunpack.c.h.b16 %v3981
  %v5155 = vunpack.c.l.b16 %v3982
  %v5156 = vunpack.c.h.b16 %v3982
  %v5157 = vunpack.c.l.b16 %v3983
  %v5158 = vunpack.c.h.b16 %v3983
  %v5159 = vunpack.c.l.b16 %v3984
  %v5160 = vunpack.c.h.b16 %v3984
  %v5161 = vunpack.c.l.b16 %v3985
  %v5162 = vunpack.c.h.b16 %v3985
  %v5163 = vunpack.c.l.b16 %v3986
  %v5164 = vunpack.c.h.b16 %v3986
  %v5165 = vunpack.c.l.b16 %v3987
  %v5166 = vunpack.c.h.b16 %v3987
  %v5167 = vunpack.c.l.b16 %v3988
  %v5168 = vunpack.c.h.b16 %v3988
  %v5169 = vunpack.c.l.b16 %v3989
  %v5170 = vunpack.c.h.b16 %v3989
  %v5171 = vunpack.c.l.b16 %v3990
  %v5172 = vunpack.c.h.b16 %v3990
  %v5173 = vunpack.c.l.b16 %v3991
  %v5174 = vunpack.c.h.b16 %v3991
  %v5175 = vunpack.c.l.b16 %v3992
  %v5176 = vunpack.c.h.b16 %v3992
  %v5177 = vunpack.c.l.b16 %v3993
  %v5178 = vunpack.c.h.b16 %v3993
  %v5179 = vunpack.c.l.b16 %v3994
  %v5180 = vunpack.c.h.b16 %v3994
  %v5181 = vunpack.c.l.b16 %v3995
  %v5182 = vunpack.c.h.b16 %v3995
  %v5183 = vunpack.c.l.b16 %v3996
  %v5184 = vunpack.c.h.b16 %v3996
  %v5185 = vunpack.c.l.b16 %v3997
  %v5186 = vunpack.c.h.b16 %v3997
  %v5187 = vunpack.c.l.b16 %v3998
  %v5188 = vunpack.c.h.b16 %v3998
  %v5189 = vunpack.c.l.b16 %v3999
  %v5190 = vunpack.c.h.b16 %v3999
  %v5191 = vunpack.c.l.b16 %v4000
  %v5192 = vunpack.c.h.b16 %v4000
  %v5193 = vunpack.c.l.b16 %v4001
  %v5194 = vunpack.c.h.b16 %v4001
  %v5195 = vunpack.c.l.b16 %v4002
  %v5196 = vunpack.c.h.b16 %v4002
  %v5197 = vunpack.c.l.b16 %v4003
  %v5198 = vunpack.c.h.b16 %v4003
  %v5199 = vunpack.c.l.b16 %v4004
  %v5200 = vunpack.c.h.b16 %v4004
  %v5201 = vunpack.c.l.b16 %v4005
  %v5202 = vunpack.c.h.b16 %v4005
  %v5203 = vunpack.c.l.b16 %v4006
  %v5204 = vunpack.c.h.b16 %v4006
  %v5205 = vunpack.c.l.b16 %v4007
  %v5206 = vunpack.c.h.b16 %v4007
  %v5207 = vunpack.c.l.b16 %v4008
  %v5208 = vunpack.c.h.b16 %v4008
  %v5209 = vunpack.c.l.b16 %v4009
  %v5210 = vunpack.c.h.b16 %v4009
  %v5211 = vunpack.c.l.b16 %v4010
  %v5212 = vunpack.c.h.b16 %v4010
  %v5213 = vunpack.c.l.b16 %v4011
  %v5214 = vunpack.c.h.b16 %v4011
  %v5215 = vunpack.c.l.b16 %v4012
  %v5216 = vunpack.c.h.b16 %v4012
  %v5217 = vunpack.c.l.b16 %v4013
  %v5218 = vunpack.c.h.b16 %v4013
  %v5219 = vunpack.c.l.b16 %v4014
  %v5220 = vunpack.c.h.b16 %v4014
  %v5221 = vunpack.c.l.b16 %v4015
  %v5222 = vunpack.c.h.b16 %v4015
  %v5223 = vunpack.c.l.b16 %v4016
  %v5224 = vunpack.c.h.b16 %v4016
  %v5225 = vunpack.c.l.b16 %v4017
  %v5226 = vunpack.c.h.b16 %v4017
  %v5227 = vunpack.c.l.b16 %v4018
  %v5228 = vunpack.c.h.b16 %v4018
  %v5229 = vunpack.c.l.b16 %v4019
  %v5230 = vunpack.c.h.b16 %v4019
  %v5231 = vunpack.c.l.b16 %v4020
  %v5232 = vunpack.c.h.b16 %v4020
  %v5233 = vunpack.c.l.b16 %v4021
  %v5234 = vunpack.c.h.b16 %v4021
  %v5235 = vunpack.c.l.b16 %v4022
  %v5236 = vunpack.c.h.b16 %v4022
  %v5237 = vunpack.c.l.b16 %v4023
  %v5238 = vunpack.c.h.b16 %v4023
  %v5239 = vunpack.c.l.b16 %v4024
  %v5240 = vunpack.c.h.b16 %v4024
  %v5241 = vunpack.c.l.b16 %v4025
  %v5242 = vunpack.c.h.b16 %v4025
  %v5243 = vunpack.c.l.b16 %v4026
  %v5244 = vunpack.c.h.b16 %v4026
  %v5245 = vunpack.c.l.b16 %v4027
  %v5246 = vunpack.c.h.b16 %v4027
  %v5247 = vunpack.c.l.b16 %v4028
  %v5248 = vunpack.c.h.b16 %v4028
  %v5249 = vunpack.c.l.b16 %v4029
  %v5250 = vunpack.c.h.b16 %v4029
  %v5251 = vunpack.c.l.b16 %v4030
  %v5252 = vunpack.c.h.b16 %v4030
  %v5253 = vunpack.c.l.b16 %v4031
  %v5254 = vunpack.c.h.b16 %v4031
  %v5255 = vunpack.c.l.b16 %v4032
  %v5256 = vunpack.c.h.b16 %v4032
  %v5257 = vunpack.c.l.b16 %v4033
  %v5258 = vunpack.c.h.b16 %v4033
  %v5259 = vunpack.c.l.b16 %v4034
  %v5260 = vunpack.c.h.b16 %v4034
  %v5261 = vunpack.c.l.b16 %v4035
  %v5262 = vunpack.c.h.b16 %v4035
  %v5263 = vunpack.c.l.b16 %v4036
  %v5264 = vunpack.c.h.b16 %v4036
  %v5265 = vunpack.c.l.b16 %v4037
  %v5266 = vunpack.c.h.b16 %v4037
  %v5267 = vunpack.c.l.b16 %v4038
  %v5268 = vunpack.c.h.b16 %v4038
  %v5269 = vunpack.c.l.b16 %v4039
  %v5270 = vunpack.c.h.b16 %v4039
  %v5271 = vunpack.c.l.b16 %v4040
  %v5272 = vunpack.c.h.b16 %v4040
  %v5273 = vunpack.c.l.b16 %v4041
  %v5274 = vunpack.c.h.b16 %v4041
  %v5275 = vunpack.c.l.b16 %v4042
  %v5276 = vunpack.c.h.b16 %v4042
  %v5277 = vunpack.c.l.b16 %v4043
  %v5278 = vunpack.c.h.b16 %v4043
  %v5279 = vunpack.c.l.b16 %v4044
  %v5280 = vunpack.c.h.b16 %v4044
  %v5281 = vunpack.c.l.b16 %v4045
  %v5282 = vunpack.c.h.b16 %v4045
  %v5283 = vunpack.c.l.b16 %v4046
  %v5284 = vunpack.c.h.b16 %v4046
  %v5285 = vunpack.c.l.b16 %v4047
  %v5286 = vunpack.c.h.b16 %v4047
  %v5287 = vunpack.c.l.b16 %v4048
  %v5288 = vunpack.c.h.b16 %v4048
  %v5289 = vunpack.c.l.b16 %v4049
  %v5290 = vunpack.c.h.b16 %v4049
  %v5291 = vunpack.c.l.b16 %v4050
  %v5292 = vunpack.c.h.b16 %v4050
  %v5293 = vunpack.c.l.b16 %v4051
  %v5294 = vunpack.c.h.b16 %v4051
  %v5295 = vunpack.c.l.b16 %v4052
  %v5296 = vunpack.c.h.b16 %v4052
  %v5297 = vunpack.c.l.b16 %v4053
  %v5298 = vunpack.c.h.b16 %v4053
  %v5299 = vunpack.c.l.b16 %v4054
  %v5300 = vunpack.c.h.b16 %v4054
  %v5301 = vunpack.c.l.b16 %v4055
  %v5302 = vunpack.c.h.b16 %v4055
  %v5303 = vunpack.c.l.b16 %v4056
  %v5304 = vunpack.c.h.b16 %v4056
  %v5305 = vunpack.c.l.b16 %v4057
  %v5306 = vunpack.c.h.b16 %v4057
  %v5307 = vunpack.c.l.b16 %v4058
  %v5308 = vunpack.c.h.b16 %v4058
  %v5309 = vunpack.c.l.b16 %v4059
  %v5310 = vunpack.c.h.b16 %v4059
  %v5311 = vunpack.c.l.b16 %v4060
  %v5312 = vunpack.c.h.b16 %v4060
  %v5313 = vunpack.c.l.b16 %v4061
  %v5314 = vunpack.c.h.b16 %v4061
  %v5315 = vunpack.c.l.b16 %v4062
  %v5316 = vunpack.c.h.b16 %v4062
  %v5317 = vunpack.c.l.b16 %v4063
  %v5318 = vunpack.c.h.b16 %v4063
  %v5319 = vunpack.c.l.b16 %v4064
  %v5320 = vunpack.c.h.b16 %v4064
  %v5321 = vunpack.c.l.b16 %v4065
  %v5322 = vunpack.c.h.b16 %v4065
  %v5323 = vunpack.c.l.b16 %v4066
  %v5324 = vunpack.c.h.b16 %v4066
  %v5325 = vunpack.c.l.b16 %v4067
  %v5326 = vunpack.c.h.b16 %v4067
  %v5327 = vunpack.c.l.b16 %v4068
  %v5328 = vunpack.c.h.b16 %v4068
  %v5329 = vunpack.c.l.b16 %v4069
  %v5330 = vunpack.c.h.b16 %v4069
  %v5331 = vunpack.c.l.b16 %v4070
  %v5332 = vunpack.c.h.b16 %v4070
  %v5333 = vunpack.c.l.b16 %v4071
  %v5334 = vunpack.c.h.b16 %v4071
  %v5335 = vunpack.c.l.b16 %v4072
  %v5336 = vunpack.c.h.b16 %v4072
  %v5337 = vunpack.c.l.b16 %v4073
  %v5338 = vunpack.c.h.b16 %v4073
  %v5339 = vunpack.c.l.b16 %v4074
  %v5340 = vunpack.c.h.b16 %v4074
  %v5341 = vunpack.c.l.b16 %v4075
  %v5342 = vunpack.c.h.b16 %v4075
  %v5343 = vunpack.c.l.b16 %v4076
  %v5344 = vunpack.c.h.b16 %v4076
  %v5345 = vunpack.c.l.b16 %v4077
  %v5346 = vunpack.c.h.b16 %v4077
  %v5347 = vunpack.c.l.b16 %v4078
  %v5348 = vunpack.c.h.b16 %v4078
  %v5349 = vunpack.c.l.b16 %v4079
  %v5350 = vunpack.c.h.b16 %v4079
  %v5351 = vunpack.c.l.b16 %v4080
  %v5352 = vunpack.c.h.b16 %v4080
  %v5353 = vunpack.c.l.b16 %v4081
  %v5354 = vunpack.c.h.b16 %v4081
  %v5355 = vunpack.c.l.b16 %v4082
  %v5356 = vunpack.c.h.b16 %v4082
  %v5357 = vunpack.c.l.b16 %v4083
  %v5358 = vunpack.c.h.b16 %v4083
  %v5359 = vunpack.c.l.b16 %v4084
  %v5360 = vunpack.c.h.b16 %v4084
  %v5361 = vunpack.c.l.b16 %v4085
  %v5362 = vunpack.c.h.b16 %v4085
  %v5363 = vunpack.c.l.b16 %v4086
  %v5364 = vunpack.c.h.b16 %v4086
  %v5365 = vunpack.c.l.b16 %v4087
  %v5366 = vunpack.c.h.b16 %v4087
  %v5367 = vunpack.c.l.b16 %v4088
  %v5368 = vunpack.c.h.b16 %v4088
  %v5369 = vunpack.c.l.b16 %v4089
  %v5370 = vunpack.c.h.b16 %v4089
  %v5371 = vunpack.c.l.b16 %v4090
  %v5372 = vunpack.c.h.b16 %v4090
  %v5373 = vunpack.c.l.b16 %v4091
  %v5374 = vunpack.c.h.b16 %v4091
  %v5375 = vunpack.c.l.b16 %v4092
  %v5376 = vunpack.c.h.b16 %v4092
  %v5377 = vunpack.c.l.b16 %v4093
  %v5378 = vunpack.c.h.b16 %v4093
  %v5379 = vunpack.c.l.b16 %v4094
  %v5380 = vunpack.c.h.b16 %v4094
  %v5381 = vunpack.c.l.b16 %v4095
  %v5382 = vunpack.c.h.b16 %v4095
  %v5383 = vunpack.c.l.b16 %v4096
  %v5384 = vunpack.c.h.b16 %v4096
  %v5385 = vunpack.c.l.b16 %v4097
  %v5386 = vunpack.c.h.b16 %v4097
  %v5387 = vunpack.c.l.b16 %v4098
  %v5388 = vunpack.c.h.b16 %v4098
  %v5389 = vunpack.c.l.b16 %v4099
  %v5390 = vunpack.c.h.b16 %v4099
  %v5391 = vunpack.c.l.b16 %v4100
  %v5392 = vunpack.c.h.b16 %v4100
  %v5393 = vunpack.c.l.b16 %v4101
  %v5394 = vunpack.c.h.b16 %v4101
  %v5395 = vunpack.c.l.b16 %v4102
  %v5396 = vunpack.c.h.b16 %v4102
  %v5397 = vunpack.c.l.b16 %v4103
  %v5398 = vunpack.c.h.b16 %v4103
  %v5399 = vunpack.c.l.b16 %v4104
  %v5400 = vunpack.c.h.b16 %v4104
  %v5401 = vunpack.c.l.b16 %v4105
  %v5402 = vunpack.c.h.b16 %v4105
  %v5403 = vunpack.c.l.b16 %v4106
  %v5404 = vunpack.c.h.b16 %v4106
  %v5405 = vunpack.c.l.b16 %v4107
  %v5406 = vunpack.c.h.b16 %v4107
  %v5407 = vunpack.c.l.b16 %v4108
  %v5408 = vunpack.c.h.b16 %v4108
  %v5409 = vunpack.c.l.b16 %v4109
  %v5410 = vunpack.c.h.b16 %v4109
  %v5411 = vunpack.c.l.b16 %v4110
  %v5412 = vunpack.c.h.b16 %v4110
  %v5413 = vunpack.c.l.b16 %v4111
  %v5414 = vunpack.c.h.b16 %v4111
  %v5415 = vunpack.c.l.b16 %v4112
  %v5416 = vunpack.c.h.b16 %v4112
  %v5417 = vunpack.c.l.b16 %v4113
  %v5418 = vunpack.c.h.b16 %v4113
  %v5419 = vunpack.c.l.b16 %v4114
  %v5420 = vunpack.c.h.b16 %v4114
  %v5421 = vunpack.c.l.b16 %v4115
  %v5422 = vunpack.c.h.b16 %v4115
  %v5423 = vunpack.c.l.b16 %v4116
  %v5424 = vunpack.c.h.b16 %v4116
  %v5425 = vunpack.c.l.b16 %v4117
  %v5426 = vunpack.c.h.b16 %v4117
  %v5427 = vunpack.c.l.b16 %v4118
  %v5428 = vunpack.c.h.b16 %v4118
  %v5429 = vunpack.c.l.b16 %v4119
  %v5430 = vunpack.c.h.b16 %v4119
  %v5431 = vunpack.c.l.b16 %v4120
  %v5432 = vunpack.c.h.b16 %v4120
  %v5433 = vunpack.c.l.b16 %v4121
  %v5434 = vunpack.c.h.b16 %v4121
  %v5435 = vunpack.c.l.b16 %v4122
  %v5436 = vunpack.c.h.b16 %v4122
  %v5437 = vunpack.c.l.b16 %v4123
  %v5438 = vunpack.c.h.b16 %v4123
  %v5439 = vunpack.c.l.b16 %v4124
  %v5440 = vunpack.c.h.b16 %v4124
  %v5441 = vunpack.c.l.b16 %v4125
  %v5442 = vunpack.c.h.b16 %v4125
  %v5443 = vunpack.c.l.b16 %v4126
  %v5444 = vunpack.c.h.b16 %v4126
  %v5445 = vunpack.c.l.b16 %v4127
  %v5446 = vunpack.c.h.b16 %v4127
  %v5447 = vunpack.c.l.b16 %v4128
  %v5448 = vunpack.c.h.b16 %v4128
  %v5449 = vunpack.c.l.b16 %v4129
  %v5450 = vunpack.c.h.b16 %v4129
  %v5451 = vunpack.c.l.b16 %v4130
  %v5452 = vunpack.c.h.b16 %v4130
  %v5453 = vunpack.c.l.b16 %v4131
  %v5454 = vunpack.c.h.b16 %v4131
  %v5455 = vunpack.c.l.b16 %v4132
  %v5456 = vunpack.c.h.b16 %v4132
  %v5457 = vunpack.c.l.b16 %v4133
  %v5458 = vunpack.c.h.b16 %v4133
  %v5459 = vunpack.c.l.b16 %v4134
  %v5460 = vunpack.c.h.b16 %v4134
  %v5461 = vunpack.c.l.b16 %v4135
  %v5462 = vunpack.c.h.b16 %v4135
  %v5463 = vunpack.c.l.b16 %v4136
  %v5464 = vunpack.c.h.b16 %v4136
  %v5465 = vunpack.c.l.b16 %v4137
  %v5466 = vunpack.c.h.b16 %v4137
  %v5467 = vunpack.c.l.b16 %v4138
  %v5468 = vunpack.c.h.b16 %v4138
  %v5469 = vunpack.c.l.b16 %v4139
  %v5470 = vunpack.c.h.b16 %v4139
  %v5471 = vunpack.c.l.b16 %v4140
  %v5472 = vunpack.c.h.b16 %v4140
  %v5473 = vunpack.c.l.b16 %v4141
  %v5474 = vunpack.c.h.b16 %v4141
  %v5475 = vunpack.c.l.b16 %v4142
  %v5476 = vunpack.c.h.b16 %v4142
  %v5477 = vunpack.c.l.b16 %v4143
  %v5478 = vunpack.c.h.b16 %v4143
  %v5479 = vunpack.c.l.b16 %v4144
  %v5480 = vunpack.c.h.b16 %v4144
  %v5481 = vunpack.c.l.b16 %v4145
  %v5482 = vunpack.c.h.b16 %v4145
  %v5483 = vunpack.c.l.b16 %v4146
  %v5484 = vunpack.c.h.b16 %v4146
  %v5485 = vunpack.c.l.b16 %v4147
  %v5486 = vunpack.c.h.b16 %v4147
  %v5487 = vunpack.c.l.b16 %v4148
  %v5488 = vunpack.c.h.b16 %v4148
  %v5489 = vunpack.c.l.b16 %v4149
  %v5490 = vunpack.c.h.b16 %v4149
  %v5491 = vunpack.c.l.b16 %v4150
  %v5492 = vunpack.c.h.b16 %v4150
  %v5493 = vunpack.c.l.b16 %v4151
  %v5494 = vunpack.c.h.b16 %v4151
  %v5495 = vunpack.c.l.b16 %v4152
  %v5496 = vunpack.c.h.b16 %v4152
  %v5497 = vunpack.c.l.b16 %v4153
  %v5498 = vunpack.c.h.b16 %v4153
  %v5499 = vunpack.c.l.b16 %v4154
  %v5500 = vunpack.c.h.b16 %v4154
  %v5501 = vunpack.c.l.b16 %v4155
  %v5502 = vunpack.c.h.b16 %v4155
  %v5503 = vunpack.c.l.b16 %v4156
  %v5504 = vunpack.c.h.b16 %v4156
  %v5505 = vunpack.c.l.b16 %v4157
  %v5506 = vunpack.c.h.b16 %v4157
  %v5507 = vunpack.c.l.b16 %v4158
  %v5508 = vunpack.c.h.b16 %v4158
  %v5509 = vunpack.c.l.b16 %v4159
  %v5510 = vunpack.c.h.b16 %v4159
  %v5511 = vunpack.c.l.b16 %v4160
  %v5512 = vunpack.c.h.b16 %v4160
  %v5513 = vunpack.c.l.b16 %v4161
  %v5514 = vunpack.c.h.b16 %v4161
  %v5515 = vunpack.c.l.b16 %v4162
  %v5516 = vunpack.c.h.b16 %v4162
  %v5517 = vunpack.c.l.b16 %v4163
  %v5518 = vunpack.c.h.b16 %v4163
  %v5519 = vunpack.c.l.b16 %v4164
  %v5520 = vunpack.c.h.b16 %v4164
  %v5521 = vunpack.c.l.b16 %v4165
  %v5522 = vunpack.c.h.b16 %v4165
  %v5523 = vunpack.c.l.b16 %v4166
  %v5524 = vunpack.c.h.b16 %v4166
  %v5525 = vunpack.c.l.b16 %v4167
  %v5526 = vunpack.c.h.b16 %v4167
  %v5527 = vunpack.c.l.b16 %v4168
  %v5528 = vunpack.c.h.b16 %v4168
  %v5529 = vunpack.c.l.b16 %v4169
  %v5530 = vunpack.c.h.b16 %v4169
  %v5531 = vunpack.c.l.b16 %v4170
  %v5532 = vunpack.c.h.b16 %v4170
  %v5533 = vunpack.c.l.b16 %v4171
  %v5534 = vunpack.c.h.b16 %v4171
  %v5535 = vunpack.c.l.b16 %v4172
  %v5536 = vunpack.c.h.b16 %v4172
  %v5537 = vunpack.c.l.b16 %v4173
  %v5538 = vunpack.c.h.b16 %v4173
  %v5539 = vunpack.c.l.b16 %v4174
  %v5540 = vunpack.c.h.b16 %v4174
  %v5541 = vunpack.c.l.b16 %v4175
  %v5542 = vunpack.c.h.b16 %v4175
  %v5543 = vunpack.c.l.b16 %v4176
  %v5544 = vunpack.c.h.b16 %v4176
  %v5545 = vunpack.c.l.b16 %v4177
  %v5546 = vunpack.c.h.b16 %v4177
  %v5547 = vunpack.c.l.b16 %v4178
  %v5548 = vunpack.c.h.b16 %v4178
  %v5549 = vunpack.c.l.b16 %v4179
  %v5550 = vunpack.c.h.b16 %v4179
  %v5551 = vunpack.c.l.b16 %v4180
  %v5552 = vunpack.c.h.b16 %v4180
  %v5553 = vunpack.c.l.b16 %v4181
  %v5554 = vunpack.c.h.b16 %v4181
  %v5555 = vunpack.c.l.b16 %v4182
  %v5556 = vunpack.c.h.b16 %v4182
  %v5557 = vunpack.c.l.b16 %v4183
  %v5558 = vunpack.c.h.b16 %v4183
  %v5559 = vunpack.c.l.b16 %v4184
  %v5560 = vunpack.c.h.b16 %v4184
  %v5561 = vunpack.c.l.b16 %v4185
  %v5562 = vunpack.c.h.b16 %v4185
  %v5563 = vunpack.c.l.b16 %v4186
  %v5564 = vunpack.c.h.b16 %v4186
  %v5565 = vunpack.c.l.b16 %v4187
  %v5566 = vunpack.c.h.b16 %v4187
  %v5567 = vunpack.c.l.b16 %v4188
  %v5568 = vunpack.c.h.b16 %v4188
  %v5569 = vunpack.c.l.b16 %v4189
  %v5570 = vunpack.c.h.b16 %v4189
  %v5571 = vunpack.c.l.b16 %v4190
  %v5572 = vunpack.c.h.b16 %v4190
  %v5573 = vunpack.c.l.b16 %v4191
  %v5574 = vunpack.c.h.b16 %v4191
  %v5575 = vunpack.c.l.b16 %v4192
  %v5576 = vunpack.c.h.b16 %v4192
  %v5577 = vunpack.c.l.b16 %v4193
  %v5578 = vunpack.c.h.b16 %v4193
  %v5579 = vunpack.c.l.b16 %v4194
  %v5580 = vunpack.c.h.b16 %v4194
  %v5581 = vunpack.c.l.b16 %v4195
  %v5582 = vunpack.c.h.b16 %v4195
  %v5583 = vunpack.c.l.b16 %v4196
  %v5584 = vunpack.c.h.b16 %v4196
  %v5585 = vunpack.c.l.b16 %v4197
  %v5586 = vunpack.c.h.b16 %v4197
  %v5587 = vunpack.c.l.b16 %v4198
  %v5588 = vunpack.c.h.b16 %v4198
  %v5589 = vunpack.c.l.b16 %v4199
  %v5590 = vunpack.c.h.b16 %v4199
  %v5591 = vunpack.c.l.b16 %v4200
  %v5592 = vunpack.c.h.b16 %v4200
  %v5593 = vunpack.c.l.b16 %v4201
  %v5594 = vunpack.c.h.b16 %v4201
  %v5595 = vunpack.c.l.b16 %v4202
  %v5596 = vunpack.c.h.b16 %v4202
  %v5597 = vunpack.c.l.b16 %v4203
  %v5598 = vunpack.c.h.b16 %v4203
  %v5599 = vunpack.c.l.b16 %v4204
  %v5600 = vunpack.c.h.b16 %v4204
  %v5601 = vunpack.c.l.b16 %v4205
  %v5602 = vunpack.c.h.b16 %v4205
  %v5603 = vunpack.c.l.b16 %v4206
  %v5604 = vunpack.c.h.b16 %v4206
  %v5605 = vunpack.c.l.b16 %v4207
  %v5606 = vunpack.c.h.b16 %v4207
  %v5607 = vunpack.c.l.b16 %v4208
  %v5608 = vunpack.c.h.b16 %v4208
  %v5609 = vunpack.c.l.b16 %v4209
  %v5610 = vunpack.c.h.b16 %v4209
  %v5611 = vunpack.c.l.b16 %v4210
  %v5612 = vunpack.c.h.b16 %v4210
  %v5613 = vunpack.c.l.b16 %v4211
  %v5614 = vunpack.c.h.b16 %v4211
  %v5615 = vunpack.c.l.b16 %v4212
  %v5616 = vunpack.c.h.b16 %v4212
  %v5617 = vunpack.c.l.b16 %v4213
  %v5618 = vunpack.c.h.b16 %v4213
  %v5619 = vunpack.c.l.b16 %v4214
  %v5620 = vunpack.c.h.b16 %v4214
  %v5621 = vunpack.c.l.b16 %v4215
  %v5622 = vunpack.c.h.b16 %v4215
  %v5623 = vunpack.c.l.b16 %v4216
  %v5624 = vunpack.c.h.b16 %v4216
  %v5625 = vunpack.c.l.b16 %v4217
  %v5626 = vunpack.c.h.b16 %v4217
  %v5627 = vunpack.c.l.b16 %v4218
  %v5628 = vunpack.c.h.b16 %v4218
  %v5629 = vunpack.c.l.b16 %v4219
  %v5630 = vunpack.c.h.b16 %v4219
  %v5631 = vunpack.c.l.b16 %v4220
  %v5632 = vunpack.c.h.b16 %v4220
  %v5633 = vunpack.c.l.b16 %v4221
  %v5634 = vunpack.c.h.b16 %v4221
  %v5635 = vunpack.c.l.b16 %v4222
  %v5636 = vunpack.c.h.b16 %v4222
  %v5637 = vunpack.c.l.b16 %v4223
  %v5638 = vunpack.c.h.b16 %v4223
  %v5639 = vunpack.c.l.b16 %v4224
  %v5640 = vunpack.c.h.b16 %v4224
  %v5641 = vunpack.c.l.b16 %v4225
  %v5642 = vunpack.c.h.b16 %v4225
  %v5643 = vunpack.c.l.b16 %v4226
  %v5644 = vunpack.c.h.b16 %v4226
  %v5645 = vunpack.c.l.b16 %v4227
  %v5646 = vunpack.c.h.b16 %v4227
  %v5647 = vunpack.c.l.b16 %v4228
  %v5648 = vunpack.c.h.b16 %v4228
  %v5649 = vunpack.c.l.b16 %v4229
  %v5650 = vunpack.c.h.b16 %v4229
  %v5651 = vunpack.c.l.b16 %v4230
  %v5652 = vunpack.c.h.b16 %v4230
  %v5653 = vunpack.c.l.b16 %v4231
  %v5654 = vunpack.c.h.b16 %v4231
  %v5655 = vunpack.c.l.b16 %v4232
  %v5656 = vunpack.c.h.b16 %v4232
  %v5657 = vunpack.c.l.b16 %v4233
  %v5658 = vunpack.c.h.b16 %v4233
  %v5659 = vunpack.c.l.b16 %v4234
  %v5660 = vunpack.c.h.b16 %v4234
  %v5661 = vunpack.c.l.b16 %v4235
  %v5662 = vunpack.c.h.b16 %v4235
  %v5663 = vunpack.c.l.b16 %v4236
  %v5664 = vunpack.c.h.b16 %v4236
  %v5665 = vunpack.c.l.b16 %v4237
  %v5666 = vunpack.c.h.b16 %v4237
  %v5667 = vunpack.c.l.b16 %v4238
  %v5668 = vunpack.c.h.b16 %v4238
  %v5669 = vunpack.c.l.b16 %v4239
  %v5670 = vunpack.c.h.b16 %v4239
  %v5671 = vunpack.c.l.b16 %v4240
  %v5672 = vunpack.c.h.b16 %v4240
  %v5673 = vunpack.c.l.b16 %v4241
  %v5674 = vunpack.c.h.b16 %v4241
  %v5675 = vunpack.c.l.b16 %v4242
  %v5676 = vunpack.c.h.b16 %v4242
  %v5677 = vunpack.c.l.b16 %v4243
  %v5678 = vunpack.c.h.b16 %v4243
  %v5679 = vunpack.c.l.b16 %v4244
  %v5680 = vunpack.c.h.b16 %v4244
  %v5681 = vunpack.c.l.b16 %v4245
  %v5682 = vunpack.c.h.b16 %v4245
  %v5683 = vunpack.c.l.b16 %v4246
  %v5684 = vunpack.c.h.b16 %v4246
  %v5685 = vunpack.c.l.b16 %v4247
  %v5686 = vunpack.c.h.b16 %v4247
  %v5687 = vunpack.c.l.b16 %v4248
  %v5688 = vunpack.c.h.b16 %v4248
  %v5689 = vunpack.c.l.b16 %v4249
  %v5690 = vunpack.c.h.b16 %v4249
  %v5691 = vunpack.c.l.b16 %v4250
  %v5692 = vunpack.c.h.b16 %v4250
  %v5693 = vunpack.c.l.b16 %v4251
  %v5694 = vunpack.c.h.b16 %v4251
  %v5695 = vunpack.c.l.b16 %v4252
  %v5696 = vunpack.c.h.b16 %v4252
  %v5697 = vunpack.c.l.b16 %v4253
  %v5698 = vunpack.c.h.b16 %v4253
  %v5699 = vunpack.c.l.b16 %v4254
  %v5700 = vunpack.c.h.b16 %v4254
  %v5701 = vunpack.c.l.b16 %v4255
  %v5702 = vunpack.c.h.b16 %v4255
  %v5703 = vunpack.c.l.b16 %v4256
  %v5704 = vunpack.c.h.b16 %v4256
  %v5705 = vunpack.c.l.b16 %v4257
  %v5706 = vunpack.c.h.b16 %v4257
  %v5707 = vunpack.c.l.b16 %v4258
  %v5708 = vunpack.c.h.b16 %v4258
  %v5709 = vunpack.c.l.b16 %v4259
  %v5710 = vunpack.c.h.b16 %v4259
  %v5711 = vunpack.c.l.b16 %v4260
  %v5712 = vunpack.c.h.b16 %v4260
  %v5713 = vunpack.c.l.b16 %v4261
  %v5714 = vunpack.c.h.b16 %v4261
  %v5715 = vunpack.c.l.b16 %v4262
  %v5716 = vunpack.c.h.b16 %v4262
  %v5717 = vunpack.c.l.b16 %v4263
  %v5718 = vunpack.c.h.b16 %v4263
  %v5719 = vunpack.c.l.b16 %v4264
  %v5720 = vunpack.c.h.b16 %v4264
  %v5721 = vunpack.c.l.b16 %v4265
  %v5722 = vunpack.c.h.b16 %v4265
  %v5723 = vunpack.c.l.b16 %v4266
  %v5724 = vunpack.c.h.b16 %v4266
  %v5725 = vunpack.c.l.b16 %v4267
  %v5726 = vunpack.c.h.b16 %v4267
  %v5727 = vunpack.c.l.b16 %v4268
  %v5728 = vunpack.c.h.b16 %v4268
  %v5729 = vunpack.c.l.b16 %v4269
  %v5730 = vunpack.c.h.b16 %v4269
  %v5731 = vunpack.c.l.b16 %v4270
  %v5732 = vunpack.c.h.b16 %v4270
  %v5733 = vunpack.c.l.b16 %v4271
  %v5734 = vunpack.c.h.b16 %v4271
  %v5735 = vunpack.c.l.b16 %v4272
  %v5736 = vunpack.c.h.b16 %v4272
  %v5737 = vunpack.c.l.b16 %v4273
  %v5738 = vunpack.c.h.b16 %v4273
  %v5739 = vunpack.c.l.b16 %v4274
  %v5740 = vunpack.c.h.b16 %v4274
  %v5741 = vunpack.c.l.b16 %v4275
  %v5742 = vunpack.c.h.b16 %v4275
  %v5743 = vunpack.c.l.b16 %v4276
  %v5744 = vunpack.c.h.b16 %v4276
  %v5745 = vunpack.c.l.b16 %v4277
  %v5746 = vunpack.c.h.b16 %v4277
  %v5747 = vunpack.c.l.b16 %v4278
  %v5748 = vunpack.c.h.b16 %v4278
  %v5749 = vunpack.c.l.b16 %v4279
  %v5750 = vunpack.c.h.b16 %v4279
  %v5751 = vunpack.c.l.b16 %v4280
  %v5752 = vunpack.c.h.b16 %v4280
  %v5753 = vunpack.c.l.b16 %v4281
  %v5754 = vunpack.c.h.b16 %v4281
  %v5755 = vunpack.c.l.b16 %v4282
  %v5756 = vunpack.c.h.b16 %v4282
  %v5757 = vunpack.c.l.b16 %v4283
  %v5758 = vunpack.c.h.b16 %v4283
  %v5759 = vunpack.c.l.b16 %v4284
  %v5760 = vunpack.c.h.b16 %v4284
  %v5761 = vunpack.c.l.b16 %v4285
  %v5762 = vunpack.c.h.b16 %v4285
  %v5763 = vunpack.c.l.b16 %v4286
  %v5764 = vunpack.c.h.b16 %v4286
  %v5765 = vunpack.c.l.b16 %v4287
  %v5766 = vunpack.c.h.b16 %v4287
  %v5767 = vunpack.c.l.b16 %v4288
  %v5768 = vunpack.c.h.b16 %v4288
  %v5769 = vunpack.c.l.b16 %v4289
  %v5770 = vunpack.c.h.b16 %v4289
  %v5771 = vunpack.c.l.b16 %v4290
  %v5772 = vunpack.c.h.b16 %v4290
  %v5773 = vunpack.c.l.b16 %v4291
  %v5774 = vunpack.c.h.b16 %v4291
  %v5775 = vunpack.c.l.b16 %v4292
  %v5776 = vunpack.c.h.b16 %v4292
  %v5777 = vunpack.c.l.b16 %v4293
  %v5778 = vunpack.c.h.b16 %v4293
  %v5779 = vunpack.c.l.b16 %v4294
  %v5780 = vunpack.c.h.b16 %v4294
  %v5781 = vunpack.c.l.b16 %v4295
  %v5782 = vunpack.c.h.b16 %v4295
  %v5783 = vunpack.c.l.b16 %v4296
  %v5784 = vunpack.c.h.b16 %v4296
  %v5785 = vunpack.c.l.b16 %v4297
  %v5786 = vunpack.c.h.b16 %v4297
  %v5787 = vunpack.c.l.b16 %v4298
  %v5788 = vunpack.c.h.b16 %v4298
  %v5789 = vunpack.c.l.b16 %v4299
  %v5790 = vunpack.c.h.b16 %v4299
  %v5791 = vunpack.c.l.b16 %v4300
  %v5792 = vunpack.c.h.b16 %v4300
  %v5793 = vunpack.c.l.b16 %v4301
  %v5794 = vunpack.c.h.b16 %v4301
  %v5795 = vunpack.c.l.b16 %v4302
  %v5796 = vunpack.c.h.b16 %v4302
  %v5797 = vunpack.c.l.b16 %v4303
  %v5798 = vunpack.c.h.b16 %v4303
  %v5799 = vunpack.c.l.b16 %v4304
  %v5800 = vunpack.c.h.b16 %v4304
  %v5801 = vunpack.c.l.b16 %v4305
  %v5802 = vunpack.c.h.b16 %v4305
  %v5803 = vunpack.c.l.b16 %v4306
  %v5804 = vunpack.c.h.b16 %v4306
  %v5805 = vunpack.c.l.b16 %v4307
  %v5806 = vunpack.c.h.b16 %v4307
  %v5807 = vunpack.c.l.b16 %v4308
  %v5808 = vunpack.c.h.b16 %v4308
  %v5809 = vunpack.c.l.b16 %v4309
  %v5810 = vunpack.c.h.b16 %v4309
  %v5811 = vunpack.c.l.b16 %v4310
  %v5812 = vunpack.c.h.b16 %v4310
  %v5813 = vunpack.c.l.b16 %v4311
  %v5814 = vunpack.c.h.b16 %v4311
  %v5815 = vunpack.c.l.b16 %v4312
  %v5816 = vunpack.c.h.b16 %v4312
  %v5817 = vunpack.c.l.b16 %v4313
  %v5818 = vunpack.c.h.b16 %v4313
  %v5819 = vunpack.c.l.b16 %v4314
  %v5820 = vunpack.c.h.b16 %v4314
  %v5821 = vunpack.c.l.b16 %v4315
  %v5822 = vunpack.c.h.b16 %v4315
  %v5823 = vunpack.c.l.b16 %v4316
  %v5824 = vunpack.c.h.b16 %v4316
  %v5825 = vunpack.c.l.b16 %v4317
  %v5826 = vunpack.c.h.b16 %v4317
  %v5827 = vunpack.c.l.b16 %v4318
  %v5828 = vunpack.c.h.b16 %v4318
  %v5829 = vunpack.c.l.b16 %v4319
  %v5830 = vunpack.c.h.b16 %v4319
  %v5831 = vunpack.c.l.b16 %v4320
  %v5832 = vunpack.c.h.b16 %v4320
  %v5833 = vunpack.c.l.b16 %v4321
  %v5834 = vunpack.c.h.b16 %v4321
  %v5835 = vunpack.c.l.b16 %v4322
  %v5836 = vunpack.c.h.b16 %v4322
  %v5837 = vunpack.c.l.b16 %v4323
  %v5838 = vunpack.c.h.b16 %v4323
  %v5839 = vunpack.c.l.b16 %v4324
  %v5840 = vunpack.c.h.b16 %v4324
  %v5841 = vunpack.c.l.b16 %v4325
  %v5842 = vunpack.c.h.b16 %v4325
  %v5843 = vunpack.c.l.b16 %v4326
  %v5844 = vunpack.c.h.b16 %v4326
  %v5845 = vunpack.c.l.b16 %v4327
  %v5846 = vunpack.c.h.b16 %v4327
  %v5847 = vunpack.c.l.b16 %v4328
  %v5848 = vunpack.c.h.b16 %v4328
  %v5849 = vunpack.c.l.b16 %v4329
  %v5850 = vunpack.c.h.b16 %v4329
  %v5851 = vunpack.c.l.b16 %v4330
  %v5852 = vunpack.c.h.b16 %v4330
  %v5853 = vunpack.c.l.b16 %v4331
  %v5854 = vunpack.c.h.b16 %v4331
  %v5855 = vunpack.c.l.b16 %v4332
  %v5856 = vunpack.c.h.b16 %v4332
  %v5857 = vunpack.c.l.b16 %v4333
  %v5858 = vunpack.c.h.b16 %v4333
  %v5859 = vunpack.c.l.b16 %v4334
  %v5860 = vunpack.c.h.b16 %v4334
  %v5861 = vunpack.c.l.b16 %v4335
  %v5862 = vunpack.c.h.b16 %v4335
  %v5863 = vunpack.c.l.b16 %v4336
  %v5864 = vunpack.c.h.b16 %v4336
  %v5865 = vunpack.c.l.b16 %v4337
  %v5866 = vunpack.c.h.b16 %v4337
  %v5867 = vunpack.c.l.b16 %v4338
  %v5868 = vunpack.c.h.b16 %v4338
  %v5869 = vunpack.c.l.b16 %v4339
  %v5870 = vunpack.c.h.b16 %v4339
  %v5871 = vunpack.c.l.b16 %v4340
  %v5872 = vunpack.c.h.b16 %v4340
  %v5873 = vunpack.c.l.b16 %v4341
  %v5874 = vunpack.c.h.b16 %v4341
  %v5875 = vunpack.c.l.b16 %v4342
  %v5876 = vunpack.c.h.b16 %v4342
  %v5877 = vunpack.c.l.b16 %v4343
  %v5878 = vunpack.c.h.b16 %v4343
  %v5879 = vunpack.c.l.b16 %v4344
  %v5880 = vunpack.c.h.b16 %v4344
  %v5881 = vunpack.c.l.b16 %v4345
  %v5882 = vunpack.c.h.b16 %v4345
  %v5883 = vunpack.c.l.b16 %v4346
  %v5884 = vunpack.c.h.b16 %v4346
  %v5885 = vunpack.c.l.b16 %v4347
  %v5886 = vunpack.c.h.b16 %v4347
  %v5887 = vunpack.c.l.b16 %v4348
  %v5888 = vunpack.c.h.b16 %v4348
  %v5889 = vunpack.c.l.b16 %v4349
  %v5890 = vunpack.c.h.b16 %v4349
  %v5891 = vunpack.c.l.b16 %v4350
  %v5892 = vunpack.c.h.b16 %v4350
  %v5893 = vunpack.c.l.b16 %v4351
  %v5894 = vunpack.c.h.b16 %v4351
  %v5895 = vunpack.c.l.b16 %v4352
  %v5896 = vunpack.c.h.b16 %v4352
  %v5897 = vunpack.c.l.b16 %v4353
  %v5898 = vunpack.c.h.b16 %v4353
  %v5899 = vunpack.c.l.b16 %v4354
  %v5900 = vunpack.c.h.b16 %v4354
  %v5901 = vunpack.c.l.b16 %v4355
  %v5902 = vunpack.c.h.b16 %v4355
  %v5903 = vunpack.c.l.b16 %v4356
  %v5904 = vunpack.c.h.b16 %v4356
  %v5905 = vunpack.c.l.b16 %v4357
  %v5906 = vunpack.c.h.b16 %v4357
  %v5907 = vunpack.c.l.b16 %v4358
  %v5908 = vunpack.c.h.b16 %v4358
  %v5909 = vunpack.c.l.b16 %v4359
  %v5910 = vunpack.c.h.b16 %v4359
  %v5911 = vunpack.c.l.b16 %v4360
  %v5912 = vunpack.c.h.b16 %v4360
  %v5913 = vunpack.c.l.b16 %v4361
  %v5914 = vunpack.c.h.b16 %v4361
  %v5915 = vunpack.c.l.b16 %v4362
  %v5916 = vunpack.c.h.b16 %v4362
  %v5917 = vunpack.c.l.b16 %v4363
  %v5918 = vunpack.c.h.b16 %v4363
  %v5919 = vunpack.c.l.b16 %v4364
  %v5920 = vunpack.c.h.b16 %v4364
  %v5921 = vunpack.c.l.b16 %v4365
  %v5922 = vunpack.c.h.b16 %v4365
  %v5923 = vunpack.c.l.b16 %v4366
  %v5924 = vunpack.c.h.b16 %v4366
  %v5925 = vunpack.c.l.b16 %v4367
  %v5926 = vunpack.c.h.b16 %v4367
  %v5927 = vunpack.c.l.b16 %v4368
  %v5928 = vunpack.c.h.b16 %v4368
  %v5929 = vunpack.c.l.b16 %v4369
  %v5930 = vunpack.c.h.b16 %v4369
  %v5931 = vunpack.c.l.b16 %v4370
  %v5932 = vunpack.c.h.b16 %v4370
  %v5933 = vunpack.c.l.b16 %v4371
  %v5934 = vunpack.c.h.b16 %v4371
  %v5935 = vunpack.c.l.b16 %v4372
  %v5936 = vunpack.c.h.b16 %v4372
  %v5937 = vunpack.c.l.b16 %v4373
  %v5938 = vunpack.c.h.b16 %v4373
  %v5939 = vunpack.c.l.b16 %v4374
  %v5940 = vunpack.c.h.b16 %v4374
  %v5941 = vunpack.c.l.b16 %v4375
  %v5942 = vunpack.c.h.b16 %v4375
  %v5943 = vunpack.c.l.b16 %v4376
  %v5944 = vunpack.c.h.b16 %v4376
  %v5945 = vunpack.c.l.b16 %v4377
  %v5946 = vunpack.c.h.b16 %v4377
  %v5947 = vunpack.c.l.b16 %v4378
  %v5948 = vunpack.c.h.b16 %v4378
  %v5949 = vunpack.c.l.b16 %v4379
  %v5950 = vunpack.c.h.b16 %v4379
  %v5951 = vunpack.c.l.b16 %v4380
  %v5952 = vunpack.c.h.b16 %v4380
  %v5953 = vunpack.c.l.b16 %v4381
  %v5954 = vunpack.c.h.b16 %v4381
  %v5955 = vunpack.c.l.b16 %v4382
  %v5956 = vunpack.c.h.b16 %v4382
  %v5957 = vunpack.c.l.b16 %v4383
  %v5958 = vunpack.c.h.b16 %v4383
  %v5959 = vunpack.c.l.b16 %v4384
  %v5960 = vunpack.c.h.b16 %v4384
  %v5961 = vunpack.c.l.b16 %v4385
  %v5962 = vunpack.c.h.b16 %v4385
  %v5963 = vunpack.c.l.b16 %v4386
  %v5964 = vunpack.c.h.b16 %v4386
  %v5965 = vpack.c.b16 %v4949, %v4941
  %v5966 = vpack.c.b16 %v4950, %v4942
  %v5967 = vpack.c.b16 %v4951, %v4943
  %v5968 = vpack.c.b16 %v4952, %v4944
  %v5969 = vpack.c.b16 %v4953, %v4945
  %v5970 = vpack.c.b16 %v4954, %v4946
  %v5971 = vpack.c.b16 %v4955, %v4947
  %v5972 = vpack.c.b16 %v4956, %v4948
  %v5973 = vpack.c.b16 %v4965, %v4957
  %v5974 = vpack.c.b16 %v4966, %v4958
  %v5975 = vpack.c.b16 %v4967, %v4959
  %v5976 = vpack.c.b16 %v4968, %v4960
  %v5977 = vpack.c.b16 %v4969, %v4961
  %v5978 = vpack.c.b16 %v4970, %v4962
  %v5979 = vpack.c.b16 %v4971, %v4963
  %v5980 = vpack.c.b16 %v4972, %v4964
  %v5981 = vpack.c.b16 %v4981, %v4973
  %v5982 = vpack.c.b16 %v4982, %v4974
  %v5983 = vpack.c.b16 %v4983, %v4975
  %v5984 = vpack.c.b16 %v4984, %v4976
  %v5985 = vpack.c.b16 %v4985, %v4977
  %v5986 = vpack.c.b16 %v4986, %v4978
  %v5987 = vpack.c.b16 %v4987, %v4979
  %v5988 = vpack.c.b16 %v4988, %v4980
  %v5989 = vpack.c.b16 %v4997, %v4989
  %v5990 = vpack.c.b16 %v4998, %v4990
  %v5991 = vpack.c.b16 %v4999, %v4991
  %v5992 = vpack.c.b16 %v5000, %v4992
  %v5993 = vpack.c.b16 %v5001, %v4993
  %v5994 = vpack.c.b16 %v5002, %v4994
  %v5995 = vpack.c.b16 %v5003, %v4995
  %v5996 = vpack.c.b16 %v5004, %v4996
  %v5997 = vpack.c.b16 %v5013, %v5005
  %v5998 = vpack.c.b16 %v5014, %v5006
  %v5999 = vpack.c.b16 %v5015, %v5007
  %v6000 = vpack.c.b16 %v5016, %v5008
  %v6001 = vpack.c.b16 %v5017, %v5009
  %v6002 = vpack.c.b16 %v5018, %v5010
  %v6003 = vpack.c.b16 %v5019, %v5011
  %v6004 = vpack.c.b16 %v5020, %v5012
  %v6005 = vpack.c.b16 %v5029, %v5021
  %v6006 = vpack.c.b16 %v5030, %v5022
  %v6007 = vpack.c.b16 %v5031, %v5023
  %v6008 = vpack.c.b16 %v5032, %v5024
  %v6009 = vpack.c.b16 %v5033, %v5025
  %v6010 = vpack.c.b16 %v5034, %v5026
  %v6011 = vpack.c.b16 %v5035, %v5027
  %v6012 = vpack.c.b16 %v5036, %v5028
  %v6013 = vpack.c.b16 %v5045, %v5037
  %v6014 = vpack.c.b16 %v5046, %v5038
  %v6015 = vpack.c.b16 %v5047, %v5039
  %v6016 = vpack.c.b16 %v5048, %v5040
  %v6017 = vpack.c.b16 %v5049, %v5041
  %v6018 = vpack.c.b16 %v5050, %v5042
  %v6019 = vpack.c.b16 %v5051, %v5043
  %v6020 = vpack.c.b16 %v5052, %v5044
  %v6021 = vpack.c.b16 %v5061, %v5053
  %v6022 = vpack.c.b16 %v5062, %v5054
  %v6023 = vpack.c.b16 %v5063, %v5055
  %v6024 = vpack.c.b16 %v5064, %v5056
  %v6025 = vpack.c.b16 %v5065, %v5057
  %v6026 = vpack.c.b16 %v5066, %v5058
  %v6027 = vpack.c.b16 %v5067, %v5059
  %v6028 = vpack.c.b16 %v5068, %v5060
  %v6029 = vpack.c.b16 %v5077, %v5069
  %v6030 = vpack.c.b16 %v5078, %v5070
  %v6031 = vpack.c.b16 %v5079, %v5071
  %v6032 = vpack.c.b16 %v5080, %v5072
  %v6033 = vpack.c.b16 %v5081, %v5073
  %v6034 = vpack.c.b16 %v5082, %v5074
  %v6035 = vpack.c.b16 %v5083, %v5075
  %v6036 = vpack.c.b16 %v5084, %v5076
  %v6037 = vpack.c.b16 %v5093, %v5085
  %v6038 = vpack.c.b16 %v5094, %v5086
  %v6039 = vpack.c.b16 %v5095, %v5087
  %v6040 = vpack.c.b16 %v5096, %v5088
  %v6041 = vpack.c.b16 %v5097, %v5089
  %v6042 = vpack.c.b16 %v5098, %v5090
  %v6043 = vpack.c.b16 %v5099, %v5091
  %v6044 = vpack.c.b16 %v5100, %v5092
  %v6045 = vpack.c.b16 %v5109, %v5101
  %v6046 = vpack.c.b16 %v5110, %v5102
  %v6047 = vpack.c.b16 %v5111, %v5103
  %v6048 = vpack.c.b16 %v5112, %v5104
  %v6049 = vpack.c.b16 %v5113, %v5105
  %v6050 = vpack.c.b16 %v5114, %v5106
  %v6051 = vpack.c.b16 %v5115, %v5107
  %v6052 = vpack.c.b16 %v5116, %v5108
  %v6053 = vpack.c.b16 %v5125, %v5117
  %v6054 = vpack.c.b16 %v5126, %v5118
  %v6055 = vpack.c.b16 %v5127, %v5119
  %v6056 = vpack.c.b16 %v5128, %v5120
  %v6057 = vpack.c.b16 %v5129, %v5121
  %v6058 = vpack.c.b16 %v5130, %v5122
  %v6059 = vpack.c.b16 %v5131, %v5123
  %v6060 = vpack.c.b16 %v5132, %v5124
  %v6061 = vpack.c.b16 %v5141, %v5133
  %v6062 = vpack.c.b16 %v5142, %v5134
  %v6063 = vpack.c.b16 %v5143, %v5135
  %v6064 = vpack.c.b16 %v5144, %v5136
  %v6065 = vpack.c.b16 %v5145, %v5137
  %v6066 = vpack.c.b16 %v5146, %v5138
  %v6067 = vpack.c.b16 %v5147, %v5139
  %v6068 = vpack.c.b16 %v5148, %v5140
  %v6069 = vpack.c.b16 %v5157, %v5149
  %v6070 = vpack.c.b16 %v5158, %v5150
  %v6071 = vpack.c.b16 %v5159, %v5151
  %v6072 = vpack.c.b16 %v5160, %v5152
  %v6073 = vpack.c.b16 %v5161, %v5153
  %v6074 = vpack.c.b16 %v5162, %v5154
  %v6075 = vpack.c.b16 %v5163, %v5155
  %v6076 = vpack.c.b16 %v5164, %v5156
  %v6077 = vpack.c.b16 %v5173, %v5165
  %v6078 = vpack.c.b16 %v5174, %v5166
  %v6079 = vpack.c.b16 %v5175, %v5167
  %v6080 = vpack.c.b16 %v5176, %v5168
  %v6081 = vpack.c.b16 %v5177, %v5169
  %v6082 = vpack.c.b16 %v5178, %v5170
  %v6083 = vpack.c.b16 %v5179, %v5171
  %v6084 = vpack.c.b16 %v5180, %v5172
  %v6085 = vpack.c.b16 %v5189, %v5181
  %v6086 = vpack.c.b16 %v5190, %v5182
  %v6087 = vpack.c.b16 %v5191, %v5183
  %v6088 = vpack.c.b16 %v5192, %v5184
  %v6089 = vpack.c.b16 %v5193, %v5185
  %v6090 = vpack.c.b16 %v5194, %v5186
  %v6091 = vpack.c.b16 %v5195, %v5187
  %v6092 = vpack.c.b16 %v5196, %v5188
  %v6093 = vpack.c.b16 %v5205, %v5197
  %v6094 = vpack.c.b16 %v5206, %v5198
  %v6095 = vpack.c.b16 %v5207, %v5199
  %v6096 = vpack.c.b16 %v5208, %v5200
  %v6097 = vpack.c.b16 %v5209, %v5201
  %v6098 = vpack.c.b16 %v5210, %v5202
  %v6099 = vpack.c.b16 %v5211, %v5203
  %v6100 = vpack.c.b16 %v5212, %v5204
  %v6101 = vpack.c.b16 %v5221, %v5213
  %v6102 = vpack.c.b16 %v5222, %v5214
  %v6103 = vpack.c.b16 %v5223, %v5215
  %v6104 = vpack.c.b16 %v5224, %v5216
  %v6105 = vpack.c.b16 %v5225, %v5217
  %v6106 = vpack.c.b16 %v5226, %v5218
  %v6107 = vpack.c.b16 %v5227, %v5219
  %v6108 = vpack.c.b16 %v5228, %v5220
  %v6109 = vpack.c.b16 %v5237, %v5229
  %v6110 = vpack.c.b16 %v5238, %v5230
  %v6111 = vpack.c.b16 %v5239, %v5231
  %v6112 = vpack.c.b16 %v5240, %v5232
  %v6113 = vpack.c.b16 %v5241, %v5233
  %v6114 = vpack.c.b16 %v5242, %v5234
  %v6115 = vpack.c.b16 %v5243, %v5235
  %v6116 = vpack.c.b16 %v5244, %v5236
  %v6117 = vpack.c.b16 %v5253, %v5245
  %v6118 = vpack.c.b16 %v5254, %v5246
  %v6119 = vpack.c.b16 %v5255, %v5247
  %v6120 = vpack.c.b16 %v5256, %v5248
  %v6121 = vpack.c.b16 %v5257, %v5249
  %v6122 = vpack.c.b16 %v5258, %v5250
  %v6123 = vpack.c.b16 %v5259, %v5251
  %v6124 = vpack.c.b16 %v5260, %v5252
  %v6125 = vpack.c.b16 %v5269, %v5261
  %v6126 = vpack.c.b16 %v5270, %v5262
  %v6127 = vpack.c.b16 %v5271, %v5263
  %v6128 = vpack.c.b16 %v5272, %v5264
  %v6129 = vpack.c.b16 %v5273, %v5265
  %v6130 = vpack.c.b16 %v5274, %v5266
  %v6131 = vpack.c.b16 %v5275, %v5267
  %v6132 = vpack.c.b16 %v5276, %v5268
  %v6133 = vpack.c.b16 %v5285, %v5277
  %v6134 = vpack.c.b16 %v5286, %v5278
  %v6135 = vpack.c.b16 %v5287, %v5279
  %v6136 = vpack.c.b16 %v5288, %v5280
  %v6137 = vpack.c.b16 %v5289, %v5281
  %v6138 = vpack.c.b16 %v5290, %v5282
  %v6139 = vpack.c.b16 %v5291, %v5283
  %v6140 = vpack.c.b16 %v5292, %v5284
  %v6141 = vpack.c.b16 %v5301, %v5293
  %v6142 = vpack.c.b16 %v5302, %v5294
  %v6143 = vpack.c.b16 %v5303, %v5295
  %v6144 = vpack.c.b16 %v5304, %v5296
  %v6145 = vpack.c.b16 %v5305, %v5297
  %v6146 = vpack.c.b16 %v5306, %v5298
  %v6147 = vpack.c.b16 %v5307, %v5299
  %v6148 = vpack.c.b16 %v5308, %v5300
  %v6149 = vpack.c.b16 %v5317, %v5309
  %v6150 = vpack.c.b16 %v5318, %v5310
  %v6151 = vpack.c.b16 %v5319, %v5311
  %v6152 = vpack.c.b16 %v5320, %v5312
  %v6153 = vpack.c.b16 %v5321, %v5313
  %v6154 = vpack.c.b16 %v5322, %v5314
  %v6155 = vpack.c.b16 %v5323, %v5315
  %v6156 = vpack.c.b16 %v5324, %v5316
  %v6157 = vpack.c.b16 %v5333, %v5325
  %v6158 = vpack.c.b16 %v5334, %v5326
  %v6159 = vpack.c.b16 %v5335, %v5327
  %v6160 = vpack.c.b16 %v5336, %v5328
  %v6161 = vpack.c.b16 %v5337, %v5329
  %v6162 = vpack.c.b16 %v5338, %v5330
  %v6163 = vpack.c.b16 %v5339, %v5331
  %v6164 = vpack.c.b16 %v5340, %v5332
  %v6165 = vpack.c.b16 %v5349, %v5341
  %v6166 = vpack.c.b16 %v5350, %v5342
  %v6167 = vpack.c.b16 %v5351, %v5343
  %v6168 = vpack.c.b16 %v5352, %v5344
  %v6169 = vpack.c.b16 %v5353, %v5345
  %v6170 = vpack.c.b16 %v5354, %v5346
  %v6171 = vpack.c.b16 %v5355, %v5347
  %v6172 = vpack.c.b16 %v5356, %v5348
  %v6173 = vpack.c.b16 %v5365, %v5357
  %v6174 = vpack.c.b16 %v5366, %v5358
  %v6175 = vpack.c.b16 %v5367, %v5359
  %v6176 = vpack.c.b16 %v5368, %v5360
  %v6177 = vpack.c.b16 %v5369, %v5361
  %v6178 = vpack.c.b16 %v5370, %v5362
  %v6179 = vpack.c.b16 %v5371, %v5363
  %v6180 = vpack.c.b16 %v5372, %v5364
  %v6181 = vpack.c.b16 %v5381, %v5373
  %v6182 = vpack.c.b16 %v5382, %v5374
  %v6183 = vpack.c.b16 %v5383, %v5375
  %v6184 = vpack.c.b16 %v5384, %v5376
  %v6185 = vpack.c.b16 %v5385, %v5377
  %v6186 = vpack.c.b16 %v5386, %v5378
  %v6187 = vpack.c.b16 %v5387, %v5379
  %v6188 = vpack.c.b16 %v5388, %v5380
  %v6189 = vpack.c.b16 %v5397, %v5389
  %v6190 = vpack.c.b16 %v5398, %v5390
  %v6191 = vpack.c.b16 %v5399, %v5391
  %v6192 = vpack.c.b16 %v5400, %v5392
  %v6193 = vpack.c.b16 %v5401, %v5393
  %v6194 = vpack.c.b16 %v5402, %v5394
  %v6195 = vpack.c.b16 %v5403, %v5395
  %v6196 = vpack.c.b16 %v5404, %v5396
  %v6197 = vpack.c.b16 %v5413, %v5405
  %v6198 = vpack.c.b16 %v5414, %v5406
  %v6199 = vpack.c.b16 %v5415, %v5407
  %v6200 = vpack.c.b16 %v5416, %v5408
  %v6201 = vpack.c.b16 %v5417, %v5409
  %v6202 = vpack.c.b16 %v5418, %v5410
  %v6203 = vpack.c.b16 %v5419, %v5411
  %v6204 = vpack.c.b16 %v5420, %v5412
  %v6205 = vpack.c.b16 %v5429, %v5421
  %v6206 = vpack.c.b16 %v5430, %v5422
  %v6207 = vpack.c.b16 %v5431, %v5423
  %v6208 = vpack.c.b16 %v5432, %v5424
  %v6209 = vpack.c.b16 %v5433, %v5425
  %v6210 = vpack.c.b16 %v5434, %v5426
  %v6211 = vpack.c.b16 %v5435, %v5427
  %v6212 = vpack.c.b16 %v5436, %v5428
  %v6213 = vpack.c.b16 %v5445, %v5437
  %v6214 = vpack.c.b16 %v5446, %v5438
  %v6215 = vpack.c.b16 %v5447, %v5439
  %v6216 = vpack.c.b16 %v5448, %v5440
  %v6217 = vpack.c.b16 %v5449, %v5441
  %v6218 = vpack.c.b16 %v5450, %v5442
  %v6219 = vpack.c.b16 %v5451, %v5443
  %v6220 = vpack.c.b16 %v5452, %v5444
  %v6221 = vpack.c.b16 %v5461, %v5453
  %v6222 = vpack.c.b16 %v5462, %v5454
  %v6223 = vpack.c.b16 %v5463, %v5455
  %v6224 = vpack.c.b16 %v5464, %v5456
  %v6225 = vpack.c.b16 %v5465, %v5457
  %v6226 = vpack.c.b16 %v5466, %v5458
  %v6227 = vpack.c.b16 %v5467, %v5459
  %v6228 = vpack.c.b16 %v5468, %v5460
  %v6229 = vpack.c.b16 %v5477, %v5469
  %v6230 = vpack.c.b16 %v5478, %v5470
  %v6231 = vpack.c.b16 %v5479, %v5471
  %v6232 = vpack.c.b16 %v5480, %v5472
  %v6233 = vpack.c.b16 %v5481, %v5473
  %v6234 = vpack.c.b16 %v5482, %v5474
  %v6235 = vpack.c.b16 %v5483, %v5475
  %v6236 = vpack.c.b16 %v5484, %v5476
  %v6237 = vpack.c.b16 %v5493, %v5485
  %v6238 = vpack.c.b16 %v5494, %v5486
  %v6239 = vpack.c.b16 %v5495, %v5487
  %v6240 = vpack.c.b16 %v5496, %v5488
  %v6241 = vpack.c.b16 %v5497, %v5489
  %v6242 = vpack.c.b16 %v5498, %v5490
  %v6243 = vpack.c.b16 %v5499, %v5491
  %v6244 = vpack.c.b16 %v5500, %v5492
  %v6245 = vpack.c.b16 %v5509, %v5501
  %v6246 = vpack.c.b16 %v5510, %v5502
  %v6247 = vpack.c.b16 %v5511, %v5503
  %v6248 = vpack.c.b16 %v5512, %v5504
  %v6249 = vpack.c.b16 %v5513, %v5505
  %v6250 = vpack.c.b16 %v5514, %v5506
  %v6251 = vpack.c.b16 %v5515, %v5507
  %v6252 = vpack.c.b16 %v5516, %v5508
  %v6253 = vpack.c.b16 %v5525, %v5517
  %v6254 = vpack.c.b16 %v5526, %v5518
  %v6255 = vpack.c.b16 %v5527, %v5519
  %v6256 = vpack.c.b16 %v5528, %v5520
  %v6257 = vpack.c.b16 %v5529, %v5521
  %v6258 = vpack.c.b16 %v5530, %v5522
  %v6259 = vpack.c.b16 %v5531, %v5523
  %v6260 = vpack.c.b16 %v5532, %v5524
  %v6261 = vpack.c.b16 %v5541, %v5533
  %v6262 = vpack.c.b16 %v5542, %v5534
  %v6263 = vpack.c.b16 %v5543, %v5535
  %v6264 = vpack.c.b16 %v5544, %v5536
  %v6265 = vpack.c.b16 %v5545, %v5537
  %v6266 = vpack.c.b16 %v5546, %v5538
  %v6267 = vpack.c.b16 %v5547, %v5539
  %v6268 = vpack.c.b16 %v5548, %v5540
  %v6269 = vpack.c.b16 %v5557, %v5549
  %v6270 = vpack.c.b16 %v5558, %v5550
  %v6271 = vpack.c.b16 %v5559, %v5551
  %v6272 = vpack.c.b16 %v5560, %v5552
  %v6273 = vpack.c.b16 %v5561, %v5553
  %v6274 = vpack.c.b16 %v5562, %v5554
  %v6275 = vpack.c.b16 %v5563, %v5555
  %v6276 = vpack.c.b16 %v5564, %v5556
  %v6277 = vpack.c.b16 %v5573, %v5565
  %v6278 = vpack.c.b16 %v5574, %v5566
  %v6279 = vpack.c.b16 %v5575, %v5567
  %v6280 = vpack.c.b16 %v5576, %v5568
  %v6281 = vpack.c.b16 %v5577, %v5569
  %v6282 = vpack.c.b16 %v5578, %v5570
  %v6283 = vpack.c.b16 %v5579, %v5571
  %v6284 = vpack.c.b16 %v5580, %v5572
  %v6285 = vpack.c.b16 %v5589, %v5581
  %v6286 = vpack.c.b16 %v5590, %v5582
  %v6287 = vpack.c.b16 %v5591, %v5583
  %v6288 = vpack.c.b16 %v5592, %v5584
  %v6289 = vpack.c.b16 %v5593, %v5585
  %v6290 = vpack.c.b16 %v5594, %v5586
  %v6291 = vpack.c.b16 %v5595, %v5587
  %v6292 = vpack.c.b16 %v5596, %v5588
  %v6293 = vpack.c.b16 %v5605, %v5597
  %v6294 = vpack.c.b16 %v5606, %v5598
  %v6295 = vpack.c.b16 %v5607, %v5599
  %v6296 = vpack.c.b16 %v5608, %v5600
  %v6297 = vpack.c.b16 %v5609, %v5601
  %v6298 = vpack.c.b16 %v5610, %v5602
  %v6299 = vpack.c.b16 %v5611, %v5603
  %v6300 = vpack.c.b16 %v5612, %v5604
  %v6301 = vpack.c.b16 %v5621, %v5613
  %v6302 = vpack.c.b16 %v5622, %v5614
  %v6303 = vpack.c.b16 %v5623, %v5615
  %v6304 = vpack.c.b16 %v5624, %v5616
  %v6305 = vpack.c.b16 %v5625, %v5617
  %v6306 = vpack.c.b16 %v5626, %v5618
  %v6307 = vpack.c.b16 %v5627, %v5619
  %v6308 = vpack.c.b16 %v5628, %v5620
  %v6309 = vpack.c.b16 %v5637, %v5629
  %v6310 = vpack.c.b16 %v5638, %v5630
  %v6311 = vpack.c.b16 %v5639, %v5631
  %v6312 = vpack.c.b16 %v5640, %v5632
  %v6313 = vpack.c.b16 %v5641, %v5633
  %v6314 = vpack.c.b16 %v5642, %v5634
  %v6315 = vpack.c.b16 %v5643, %v5635
  %v6316 = vpack.c.b16 %v5644, %v5636
  %v6317 = vpack.c.b16 %v5653, %v5645
  %v6318 = vpack.c.b16 %v5654, %v5646
  %v6319 = vpack.c.b16 %v5655, %v5647
  %v6320 = vpack.c.b16 %v5656, %v5648
  %v6321 = vpack.c.b16 %v5657, %v5649
  %v6322 = vpack.c.b16 %v5658, %v5650
  %v6323 = vpack.c.b16 %v5659, %v5651
  %v6324 = vpack.c.b16 %v5660, %v5652
  %v6325 = vpack.c.b16 %v5669, %v5661
  %v6326 = vpack.c.b16 %v5670, %v5662
  %v6327 = vpack.c.b16 %v5671, %v5663
  %v6328 = vpack.c.b16 %v5672, %v5664
  %v6329 = vpack.c.b16 %v5673, %v5665
  %v6330 = vpack.c.b16 %v5674, %v5666
  %v6331 = vpack.c.b16 %v5675, %v5667
  %v6332 = vpack.c.b16 %v5676, %v5668
  %v6333 = vpack.c.b16 %v5685, %v5677
  %v6334 = vpack.c.b16 %v5686, %v5678
  %v6335 = vpack.c.b16 %v5687, %v5679
  %v6336 = vpack.c.b16 %v5688, %v5680
  %v6337 = vpack.c.b16 %v5689, %v5681
  %v6338 = vpack.c.b16 %v5690, %v5682
  %v6339 = vpack.c.b16 %v5691, %v5683
  %v6340 = vpack.c.b16 %v5692, %v5684
  %v6341 = vpack.c.b16 %v5701, %v5693
  %v6342 = vpack.c.b16 %v5702, %v5694
  %v6343 = vpack.c.b16 %v5703, %v5695
  %v6344 = vpack.c.b16 %v5704, %v5696
  %v6345 = vpack.c.b16 %v5705, %v5697
  %v6346 = vpack.c.b16 %v5706, %v5698
  %v6347 = vpack.c.b16 %v5707, %v5699
  %v6348 = vpack.c.b16 %v5708, %v5700
  %v6349 = vpack.c.b16 %v5717, %v5709
  %v6350 = vpack.c.b16 %v5718, %v5710
  %v6351 = vpack.c.b16 %v5719, %v5711
  %v6352 = vpack.c.b16 %v5720, %v5712
  %v6353 = vpack.c.b16 %v5721, %v5713
  %v6354 = vpack.c.b16 %v5722, %v5714
  %v6355 = vpack.c.b16 %v5723, %v5715
  %v6356 = vpack.c.b16 %v5724, %v5716
  %v6357 = vpack.c.b16 %v5733, %v5725
  %v6358 = vpack.c.b16 %v5734, %v5726
  %v6359 = vpack.c.b16 %v5735, %v5727
  %v6360 = vpack.c.b16 %v5736, %v5728
  %v6361 = vpack.c.b16 %v5737, %v5729
  %v6362 = vpack.c.b16 %v5738, %v5730
  %v6363 = vpack.c.b16 %v5739, %v5731
  %v6364 = vpack.c.b16 %v5740, %v5732
  %v6365 = vpack.c.b16 %v5749, %v5741
  %v6366 = vpack.c.b16 %v5750, %v5742
  %v6367 = vpack.c.b16 %v5751, %v5743
  %v6368 = vpack.c.b16 %v5752, %v5744
  %v6369 = vpack.c.b16 %v5753, %v5745
  %v6370 = vpack.c.b16 %v5754, %v5746
  %v6371 = vpack.c.b16 %v5755, %v5747
  %v6372 = vpack.c.b16 %v5756, %v5748
  %v6373 = vpack.c.b16 %v5765, %v5757
  %v6374 = vpack.c.b16 %v5766, %v5758
  %v6375 = vpack.c.b16 %v5767, %v5759
  %v6376 = vpack.c.b16 %v5768, %v5760
  %v6377 = vpack.c.b16 %v5769, %v5761
  %v6378 = vpack.c.b16 %v5770, %v5762
  %v6379 = vpack.c.b16 %v5771, %v5763
  %v6380 = vpack.c.b16 %v5772, %v5764
  %v6381 = vpack.c.b16 %v5781, %v5773
  %v6382 = vpack.c.b16 %v5782, %v5774
  %v6383 = vpack.c.b16 %v5783, %v5775
  %v6384 = vpack.c.b16 %v5784, %v5776
  %v6385 = vpack.c.b16 %v5785, %v5777
  %v6386 = vpack.c.b16 %v5786, %v5778
  %v6387 = vpack.c.b16 %v5787, %v5779
  %v6388 = vpack.c.b16 %v5788, %v5780
  %v6389 = vpack.c.b16 %v5797, %v5789
  %v6390 = vpack.c.b16 %v5798, %v5790
  %v6391 = vpack.c.b16 %v5799, %v5791
  %v6392 = vpack.c.b16 %v5800, %v5792
  %v6393 = vpack.c.b16 %v5801, %v5793
  %v6394 = vpack.c.b16 %v5802, %v5794
  %v6395 = vpack.c.b16 %v5803, %v5795
  %v6396 = vpack.c.b16 %v5804, %v5796
  %v6397 = vpack.c.b16 %v5813, %v5805
  %v6398 = vpack.c.b16 %v5814, %v5806
  %v6399 = vpack.c.b16 %v5815, %v5807
  %v6400 = vpack.c.b16 %v5816, %v5808
  %v6401 = vpack.c.b16 %v5817, %v5809
  %v6402 = vpack.c.b16 %v5818, %v5810
  %v6403 = vpack.c.b16 %v5819, %v5811
  %v6404 = vpack.c.b16 %v5820, %v5812
  %v6405 = vpack.c.b16 %v5829, %v5821
  %v6406 = vpack.c.b16 %v5830, %v5822
  %v6407 = vpack.c.b16 %v5831, %v5823
  %v6408 = vpack.c.b16 %v5832, %v5824
  %v6409 = vpack.c.b16 %v5833, %v5825
  %v6410 = vpack.c.b16 %v5834, %v5826
  %v6411 = vpack.c.b16 %v5835, %v5827
  %v6412 = vpack.c.b16 %v5836, %v5828
  %v6413 = vpack.c.b16 %v5845, %v5837
  %v6414 = vpack.c.b16 %v5846, %v5838
  %v6415 = vpack.c.b16 %v5847, %v5839
  %v6416 = vpack.c.b16 %v5848, %v5840
  %v6417 = vpack.c.b16 %v5849, %v5841
  %v6418 = vpack.c.b16 %v5850, %v5842
  %v6419 = vpack.c.b16 %v5851, %v5843
  %v6420 = vpack.c.b16 %v5852, %v5844
  %v6421 = vpack.c.b16 %v5861, %v5853
  %v6422 = vpack.c.b16 %v5862, %v5854
  %v6423 = vpack.c.b16 %v5863, %v5855
  %v6424 = vpack.c.b16 %v5864, %v5856
  %v6425 = vpack.c.b16 %v5865, %v5857
  %v6426 = vpack.c.b16 %v5866, %v5858
  %v6427 = vpack.c.b16 %v5867, %v5859
  %v6428 = vpack.c.b16 %v5868, %v5860
  %v6429 = vpack.c.b16 %v5877, %v5869
  %v6430 = vpack.c.b16 %v5878, %v5870
  %v6431 = vpack.c.b16 %v5879, %v5871
  %v6432 = vpack.c.b16 %v5880, %v5872
  %v6433 = vpack.c.b16 %v5881, %v5873
  %v6434 = vpack.c.b16 %v5882, %v5874
  %v6435 = vpack.c.b16 %v5883, %v5875
  %v6436 = vpack.c.b16 %v5884, %v5876
  %v6437 = vpack.c.b16 %v5893, %v5885
  %v6438 = vpack.c.b16 %v5894, %v5886
  %v6439 = vpack.c.b16 %v5895, %v5887
  %v6440 = vpack.c.b16 %v5896, %v5888
  %v6441 = vpack.c.b16 %v5897, %v5889
  %v6442 = vpack.c.b16 %v5898, %v5890
  %v6443 = vpack.c.b16 %v5899, %v5891
  %v6444 = vpack.c.b16 %v5900, %v5892
  %v6445 = vpack.c.b16 %v5909, %v5901
  %v6446 = vpack.c.b16 %v5910, %v5902
  %v6447 = vpack.c.b16 %v5911, %v5903
  %v6448 = vpack.c.b16 %v5912, %v5904
  %v6449 = vpack.c.b16 %v5913, %v5905
  %v6450 = vpack.c.b16 %v5914, %v5906
  %v6451 = vpack.c.b16 %v5915, %v5907
  %v6452 = vpack.c.b16 %v5916, %v5908
  %v6453 = vpack.c.b16 %v5925, %v5917
  %v6454 = vpack.c.b16 %v5926, %v5918
  %v6455 = vpack.c.b16 %v5927, %v5919
  %v6456 = vpack.c.b16 %v5928, %v5920
  %v6457 = vpack.c.b16 %v5929, %v5921
  %v6458 = vpack.c.b16 %v5930, %v5922
  %v6459 = vpack.c.b16 %v5931, %v5923
  %v6460 = vpack.c.b16 %v5932, %v5924
  %v6461 = vpack.c.b16 %v5941, %v5933
  %v6462 = vpack.c.b16 %v5942, %v5934
  %v6463 = vpack.c.b16 %v5943, %v5935
  %v6464 = vpack.c.b16 %v5944, %v5936
  %v6465 = vpack.c.b16 %v5945, %v5937
  %v6466 = vpack.c.b16 %v5946, %v5938
  %v6467 = vpack.c.b16 %v5947, %v5939
  %v6468 = vpack.c.b16 %v5948, %v5940
  %v6469 = vpack.c.b16 %v5957, %v5949
  %v6470 = vpack.c.b16 %v5958, %v5950
  %v6471 = vpack.c.b16 %v5959, %v5951
  %v6472 = vpack.c.b16 %v5960, %v5952
  %v6473 = vpack.c.b16 %v5961, %v5953
  %v6474 = vpack.c.b16 %v5962, %v5954
  %v6475 = vpack.c.b16 %v5963, %v5955
  %v6476 = vpack.c.b16 %v5964, %v5956
  %6989 = vmatprep.subr.bf16.mxu0 %v5966
  %6990 = vmatpush1.bf16.msra.mxu0 %v5965
  %6991 = vmatprep.subr.bf16.mxu0 %v5974
  %6992 = vmatpush1.bf16.msra.mxu0 %v5973
  %6993 = vmatprep.subr.bf16.mxu0 %v5982
  %6994 = vmatpush1.bf16.msra.mxu0 %v5981
  %6995 = vmatprep.subr.bf16.mxu0 %v5990
  %6996 = vmatpush1.bf16.msra.mxu0 %v5989
  %6997 = vmatprep.subr.bf16.mxu0 %v5998
  %6998 = vmatpush1.bf16.msra.mxu0 %v5997
  %6999 = vmatprep.subr.bf16.mxu0 %v6006
  %7000 = vmatpush1.bf16.msra.mxu0 %v6005
  %7001 = vmatprep.subr.bf16.mxu0 %v6014
  %7002 = vmatpush1.bf16.msra.mxu0 %v6013
  %7003 = vmatprep.subr.bf16.mxu0 %v6022
  %7004 = vmatpush1.bf16.msra.mxu0 %v6021
  %7005 = vmatprep.subr.bf16.mxu0 %v6030
  %7006 = vmatpush1.bf16.msra.mxu0 %v6029
  %7007 = vmatprep.subr.bf16.mxu0 %v6038
  %7008 = vmatpush1.bf16.msra.mxu0 %v6037
  %7009 = vmatprep.subr.bf16.mxu0 %v6046
  %7010 = vmatpush1.bf16.msra.mxu0 %v6045
  %7011 = vmatprep.subr.bf16.mxu0 %v6054
  %7012 = vmatpush1.bf16.msra.mxu0 %v6053
  %7013 = vmatprep.subr.bf16.mxu0 %v6062
  %7014 = vmatpush1.bf16.msra.mxu0 %v6061
  %7015 = vmatprep.subr.bf16.mxu0 %v6070
  %7016 = vmatpush1.bf16.msra.mxu0 %v6069
  %7017 = vmatprep.subr.bf16.mxu0 %v6078
  %7018 = vmatpush1.bf16.msra.mxu0 %v6077
  %7019 = vmatprep.subr.bf16.mxu0 %v6086
  %7020 = vmatpush1.bf16.msra.mxu0 %v6085
  %7021 = vmatprep.mubr.bf16.mxu0 %v3868
  %7022 = vmatmul.mubr.bf16.gmra.mrb[0].mxu0 %v3867
  %v7023 = vpop.f32.mrb[0].mxu0
  %v7024 = vadd.f32 %v4392, %v7023
  %v7025 = vpop.f32.mrb[0].mxu0
  %v7026 = vadd.f32 %v4396, %v7025
  %v7027 = vpop.f32.mrb[0].mxu0
  %v7028 = vadd.f32 %v4392, %v7027
  %v7029 = vpop.f32.mrb[0].mxu0
  %v7030 = vadd.f32 %v4396, %v7029
  %7031 = vdwg.mxu0
  %7032 = vmatprep.subr.bf16.mxu0 %v6094
  %7033 = vmatpush1.bf16.msra.mxu0 %v6093
  %7034 = vmatprep.subr.bf16.mxu0 %v6102
  %7035 = vmatpush1.bf16.msra.mxu0 %v6101
  %7036 = vmatprep.subr.bf16.mxu0 %v6110
  %7037 = vmatpush1.bf16.msra.mxu0 %v6109
  %7038 = vmatprep.subr.bf16.mxu0 %v6118
  %7039 = vmatpush1.bf16.msra.mxu0 %v6117
  %7040 = vmatprep.subr.bf16.mxu0 %v6126
  %7041 = vmatpush1.bf16.msra.mxu0 %v6125
  %7042 = vmatprep.subr.bf16.mxu0 %v6134
  %7043 = vmatpush1.bf16.msra.mxu0 %v6133
  %7044 = vmatprep.subr.bf16.mxu0 %v6142
  %7045 = vmatpush1.bf16.msra.mxu0 %v6141
  %7046 = vmatprep.subr.bf16.mxu0 %v6150
  %7047 = vmatpush1.bf16.msra.mxu0 %v6149
  %7048 = vmatprep.subr.bf16.mxu0 %v6158
  %7049 = vmatpush1.bf16.msra.mxu0 %v6157
  %7050 = vmatprep.subr.bf16.mxu0 %v6166
  %7051 = vmatpush1.bf16.msra.mxu0 %v6165
  %7052 = vmatprep.subr.bf16.mxu0 %v6174
  %7053 = vmatpush1.bf16.msra.mxu0 %v6173
  %7054 = vmatprep.subr.bf16.mxu0 %v6182
  %7055 = vmatpush1.bf16.msra.mxu0 %v6181
  %7056 = vmatprep.subr.bf16.mxu0 %v6190
  %7057 = vmatpush1.bf16.msra.mxu0 %v6189
  %7058 = vmatprep.subr.bf16.mxu0 %v6198
  %7059 = vmatpush1.bf16.msra.mxu0 %v6197
  %7060 = vmatprep.subr.bf16.mxu0 %v6206
  %7061 = vmatpush1.bf16.msra.mxu0 %v6205
  %7062 = vmatprep.subr.bf16.mxu0 %v6214
  %7063 = vmatpush1.bf16.msra.mxu0 %v6213
  %7064 = vmatprep.mubr.bf16.mxu0 %v3870
  %7065 = vmatmul.mubr.bf16.gmra.mrb[0].mxu0 %v3869
  %v7066 = vpop.f32.mrb[0].mxu0
  %v7067 = vadd.f32 %v7024, %v7066
  %v7068 = vpop.f32.mrb[0].mxu0
  %v7069 = vadd.f32 %v7026, %v7068
  %v7070 = vpop.f32.mrb[0].mxu0
  %v7071 = vadd.f32 %v7028, %v7070
  %v7072 = vpop.f32.mrb[0].mxu0
  %v7073 = vadd.f32 %v7030, %v7072
  %7074 = vdwg.mxu0
  %7075 = vmatprep.subr.bf16.mxu0 %v6222
  %7076 = vmatpush1.bf16.msra.mxu0 %v6221
  %7077 = vmatprep.subr.bf16.mxu0 %v6230
  %7078 = vmatpush1.bf16.msra.mxu0 %v6229
  %7079 = vmatprep.subr.bf16.mxu0 %v6238
  %7080 = vmatpush1.bf16.msra.mxu0 %v6237
  %7081 = vmatprep.subr.bf16.mxu0 %v6246
  %7082 = vmatpush1.bf16.msra.mxu0 %v6245
  %7083 = vmatprep.subr.bf16.mxu0 %v6254
  %7084 = vmatpush1.bf16.msra.mxu0 %v6253
  %7085 = vmatprep.subr.bf16.mxu0 %v6262
  %7086 = vmatpush1.bf16.msra.mxu0 %v6261
  %7087 = vmatprep.subr.bf16.mxu0 %v6270
  %7088 = vmatpush1.bf16.msra.mxu0 %v6269
  %7089 = vmatprep.subr.bf16.mxu0 %v6278
  %7090 = vmatpush1.bf16.msra.mxu0 %v6277
  %7091 = vmatprep.subr.bf16.mxu0 %v6286
  %7092 = vmatpush1.bf16.msra.mxu0 %v6285
  %7093 = vmatprep.subr.bf16.mxu0 %v6294
  %7094 = vmatpush1.bf16.msra.mxu0 %v6293
  %7095 = vmatprep.subr.bf16.mxu0 %v6302
  %7096 = vmatpush1.bf16.msra.mxu0 %v6301
  %7097 = vmatprep.subr.bf16.mxu0 %v6310
  %7098 = vmatpush1.bf16.msra.mxu0 %v6309
  %7099 = vmatprep.subr.bf16.mxu0 %v6318
  %7100 = vmatpush1.bf16.msra.mxu0 %v6317
  %7101 = vmatprep.subr.bf16.mxu0 %v6326
  %7102 = vmatpush1.bf16.msra.mxu0 %v6325
  %7103 = vmatprep.subr.bf16.mxu0 %v6334
  %7104 = vmatpush1.bf16.msra.mxu0 %v6333
  %7105 = vmatprep.subr.bf16.mxu0 %v6342
  %7106 = vmatpush1.bf16.msra.mxu0 %v6341
  %7107 = vmatprep.mubr.bf16.mxu0 %v3872
  %7108 = vmatmul.mubr.bf16.gmra.mrb[0].mxu0 %v3871
  %v7109 = vpop.f32.mrb[0].mxu0
  %v7110 = vadd.f32 %v7067, %v7109
  %v7111 = vpop.f32.mrb[0].mxu0
  %v7112 = vadd.f32 %v7069, %v7111
  %v7113 = vpop.f32.mrb[0].mxu0
  %v7114 = vadd.f32 %v7071, %v7113
  %v7115 = vpop.f32.mrb[0].mxu0
  %v7116 = vadd.f32 %v7073, %v7115
  %7117 = vdwg.mxu0
  %7118 = vmatprep.subr.bf16.mxu0 %v6350
  %7119 = vmatpush1.bf16.msra.mxu0 %v6349
  %7120 = vmatprep.subr.bf16.mxu0 %v6358
  %7121 = vmatpush1.bf16.msra.mxu0 %v6357
  %7122 = vmatprep.subr.bf16.mxu0 %v6366
  %7123 = vmatpush1.bf16.msra.mxu0 %v6365
  %7124 = vmatprep.subr.bf16.mxu0 %v6374
  %7125 = vmatpush1.bf16.msra.mxu0 %v6373
  %7126 = vmatprep.subr.bf16.mxu0 %v6382
  %7127 = vmatpush1.bf16.msra.mxu0 %v6381
  %7128 = vmatprep.subr.bf16.mxu0 %v6390
  %7129 = vmatpush1.bf16.msra.mxu0 %v6389
  %7130 = vmatprep.subr.bf16.mxu0 %v6398
  %7131 = vmatpush1.bf16.msra.mxu0 %v6397
  %7132 = vmatprep.subr.bf16.mxu0 %v6406
  %7133 = vmatpush1.bf16.msra.mxu0 %v6405
  %7134 = vmatprep.subr.bf16.mxu0 %v6414
  %7135 = vmatpush1.bf16.msra.mxu0 %v6413
  %7136 = vmatprep.subr.bf16.mxu0 %v6422
  %7137 = vmatpush1.bf16.msra.mxu0 %v6421
  %7138 = vmatprep.subr.bf16.mxu0 %v6430
  %7139 = vmatpush1.bf16.msra.mxu0 %v6429
  %7140 = vmatprep.subr.bf16.mxu0 %v6438
  %7141 = vmatpush1.bf16.msra.mxu0 %v6437
  %7142 = vmatprep.subr.bf16.mxu0 %v6446
  %7143 = vmatpush1.bf16.msra.mxu0 %v6445
  %7144 = vmatprep.subr.bf16.mxu0 %v6454
  %7145 = vmatpush1.bf16.msra.mxu0 %v6453
  %7146 = vmatprep.subr.bf16.mxu0 %v6462
  %7147 = vmatpush1.bf16.msra.mxu0 %v6461
  %7148 = vmatprep.subr.bf16.mxu0 %v6470
  %7149 = vmatpush1.bf16.msra.mxu0 %v6469
  %7150 = vmatprep.mubr.bf16.mxu0 %v3874
  %7151 = vmatmul.mubr.bf16.gmra.mrb[0].mxu0 %v3873
  %v7152 = vpop.f32.mrb[0].mxu0
  %v7153 = vadd.f32 %v7110, %v7152
  %v7154 = vpop.f32.mrb[0].mxu0
  %v7155 = vadd.f32 %v7112, %v7154
  %v7156 = vpop.f32.mrb[0].mxu0
  %v7157 = vadd.f32 %v7114, %v7156
  %v7158 = vpop.f32.mrb[0].mxu0
  %v7159 = vadd.f32 %v7116, %v7158
  %7160 = vdwg.mxu0
  %7161 = vmatprep.subr.bf16.mxu0 %v5968
  %7162 = vmatpush1.bf16.msra.mxu0 %v5967
  %7163 = vmatprep.subr.bf16.mxu0 %v5976
  %7164 = vmatpush1.bf16.msra.mxu0 %v5975
  %7165 = vmatprep.subr.bf16.mxu0 %v5984
  %7166 = vmatpush1.bf16.msra.mxu0 %v5983
  %7167 = vmatprep.subr.bf16.mxu0 %v5992
  %7168 = vmatpush1.bf16.msra.mxu0 %v5991
  %7169 = vmatprep.subr.bf16.mxu0 %v6000
  %7170 = vmatpush1.bf16.msra.mxu0 %v5999
  %7171 = vmatprep.subr.bf16.mxu0 %v6008
  %7172 = vmatpush1.bf16.msra.mxu0 %v6007
  %7173 = vmatprep.subr.bf16.mxu0 %v6016
  %7174 = vmatpush1.bf16.msra.mxu0 %v6015
  %7175 = vmatprep.subr.bf16.mxu0 %v6024
  %7176 = vmatpush1.bf16.msra.mxu0 %v6023
  %7177 = vmatprep.subr.bf16.mxu0 %v6032
  %7178 = vmatpush1.bf16.msra.mxu0 %v6031
  %7179 = vmatprep.subr.bf16.mxu0 %v6040
  %7180 = vmatpush1.bf16.msra.mxu0 %v6039
  %7181 = vmatprep.subr.bf16.mxu0 %v6048
  %7182 = vmatpush1.bf16.msra.mxu0 %v6047
  %7183 = vmatprep.subr.bf16.mxu0 %v6056
  %7184 = vmatpush1.bf16.msra.mxu0 %v6055
  %7185 = vmatprep.subr.bf16.mxu0 %v6064
  %7186 = vmatpush1.bf16.msra.mxu0 %v6063
  %7187 = vmatprep.subr.bf16.mxu0 %v6072
  %7188 = vmatpush1.bf16.msra.mxu0 %v6071
  %7189 = vmatprep.subr.bf16.mxu0 %v6080
  %7190 = vmatpush1.bf16.msra.mxu0 %v6079
  %7191 = vmatprep.subr.bf16.mxu0 %v6088
  %7192 = vmatpush1.bf16.msra.mxu0 %v6087
  %7193 = vmatprep.mubr.bf16.mxu0 %v3868
  %7194 = vmatmul.mubr.bf16.gmra.mrb[0].mxu0 %v3867
  %v7195 = vpop.f32.mrb[0].mxu0
  %v7196 = vadd.f32 %v4400, %v7195
  %v7197 = vpop.f32.mrb[0].mxu0
  %v7198 = vadd.f32 %v4404, %v7197
  %v7199 = vpop.f32.mrb[0].mxu0
  %v7200 = vadd.f32 %v4400, %v7199
  %v7201 = vpop.f32.mrb[0].mxu0
  %v7202 = vadd.f32 %v4404, %v7201
  %7203 = vdwg.mxu0
  %7204 = vmatprep.subr.bf16.mxu0 %v6096
  %7205 = vmatpush1.bf16.msra.mxu0 %v6095
  %7206 = vmatprep.subr.bf16.mxu0 %v6104
  %7207 = vmatpush1.bf16.msra.mxu0 %v6103
  %7208 = vmatprep.subr.bf16.mxu0 %v6112
  %7209 = vmatpush1.bf16.msra.mxu0 %v6111
  %7210 = vmatprep.subr.bf16.mxu0 %v6120
  %7211 = vmatpush1.bf16.msra.mxu0 %v6119
  %7212 = vmatprep.subr.bf16.mxu0 %v6128
  %7213 = vmatpush1.bf16.msra.mxu0 %v6127
  %7214 = vmatprep.subr.bf16.mxu0 %v6136
  %7215 = vmatpush1.bf16.msra.mxu0 %v6135
  %7216 = vmatprep.subr.bf16.mxu0 %v6144
  %7217 = vmatpush1.bf16.msra.mxu0 %v6143
  %7218 = vmatprep.subr.bf16.mxu0 %v6152
  %7219 = vmatpush1.bf16.msra.mxu0 %v6151
  %7220 = vmatprep.subr.bf16.mxu0 %v6160
  %7221 = vmatpush1.bf16.msra.mxu0 %v6159
  %7222 = vmatprep.subr.bf16.mxu0 %v6168
  %7223 = vmatpush1.bf16.msra.mxu0 %v6167
  %7224 = vmatprep.subr.bf16.mxu0 %v6176
  %7225 = vmatpush1.bf16.msra.mxu0 %v6175
  %7226 = vmatprep.subr.bf16.mxu0 %v6184
  %7227 = vmatpush1.bf16.msra.mxu0 %v6183
  %7228 = vmatprep.subr.bf16.mxu0 %v6192
  %7229 = vmatpush1.bf16.msra.mxu0 %v6191
  %7230 = vmatprep.subr.bf16.mxu0 %v6200
  %7231 = vmatpush1.bf16.msra.mxu0 %v6199
  %7232 = vmatprep.subr.bf16.mxu0 %v6208
  %7233 = vmatpush1.bf16.msra.mxu0 %v6207
  %7234 = vmatprep.subr.bf16.mxu0 %v6216
  %7235 = vmatpush1.bf16.msra.mxu0 %v6215
  %7236 = vmatprep.mubr.bf16.mxu0 %v3870
  %7237 = vmatmul.mubr.bf16.gmra.mrb[0].mxu0 %v3869
  %v7238 = vpop.f32.mrb[0].mxu0
  %v7239 = vadd.f32 %v7196, %v7238
  %v7240 = vpop.f32.mrb[0].mxu0
  %v7241 = vadd.f32 %v7198, %v7240
  %v7242 = vpop.f32.mrb[0].mxu0
  %v7243 = vadd.f32 %v7200, %v7242
  %v7244 = vpop.f32.mrb[0].mxu0
  %v7245 = vadd.f32 %v7202, %v7244
  %7246 = vdwg.mxu0
  %7247 = vmatprep.subr.bf16.mxu0 %v6224
  %7248 = vmatpush1.bf16.msra.mxu0 %v6223
  %7249 = vmatprep.subr.bf16.mxu0 %v6232
  %7250 = vmatpush1.bf16.msra.mxu0 %v6231
  %7251 = vmatprep.subr.bf16.mxu0 %v6240
  %7252 = vmatpush1.bf16.msra.mxu0 %v6239
  %7253 = vmatprep.subr.bf16.mxu0 %v6248
  %7254 = vmatpush1.bf16.msra.mxu0 %v6247
  %7255 = vmatprep.subr.bf16.mxu0 %v6256
  %7256 = vmatpush1.bf16.msra.mxu0 %v6255
  %7257 = vmatprep.subr.bf16.mxu0 %v6264
  %7258 = vmatpush1.bf16.msra.mxu0 %v6263
  %7259 = vmatprep.subr.bf16.mxu0 %v6272
  %7260 = vmatpush1.bf16.msra.mxu0 %v6271
  %7261 = vmatprep.subr.bf16.mxu0 %v6280
  %7262 = vmatpush1.bf16.msra.mxu0 %v6279
  %7263 = vmatprep.subr.bf16.mxu0 %v6288
  %7264 = vmatpush1.bf16.msra.mxu0 %v6287
  %7265 = vmatprep.subr.bf16.mxu0 %v6296
  %7266 = vmatpush1.bf16.msra.mxu0 %v6295
  %7267 = vmatprep.subr.bf16.mxu0 %v6304
  %7268 = vmatpush1.bf16.msra.mxu0 %v6303
  %7269 = vmatprep.subr.bf16.mxu0 %v6312
  %7270 = vmatpush1.bf16.msra.mxu0 %v6311
  %7271 = vmatprep.subr.bf16.mxu0 %v6320
  %7272 = vmatpush1.bf16.msra.mxu0 %v6319
  %7273 = vmatprep.subr.bf16.mxu0 %v6328
  %7274 = vmatpush1.bf16.msra.mxu0 %v6327
  %7275 = vmatprep.subr.bf16.mxu0 %v6336
  %7276 = vmatpush1.bf16.msra.mxu0 %v6335
  %7277 = vmatprep.subr.bf16.mxu0 %v6344
  %7278 = vmatpush1.bf16.msra.mxu0 %v6343
  %7279 = vmatprep.mubr.bf16.mxu0 %v3872
  %7280 = vmatmul.mubr.bf16.gmra.mrb[0].mxu0 %v3871
  %v7281 = vpop.f32.mrb[0].mxu0
  %v7282 = vadd.f32 %v7239, %v7281
  %v7283 = vpop.f32.mrb[0].mxu0
  %v7284 = vadd.f32 %v7241, %v7283
  %v7285 = vpop.f32.mrb[0].mxu0
  %v7286 = vadd.f32 %v7243, %v7285
  %v7287 = vpop.f32.mrb[0].mxu0
  %v7288 = vadd.f32 %v7245, %v7287
  %7289 = vdwg.mxu0
  %7290 = vmatprep.subr.bf16.mxu0 %v6352
  %7291 = vmatpush1.bf16.msra.mxu0 %v6351
  %7292 = vmatprep.subr.bf16.mxu0 %v6360
  %7293 = vmatpush1.bf16.msra.mxu0 %v6359
  %7294 = vmatprep.subr.bf16.mxu0 %v6368
  %7295 = vmatpush1.bf16.msra.mxu0 %v6367
  %7296 = vmatprep.subr.bf16.mxu0 %v6376
  %7297 = vmatpush1.bf16.msra.mxu0 %v6375
  %7298 = vmatprep.subr.bf16.mxu0 %v6384
  %7299 = vmatpush1.bf16.msra.mxu0 %v6383
  %7300 = vmatprep.subr.bf16.mxu0 %v6392
  %7301 = vmatpush1.bf16.msra.mxu0 %v6391
  %7302 = vmatprep.subr.bf16.mxu0 %v6400
  %7303 = vmatpush1.bf16.msra.mxu0 %v6399
  %7304 = vmatprep.subr.bf16.mxu0 %v6408
  %7305 = vmatpush1.bf16.msra.mxu0 %v6407
  %7306 = vmatprep.subr.bf16.mxu0 %v6416
  %7307 = vmatpush1.bf16.msra.mxu0 %v6415
  %7308 = vmatprep.subr.bf16.mxu0 %v6424
  %7309 = vmatpush1.bf16.msra.mxu0 %v6423
  %7310 = vmatprep.subr.bf16.mxu0 %v6432
  %7311 = vmatpush1.bf16.msra.mxu0 %v6431
  %7312 = vmatprep.subr.bf16.mxu0 %v6440
  %7313 = vmatpush1.bf16.msra.mxu0 %v6439
  %7314 = vmatprep.subr.bf16.mxu0 %v6448
  %7315 = vmatpush1.bf16.msra.mxu0 %v6447
  %7316 = vmatprep.subr.bf16.mxu0 %v6456
  %7317 = vmatpush1.bf16.msra.mxu0 %v6455
  %7318 = vmatprep.subr.bf16.mxu0 %v6464
  %7319 = vmatpush1.bf16.msra.mxu0 %v6463
  %7320 = vmatprep.subr.bf16.mxu0 %v6472
  %7321 = vmatpush1.bf16.msra.mxu0 %v6471
  %7322 = vmatprep.mubr.bf16.mxu0 %v3874
  %7323 = vmatmul.mubr.bf16.gmra.mrb[0].mxu0 %v3873
  %v7324 = vpop.f32.mrb[0].mxu0
  %v7325 = vadd.f32 %v7282, %v7324
  %v7326 = vpop.f32.mrb[0].mxu0
  %v7327 = vadd.f32 %v7284, %v7326
  %v7328 = vpop.f32.mrb[0].mxu0
  %v7329 = vadd.f32 %v7286, %v7328
  %v7330 = vpop.f32.mrb[0].mxu0
  %v7331 = vadd.f32 %v7288, %v7330
  %7332 = vdwg.mxu0
  %7333 = vmatprep.subr.bf16.mxu0 %v5970
  %7334 = vmatpush1.bf16.msra.mxu0 %v5969
  %7335 = vmatprep.subr.bf16.mxu0 %v5978
  %7336 = vmatpush1.bf16.msra.mxu0 %v5977
  %7337 = vmatprep.subr.bf16.mxu0 %v5986
  %7338 = vmatpush1.bf16.msra.mxu0 %v5985
  %7339 = vmatprep.subr.bf16.mxu0 %v5994
  %7340 = vmatpush1.bf16.msra.mxu0 %v5993
  %7341 = vmatprep.subr.bf16.mxu0 %v6002
  %7342 = vmatpush1.bf16.msra.mxu0 %v6001
  %7343 = vmatprep.subr.bf16.mxu0 %v6010
  %7344 = vmatpush1.bf16.msra.mxu0 %v6009
  %7345 = vmatprep.subr.bf16.mxu0 %v6018
  %7346 = vmatpush1.bf16.msra.mxu0 %v6017
  %7347 = vmatprep.subr.bf16.mxu0 %v6026
  %7348 = vmatpush1.bf16.msra.mxu0 %v6025
  %7349 = vmatprep.subr.bf16.mxu0 %v6034
  %7350 = vmatpush1.bf16.msra.mxu0 %v6033
  %7351 = vmatprep.subr.bf16.mxu0 %v6042
  %7352 = vmatpush1.bf16.msra.mxu0 %v6041
  %7353 = vmatprep.subr.bf16.mxu0 %v6050
  %7354 = vmatpush1.bf16.msra.mxu0 %v6049
  %7355 = vmatprep.subr.bf16.mxu0 %v6058
  %7356 = vmatpush1.bf16.msra.mxu0 %v6057
  %7357 = vmatprep.subr.bf16.mxu0 %v6066
  %7358 = vmatpush1.bf16.msra.mxu0 %v6065
  %7359 = vmatprep.subr.bf16.mxu0 %v6074
  %7360 = vmatpush1.bf16.msra.mxu0 %v6073
  %7361 = vmatprep.subr.bf16.mxu0 %v6082
  %7362 = vmatpush1.bf16.msra.mxu0 %v6081
  %7363 = vmatprep.subr.bf16.mxu0 %v6090
  %7364 = vmatpush1.bf16.msra.mxu0 %v6089
  %7365 = vmatprep.mubr.bf16.mxu0 %v3868
  %7366 = vmatmul.mubr.bf16.gmra.mrb[0].mxu0 %v3867
  %v7367 = vpop.f32.mrb[0].mxu0
  %v7368 = vadd.f32 %v4408, %v7367
  %v7369 = vpop.f32.mrb[0].mxu0
  %v7370 = vadd.f32 %v4412, %v7369
  %v7371 = vpop.f32.mrb[0].mxu0
  %v7372 = vadd.f32 %v4408, %v7371
  %v7373 = vpop.f32.mrb[0].mxu0
  %v7374 = vadd.f32 %v4412, %v7373
  %7375 = vdwg.mxu0
  %7376 = vmatprep.subr.bf16.mxu0 %v6098
  %7377 = vmatpush1.bf16.msra.mxu0 %v6097
  %7378 = vmatprep.subr.bf16.mxu0 %v6106
  %7379 = vmatpush1.bf16.msra.mxu0 %v6105
  %7380 = vmatprep.subr.bf16.mxu0 %v6114
  %7381 = vmatpush1.bf16.msra.mxu0 %v6113
  %7382 = vmatprep.subr.bf16.mxu0 %v6122
  %7383 = vmatpush1.bf16.msra.mxu0 %v6121
  %7384 = vmatprep.subr.bf16.mxu0 %v6130
  %7385 = vmatpush1.bf16.msra.mxu0 %v6129
  %7386 = vmatprep.subr.bf16.mxu0 %v6138
  %7387 = vmatpush1.bf16.msra.mxu0 %v6137
  %7388 = vmatprep.subr.bf16.mxu0 %v6146
  %7389 = vmatpush1.bf16.msra.mxu0 %v6145
  %7390 = vmatprep.subr.bf16.mxu0 %v6154
  %7391 = vmatpush1.bf16.msra.mxu0 %v6153
  %7392 = vmatprep.subr.bf16.mxu0 %v6162
  %7393 = vmatpush1.bf16.msra.mxu0 %v6161
  %7394 = vmatprep.subr.bf16.mxu0 %v6170
  %7395 = vmatpush1.bf16.msra.mxu0 %v6169
  %7396 = vmatprep.subr.bf16.mxu0 %v6178
  %7397 = vmatpush1.bf16.msra.mxu0 %v6177
  %7398 = vmatprep.subr.bf16.mxu0 %v6186
  %7399 = vmatpush1.bf16.msra.mxu0 %v6185
  %7400 = vmatprep.subr.bf16.mxu0 %v6194
  %7401 = vmatpush1.bf16.msra.mxu0 %v6193
  %7402 = vmatprep.subr.bf16.mxu0 %v6202
  %7403 = vmatpush1.bf16.msra.mxu0 %v6201
  %7404 = vmatprep.subr.bf16.mxu0 %v6210
  %7405 = vmatpush1.bf16.msra.mxu0 %v6209
  %7406 = vmatprep.subr.bf16.mxu0 %v6218
  %7407 = vmatpush1.bf16.msra.mxu0 %v6217
  %7408 = vmatprep.mubr.bf16.mxu0 %v3870
  %7409 = vmatmul.mubr.bf16.gmra.mrb[0].mxu0 %v3869
  %v7410 = vpop.f32.mrb[0].mxu0
  %v7411 = vadd.f32 %v7368, %v7410
  %v7412 = vpop.f32.mrb[0].mxu0
  %v7413 = vadd.f32 %v7370, %v7412
  %v7414 = vpop.f32.mrb[0].mxu0
  %v7415 = vadd.f32 %v7372, %v7414
  %v7416 = vpop.f32.mrb[0].mxu0
  %v7417 = vadd.f32 %v7374, %v7416
  %7418 = vdwg.mxu0
  %7419 = vmatprep.subr.bf16.mxu0 %v6226
  %7420 = vmatpush1.bf16.msra.mxu0 %v6225
  %7421 = vmatprep.subr.bf16.mxu0 %v6234
  %7422 = vmatpush1.bf16.msra.mxu0 %v6233
  %7423 = vmatprep.subr.bf16.mxu0 %v6242
  %7424 = vmatpush1.bf16.msra.mxu0 %v6241
  %7425 = vmatprep.subr.bf16.mxu0 %v6250
  %7426 = vmatpush1.bf16.msra.mxu0 %v6249
  %7427 = vmatprep.subr.bf16.mxu0 %v6258
  %7428 = vmatpush1.bf16.msra.mxu0 %v6257
  %7429 = vmatprep.subr.bf16.mxu0 %v6266
  %7430 = vmatpush1.bf16.msra.mxu0 %v6265
  %7431 = vmatprep.subr.bf16.mxu0 %v6274
  %7432 = vmatpush1.bf16.msra.mxu0 %v6273
  %7433 = vmatprep.subr.bf16.mxu0 %v6282
  %7434 = vmatpush1.bf16.msra.mxu0 %v6281
  %7435 = vmatprep.subr.bf16.mxu0 %v6290
  %7436 = vmatpush1.bf16.msra.mxu0 %v6289
  %7437 = vmatprep.subr.bf16.mxu0 %v6298
  %7438 = vmatpush1.bf16.msra.mxu0 %v6297
  %7439 = vmatprep.subr.bf16.mxu0 %v6306
  %7440 = vmatpush1.bf16.msra.mxu0 %v6305
  %7441 = vmatprep.subr.bf16.mxu0 %v6314
  %7442 = vmatpush1.bf16.msra.mxu0 %v6313
  %7443 = vmatprep.subr.bf16.mxu0 %v6322
  %7444 = vmatpush1.bf16.msra.mxu0 %v6321
  %7445 = vmatprep.subr.bf16.mxu0 %v6330
  %7446 = vmatpush1.bf16.msra.mxu0 %v6329
  %7447 = vmatprep.subr.bf16.mxu0 %v6338
  %7448 = vmatpush1.bf16.msra.mxu0 %v6337
  %7449 = vmatprep.subr.bf16.mxu0 %v6346
  %7450 = vmatpush1.bf16.msra.mxu0 %v6345
  %7451 = vmatprep.mubr.bf16.mxu0 %v3872
  %7452 = vmatmul.mubr.bf16.gmra.mrb[0].mxu0 %v3871
  %v7453 = vpop.f32.mrb[0].mxu0
  %v7454 = vadd.f32 %v7411, %v7453
  %v7455 = vpop.f32.mrb[0].mxu0
  %v7456 = vadd.f32 %v7413, %v7455
  %v7457 = vpop.f32.mrb[0].mxu0
  %v7458 = vadd.f32 %v7415, %v7457
  %v7459 = vpop.f32.mrb[0].mxu0
  %v7460 = vadd.f32 %v7417, %v7459
  %7461 = vdwg.mxu0
  %7462 = vmatprep.subr.bf16.mxu0 %v6354
  %7463 = vmatpush1.bf16.msra.mxu0 %v6353
  %7464 = vmatprep.subr.bf16.mxu0 %v6362
  %7465 = vmatpush1.bf16.msra.mxu0 %v6361
  %7466 = vmatprep.subr.bf16.mxu0 %v6370
  %7467 = vmatpush1.bf16.msra.mxu0 %v6369
  %7468 = vmatprep.subr.bf16.mxu0 %v6378
  %7469 = vmatpush1.bf16.msra.mxu0 %v6377
  %7470 = vmatprep.subr.bf16.mxu0 %v6386
  %7471 = vmatpush1.bf16.msra.mxu0 %v6385
  %7472 = vmatprep.subr.bf16.mxu0 %v6394
  %7473 = vmatpush1.bf16.msra.mxu0 %v6393
  %7474 = vmatprep.subr.bf16.mxu0 %v6402
  %7475 = vmatpush1.bf16.msra.mxu0 %v6401
  %7476 = vmatprep.subr.bf16.mxu0 %v6410
  %7477 = vmatpush1.bf16.msra.mxu0 %v6409
  %7478 = vmatprep.subr.bf16.mxu0 %v6418
  %7479 = vmatpush1.bf16.msra.mxu0 %v6417
  %7480 = vmatprep.subr.bf16.mxu0 %v6426
  %7481 = vmatpush1.bf16.msra.mxu0 %v6425
  %7482 = vmatprep.subr.bf16.mxu0 %v6434
  %7483 = vmatpush1.bf16.msra.mxu0 %v6433
  %7484 = vmatprep.subr.bf16.mxu0 %v6442
  %7485 = vmatpush1.bf16.msra.mxu0 %v6441
  %7486 = vmatprep.subr.bf16.mxu0 %v6450
  %7487 = vmatpush1.bf16.msra.mxu0 %v6449
  %7488 = vmatprep.subr.bf16.mxu0 %v6458
  %7489 = vmatpush1.bf16.msra.mxu0 %v6457
  %7490 = vmatprep.subr.bf16.mxu0 %v6466
  %7491 = vmatpush1.bf16.msra.mxu0 %v6465
  %7492 = vmatprep.subr.bf16.mxu0 %v6474
  %7493 = vmatpush1.bf16.msra.mxu0 %v6473
  %7494 = vmatprep.mubr.bf16.mxu0 %v3874
  %7495 = vmatmul.mubr.bf16.gmra.mrb[0].mxu0 %v3873
  %v7496 = vpop.f32.mrb[0].mxu0
  %v7497 = vadd.f32 %v7454, %v7496
  %v7498 = vpop.f32.mrb[0].mxu0
  %v7499 = vadd.f32 %v7456, %v7498
  %v7500 = vpop.f32.mrb[0].mxu0
  %v7501 = vadd.f32 %v7458, %v7500
  %v7502 = vpop.f32.mrb[0].mxu0
  %v7503 = vadd.f32 %v7460, %v7502
  %7504 = vdwg.mxu0
  %7505 = vmatprep.subr.bf16.mxu0 %v5972
  %7506 = vmatpush1.bf16.msra.mxu0 %v5971
  %7507 = vmatprep.subr.bf16.mxu0 %v5980
  %7508 = vmatpush1.bf16.msra.mxu0 %v5979
  %7509 = vmatprep.subr.bf16.mxu0 %v5988
  %7510 = vmatpush1.bf16.msra.mxu0 %v5987
  %7511 = vmatprep.subr.bf16.mxu0 %v5996
  %7512 = vmatpush1.bf16.msra.mxu0 %v5995
  %7513 = vmatprep.subr.bf16.mxu0 %v6004
  %7514 = vmatpush1.bf16.msra.mxu0 %v6003
  %7515 = vmatprep.subr.bf16.mxu0 %v6012
  %7516 = vmatpush1.bf16.msra.mxu0 %v6011
  %7517 = vmatprep.subr.bf16.mxu0 %v6020
  %7518 = vmatpush1.bf16.msra.mxu0 %v6019
  %7519 = vmatprep.subr.bf16.mxu0 %v6028
  %7520 = vmatpush1.bf16.msra.mxu0 %v6027
  %7521 = vmatprep.subr.bf16.mxu0 %v6036
  %7522 = vmatpush1.bf16.msra.mxu0 %v6035
  %7523 = vmatprep.subr.bf16.mxu0 %v6044
  %7524 = vmatpush1.bf16.msra.mxu0 %v6043
  %7525 = vmatprep.subr.bf16.mxu0 %v6052
  %7526 = vmatpush1.bf16.msra.mxu0 %v6051
  %7527 = vmatprep.subr.bf16.mxu0 %v6060
  %7528 = vmatpush1.bf16.msra.mxu0 %v6059
  %7529 = vmatprep.subr.bf16.mxu0 %v6068
  %7530 = vmatpush1.bf16.msra.mxu0 %v6067
  %7531 = vmatprep.subr.bf16.mxu0 %v6076
  %7532 = vmatpush1.bf16.msra.mxu0 %v6075
  %7533 = vmatprep.subr.bf16.mxu0 %v6084
  %7534 = vmatpush1.bf16.msra.mxu0 %v6083
  %7535 = vmatprep.subr.bf16.mxu0 %v6092
  %7536 = vmatpush1.bf16.msra.mxu0 %v6091
  %7537 = vmatprep.mubr.bf16.mxu0 %v3868
  %7538 = vmatmul.mubr.bf16.gmra.mrb[0].mxu0 %v3867
  %v7539 = vpop.f32.mrb[0].mxu0
  %v7540 = vadd.f32 %v4416, %v7539
  %v7541 = vpop.f32.mrb[0].mxu0
  %v7542 = vadd.f32 %v4420, %v7541
  %v7543 = vpop.f32.mrb[0].mxu0
  %v7544 = vadd.f32 %v4416, %v7543
  %v7545 = vpop.f32.mrb[0].mxu0
  %v7546 = vadd.f32 %v4420, %v7545
  %7547 = vdwg.mxu0
  %7548 = vmatprep.subr.bf16.mxu0 %v6100
  %7549 = vmatpush1.bf16.msra.mxu0 %v6099
  %7550 = vmatprep.subr.bf16.mxu0 %v6108
  %7551 = vmatpush1.bf16.msra.mxu0 %v6107
  %7552 = vmatprep.subr.bf16.mxu0 %v6116
  %7553 = vmatpush1.bf16.msra.mxu0 %v6115
  %7554 = vmatprep.subr.bf16.mxu0 %v6124
  %7555 = vmatpush1.bf16.msra.mxu0 %v6123
  %7556 = vmatprep.subr.bf16.mxu0 %v6132
  %7557 = vmatpush1.bf16.msra.mxu0 %v6131
  %7558 = vmatprep.subr.bf16.mxu0 %v6140
  %7559 = vmatpush1.bf16.msra.mxu0 %v6139
  %7560 = vmatprep.subr.bf16.mxu0 %v6148
  %7561 = vmatpush1.bf16.msra.mxu0 %v6147
  %7562 = vmatprep.subr.bf16.mxu0 %v6156
  %7563 = vmatpush1.bf16.msra.mxu0 %v6155
  %7564 = vmatprep.subr.bf16.mxu0 %v6164
  %7565 = vmatpush1.bf16.msra.mxu0 %v6163
  %7566 = vmatprep.subr.bf16.mxu0 %v6172
  %7567 = vmatpush1.bf16.msra.mxu0 %v6171
  %7568 = vmatprep.subr.bf16.mxu0 %v6180
  %7569 = vmatpush1.bf16.msra.mxu0 %v6179
  %7570 = vmatprep.subr.bf16.mxu0 %v6188
  %7571 = vmatpush1.bf16.msra.mxu0 %v6187
  %7572 = vmatprep.subr.bf16.mxu0 %v6196
  %7573 = vmatpush1.bf16.msra.mxu0 %v6195
  %7574 = vmatprep.subr.bf16.mxu0 %v6204
  %7575 = vmatpush1.bf16.msra.mxu0 %v6203
  %7576 = vmatprep.subr.bf16.mxu0 %v6212
  %7577 = vmatpush1.bf16.msra.mxu0 %v6211
  %7578 = vmatprep.subr.bf16.mxu0 %v6220
  %7579 = vmatpush1.bf16.msra.mxu0 %v6219
  %7580 = vmatprep.mubr.bf16.mxu0 %v3870
  %7581 = vmatmul.mubr.bf16.gmra.mrb[0].mxu0 %v3869
  %v7582 = vpop.f32.mrb[0].mxu0
  %v7583 = vadd.f32 %v7540, %v7582
  %v7584 = vpop.f32.mrb[0].mxu0
  %v7585 = vadd.f32 %v7542, %v7584
  %v7586 = vpop.f32.mrb[0].mxu0
  %v7587 = vadd.f32 %v7544, %v7586
  %v7588 = vpop.f32.mrb[0].mxu0
  %v7589 = vadd.f32 %v7546, %v7588
  %7590 = vdwg.mxu0
  %7591 = vmatprep.subr.bf16.mxu0 %v6228
  %7592 = vmatpush1.bf16.msra.mxu0 %v6227
  %7593 = vmatprep.subr.bf16.mxu0 %v6236
  %7594 = vmatpush1.bf16.msra.mxu0 %v6235
  %7595 = vmatprep.subr.bf16.mxu0 %v6244
  %7596 = vmatpush1.bf16.msra.mxu0 %v6243
  %7597 = vmatprep.subr.bf16.mxu0 %v6252
  %7598 = vmatpush1.bf16.msra.mxu0 %v6251
  %7599 = vmatprep.subr.bf16.mxu0 %v6260
  %7600 = vmatpush1.bf16.msra.mxu0 %v6259
  %7601 = vmatprep.subr.bf16.mxu0 %v6268
  %7602 = vmatpush1.bf16.msra.mxu0 %v6267
  %7603 = vmatprep.subr.bf16.mxu0 %v6276
  %7604 = vmatpush1.bf16.msra.mxu0 %v6275
  %7605 = vmatprep.subr.bf16.mxu0 %v6284
  %7606 = vmatpush1.bf16.msra.mxu0 %v6283
  %7607 = vmatprep.subr.bf16.mxu0 %v6292
  %7608 = vmatpush1.bf16.msra.mxu0 %v6291
  %7609 = vmatprep.subr.bf16.mxu0 %v6300
  %7610 = vmatpush1.bf16.msra.mxu0 %v6299
  %7611 = vmatprep.subr.bf16.mxu0 %v6308
  %7612 = vmatpush1.bf16.msra.mxu0 %v6307
  %7613 = vmatprep.subr.bf16.mxu0 %v6316
  %7614 = vmatpush1.bf16.msra.mxu0 %v6315
  %7615 = vmatprep.subr.bf16.mxu0 %v6324
  %7616 = vmatpush1.bf16.msra.mxu0 %v6323
  %7617 = vmatprep.subr.bf16.mxu0 %v6332
  %7618 = vmatpush1.bf16.msra.mxu0 %v6331
  %7619 = vmatprep.subr.bf16.mxu0 %v6340
  %7620 = vmatpush1.bf16.msra.mxu0 %v6339
  %7621 = vmatprep.subr.bf16.mxu0 %v6348
  %7622 = vmatpush1.bf16.msra.mxu0 %v6347
  %7623 = vmatprep.mubr.bf16.mxu0 %v3872
  %7624 = vmatmul.mubr.bf16.gmra.mrb[0].mxu0 %v3871
  %v7625 = vpop.f32.mrb[0].mxu0
  %v7626 = vadd.f32 %v7583, %v7625
  %v7627 = vpop.f32.mrb[0].mxu0
  %v7628 = vadd.f32 %v7585, %v7627
  %v7629 = vpop.f32.mrb[0].mxu0
  %v7630 = vadd.f32 %v7587, %v7629
  %v7631 = vpop.f32.mrb[0].mxu0
  %v7632 = vadd.f32 %v7589, %v7631
  %7633 = vdwg.mxu0
  %7634 = vmatprep.subr.bf16.mxu0 %v6356
  %7635 = vmatpush1.bf16.msra.mxu0 %v6355
  %7636 = vmatprep.subr.bf16.mxu0 %v6364
  %7637 = vmatpush1.bf16.msra.mxu0 %v6363
  %7638 = vmatprep.subr.bf16.mxu0 %v6372
  %7639 = vmatpush1.bf16.msra.mxu0 %v6371
  %7640 = vmatprep.subr.bf16.mxu0 %v6380
  %7641 = vmatpush1.bf16.msra.mxu0 %v6379
  %7642 = vmatprep.subr.bf16.mxu0 %v6388
  %7643 = vmatpush1.bf16.msra.mxu0 %v6387
  %7644 = vmatprep.subr.bf16.mxu0 %v6396
  %7645 = vmatpush1.bf16.msra.mxu0 %v6395
  %7646 = vmatprep.subr.bf16.mxu0 %v6404
  %7647 = vmatpush1.bf16.msra.mxu0 %v6403
  %7648 = vmatprep.subr.bf16.mxu0 %v6412
  %7649 = vmatpush1.bf16.msra.mxu0 %v6411
  %7650 = vmatprep.subr.bf16.mxu0 %v6420
  %7651 = vmatpush1.bf16.msra.mxu0 %v6419
  %7652 = vmatprep.subr.bf16.mxu0 %v6428
  %7653 = vmatpush1.bf16.msra.mxu0 %v6427
  %7654 = vmatprep.subr.bf16.mxu0 %v6436
  %7655 = vmatpush1.bf16.msra.mxu0 %v6435
  %7656 = vmatprep.subr.bf16.mxu0 %v6444
  %7657 = vmatpush1.bf16.msra.mxu0 %v6443
  %7658 = vmatprep.subr.bf16.mxu0 %v6452
  %7659 = vmatpush1.bf16.msra.mxu0 %v6451
  %7660 = vmatprep.subr.bf16.mxu0 %v6460
  %7661 = vmatpush1.bf16.msra.mxu0 %v6459
  %7662 = vmatprep.subr.bf16.mxu0 %v6468
  %7663 = vmatpush1.bf16.msra.mxu0 %v6467
  %7664 = vmatprep.subr.bf16.mxu0 %v6476
  %7665 = vmatpush1.bf16.msra.mxu0 %v6475
  %7666 = vmatprep.mubr.bf16.mxu0 %v3874
  %7667 = vmatmul.mubr.bf16.gmra.mrb[0].mxu0 %v3873
  %v7668 = vpop.f32.mrb[0].mxu0
  %v7669 = vadd.f32 %v7626, %v7668
  %v7670 = vpop.f32.mrb[0].mxu0
  %v7671 = vadd.f32 %v7628, %v7670
  %v7672 = vpop.f32.mrb[0].mxu0
  %v7673 = vadd.f32 %v7630, %v7672
  %v7674 = vpop.f32.mrb[0].mxu0
  %v7675 = vadd.f32 %v7632, %v7674
  %7676 = vdwg.mxu0
  %v7677 = vmax.f32 %v7153, 0.0
  %v7678 = vmax.f32 %v7155, 0.0
  %v7679 = vmax.f32 %v7325, 0.0
  %v7680 = vmax.f32 %v7327, 0.0
  %v7681 = vmax.f32 %v7497, 0.0
  %v7682 = vmax.f32 %v7499, 0.0
  %v7683 = vmax.f32 %v7669, 0.0
  %v7684 = vmax.f32 %v7671, 0.0
  %v7685 = vmax.f32 %v7157, 0.0
  %v7686 = vmax.f32 %v7159, 0.0
  %v7687 = vmax.f32 %v7329, 0.0
  %v7688 = vmax.f32 %v7331, 0.0
  %v7689 = vmax.f32 %v7501, 0.0
  %v7690 = vmax.f32 %v7503, 0.0
  %v7691 = vmax.f32 %v7673, 0.0
  %v7692 = vmax.f32 %v7675, 0.0
  %v7693 = vpack.c.bf16 %v7685, %v7677
  %v7694 = vpack.c.bf16 %v7686, %v7678
  %v7695 = vpack.c.bf16 %v7687, %v7679
  %v7696 = vpack.c.bf16 %v7688, %v7680
  %v7697 = vpack.c.bf16 %v7689, %v7681
  %v7698 = vpack.c.bf16 %v7690, %v7682
  %v7699 = vpack.c.bf16 %v7691, %v7683
  %v7700 = vpack.c.bf16 %v7692, %v7684
  %v7709 = vunpack.c.l.b16 %v7693
  %v7710 = vunpack.c.l.b16 %v7694
  %v7711 = vunpack.c.l.b16 %v7695
  %v7712 = vunpack.c.l.b16 %v7696
  %v7713 = vunpack.c.l.b16 %v7697
  %v7714 = vunpack.c.l.b16 %v7698
  %v7715 = vunpack.c.l.b16 %v7699
  %v7716 = vunpack.c.l.b16 %v7700
  %v7717 = vunpack.c.h.b16 %v7693
  %v7718 = vunpack.c.h.b16 %v7694
  %v7719 = vunpack.c.h.b16 %v7695
  %v7720 = vunpack.c.h.b16 %v7696
  %v7721 = vunpack.c.h.b16 %v7697
  %v7722 = vunpack.c.h.b16 %v7698
  %v7723 = vunpack.c.h.b16 %v7699
  %v7724 = vunpack.c.h.b16 %v7700
  %v7725 = vpack.c.b16 %v7710, %v7709
  %v7726 = vpack.c.b16 %v7712, %v7711
  %v7727 = vpack.c.b16 %v7714, %v7713
  %v7728 = vpack.c.b16 %v7716, %v7715
  %v7729 = vpack.c.b16 %v7718, %v7717
  %v7730 = vpack.c.b16 %v7720, %v7719
  %v7731 = vpack.c.b16 %v7722, %v7721
  %v7732 = vpack.c.b16 %v7724, %v7723
  %7741 = vst [vmem:[%s6] sm:$0xff] %v7725
  %7742 = vst [vmem:[%s6 + $0x8] sm:$0xff] %v7726
  %7743 = vst [vmem:[%s6 + $0x10] sm:$0xff] %v7727
  %7744 = vst [vmem:[%s6 + $0x18] sm:$0xff] %v7728
  %7745 = vst [vmem:[%s6 + $0x20] sm:$0xff] %v7729
  %7746 = vst [vmem:[%s6 + $0x28] sm:$0xff] %v7730
  %7747 = vst [vmem:[%s6 + $0x30] sm:$0xff] %v7731
  %7748 = vst [vmem:[%s6 + $0x38] sm:$0xff] %v7732
  %v7749 = vld [vmem:[%s5] sm:$0xff]
  %v7750 = vld [vmem:[%s5 + $0x8] sm:$0xff]
  %v7751 = vld [vmem:[%s5 + $0x10] sm:$0xff]
  %v7752 = vld [vmem:[%s5 + $0x18] sm:$0xff]
  %v7753 = vld [vmem:[%s5 + $0x20] sm:$0xff]
  %v7754 = vld [vmem:[%s5 + $0x28] sm:$0xff]
  %v7755 = vld [vmem:[%s5 + $0x30] sm:$0xff]
  %v7756 = vld [vmem:[%s5 + $0x38] sm:$0xff]
  %v7757 = vld [vmem:[%s5 + $0x40] sm:$0xff]
  %v7758 = vld [vmem:[%s5 + $0x48] sm:$0xff]
  %v7759 = vld [vmem:[%s5 + $0x50] sm:$0xff]
  %v7760 = vld [vmem:[%s5 + $0x58] sm:$0xff]
  %v7761 = vld [vmem:[%s5 + $0x60] sm:$0xff]
  %v7762 = vld [vmem:[%s5 + $0x68] sm:$0xff]
  %v7763 = vld [vmem:[%s5 + $0x70] sm:$0xff]
  %v7764 = vld [vmem:[%s5 + $0x78] sm:$0xff]
  %v7765 = vld [vmem:[%s5 + $0x80] sm:$0xff]
  %v7766 = vld [vmem:[%s5 + $0x88] sm:$0xff]
  %v7767 = vld [vmem:[%s5 + $0x90] sm:$0xff]
  %v7768 = vld [vmem:[%s5 + $0x98] sm:$0xff]
  %v7769 = vld [vmem:[%s5 + $0xa0] sm:$0xff]
  %v7770 = vld [vmem:[%s5 + $0xa8] sm:$0xff]
  %v7771 = vld [vmem:[%s5 + $0xb0] sm:$0xff]
  %v7772 = vld [vmem:[%s5 + $0xb8] sm:$0xff]
  %v7773 = vld [vmem:[%s5 + $0xc0] sm:$0xff]
  %v7774 = vld [vmem:[%s5 + $0xc8] sm:$0xff]
  %v7775 = vld [vmem:[%s5 + $0xd0] sm:$0xff]
  %v7776 = vld [vmem:[%s5 + $0xd8] sm:$0xff]
  %v7777 = vld [vmem:[%s5 + $0xe0] sm:$0xff]
  %v7778 = vld [vmem:[%s5 + $0xe8] sm:$0xff]
  %v7779 = vld [vmem:[%s5 + $0xf0] sm:$0xff]
  %v7780 = vld [vmem:[%s5 + $0xf8] sm:$0xff]
  %v7781 = vld [vmem:[%s5 + $0x100] sm:$0xff]
  %v7782 = vld [vmem:[%s5 + $0x108] sm:$0xff]
  %v7783 = vld [vmem:[%s5 + $0x110] sm:$0xff]
  %v7784 = vld [vmem:[%s5 + $0x118] sm:$0xff]
  %v7785 = vld [vmem:[%s5 + $0x120] sm:$0xff]
  %v7786 = vld [vmem:[%s5 + $0x128] sm:$0xff]
  %v7787 = vld [vmem:[%s5 + $0x130] sm:$0xff]
  %v7788 = vld [vmem:[%s5 + $0x138] sm:$0xff]
  %v7789 = vld [vmem:[%s5 + $0x140] sm:$0xff]
  %v7790 = vld [vmem:[%s5 + $0x148] sm:$0xff]
  %v7791 = vld [vmem:[%s5 + $0x150] sm:$0xff]
  %v7792 = vld [vmem:[%s5 + $0x158] sm:$0xff]
  %v7793 = vld [vmem:[%s5 + $0x160] sm:$0xff]
  %v7794 = vld [vmem:[%s5 + $0x168] sm:$0xff]
  %v7795 = vld [vmem:[%s5 + $0x170] sm:$0xff]
  %v7796 = vld [vmem:[%s5 + $0x178] sm:$0xff]
  %v7797 = vld [vmem:[%s5 + $0x180] sm:$0xff]
  %v7798 = vld [vmem:[%s5 + $0x188] sm:$0xff]
  %v7799 = vld [vmem:[%s5 + $0x190] sm:$0xff]
  %v7800 = vld [vmem:[%s5 + $0x198] sm:$0xff]
  %v7801 = vld [vmem:[%s5 + $0x1a0] sm:$0xff]
  %v7802 = vld [vmem:[%s5 + $0x1a8] sm:$0xff]
  %v7803 = vld [vmem:[%s5 + $0x1b0] sm:$0xff]
  %v7804 = vld [vmem:[%s5 + $0x1b8] sm:$0xff]
  %v7805 = vld [vmem:[%s5 + $0x1c0] sm:$0xff]
  %v7806 = vld [vmem:[%s5 + $0x1c8] sm:$0xff]
  %v7807 = vld [vmem:[%s5 + $0x1d0] sm:$0xff]
  %v7808 = vld [vmem:[%s5 + $0x1d8] sm:$0xff]
  %v7809 = vld [vmem:[%s5 + $0x1e0] sm:$0xff]
  %v7810 = vld [vmem:[%s5 + $0x1e8] sm:$0xff]
  %v7811 = vld [vmem:[%s5 + $0x1f0] sm:$0xff]
  %v7812 = vld [vmem:[%s5 + $0x1f8] sm:$0xff]
  %v7813 = vld [vmem:[%s5 + $0x200] sm:$0xff]
  %v7814 = vld [vmem:[%s5 + $0x208] sm:$0xff]
  %v7815 = vld [vmem:[%s5 + $0x210] sm:$0xff]
  %v7816 = vld [vmem:[%s5 + $0x218] sm:$0xff]
  %v7817 = vld [vmem:[%s5 + $0x220] sm:$0xff]
  %v7818 = vld [vmem:[%s5 + $0x228] sm:$0xff]
  %v7819 = vld [vmem:[%s5 + $0x230] sm:$0xff]
  %v7820 = vld [vmem:[%s5 + $0x238] sm:$0xff]
  %v7821 = vld [vmem:[%s5 + $0x240] sm:$0xff]
  %v7822 = vld [vmem:[%s5 + $0x248] sm:$0xff]
  %v7823 = vld [vmem:[%s5 + $0x250] sm:$0xff]
  %v7824 = vld [vmem:[%s5 + $0x258] sm:$0xff]
  %v7825 = vld [vmem:[%s5 + $0x260] sm:$0xff]
  %v7826 = vld [vmem:[%s5 + $0x268] sm:$0xff]
  %v7827 = vld [vmem:[%s5 + $0x270] sm:$0xff]
  %v7828 = vld [vmem:[%s5 + $0x278] sm:$0xff]
  %v7829 = vld [vmem:[%s5 + $0x280] sm:$0xff]
  %v7830 = vld [vmem:[%s5 + $0x288] sm:$0xff]
  %v7831 = vld [vmem:[%s5 + $0x290] sm:$0xff]
  %v7832 = vld [vmem:[%s5 + $0x298] sm:$0xff]
  %v7833 = vld [vmem:[%s5 + $0x2a0] sm:$0xff]
  %v7834 = vld [vmem:[%s5 + $0x2a8] sm:$0xff]
  %v7835 = vld [vmem:[%s5 + $0x2b0] sm:$0xff]
  %v7836 = vld [vmem:[%s5 + $0x2b8] sm:$0xff]
  %v7837 = vld [vmem:[%s5 + $0x2c0] sm:$0xff]
  %v7838 = vld [vmem:[%s5 + $0x2c8] sm:$0xff]
  %v7839 = vld [vmem:[%s5 + $0x2d0] sm:$0xff]
  %v7840 = vld [vmem:[%s5 + $0x2d8] sm:$0xff]
  %v7841 = vld [vmem:[%s5 + $0x2e0] sm:$0xff]
  %v7842 = vld [vmem:[%s5 + $0x2e8] sm:$0xff]
  %v7843 = vld [vmem:[%s5 + $0x2f0] sm:$0xff]
  %v7844 = vld [vmem:[%s5 + $0x2f8] sm:$0xff]
  %v7845 = vld [vmem:[%s5 + $0x300] sm:$0xff]
  %v7846 = vld [vmem:[%s5 + $0x308] sm:$0xff]
  %v7847 = vld [vmem:[%s5 + $0x310] sm:$0xff]
  %v7848 = vld [vmem:[%s5 + $0x318] sm:$0xff]
  %v7849 = vld [vmem:[%s5 + $0x320] sm:$0xff]
  %v7850 = vld [vmem:[%s5 + $0x328] sm:$0xff]
  %v7851 = vld [vmem:[%s5 + $0x330] sm:$0xff]
  %v7852 = vld [vmem:[%s5 + $0x338] sm:$0xff]
  %v7853 = vld [vmem:[%s5 + $0x340] sm:$0xff]
  %v7854 = vld [vmem:[%s5 + $0x348] sm:$0xff]
  %v7855 = vld [vmem:[%s5 + $0x350] sm:$0xff]
  %v7856 = vld [vmem:[%s5 + $0x358] sm:$0xff]
  %v7857 = vld [vmem:[%s5 + $0x360] sm:$0xff]
  %v7858 = vld [vmem:[%s5 + $0x368] sm:$0xff]
  %v7859 = vld [vmem:[%s5 + $0x370] sm:$0xff]
  %v7860 = vld [vmem:[%s5 + $0x378] sm:$0xff]
  %v7861 = vld [vmem:[%s5 + $0x380] sm:$0xff]
  %v7862 = vld [vmem:[%s5 + $0x388] sm:$0xff]
  %v7863 = vld [vmem:[%s5 + $0x390] sm:$0xff]
  %v7864 = vld [vmem:[%s5 + $0x398] sm:$0xff]
  %v7865 = vld [vmem:[%s5 + $0x3a0] sm:$0xff]
  %v7866 = vld [vmem:[%s5 + $0x3a8] sm:$0xff]
  %v7867 = vld [vmem:[%s5 + $0x3b0] sm:$0xff]
  %v7868 = vld [vmem:[%s5 + $0x3b8] sm:$0xff]
  %v7869 = vld [vmem:[%s5 + $0x3c0] sm:$0xff]
  %v7870 = vld [vmem:[%s5 + $0x3c8] sm:$0xff]
  %v7871 = vld [vmem:[%s5 + $0x3d0] sm:$0xff]
  %v7872 = vld [vmem:[%s5 + $0x3d8] sm:$0xff]
  %v7873 = vld [vmem:[%s5 + $0x3e0] sm:$0xff]
  %v7874 = vld [vmem:[%s5 + $0x3e8] sm:$0xff]
  %v7875 = vld [vmem:[%s5 + $0x3f0] sm:$0xff]
  %v7876 = vld [vmem:[%s5 + $0x3f8] sm:$0xff]
  %v7877 = vld [vmem:[%s5 + $0x400] sm:$0xff]
  %v7878 = vld [vmem:[%s5 + $0x408] sm:$0xff]
  %v7879 = vld [vmem:[%s5 + $0x410] sm:$0xff]
  %v7880 = vld [vmem:[%s5 + $0x418] sm:$0xff]
  %v7881 = vld [vmem:[%s5 + $0x420] sm:$0xff]
  %v7882 = vld [vmem:[%s5 + $0x428] sm:$0xff]
  %v7883 = vld [vmem:[%s5 + $0x430] sm:$0xff]
  %v7884 = vld [vmem:[%s5 + $0x438] sm:$0xff]
  %v7885 = vld [vmem:[%s5 + $0x440] sm:$0xff]
  %v7886 = vld [vmem:[%s5 + $0x448] sm:$0xff]
  %v7887 = vld [vmem:[%s5 + $0x450] sm:$0xff]
  %v7888 = vld [vmem:[%s5 + $0x458] sm:$0xff]
  %v7889 = vld [vmem:[%s5 + $0x460] sm:$0xff]
  %v7890 = vld [vmem:[%s5 + $0x468] sm:$0xff]
  %v7891 = vld [vmem:[%s5 + $0x470] sm:$0xff]
  %v7892 = vld [vmem:[%s5 + $0x478] sm:$0xff]
  %v7893 = vld [vmem:[%s5 + $0x480] sm:$0xff]
  %v7894 = vld [vmem:[%s5 + $0x488] sm:$0xff]
  %v7895 = vld [vmem:[%s5 + $0x490] sm:$0xff]
  %v7896 = vld [vmem:[%s5 + $0x498] sm:$0xff]
  %v7897 = vld [vmem:[%s5 + $0x4a0] sm:$0xff]
  %v7898 = vld [vmem:[%s5 + $0x4a8] sm:$0xff]
  %v7899 = vld [vmem:[%s5 + $0x4b0] sm:$0xff]
  %v7900 = vld [vmem:[%s5 + $0x4b8] sm:$0xff]
  %v7901 = vld [vmem:[%s5 + $0x4c0] sm:$0xff]
  %v7902 = vld [vmem:[%s5 + $0x4c8] sm:$0xff]
  %v7903 = vld [vmem:[%s5 + $0x4d0] sm:$0xff]
  %v7904 = vld [vmem:[%s5 + $0x4d8] sm:$0xff]
  %v7905 = vld [vmem:[%s5 + $0x4e0] sm:$0xff]
  %v7906 = vld [vmem:[%s5 + $0x4e8] sm:$0xff]
  %v7907 = vld [vmem:[%s5 + $0x4f0] sm:$0xff]
  %v7908 = vld [vmem:[%s5 + $0x4f8] sm:$0xff]
  %v7909 = vld [vmem:[%s5 + $0x500] sm:$0xff]
  %v7910 = vld [vmem:[%s5 + $0x508] sm:$0xff]
  %v7911 = vld [vmem:[%s5 + $0x510] sm:$0xff]
  %v7912 = vld [vmem:[%s5 + $0x518] sm:$0xff]
  %v7913 = vld [vmem:[%s5 + $0x520] sm:$0xff]
  %v7914 = vld [vmem:[%s5 + $0x528] sm:$0xff]
  %v7915 = vld [vmem:[%s5 + $0x530] sm:$0xff]
  %v7916 = vld [vmem:[%s5 + $0x538] sm:$0xff]
  %v7917 = vld [vmem:[%s5 + $0x540] sm:$0xff]
  %v7918 = vld [vmem:[%s5 + $0x548] sm:$0xff]
  %v7919 = vld [vmem:[%s5 + $0x550] sm:$0xff]
  %v7920 = vld [vmem:[%s5 + $0x558] sm:$0xff]
  %v7921 = vld [vmem:[%s5 + $0x560] sm:$0xff]
  %v7922 = vld [vmem:[%s5 + $0x568] sm:$0xff]
  %v7923 = vld [vmem:[%s5 + $0x570] sm:$0xff]
  %v7924 = vld [vmem:[%s5 + $0x578] sm:$0xff]
  %v7925 = vld [vmem:[%s5 + $0x580] sm:$0xff]
  %v7926 = vld [vmem:[%s5 + $0x588] sm:$0xff]
  %v7927 = vld [vmem:[%s5 + $0x590] sm:$0xff]
  %v7928 = vld [vmem:[%s5 + $0x598] sm:$0xff]
  %v7929 = vld [vmem:[%s5 + $0x5a0] sm:$0xff]
  %v7930 = vld [vmem:[%s5 + $0x5a8] sm:$0xff]
  %v7931 = vld [vmem:[%s5 + $0x5b0] sm:$0xff]
  %v7932 = vld [vmem:[%s5 + $0x5b8] sm:$0xff]
  %v7933 = vld [vmem:[%s5 + $0x5c0] sm:$0xff]
  %v7934 = vld [vmem:[%s5 + $0x5c8] sm:$0xff]
  %v7935 = vld [vmem:[%s5 + $0x5d0] sm:$0xff]
  %v7936 = vld [vmem:[%s5 + $0x5d8] sm:$0xff]
  %v7937 = vld [vmem:[%s5 + $0x5e0] sm:$0xff]
  %v7938 = vld [vmem:[%s5 + $0x5e8] sm:$0xff]
  %v7939 = vld [vmem:[%s5 + $0x5f0] sm:$0xff]
  %v7940 = vld [vmem:[%s5 + $0x5f8] sm:$0xff]
  %v7941 = vld [vmem:[%s5 + $0x600] sm:$0xff]
  %v7942 = vld [vmem:[%s5 + $0x608] sm:$0xff]
  %v7943 = vld [vmem:[%s5 + $0x610] sm:$0xff]
  %v7944 = vld [vmem:[%s5 + $0x618] sm:$0xff]
  %v7945 = vld [vmem:[%s5 + $0x620] sm:$0xff]
  %v7946 = vld [vmem:[%s5 + $0x628] sm:$0xff]
  %v7947 = vld [vmem:[%s5 + $0x630] sm:$0xff]
  %v7948 = vld [vmem:[%s5 + $0x638] sm:$0xff]
  %v7949 = vld [vmem:[%s5 + $0x640] sm:$0xff]
  %v7950 = vld [vmem:[%s5 + $0x648] sm:$0xff]
  %v7951 = vld [vmem:[%s5 + $0x650] sm:$0xff]
  %v7952 = vld [vmem:[%s5 + $0x658] sm:$0xff]
  %v7953 = vld [vmem:[%s5 + $0x660] sm:$0xff]
  %v7954 = vld [vmem:[%s5 + $0x668] sm:$0xff]
  %v7955 = vld [vmem:[%s5 + $0x670] sm:$0xff]
  %v7956 = vld [vmem:[%s5 + $0x678] sm:$0xff]
  %v7957 = vld [vmem:[%s5 + $0x680] sm:$0xff]
  %v7958 = vld [vmem:[%s5 + $0x688] sm:$0xff]
  %v7959 = vld [vmem:[%s5 + $0x690] sm:$0xff]
  %v7960 = vld [vmem:[%s5 + $0x698] sm:$0xff]
  %v7961 = vld [vmem:[%s5 + $0x6a0] sm:$0xff]
  %v7962 = vld [vmem:[%s5 + $0x6a8] sm:$0xff]
  %v7963 = vld [vmem:[%s5 + $0x6b0] sm:$0xff]
  %v7964 = vld [vmem:[%s5 + $0x6b8] sm:$0xff]
  %v7965 = vld [vmem:[%s5 + $0x6c0] sm:$0xff]
  %v7966 = vld [vmem:[%s5 + $0x6c8] sm:$0xff]
  %v7967 = vld [vmem:[%s5 + $0x6d0] sm:$0xff]
  %v7968 = vld [vmem:[%s5 + $0x6d8] sm:$0xff]
  %v7969 = vld [vmem:[%s5 + $0x6e0] sm:$0xff]
  %v7970 = vld [vmem:[%s5 + $0x6e8] sm:$0xff]
  %v7971 = vld [vmem:[%s5 + $0x6f0] sm:$0xff]
  %v7972 = vld [vmem:[%s5 + $0x6f8] sm:$0xff]
  %v7973 = vld [vmem:[%s5 + $0x700] sm:$0xff]
  %v7974 = vld [vmem:[%s5 + $0x708] sm:$0xff]
  %v7975 = vld [vmem:[%s5 + $0x710] sm:$0xff]
  %v7976 = vld [vmem:[%s5 + $0x718] sm:$0xff]
  %v7977 = vld [vmem:[%s5 + $0x720] sm:$0xff]
  %v7978 = vld [vmem:[%s5 + $0x728] sm:$0xff]
  %v7979 = vld [vmem:[%s5 + $0x730] sm:$0xff]
  %v7980 = vld [vmem:[%s5 + $0x738] sm:$0xff]
  %v7981 = vld [vmem:[%s5 + $0x740] sm:$0xff]
  %v7982 = vld [vmem:[%s5 + $0x748] sm:$0xff]
  %v7983 = vld [vmem:[%s5 + $0x750] sm:$0xff]
  %v7984 = vld [vmem:[%s5 + $0x758] sm:$0xff]
  %v7985 = vld [vmem:[%s5 + $0x760] sm:$0xff]
  %v7986 = vld [vmem:[%s5 + $0x768] sm:$0xff]
  %v7987 = vld [vmem:[%s5 + $0x770] sm:$0xff]
  %v7988 = vld [vmem:[%s5 + $0x778] sm:$0xff]
  %v7989 = vld [vmem:[%s5 + $0x780] sm:$0xff]
  %v7990 = vld [vmem:[%s5 + $0x788] sm:$0xff]
  %v7991 = vld [vmem:[%s5 + $0x790] sm:$0xff]
  %v7992 = vld [vmem:[%s5 + $0x798] sm:$0xff]
  %v7993 = vld [vmem:[%s5 + $0x7a0] sm:$0xff]
  %v7994 = vld [vmem:[%s5 + $0x7a8] sm:$0xff]
  %v7995 = vld [vmem:[%s5 + $0x7b0] sm:$0xff]
  %v7996 = vld [vmem:[%s5 + $0x7b8] sm:$0xff]
  %v7997 = vld [vmem:[%s5 + $0x7c0] sm:$0xff]
  %v7998 = vld [vmem:[%s5 + $0x7c8] sm:$0xff]
  %v7999 = vld [vmem:[%s5 + $0x7d0] sm:$0xff]
  %v8000 = vld [vmem:[%s5 + $0x7d8] sm:$0xff]
  %v8001 = vld [vmem:[%s5 + $0x7e0] sm:$0xff]
  %v8002 = vld [vmem:[%s5 + $0x7e8] sm:$0xff]
  %v8003 = vld [vmem:[%s5 + $0x7f0] sm:$0xff]
  %v8004 = vld [vmem:[%s5 + $0x7f8] sm:$0xff]
  %v8261 = vunpack.c.l.b16 %v7749
  %v8262 = vunpack.c.h.b16 %v7749
  %v8263 = vunpack.c.l.b16 %v7750
  %v8264 = vunpack.c.h.b16 %v7750
  %v8265 = vunpack.c.l.b16 %v7751
  %v8266 = vunpack.c.h.b16 %v7751
  %v8267 = vunpack.c.l.b16 %v7752
  %v8268 = vunpack.c.h.b16 %v7752
  %v8269 = vunpack.c.l.b16 %v7753
  %v8270 = vunpack.c.h.b16 %v7753
  %v8271 = vunpack.c.l.b16 %v7754
  %v8272 = vunpack.c.h.b16 %v7754
  %v8273 = vunpack.c.l.b16 %v7755
  %v8274 = vunpack.c.h.b16 %v7755
  %v8275 = vunpack.c.l.b16 %v7756
  %v8276 = vunpack.c.h.b16 %v7756
  %v8277 = vunpack.c.l.b16 %v7757
  %v8278 = vunpack.c.h.b16 %v7757
  %v8279 = vunpack.c.l.b16 %v7758
  %v8280 = vunpack.c.h.b16 %v7758
  %v8281 = vunpack.c.l.b16 %v7759
  %v8282 = vunpack.c.h.b16 %v7759
  %v8283 = vunpack.c.l.b16 %v7760
  %v8284 = vunpack.c.h.b16 %v7760
  %v8285 = vunpack.c.l.b16 %v7761
  %v8286 = vunpack.c.h.b16 %v7761
  %v8287 = vunpack.c.l.b16 %v7762
  %v8288 = vunpack.c.h.b16 %v7762
  %v8289 = vunpack.c.l.b16 %v7763
  %v8290 = vunpack.c.h.b16 %v7763
  %v8291 = vunpack.c.l.b16 %v7764
  %v8292 = vunpack.c.h.b16 %v7764
  %v8293 = vunpack.c.l.b16 %v7765
  %v8294 = vunpack.c.h.b16 %v7765
  %v8295 = vunpack.c.l.b16 %v7766
  %v8296 = vunpack.c.h.b16 %v7766
  %v8297 = vunpack.c.l.b16 %v7767
  %v8298 = vunpack.c.h.b16 %v7767
  %v8299 = vunpack.c.l.b16 %v7768
  %v8300 = vunpack.c.h.b16 %v7768
  %v8301 = vunpack.c.l.b16 %v7769
  %v8302 = vunpack.c.h.b16 %v7769
  %v8303 = vunpack.c.l.b16 %v7770
  %v8304 = vunpack.c.h.b16 %v7770
  %v8305 = vunpack.c.l.b16 %v7771
  %v8306 = vunpack.c.h.b16 %v7771
  %v8307 = vunpack.c.l.b16 %v7772
  %v8308 = vunpack.c.h.b16 %v7772
  %v8309 = vunpack.c.l.b16 %v7773
  %v8310 = vunpack.c.h.b16 %v7773
  %v8311 = vunpack.c.l.b16 %v7774
  %v8312 = vunpack.c.h.b16 %v7774
  %v8313 = vunpack.c.l.b16 %v7775
  %v8314 = vunpack.c.h.b16 %v7775
  %v8315 = vunpack.c.l.b16 %v7776
  %v8316 = vunpack.c.h.b16 %v7776
  %v8317 = vunpack.c.l.b16 %v7777
  %v8318 = vunpack.c.h.b16 %v7777
  %v8319 = vunpack.c.l.b16 %v7778
  %v8320 = vunpack.c.h.b16 %v7778
  %v8321 = vunpack.c.l.b16 %v7779
  %v8322 = vunpack.c.h.b16 %v7779
  %v8323 = vunpack.c.l.b16 %v7780
  %v8324 = vunpack.c.h.b16 %v7780
  %v8325 = vunpack.c.l.b16 %v7781
  %v8326 = vunpack.c.h.b16 %v7781
  %v8327 = vunpack.c.l.b16 %v7782
  %v8328 = vunpack.c.h.b16 %v7782
  %v8329 = vunpack.c.l.b16 %v7783
  %v8330 = vunpack.c.h.b16 %v7783
  %v8331 = vunpack.c.l.b16 %v7784
  %v8332 = vunpack.c.h.b16 %v7784
  %v8333 = vunpack.c.l.b16 %v7785
  %v8334 = vunpack.c.h.b16 %v7785
  %v8335 = vunpack.c.l.b16 %v7786
  %v8336 = vunpack.c.h.b16 %v7786
  %v8337 = vunpack.c.l.b16 %v7787
  %v8338 = vunpack.c.h.b16 %v7787
  %v8339 = vunpack.c.l.b16 %v7788
  %v8340 = vunpack.c.h.b16 %v7788
  %v8341 = vunpack.c.l.b16 %v7789
  %v8342 = vunpack.c.h.b16 %v7789
  %v8343 = vunpack.c.l.b16 %v7790
  %v8344 = vunpack.c.h.b16 %v7790
  %v8345 = vunpack.c.l.b16 %v7791
  %v8346 = vunpack.c.h.b16 %v7791
  %v8347 = vunpack.c.l.b16 %v7792
  %v8348 = vunpack.c.h.b16 %v7792
  %v8349 = vunpack.c.l.b16 %v7793
  %v8350 = vunpack.c.h.b16 %v7793
  %v8351 = vunpack.c.l.b16 %v7794
  %v8352 = vunpack.c.h.b16 %v7794
  %v8353 = vunpack.c.l.b16 %v7795
  %v8354 = vunpack.c.h.b16 %v7795
  %v8355 = vunpack.c.l.b16 %v7796
  %v8356 = vunpack.c.h.b16 %v7796
  %v8357 = vunpack.c.l.b16 %v7797
  %v8358 = vunpack.c.h.b16 %v7797
  %v8359 = vunpack.c.l.b16 %v7798
  %v8360 = vunpack.c.h.b16 %v7798
  %v8361 = vunpack.c.l.b16 %v7799
  %v8362 = vunpack.c.h.b16 %v7799
  %v8363 = vunpack.c.l.b16 %v7800
  %v8364 = vunpack.c.h.b16 %v7800
  %v8365 = vunpack.c.l.b16 %v7801
  %v8366 = vunpack.c.h.b16 %v7801
  %v8367 = vunpack.c.l.b16 %v7802
  %v8368 = vunpack.c.h.b16 %v7802
  %v8369 = vunpack.c.l.b16 %v7803
  %v8370 = vunpack.c.h.b16 %v7803
  %v8371 = vunpack.c.l.b16 %v7804
  %v8372 = vunpack.c.h.b16 %v7804
  %v8373 = vunpack.c.l.b16 %v7805
  %v8374 = vunpack.c.h.b16 %v7805
  %v8375 = vunpack.c.l.b16 %v7806
  %v8376 = vunpack.c.h.b16 %v7806
  %v8377 = vunpack.c.l.b16 %v7807
  %v8378 = vunpack.c.h.b16 %v7807
  %v8379 = vunpack.c.l.b16 %v7808
  %v8380 = vunpack.c.h.b16 %v7808
  %v8381 = vunpack.c.l.b16 %v7809
  %v8382 = vunpack.c.h.b16 %v7809
  %v8383 = vunpack.c.l.b16 %v7810
  %v8384 = vunpack.c.h.b16 %v7810
  %v8385 = vunpack.c.l.b16 %v7811
  %v8386 = vunpack.c.h.b16 %v7811
  %v8387 = vunpack.c.l.b16 %v7812
  %v8388 = vunpack.c.h.b16 %v7812
  %v8389 = vunpack.c.l.b16 %v7813
  %v8390 = vunpack.c.h.b16 %v7813
  %v8391 = vunpack.c.l.b16 %v7814
  %v8392 = vunpack.c.h.b16 %v7814
  %v8393 = vunpack.c.l.b16 %v7815
  %v8394 = vunpack.c.h.b16 %v7815
  %v8395 = vunpack.c.l.b16 %v7816
  %v8396 = vunpack.c.h.b16 %v7816
  %v8397 = vunpack.c.l.b16 %v7817
  %v8398 = vunpack.c.h.b16 %v7817
  %v8399 = vunpack.c.l.b16 %v7818
  %v8400 = vunpack.c.h.b16 %v7818
  %v8401 = vunpack.c.l.b16 %v7819
  %v8402 = vunpack.c.h.b16 %v7819
  %v8403 = vunpack.c.l.b16 %v7820
  %v8404 = vunpack.c.h.b16 %v7820
  %v8405 = vunpack.c.l.b16 %v7821
  %v8406 = vunpack.c.h.b16 %v7821
  %v8407 = vunpack.c.l.b16 %v7822
  %v8408 = vunpack.c.h.b16 %v7822
  %v8409 = vunpack.c.l.b16 %v7823
  %v8410 = vunpack.c.h.b16 %v7823
  %v8411 = vunpack.c.l.b16 %v7824
  %v8412 = vunpack.c.h.b16 %v7824
  %v8413 = vunpack.c.l.b16 %v7825
  %v8414 = vunpack.c.h.b16 %v7825
  %v8415 = vunpack.c.l.b16 %v7826
  %v8416 = vunpack.c.h.b16 %v7826
  %v8417 = vunpack.c.l.b16 %v7827
  %v8418 = vunpack.c.h.b16 %v7827
  %v8419 = vunpack.c.l.b16 %v7828
  %v8420 = vunpack.c.h.b16 %v7828
  %v8421 = vunpack.c.l.b16 %v7829
  %v8422 = vunpack.c.h.b16 %v7829
  %v8423 = vunpack.c.l.b16 %v7830
  %v8424 = vunpack.c.h.b16 %v7830
  %v8425 = vunpack.c.l.b16 %v7831
  %v8426 = vunpack.c.h.b16 %v7831
  %v8427 = vunpack.c.l.b16 %v7832
  %v8428 = vunpack.c.h.b16 %v7832
  %v8429 = vunpack.c.l.b16 %v7833
  %v8430 = vunpack.c.h.b16 %v7833
  %v8431 = vunpack.c.l.b16 %v7834
  %v8432 = vunpack.c.h.b16 %v7834
  %v8433 = vunpack.c.l.b16 %v7835
  %v8434 = vunpack.c.h.b16 %v7835
  %v8435 = vunpack.c.l.b16 %v7836
  %v8436 = vunpack.c.h.b16 %v7836
  %v8437 = vunpack.c.l.b16 %v7837
  %v8438 = vunpack.c.h.b16 %v7837
  %v8439 = vunpack.c.l.b16 %v7838
  %v8440 = vunpack.c.h.b16 %v7838
  %v8441 = vunpack.c.l.b16 %v7839
  %v8442 = vunpack.c.h.b16 %v7839
  %v8443 = vunpack.c.l.b16 %v7840
  %v8444 = vunpack.c.h.b16 %v7840
  %v8445 = vunpack.c.l.b16 %v7841
  %v8446 = vunpack.c.h.b16 %v7841
  %v8447 = vunpack.c.l.b16 %v7842
  %v8448 = vunpack.c.h.b16 %v7842
  %v8449 = vunpack.c.l.b16 %v7843
  %v8450 = vunpack.c.h.b16 %v7843
  %v8451 = vunpack.c.l.b16 %v7844
  %v8452 = vunpack.c.h.b16 %v7844
  %v8453 = vunpack.c.l.b16 %v7845
  %v8454 = vunpack.c.h.b16 %v7845
  %v8455 = vunpack.c.l.b16 %v7846
  %v8456 = vunpack.c.h.b16 %v7846
  %v8457 = vunpack.c.l.b16 %v7847
  %v8458 = vunpack.c.h.b16 %v7847
  %v8459 = vunpack.c.l.b16 %v7848
  %v8460 = vunpack.c.h.b16 %v7848
  %v8461 = vunpack.c.l.b16 %v7849
  %v8462 = vunpack.c.h.b16 %v7849
  %v8463 = vunpack.c.l.b16 %v7850
  %v8464 = vunpack.c.h.b16 %v7850
  %v8465 = vunpack.c.l.b16 %v7851
  %v8466 = vunpack.c.h.b16 %v7851
  %v8467 = vunpack.c.l.b16 %v7852
  %v8468 = vunpack.c.h.b16 %v7852
  %v8469 = vunpack.c.l.b16 %v7853
  %v8470 = vunpack.c.h.b16 %v7853
  %v8471 = vunpack.c.l.b16 %v7854
  %v8472 = vunpack.c.h.b16 %v7854
  %v8473 = vunpack.c.l.b16 %v7855
  %v8474 = vunpack.c.h.b16 %v7855
  %v8475 = vunpack.c.l.b16 %v7856
  %v8476 = vunpack.c.h.b16 %v7856
  %v8477 = vunpack.c.l.b16 %v7857
  %v8478 = vunpack.c.h.b16 %v7857
  %v8479 = vunpack.c.l.b16 %v7858
  %v8480 = vunpack.c.h.b16 %v7858
  %v8481 = vunpack.c.l.b16 %v7859
  %v8482 = vunpack.c.h.b16 %v7859
  %v8483 = vunpack.c.l.b16 %v7860
  %v8484 = vunpack.c.h.b16 %v7860
  %v8485 = vunpack.c.l.b16 %v7861
  %v8486 = vunpack.c.h.b16 %v7861
  %v8487 = vunpack.c.l.b16 %v7862
  %v8488 = vunpack.c.h.b16 %v7862
  %v8489 = vunpack.c.l.b16 %v7863
  %v8490 = vunpack.c.h.b16 %v7863
  %v8491 = vunpack.c.l.b16 %v7864
  %v8492 = vunpack.c.h.b16 %v7864
  %v8493 = vunpack.c.l.b16 %v7865
  %v8494 = vunpack.c.h.b16 %v7865
  %v8495 = vunpack.c.l.b16 %v7866
  %v8496 = vunpack.c.h.b16 %v7866
  %v8497 = vunpack.c.l.b16 %v7867
  %v8498 = vunpack.c.h.b16 %v7867
  %v8499 = vunpack.c.l.b16 %v7868
  %v8500 = vunpack.c.h.b16 %v7868
  %v8501 = vunpack.c.l.b16 %v7869
  %v8502 = vunpack.c.h.b16 %v7869
  %v8503 = vunpack.c.l.b16 %v7870
  %v8504 = vunpack.c.h.b16 %v7870
  %v8505 = vunpack.c.l.b16 %v7871
  %v8506 = vunpack.c.h.b16 %v7871
  %v8507 = vunpack.c.l.b16 %v7872
  %v8508 = vunpack.c.h.b16 %v7872
  %v8509 = vunpack.c.l.b16 %v7873
  %v8510 = vunpack.c.h.b16 %v7873
  %v8511 = vunpack.c.l.b16 %v7874
  %v8512 = vunpack.c.h.b16 %v7874
  %v8513 = vunpack.c.l.b16 %v7875
  %v8514 = vunpack.c.h.b16 %v7875
  %v8515 = vunpack.c.l.b16 %v7876
  %v8516 = vunpack.c.h.b16 %v7876
  %v8517 = vunpack.c.l.b16 %v7877
  %v8518 = vunpack.c.h.b16 %v7877
  %v8519 = vunpack.c.l.b16 %v7878
  %v8520 = vunpack.c.h.b16 %v7878
  %v8521 = vunpack.c.l.b16 %v7879
  %v8522 = vunpack.c.h.b16 %v7879
  %v8523 = vunpack.c.l.b16 %v7880
  %v8524 = vunpack.c.h.b16 %v7880
  %v8525 = vunpack.c.l.b16 %v7881
  %v8526 = vunpack.c.h.b16 %v7881
  %v8527 = vunpack.c.l.b16 %v7882
  %v8528 = vunpack.c.h.b16 %v7882
  %v8529 = vunpack.c.l.b16 %v7883
  %v8530 = vunpack.c.h.b16 %v7883
  %v8531 = vunpack.c.l.b16 %v7884
  %v8532 = vunpack.c.h.b16 %v7884
  %v8533 = vunpack.c.l.b16 %v7885
  %v8534 = vunpack.c.h.b16 %v7885
  %v8535 = vunpack.c.l.b16 %v7886
  %v8536 = vunpack.c.h.b16 %v7886
  %v8537 = vunpack.c.l.b16 %v7887
  %v8538 = vunpack.c.h.b16 %v7887
  %v8539 = vunpack.c.l.b16 %v7888
  %v8540 = vunpack.c.h.b16 %v7888
  %v8541 = vunpack.c.l.b16 %v7889
  %v8542 = vunpack.c.h.b16 %v7889
  %v8543 = vunpack.c.l.b16 %v7890
  %v8544 = vunpack.c.h.b16 %v7890
  %v8545 = vunpack.c.l.b16 %v7891
  %v8546 = vunpack.c.h.b16 %v7891
  %v8547 = vunpack.c.l.b16 %v7892
  %v8548 = vunpack.c.h.b16 %v7892
  %v8549 = vunpack.c.l.b16 %v7893
  %v8550 = vunpack.c.h.b16 %v7893
  %v8551 = vunpack.c.l.b16 %v7894
  %v8552 = vunpack.c.h.b16 %v7894
  %v8553 = vunpack.c.l.b16 %v7895
  %v8554 = vunpack.c.h.b16 %v7895
  %v8555 = vunpack.c.l.b16 %v7896
  %v8556 = vunpack.c.h.b16 %v7896
  %v8557 = vunpack.c.l.b16 %v7897
  %v8558 = vunpack.c.h.b16 %v7897
  %v8559 = vunpack.c.l.b16 %v7898
  %v8560 = vunpack.c.h.b16 %v7898
  %v8561 = vunpack.c.l.b16 %v7899
  %v8562 = vunpack.c.h.b16 %v7899
  %v8563 = vunpack.c.l.b16 %v7900
  %v8564 = vunpack.c.h.b16 %v7900
  %v8565 = vunpack.c.l.b16 %v7901
  %v8566 = vunpack.c.h.b16 %v7901
  %v8567 = vunpack.c.l.b16 %v7902
  %v8568 = vunpack.c.h.b16 %v7902
  %v8569 = vunpack.c.l.b16 %v7903
  %v8570 = vunpack.c.h.b16 %v7903
  %v8571 = vunpack.c.l.b16 %v7904
  %v8572 = vunpack.c.h.b16 %v7904
  %v8573 = vunpack.c.l.b16 %v7905
  %v8574 = vunpack.c.h.b16 %v7905
  %v8575 = vunpack.c.l.b16 %v7906
  %v8576 = vunpack.c.h.b16 %v7906
  %v8577 = vunpack.c.l.b16 %v7907
  %v8578 = vunpack.c.h.b16 %v7907
  %v8579 = vunpack.c.l.b16 %v7908
  %v8580 = vunpack.c.h.b16 %v7908
  %v8581 = vunpack.c.l.b16 %v7909
  %v8582 = vunpack.c.h.b16 %v7909
  %v8583 = vunpack.c.l.b16 %v7910
  %v8584 = vunpack.c.h.b16 %v7910
  %v8585 = vunpack.c.l.b16 %v7911
  %v8586 = vunpack.c.h.b16 %v7911
  %v8587 = vunpack.c.l.b16 %v7912
  %v8588 = vunpack.c.h.b16 %v7912
  %v8589 = vunpack.c.l.b16 %v7913
  %v8590 = vunpack.c.h.b16 %v7913
  %v8591 = vunpack.c.l.b16 %v7914
  %v8592 = vunpack.c.h.b16 %v7914
  %v8593 = vunpack.c.l.b16 %v7915
  %v8594 = vunpack.c.h.b16 %v7915
  %v8595 = vunpack.c.l.b16 %v7916
  %v8596 = vunpack.c.h.b16 %v7916
  %v8597 = vunpack.c.l.b16 %v7917
  %v8598 = vunpack.c.h.b16 %v7917
  %v8599 = vunpack.c.l.b16 %v7918
  %v8600 = vunpack.c.h.b16 %v7918
  %v8601 = vunpack.c.l.b16 %v7919
  %v8602 = vunpack.c.h.b16 %v7919
  %v8603 = vunpack.c.l.b16 %v7920
  %v8604 = vunpack.c.h.b16 %v7920
  %v8605 = vunpack.c.l.b16 %v7921
  %v8606 = vunpack.c.h.b16 %v7921
  %v8607 = vunpack.c.l.b16 %v7922
  %v8608 = vunpack.c.h.b16 %v7922
  %v8609 = vunpack.c.l.b16 %v7923
  %v8610 = vunpack.c.h.b16 %v7923
  %v8611 = vunpack.c.l.b16 %v7924
  %v8612 = vunpack.c.h.b16 %v7924
  %v8613 = vunpack.c.l.b16 %v7925
  %v8614 = vunpack.c.h.b16 %v7925
  %v8615 = vunpack.c.l.b16 %v7926
  %v8616 = vunpack.c.h.b16 %v7926
  %v8617 = vunpack.c.l.b16 %v7927
  %v8618 = vunpack.c.h.b16 %v7927
  %v8619 = vunpack.c.l.b16 %v7928
  %v8620 = vunpack.c.h.b16 %v7928
  %v8621 = vunpack.c.l.b16 %v7929
  %v8622 = vunpack.c.h.b16 %v7929
  %v8623 = vunpack.c.l.b16 %v7930
  %v8624 = vunpack.c.h.b16 %v7930
  %v8625 = vunpack.c.l.b16 %v7931
  %v8626 = vunpack.c.h.b16 %v7931
  %v8627 = vunpack.c.l.b16 %v7932
  %v8628 = vunpack.c.h.b16 %v7932
  %v8629 = vunpack.c.l.b16 %v7933
  %v8630 = vunpack.c.h.b16 %v7933
  %v8631 = vunpack.c.l.b16 %v7934
  %v8632 = vunpack.c.h.b16 %v7934
  %v8633 = vunpack.c.l.b16 %v7935
  %v8634 = vunpack.c.h.b16 %v7935
  %v8635 = vunpack.c.l.b16 %v7936
  %v8636 = vunpack.c.h.b16 %v7936
  %v8637 = vunpack.c.l.b16 %v7937
  %v8638 = vunpack.c.h.b16 %v7937
  %v8639 = vunpack.c.l.b16 %v7938
  %v8640 = vunpack.c.h.b16 %v7938
  %v8641 = vunpack.c.l.b16 %v7939
  %v8642 = vunpack.c.h.b16 %v7939
  %v8643 = vunpack.c.l.b16 %v7940
  %v8644 = vunpack.c.h.b16 %v7940
  %v8645 = vunpack.c.l.b16 %v7941
  %v8646 = vunpack.c.h.b16 %v7941
  %v8647 = vunpack.c.l.b16 %v7942
  %v8648 = vunpack.c.h.b16 %v7942
  %v8649 = vunpack.c.l.b16 %v7943
  %v8650 = vunpack.c.h.b16 %v7943
  %v8651 = vunpack.c.l.b16 %v7944
  %v8652 = vunpack.c.h.b16 %v7944
  %v8653 = vunpack.c.l.b16 %v7945
  %v8654 = vunpack.c.h.b16 %v7945
  %v8655 = vunpack.c.l.b16 %v7946
  %v8656 = vunpack.c.h.b16 %v7946
  %v8657 = vunpack.c.l.b16 %v7947
  %v8658 = vunpack.c.h.b16 %v7947
  %v8659 = vunpack.c.l.b16 %v7948
  %v8660 = vunpack.c.h.b16 %v7948
  %v8661 = vunpack.c.l.b16 %v7949
  %v8662 = vunpack.c.h.b16 %v7949
  %v8663 = vunpack.c.l.b16 %v7950
  %v8664 = vunpack.c.h.b16 %v7950
  %v8665 = vunpack.c.l.b16 %v7951
  %v8666 = vunpack.c.h.b16 %v7951
  %v8667 = vunpack.c.l.b16 %v7952
  %v8668 = vunpack.c.h.b16 %v7952
  %v8669 = vunpack.c.l.b16 %v7953
  %v8670 = vunpack.c.h.b16 %v7953
  %v8671 = vunpack.c.l.b16 %v7954
  %v8672 = vunpack.c.h.b16 %v7954
  %v8673 = vunpack.c.l.b16 %v7955
  %v8674 = vunpack.c.h.b16 %v7955
  %v8675 = vunpack.c.l.b16 %v7956
  %v8676 = vunpack.c.h.b16 %v7956
  %v8677 = vunpack.c.l.b16 %v7957
  %v8678 = vunpack.c.h.b16 %v7957
  %v8679 = vunpack.c.l.b16 %v7958
  %v8680 = vunpack.c.h.b16 %v7958
  %v8681 = vunpack.c.l.b16 %v7959
  %v8682 = vunpack.c.h.b16 %v7959
  %v8683 = vunpack.c.l.b16 %v7960
  %v8684 = vunpack.c.h.b16 %v7960
  %v8685 = vunpack.c.l.b16 %v7961
  %v8686 = vunpack.c.h.b16 %v7961
  %v8687 = vunpack.c.l.b16 %v7962
  %v8688 = vunpack.c.h.b16 %v7962
  %v8689 = vunpack.c.l.b16 %v7963
  %v8690 = vunpack.c.h.b16 %v7963
  %v8691 = vunpack.c.l.b16 %v7964
  %v8692 = vunpack.c.h.b16 %v7964
  %v8693 = vunpack.c.l.b16 %v7965
  %v8694 = vunpack.c.h.b16 %v7965
  %v8695 = vunpack.c.l.b16 %v7966
  %v8696 = vunpack.c.h.b16 %v7966
  %v8697 = vunpack.c.l.b16 %v7967
  %v8698 = vunpack.c.h.b16 %v7967
  %v8699 = vunpack.c.l.b16 %v7968
  %v8700 = vunpack.c.h.b16 %v7968
  %v8701 = vunpack.c.l.b16 %v7969
  %v8702 = vunpack.c.h.b16 %v7969
  %v8703 = vunpack.c.l.b16 %v7970
  %v8704 = vunpack.c.h.b16 %v7970
  %v8705 = vunpack.c.l.b16 %v7971
  %v8706 = vunpack.c.h.b16 %v7971
  %v8707 = vunpack.c.l.b16 %v7972
  %v8708 = vunpack.c.h.b16 %v7972
  %v8709 = vunpack.c.l.b16 %v7973
  %v8710 = vunpack.c.h.b16 %v7973
  %v8711 = vunpack.c.l.b16 %v7974
  %v8712 = vunpack.c.h.b16 %v7974
  %v8713 = vunpack.c.l.b16 %v7975
  %v8714 = vunpack.c.h.b16 %v7975
  %v8715 = vunpack.c.l.b16 %v7976
  %v8716 = vunpack.c.h.b16 %v7976
  %v8717 = vunpack.c.l.b16 %v7977
  %v8718 = vunpack.c.h.b16 %v7977
  %v8719 = vunpack.c.l.b16 %v7978
  %v8720 = vunpack.c.h.b16 %v7978
  %v8721 = vunpack.c.l.b16 %v7979
  %v8722 = vunpack.c.h.b16 %v7979
  %v8723 = vunpack.c.l.b16 %v7980
  %v8724 = vunpack.c.h.b16 %v7980
  %v8725 = vunpack.c.l.b16 %v7981
  %v8726 = vunpack.c.h.b16 %v7981
  %v8727 = vunpack.c.l.b16 %v7982
  %v8728 = vunpack.c.h.b16 %v7982
  %v8729 = vunpack.c.l.b16 %v7983
  %v8730 = vunpack.c.h.b16 %v7983
  %v8731 = vunpack.c.l.b16 %v7984
  %v8732 = vunpack.c.h.b16 %v7984
  %v8733 = vunpack.c.l.b16 %v7985
  %v8734 = vunpack.c.h.b16 %v7985
  %v8735 = vunpack.c.l.b16 %v7986
  %v8736 = vunpack.c.h.b16 %v7986
  %v8737 = vunpack.c.l.b16 %v7987
  %v8738 = vunpack.c.h.b16 %v7987
  %v8739 = vunpack.c.l.b16 %v7988
  %v8740 = vunpack.c.h.b16 %v7988
  %v8741 = vunpack.c.l.b16 %v7989
  %v8742 = vunpack.c.h.b16 %v7989
  %v8743 = vunpack.c.l.b16 %v7990
  %v8744 = vunpack.c.h.b16 %v7990
  %v8745 = vunpack.c.l.b16 %v7991
  %v8746 = vunpack.c.h.b16 %v7991
  %v8747 = vunpack.c.l.b16 %v7992
  %v8748 = vunpack.c.h.b16 %v7992
  %v8749 = vunpack.c.l.b16 %v7993
  %v8750 = vunpack.c.h.b16 %v7993
  %v8751 = vunpack.c.l.b16 %v7994
  %v8752 = vunpack.c.h.b16 %v7994
  %v8753 = vunpack.c.l.b16 %v7995
  %v8754 = vunpack.c.h.b16 %v7995
  %v8755 = vunpack.c.l.b16 %v7996
  %v8756 = vunpack.c.h.b16 %v7996
  %v8757 = vunpack.c.l.b16 %v7997
  %v8758 = vunpack.c.h.b16 %v7997
  %v8759 = vunpack.c.l.b16 %v7998
  %v8760 = vunpack.c.h.b16 %v7998
  %v8761 = vunpack.c.l.b16 %v7999
  %v8762 = vunpack.c.h.b16 %v7999
  %v8763 = vunpack.c.l.b16 %v8000
  %v8764 = vunpack.c.h.b16 %v8000
  %v8765 = vunpack.c.l.b16 %v8001
  %v8766 = vunpack.c.h.b16 %v8001
  %v8767 = vunpack.c.l.b16 %v8002
  %v8768 = vunpack.c.h.b16 %v8002
  %v8769 = vunpack.c.l.b16 %v8003
  %v8770 = vunpack.c.h.b16 %v8003
  %v8771 = vunpack.c.l.b16 %v8004
  %v8772 = vunpack.c.h.b16 %v8004
  %v8773 = vpack.c.b16 %v8265, %v8261
  %v8774 = vpack.c.b16 %v8266, %v8262
  %v8775 = vpack.c.b16 %v8267, %v8263
  %v8776 = vpack.c.b16 %v8268, %v8264
  %v8777 = vpack.c.b16 %v8273, %v8269
  %v8778 = vpack.c.b16 %v8274, %v8270
  %v8779 = vpack.c.b16 %v8275, %v8271
  %v8780 = vpack.c.b16 %v8276, %v8272
  %v8781 = vpack.c.b16 %v8281, %v8277
  %v8782 = vpack.c.b16 %v8282, %v8278
  %v8783 = vpack.c.b16 %v8283, %v8279
  %v8784 = vpack.c.b16 %v8284, %v8280
  %v8785 = vpack.c.b16 %v8289, %v8285
  %v8786 = vpack.c.b16 %v8290, %v8286
  %v8787 = vpack.c.b16 %v8291, %v8287
  %v8788 = vpack.c.b16 %v8292, %v8288
  %v8789 = vpack.c.b16 %v8297, %v8293
  %v8790 = vpack.c.b16 %v8298, %v8294
  %v8791 = vpack.c.b16 %v8299, %v8295
  %v8792 = vpack.c.b16 %v8300, %v8296
  %v8793 = vpack.c.b16 %v8305, %v8301
  %v8794 = vpack.c.b16 %v8306, %v8302
  %v8795 = vpack.c.b16 %v8307, %v8303
  %v8796 = vpack.c.b16 %v8308, %v8304
  %v8797 = vpack.c.b16 %v8313, %v8309
  %v8798 = vpack.c.b16 %v8314, %v8310
  %v8799 = vpack.c.b16 %v8315, %v8311
  %v8800 = vpack.c.b16 %v8316, %v8312
  %v8801 = vpack.c.b16 %v8321, %v8317
  %v8802 = vpack.c.b16 %v8322, %v8318
  %v8803 = vpack.c.b16 %v8323, %v8319
  %v8804 = vpack.c.b16 %v8324, %v8320
  %v8805 = vpack.c.b16 %v8329, %v8325
  %v8806 = vpack.c.b16 %v8330, %v8326
  %v8807 = vpack.c.b16 %v8331, %v8327
  %v8808 = vpack.c.b16 %v8332, %v8328
  %v8809 = vpack.c.b16 %v8337, %v8333
  %v8810 = vpack.c.b16 %v8338, %v8334
  %v8811 = vpack.c.b16 %v8339, %v8335
  %v8812 = vpack.c.b16 %v8340, %v8336
  %v8813 = vpack.c.b16 %v8345, %v8341
  %v8814 = vpack.c.b16 %v8346, %v8342
  %v8815 = vpack.c.b16 %v8347, %v8343
  %v8816 = vpack.c.b16 %v8348, %v8344
  %v8817 = vpack.c.b16 %v8353, %v8349
  %v8818 = vpack.c.b16 %v8354, %v8350
  %v8819 = vpack.c.b16 %v8355, %v8351
  %v8820 = vpack.c.b16 %v8356, %v8352
  %v8821 = vpack.c.b16 %v8361, %v8357
  %v8822 = vpack.c.b16 %v8362, %v8358
  %v8823 = vpack.c.b16 %v8363, %v8359
  %v8824 = vpack.c.b16 %v8364, %v8360
  %v8825 = vpack.c.b16 %v8369, %v8365
  %v8826 = vpack.c.b16 %v8370, %v8366
  %v8827 = vpack.c.b16 %v8371, %v8367
  %v8828 = vpack.c.b16 %v8372, %v8368
  %v8829 = vpack.c.b16 %v8377, %v8373
  %v8830 = vpack.c.b16 %v8378, %v8374
  %v8831 = vpack.c.b16 %v8379, %v8375
  %v8832 = vpack.c.b16 %v8380, %v8376
  %v8833 = vpack.c.b16 %v8385, %v8381
  %v8834 = vpack.c.b16 %v8386, %v8382
  %v8835 = vpack.c.b16 %v8387, %v8383
  %v8836 = vpack.c.b16 %v8388, %v8384
  %v8837 = vpack.c.b16 %v8393, %v8389
  %v8838 = vpack.c.b16 %v8394, %v8390
  %v8839 = vpack.c.b16 %v8395, %v8391
  %v8840 = vpack.c.b16 %v8396, %v8392
  %v8841 = vpack.c.b16 %v8401, %v8397
  %v8842 = vpack.c.b16 %v8402, %v8398
  %v8843 = vpack.c.b16 %v8403, %v8399
  %v8844 = vpack.c.b16 %v8404, %v8400
  %v8845 = vpack.c.b16 %v8409, %v8405
  %v8846 = vpack.c.b16 %v8410, %v8406
  %v8847 = vpack.c.b16 %v8411, %v8407
  %v8848 = vpack.c.b16 %v8412, %v8408
  %v8849 = vpack.c.b16 %v8417, %v8413
  %v8850 = vpack.c.b16 %v8418, %v8414
  %v8851 = vpack.c.b16 %v8419, %v8415
  %v8852 = vpack.c.b16 %v8420, %v8416
  %v8853 = vpack.c.b16 %v8425, %v8421
  %v8854 = vpack.c.b16 %v8426, %v8422
  %v8855 = vpack.c.b16 %v8427, %v8423
  %v8856 = vpack.c.b16 %v8428, %v8424
  %v8857 = vpack.c.b16 %v8433, %v8429
  %v8858 = vpack.c.b16 %v8434, %v8430
  %v8859 = vpack.c.b16 %v8435, %v8431
  %v8860 = vpack.c.b16 %v8436, %v8432
  %v8861 = vpack.c.b16 %v8441, %v8437
  %v8862 = vpack.c.b16 %v8442, %v8438
  %v8863 = vpack.c.b16 %v8443, %v8439
  %v8864 = vpack.c.b16 %v8444, %v8440
  %v8865 = vpack.c.b16 %v8449, %v8445
  %v8866 = vpack.c.b16 %v8450, %v8446
  %v8867 = vpack.c.b16 %v8451, %v8447
  %v8868 = vpack.c.b16 %v8452, %v8448
  %v8869 = vpack.c.b16 %v8457, %v8453
  %v8870 = vpack.c.b16 %v8458, %v8454
  %v8871 = vpack.c.b16 %v8459, %v8455
  %v8872 = vpack.c.b16 %v8460, %v8456
  %v8873 = vpack.c.b16 %v8465, %v8461
  %v8874 = vpack.c.b16 %v8466, %v8462
  %v8875 = vpack.c.b16 %v8467, %v8463
  %v8876 = vpack.c.b16 %v8468, %v8464
  %v8877 = vpack.c.b16 %v8473, %v8469
  %v8878 = vpack.c.b16 %v8474, %v8470
  %v8879 = vpack.c.b16 %v8475, %v8471
  %v8880 = vpack.c.b16 %v8476, %v8472
  %v8881 = vpack.c.b16 %v8481, %v8477
  %v8882 = vpack.c.b16 %v8482, %v8478
  %v8883 = vpack.c.b16 %v8483, %v8479
  %v8884 = vpack.c.b16 %v8484, %v8480
  %v8885 = vpack.c.b16 %v8489, %v8485
  %v8886 = vpack.c.b16 %v8490, %v8486
  %v8887 = vpack.c.b16 %v8491, %v8487
  %v8888 = vpack.c.b16 %v8492, %v8488
  %v8889 = vpack.c.b16 %v8497, %v8493
  %v8890 = vpack.c.b16 %v8498, %v8494
  %v8891 = vpack.c.b16 %v8499, %v8495
  %v8892 = vpack.c.b16 %v8500, %v8496
  %v8893 = vpack.c.b16 %v8505, %v8501
  %v8894 = vpack.c.b16 %v8506, %v8502
  %v8895 = vpack.c.b16 %v8507, %v8503
  %v8896 = vpack.c.b16 %v8508, %v8504
  %v8897 = vpack.c.b16 %v8513, %v8509
  %v8898 = vpack.c.b16 %v8514, %v8510
  %v8899 = vpack.c.b16 %v8515, %v8511
  %v8900 = vpack.c.b16 %v8516, %v8512
  %v8901 = vpack.c.b16 %v8521, %v8517
  %v8902 = vpack.c.b16 %v8522, %v8518
  %v8903 = vpack.c.b16 %v8523, %v8519
  %v8904 = vpack.c.b16 %v8524, %v8520
  %v8905 = vpack.c.b16 %v8529, %v8525
  %v8906 = vpack.c.b16 %v8530, %v8526
  %v8907 = vpack.c.b16 %v8531, %v8527
  %v8908 = vpack.c.b16 %v8532, %v8528
  %v8909 = vpack.c.b16 %v8537, %v8533
  %v8910 = vpack.c.b16 %v8538, %v8534
  %v8911 = vpack.c.b16 %v8539, %v8535
  %v8912 = vpack.c.b16 %v8540, %v8536
  %v8913 = vpack.c.b16 %v8545, %v8541
  %v8914 = vpack.c.b16 %v8546, %v8542
  %v8915 = vpack.c.b16 %v8547, %v8543
  %v8916 = vpack.c.b16 %v8548, %v8544
  %v8917 = vpack.c.b16 %v8553, %v8549
  %v8918 = vpack.c.b16 %v8554, %v8550
  %v8919 = vpack.c.b16 %v8555, %v8551
  %v8920 = vpack.c.b16 %v8556, %v8552
  %v8921 = vpack.c.b16 %v8561, %v8557
  %v8922 = vpack.c.b16 %v8562, %v8558
  %v8923 = vpack.c.b16 %v8563, %v8559
  %v8924 = vpack.c.b16 %v8564, %v8560
  %v8925 = vpack.c.b16 %v8569, %v8565
  %v8926 = vpack.c.b16 %v8570, %v8566
  %v8927 = vpack.c.b16 %v8571, %v8567
  %v8928 = vpack.c.b16 %v8572, %v8568
  %v8929 = vpack.c.b16 %v8577, %v8573
  %v8930 = vpack.c.b16 %v8578, %v8574
  %v8931 = vpack.c.b16 %v8579, %v8575
  %v8932 = vpack.c.b16 %v8580, %v8576
  %v8933 = vpack.c.b16 %v8585, %v8581
  %v8934 = vpack.c.b16 %v8586, %v8582
  %v8935 = vpack.c.b16 %v8587, %v8583
  %v8936 = vpack.c.b16 %v8588, %v8584
  %v8937 = vpack.c.b16 %v8593, %v8589
  %v8938 = vpack.c.b16 %v8594, %v8590
  %v8939 = vpack.c.b16 %v8595, %v8591
  %v8940 = vpack.c.b16 %v8596, %v8592
  %v8941 = vpack.c.b16 %v8601, %v8597
  %v8942 = vpack.c.b16 %v8602, %v8598
  %v8943 = vpack.c.b16 %v8603, %v8599
  %v8944 = vpack.c.b16 %v8604, %v8600
  %v8945 = vpack.c.b16 %v8609, %v8605
  %v8946 = vpack.c.b16 %v8610, %v8606
  %v8947 = vpack.c.b16 %v8611, %v8607
  %v8948 = vpack.c.b16 %v8612, %v8608
  %v8949 = vpack.c.b16 %v8617, %v8613
  %v8950 = vpack.c.b16 %v8618, %v8614
  %v8951 = vpack.c.b16 %v8619, %v8615
  %v8952 = vpack.c.b16 %v8620, %v8616
  %v8953 = vpack.c.b16 %v8625, %v8621
  %v8954 = vpack.c.b16 %v8626, %v8622
  %v8955 = vpack.c.b16 %v8627, %v8623
  %v8956 = vpack.c.b16 %v8628, %v8624
  %v8957 = vpack.c.b16 %v8633, %v8629
  %v8958 = vpack.c.b16 %v8634, %v8630
  %v8959 = vpack.c.b16 %v8635, %v8631
  %v8960 = vpack.c.b16 %v8636, %v8632
  %v8961 = vpack.c.b16 %v8641, %v8637
  %v8962 = vpack.c.b16 %v8642, %v8638
  %v8963 = vpack.c.b16 %v8643, %v8639
  %v8964 = vpack.c.b16 %v8644, %v8640
  %v8965 = vpack.c.b16 %v8649, %v8645
  %v8966 = vpack.c.b16 %v8650, %v8646
  %v8967 = vpack.c.b16 %v8651, %v8647
  %v8968 = vpack.c.b16 %v8652, %v8648
  %v8969 = vpack.c.b16 %v8657, %v8653
  %v8970 = vpack.c.b16 %v8658, %v8654
  %v8971 = vpack.c.b16 %v8659, %v8655
  %v8972 = vpack.c.b16 %v8660, %v8656
  %v8973 = vpack.c.b16 %v8665, %v8661
  %v8974 = vpack.c.b16 %v8666, %v8662
  %v8975 = vpack.c.b16 %v8667, %v8663
  %v8976 = vpack.c.b16 %v8668, %v8664
  %v8977 = vpack.c.b16 %v8673, %v8669
  %v8978 = vpack.c.b16 %v8674, %v8670
  %v8979 = vpack.c.b16 %v8675, %v8671
  %v8980 = vpack.c.b16 %v8676, %v8672
  %v8981 = vpack.c.b16 %v8681, %v8677
  %v8982 = vpack.c.b16 %v8682, %v8678
  %v8983 = vpack.c.b16 %v8683, %v8679
  %v8984 = vpack.c.b16 %v8684, %v8680
  %v8985 = vpack.c.b16 %v8689, %v8685
  %v8986 = vpack.c.b16 %v8690, %v8686
  %v8987 = vpack.c.b16 %v8691, %v8687
  %v8988 = vpack.c.b16 %v8692, %v8688
  %v8989 = vpack.c.b16 %v8697, %v8693
  %v8990 = vpack.c.b16 %v8698, %v8694
  %v8991 = vpack.c.b16 %v8699, %v8695
  %v8992 = vpack.c.b16 %v8700, %v8696
  %v8993 = vpack.c.b16 %v8705, %v8701
  %v8994 = vpack.c.b16 %v8706, %v8702
  %v8995 = vpack.c.b16 %v8707, %v8703
  %v8996 = vpack.c.b16 %v8708, %v8704
  %v8997 = vpack.c.b16 %v8713, %v8709
  %v8998 = vpack.c.b16 %v8714, %v8710
  %v8999 = vpack.c.b16 %v8715, %v8711
  %v9000 = vpack.c.b16 %v8716, %v8712
  %v9001 = vpack.c.b16 %v8721, %v8717
  %v9002 = vpack.c.b16 %v8722, %v8718
  %v9003 = vpack.c.b16 %v8723, %v8719
  %v9004 = vpack.c.b16 %v8724, %v8720
  %v9005 = vpack.c.b16 %v8729, %v8725
  %v9006 = vpack.c.b16 %v8730, %v8726
  %v9007 = vpack.c.b16 %v8731, %v8727
  %v9008 = vpack.c.b16 %v8732, %v8728
  %v9009 = vpack.c.b16 %v8737, %v8733
  %v9010 = vpack.c.b16 %v8738, %v8734
  %v9011 = vpack.c.b16 %v8739, %v8735
  %v9012 = vpack.c.b16 %v8740, %v8736
  %v9013 = vpack.c.b16 %v8745, %v8741
  %v9014 = vpack.c.b16 %v8746, %v8742
  %v9015 = vpack.c.b16 %v8747, %v8743
  %v9016 = vpack.c.b16 %v8748, %v8744
  %v9017 = vpack.c.b16 %v8753, %v8749
  %v9018 = vpack.c.b16 %v8754, %v8750
  %v9019 = vpack.c.b16 %v8755, %v8751
  %v9020 = vpack.c.b16 %v8756, %v8752
  %v9021 = vpack.c.b16 %v8761, %v8757
  %v9022 = vpack.c.b16 %v8762, %v8758
  %v9023 = vpack.c.b16 %v8763, %v8759
  %v9024 = vpack.c.b16 %v8764, %v8760
  %v9025 = vpack.c.b16 %v8769, %v8765
  %v9026 = vpack.c.b16 %v8770, %v8766
  %v9027 = vpack.c.b16 %v8771, %v8767
  %v9028 = vpack.c.b16 %v8772, %v8768
  %9285 = vmatprep.subr.bf16.mxu0 %v8774
  %9286 = vmatpush1.bf16.msra.mxu0 %v8773
  %9287 = vmatprep.subr.bf16.mxu0 %v8778
  %9288 = vmatpush1.bf16.msra.mxu0 %v8777
  %9289 = vmatprep.subr.bf16.mxu0 %v8782
  %9290 = vmatpush1.bf16.msra.mxu0 %v8781
  %9291 = vmatprep.subr.bf16.mxu0 %v8786
  %9292 = vmatpush1.bf16.msra.mxu0 %v8785
  %9293 = vmatprep.subr.bf16.mxu0 %v8790
  %9294 = vmatpush1.bf16.msra.mxu0 %v8789
  %9295 = vmatprep.subr.bf16.mxu0 %v8794
  %9296 = vmatpush1.bf16.msra.mxu0 %v8793
  %9297 = vmatprep.subr.bf16.mxu0 %v8798
  %9298 = vmatpush1.bf16.msra.mxu0 %v8797
  %9299 = vmatprep.subr.bf16.mxu0 %v8802
  %9300 = vmatpush1.bf16.msra.mxu0 %v8801
  %9301 = vmatprep.subr.bf16.mxu0 %v8806
  %9302 = vmatpush1.bf16.msra.mxu0 %v8805
  %9303 = vmatprep.subr.bf16.mxu0 %v8810
  %9304 = vmatpush1.bf16.msra.mxu0 %v8809
  %9305 = vmatprep.subr.bf16.mxu0 %v8814
  %9306 = vmatpush1.bf16.msra.mxu0 %v8813
  %9307 = vmatprep.subr.bf16.mxu0 %v8818
  %9308 = vmatpush1.bf16.msra.mxu0 %v8817
  %9309 = vmatprep.subr.bf16.mxu0 %v8822
  %9310 = vmatpush1.bf16.msra.mxu0 %v8821
  %9311 = vmatprep.subr.bf16.mxu0 %v8826
  %9312 = vmatpush1.bf16.msra.mxu0 %v8825
  %9313 = vmatprep.subr.bf16.mxu0 %v8830
  %9314 = vmatpush1.bf16.msra.mxu0 %v8829
  %9315 = vmatprep.subr.bf16.mxu0 %v8834
  %9316 = vmatpush1.bf16.msra.mxu0 %v8833
  %9317 = vmatprep.mubr.bf16.mxu0 %v42
  %9318 = vmatmul.mubr.bf16.gmra.mrb[0].mxu0 %v41
  %v9319 = vpop.f32.mrb[0].mxu0
  %v9320 = vadd.f32 0.0, %v9319
  %v9321 = vpop.f32.mrb[0].mxu0
  %v9322 = vadd.f32 0.0, %v9321
  %v9323 = vpop.f32.mrb[0].mxu0
  %v9324 = vadd.f32 0.0, %v9323
  %v9325 = vpop.f32.mrb[0].mxu0
  %v9326 = vadd.f32 0.0, %v9325
  %9327 = vdwg.mxu0
  %9328 = vmatprep.subr.bf16.mxu0 %v8838
  %9329 = vmatpush1.bf16.msra.mxu0 %v8837
  %9330 = vmatprep.subr.bf16.mxu0 %v8842
  %9331 = vmatpush1.bf16.msra.mxu0 %v8841
  %9332 = vmatprep.subr.bf16.mxu0 %v8846
  %9333 = vmatpush1.bf16.msra.mxu0 %v8845
  %9334 = vmatprep.subr.bf16.mxu0 %v8850
  %9335 = vmatpush1.bf16.msra.mxu0 %v8849
  %9336 = vmatprep.subr.bf16.mxu0 %v8854
  %9337 = vmatpush1.bf16.msra.mxu0 %v8853
  %9338 = vmatprep.subr.bf16.mxu0 %v8858
  %9339 = vmatpush1.bf16.msra.mxu0 %v8857
  %9340 = vmatprep.subr.bf16.mxu0 %v8862
  %9341 = vmatpush1.bf16.msra.mxu0 %v8861
  %9342 = vmatprep.subr.bf16.mxu0 %v8866
  %9343 = vmatpush1.bf16.msra.mxu0 %v8865
  %9344 = vmatprep.subr.bf16.mxu0 %v8870
  %9345 = vmatpush1.bf16.msra.mxu0 %v8869
  %9346 = vmatprep.subr.bf16.mxu0 %v8874
  %9347 = vmatpush1.bf16.msra.mxu0 %v8873
  %9348 = vmatprep.subr.bf16.mxu0 %v8878
  %9349 = vmatpush1.bf16.msra.mxu0 %v8877
  %9350 = vmatprep.subr.bf16.mxu0 %v8882
  %9351 = vmatpush1.bf16.msra.mxu0 %v8881
  %9352 = vmatprep.subr.bf16.mxu0 %v8886
  %9353 = vmatpush1.bf16.msra.mxu0 %v8885
  %9354 = vmatprep.subr.bf16.mxu0 %v8890
  %9355 = vmatpush1.bf16.msra.mxu0 %v8889
  %9356 = vmatprep.subr.bf16.mxu0 %v8894
  %9357 = vmatpush1.bf16.msra.mxu0 %v8893
  %9358 = vmatprep.subr.bf16.mxu0 %v8898
  %9359 = vmatpush1.bf16.msra.mxu0 %v8897
  %9360 = vmatprep.mubr.bf16.mxu0 %v44
  %9361 = vmatmul.mubr.bf16.gmra.mrb[0].mxu0 %v43
  %v9362 = vpop.f32.mrb[0].mxu0
  %v9363 = vadd.f32 %v9320, %v9362
  %v9364 = vpop.f32.mrb[0].mxu0
  %v9365 = vadd.f32 %v9322, %v9364
  %v9366 = vpop.f32.mrb[0].mxu0
  %v9367 = vadd.f32 %v9324, %v9366
  %v9368 = vpop.f32.mrb[0].mxu0
  %v9369 = vadd.f32 %v9326, %v9368
  %9370 = vdwg.mxu0
  %9371 = vmatprep.subr.bf16.mxu0 %v8902
  %9372 = vmatpush1.bf16.msra.mxu0 %v8901
  %9373 = vmatprep.subr.bf16.mxu0 %v8906
  %9374 = vmatpush1.bf16.msra.mxu0 %v8905
  %9375 = vmatprep.subr.bf16.mxu0 %v8910
  %9376 = vmatpush1.bf16.msra.mxu0 %v8909
  %9377 = vmatprep.subr.bf16.mxu0 %v8914
  %9378 = vmatpush1.bf16.msra.mxu0 %v8913
  %9379 = vmatprep.subr.bf16.mxu0 %v8918
  %9380 = vmatpush1.bf16.msra.mxu0 %v8917
  %9381 = vmatprep.subr.bf16.mxu0 %v8922
  %9382 = vmatpush1.bf16.msra.mxu0 %v8921
  %9383 = vmatprep.subr.bf16.mxu0 %v8926
  %9384 = vmatpush1.bf16.msra.mxu0 %v8925
  %9385 = vmatprep.subr.bf16.mxu0 %v8930
  %9386 = vmatpush1.bf16.msra.mxu0 %v8929
  %9387 = vmatprep.subr.bf16.mxu0 %v8934
  %9388 = vmatpush1.bf16.msra.mxu0 %v8933
  %9389 = vmatprep.subr.bf16.mxu0 %v8938
  %9390 = vmatpush1.bf16.msra.mxu0 %v8937
  %9391 = vmatprep.subr.bf16.mxu0 %v8942
  %9392 = vmatpush1.bf16.msra.mxu0 %v8941
  %9393 = vmatprep.subr.bf16.mxu0 %v8946
  %9394 = vmatpush1.bf16.msra.mxu0 %v8945
  %9395 = vmatprep.subr.bf16.mxu0 %v8950
  %9396 = vmatpush1.bf16.msra.mxu0 %v8949
  %9397 = vmatprep.subr.bf16.mxu0 %v8954
  %9398 = vmatpush1.bf16.msra.mxu0 %v8953
  %9399 = vmatprep.subr.bf16.mxu0 %v8958
  %9400 = vmatpush1.bf16.msra.mxu0 %v8957
  %9401 = vmatprep.subr.bf16.mxu0 %v8962
  %9402 = vmatpush1.bf16.msra.mxu0 %v8961
  %9403 = vmatprep.mubr.bf16.mxu0 %v46
  %9404 = vmatmul.mubr.bf16.gmra.mrb[0].mxu0 %v45
  %v9405 = vpop.f32.mrb[0].mxu0
  %v9406 = vadd.f32 %v9363, %v9405
  %v9407 = vpop.f32.mrb[0].mxu0
  %v9408 = vadd.f32 %v9365, %v9407
  %v9409 = vpop.f32.mrb[0].mxu0
  %v9410 = vadd.f32 %v9367, %v9409
  %v9411 = vpop.f32.mrb[0].mxu0
  %v9412 = vadd.f32 %v9369, %v9411
  %9413 = vdwg.mxu0
  %9414 = vmatprep.subr.bf16.mxu0 %v8966
  %9415 = vmatpush1.bf16.msra.mxu0 %v8965
  %9416 = vmatprep.subr.bf16.mxu0 %v8970
  %9417 = vmatpush1.bf16.msra.mxu0 %v8969
  %9418 = vmatprep.subr.bf16.mxu0 %v8974
  %9419 = vmatpush1.bf16.msra.mxu0 %v8973
  %9420 = vmatprep.subr.bf16.mxu0 %v8978
  %9421 = vmatpush1.bf16.msra.mxu0 %v8977
  %9422 = vmatprep.subr.bf16.mxu0 %v8982
  %9423 = vmatpush1.bf16.msra.mxu0 %v8981
  %9424 = vmatprep.subr.bf16.mxu0 %v8986
  %9425 = vmatpush1.bf16.msra.mxu0 %v8985
  %9426 = vmatprep.subr.bf16.mxu0 %v8990
  %9427 = vmatpush1.bf16.msra.mxu0 %v8989
  %9428 = vmatprep.subr.bf16.mxu0 %v8994
  %9429 = vmatpush1.bf16.msra.mxu0 %v8993
  %9430 = vmatprep.subr.bf16.mxu0 %v8998
  %9431 = vmatpush1.bf16.msra.mxu0 %v8997
  %9432 = vmatprep.subr.bf16.mxu0 %v9002
  %9433 = vmatpush1.bf16.msra.mxu0 %v9001
  %9434 = vmatprep.subr.bf16.mxu0 %v9006
  %9435 = vmatpush1.bf16.msra.mxu0 %v9005
  %9436 = vmatprep.subr.bf16.mxu0 %v9010
  %9437 = vmatpush1.bf16.msra.mxu0 %v9009
  %9438 = vmatprep.subr.bf16.mxu0 %v9014
  %9439 = vmatpush1.bf16.msra.mxu0 %v9013
  %9440 = vmatprep.subr.bf16.mxu0 %v9018
  %9441 = vmatpush1.bf16.msra.mxu0 %v9017
  %9442 = vmatprep.subr.bf16.mxu0 %v9022
  %9443 = vmatpush1.bf16.msra.mxu0 %v9021
  %9444 = vmatprep.subr.bf16.mxu0 %v9026
  %9445 = vmatpush1.bf16.msra.mxu0 %v9025
  %9446 = vmatprep.mubr.bf16.mxu0 %v48
  %9447 = vmatmul.mubr.bf16.gmra.mrb[0].mxu0 %v47
  %v9448 = vpop.f32.mrb[0].mxu0
  %v9449 = vadd.f32 %v9406, %v9448
  %v9450 = vpop.f32.mrb[0].mxu0
  %v9451 = vadd.f32 %v9408, %v9450
  %v9452 = vpop.f32.mrb[0].mxu0
  %v9453 = vadd.f32 %v9410, %v9452
  %v9454 = vpop.f32.mrb[0].mxu0
  %v9455 = vadd.f32 %v9412, %v9454
  %9456 = vdwg.mxu0
  %9457 = vmatprep.subr.bf16.mxu0 %v8776
  %9458 = vmatpush1.bf16.msra.mxu0 %v8775
  %9459 = vmatprep.subr.bf16.mxu0 %v8780
  %9460 = vmatpush1.bf16.msra.mxu0 %v8779
  %9461 = vmatprep.subr.bf16.mxu0 %v8784
  %9462 = vmatpush1.bf16.msra.mxu0 %v8783
  %9463 = vmatprep.subr.bf16.mxu0 %v8788
  %9464 = vmatpush1.bf16.msra.mxu0 %v8787
  %9465 = vmatprep.subr.bf16.mxu0 %v8792
  %9466 = vmatpush1.bf16.msra.mxu0 %v8791
  %9467 = vmatprep.subr.bf16.mxu0 %v8796
  %9468 = vmatpush1.bf16.msra.mxu0 %v8795
  %9469 = vmatprep.subr.bf16.mxu0 %v8800
  %9470 = vmatpush1.bf16.msra.mxu0 %v8799
  %9471 = vmatprep.subr.bf16.mxu0 %v8804
  %9472 = vmatpush1.bf16.msra.mxu0 %v8803
  %9473 = vmatprep.subr.bf16.mxu0 %v8808
  %9474 = vmatpush1.bf16.msra.mxu0 %v8807
  %9475 = vmatprep.subr.bf16.mxu0 %v8812
  %9476 = vmatpush1.bf16.msra.mxu0 %v8811
  %9477 = vmatprep.subr.bf16.mxu0 %v8816
  %9478 = vmatpush1.bf16.msra.mxu0 %v8815
  %9479 = vmatprep.subr.bf16.mxu0 %v8820
  %9480 = vmatpush1.bf16.msra.mxu0 %v8819
  %9481 = vmatprep.subr.bf16.mxu0 %v8824
  %9482 = vmatpush1.bf16.msra.mxu0 %v8823
  %9483 = vmatprep.subr.bf16.mxu0 %v8828
  %9484 = vmatpush1.bf16.msra.mxu0 %v8827
  %9485 = vmatprep.subr.bf16.mxu0 %v8832
  %9486 = vmatpush1.bf16.msra.mxu0 %v8831
  %9487 = vmatprep.subr.bf16.mxu0 %v8836
  %9488 = vmatpush1.bf16.msra.mxu0 %v8835
  %9489 = vmatprep.mubr.bf16.mxu0 %v42
  %9490 = vmatmul.mubr.bf16.gmra.mrb[0].mxu0 %v41
  %v9491 = vpop.f32.mrb[0].mxu0
  %v9492 = vadd.f32 0.0, %v9491
  %v9493 = vpop.f32.mrb[0].mxu0
  %v9494 = vadd.f32 0.0, %v9493
  %v9495 = vpop.f32.mrb[0].mxu0
  %v9496 = vadd.f32 0.0, %v9495
  %v9497 = vpop.f32.mrb[0].mxu0
  %v9498 = vadd.f32 0.0, %v9497
  %9499 = vdwg.mxu0
  %9500 = vmatprep.subr.bf16.mxu0 %v8840
  %9501 = vmatpush1.bf16.msra.mxu0 %v8839
  %9502 = vmatprep.subr.bf16.mxu0 %v8844
  %9503 = vmatpush1.bf16.msra.mxu0 %v8843
  %9504 = vmatprep.subr.bf16.mxu0 %v8848
  %9505 = vmatpush1.bf16.msra.mxu0 %v8847
  %9506 = vmatprep.subr.bf16.mxu0 %v8852
  %9507 = vmatpush1.bf16.msra.mxu0 %v8851
  %9508 = vmatprep.subr.bf16.mxu0 %v8856
  %9509 = vmatpush1.bf16.msra.mxu0 %v8855
  %9510 = vmatprep.subr.bf16.mxu0 %v8860
  %9511 = vmatpush1.bf16.msra.mxu0 %v8859
  %9512 = vmatprep.subr.bf16.mxu0 %v8864
  %9513 = vmatpush1.bf16.msra.mxu0 %v8863
  %9514 = vmatprep.subr.bf16.mxu0 %v8868
  %9515 = vmatpush1.bf16.msra.mxu0 %v8867
  %9516 = vmatprep.subr.bf16.mxu0 %v8872
  %9517 = vmatpush1.bf16.msra.mxu0 %v8871
  %9518 = vmatprep.subr.bf16.mxu0 %v8876
  %9519 = vmatpush1.bf16.msra.mxu0 %v8875
  %9520 = vmatprep.subr.bf16.mxu0 %v8880
  %9521 = vmatpush1.bf16.msra.mxu0 %v8879
  %9522 = vmatprep.subr.bf16.mxu0 %v8884
  %9523 = vmatpush1.bf16.msra.mxu0 %v8883
  %9524 = vmatprep.subr.bf16.mxu0 %v8888
  %9525 = vmatpush1.bf16.msra.mxu0 %v8887
  %9526 = vmatprep.subr.bf16.mxu0 %v8892
  %9527 = vmatpush1.bf16.msra.mxu0 %v8891
  %9528 = vmatprep.subr.bf16.mxu0 %v8896
  %9529 = vmatpush1.bf16.msra.mxu0 %v8895
  %9530 = vmatprep.subr.bf16.mxu0 %v8900
  %9531 = vmatpush1.bf16.msra.mxu0 %v8899
  %9532 = vmatprep.mubr.bf16.mxu0 %v44
  %9533 = vmatmul.mubr.bf16.gmra.mrb[0].mxu0 %v43
  %v9534 = vpop.f32.mrb[0].mxu0
  %v9535 = vadd.f32 %v9492, %v9534
  %v9536 = vpop.f32.mrb[0].mxu0
  %v9537 = vadd.f32 %v9494, %v9536
  %v9538 = vpop.f32.mrb[0].mxu0
  %v9539 = vadd.f32 %v9496, %v9538
  %v9540 = vpop.f32.mrb[0].mxu0
  %v9541 = vadd.f32 %v9498, %v9540
  %9542 = vdwg.mxu0
  %9543 = vmatprep.subr.bf16.mxu0 %v8904
  %9544 = vmatpush1.bf16.msra.mxu0 %v8903
  %9545 = vmatprep.subr.bf16.mxu0 %v8908
  %9546 = vmatpush1.bf16.msra.mxu0 %v8907
  %9547 = vmatprep.subr.bf16.mxu0 %v8912
  %9548 = vmatpush1.bf16.msra.mxu0 %v8911
  %9549 = vmatprep.subr.bf16.mxu0 %v8916
  %9550 = vmatpush1.bf16.msra.mxu0 %v8915
  %9551 = vmatprep.subr.bf16.mxu0 %v8920
  %9552 = vmatpush1.bf16.msra.mxu0 %v8919
  %9553 = vmatprep.subr.bf16.mxu0 %v8924
  %9554 = vmatpush1.bf16.msra.mxu0 %v8923
  %9555 = vmatprep.subr.bf16.mxu0 %v8928
  %9556 = vmatpush1.bf16.msra.mxu0 %v8927
  %9557 = vmatprep.subr.bf16.mxu0 %v8932
  %9558 = vmatpush1.bf16.msra.mxu0 %v8931
  %9559 = vmatprep.subr.bf16.mxu0 %v8936
  %9560 = vmatpush1.bf16.msra.mxu0 %v8935
  %9561 = vmatprep.subr.bf16.mxu0 %v8940
  %9562 = vmatpush1.bf16.msra.mxu0 %v8939
  %9563 = vmatprep.subr.bf16.mxu0 %v8944
  %9564 = vmatpush1.bf16.msra.mxu0 %v8943
  %9565 = vmatprep.subr.bf16.mxu0 %v8948
  %9566 = vmatpush1.bf16.msra.mxu0 %v8947
  %9567 = vmatprep.subr.bf16.mxu0 %v8952
  %9568 = vmatpush1.bf16.msra.mxu0 %v8951
  %9569 = vmatprep.subr.bf16.mxu0 %v8956
  %9570 = vmatpush1.bf16.msra.mxu0 %v8955
  %9571 = vmatprep.subr.bf16.mxu0 %v8960
  %9572 = vmatpush1.bf16.msra.mxu0 %v8959
  %9573 = vmatprep.subr.bf16.mxu0 %v8964
  %9574 = vmatpush1.bf16.msra.mxu0 %v8963
  %9575 = vmatprep.mubr.bf16.mxu0 %v46
  %9576 = vmatmul.mubr.bf16.gmra.mrb[0].mxu0 %v45
  %v9577 = vpop.f32.mrb[0].mxu0
  %v9578 = vadd.f32 %v9535, %v9577
  %v9579 = vpop.f32.mrb[0].mxu0
  %v9580 = vadd.f32 %v9537, %v9579
  %v9581 = vpop.f32.mrb[0].mxu0
  %v9582 = vadd.f32 %v9539, %v9581
  %v9583 = vpop.f32.mrb[0].mxu0
  %v9584 = vadd.f32 %v9541, %v9583
  %9585 = vdwg.mxu0
  %9586 = vmatprep.subr.bf16.mxu0 %v8968
  %9587 = vmatpush1.bf16.msra.mxu0 %v8967
  %9588 = vmatprep.subr.bf16.mxu0 %v8972
  %9589 = vmatpush1.bf16.msra.mxu0 %v8971
  %9590 = vmatprep.subr.bf16.mxu0 %v8976
  %9591 = vmatpush1.bf16.msra.mxu0 %v8975
  %9592 = vmatprep.subr.bf16.mxu0 %v8980
  %9593 = vmatpush1.bf16.msra.mxu0 %v8979
  %9594 = vmatprep.subr.bf16.mxu0 %v8984
  %9595 = vmatpush1.bf16.msra.mxu0 %v8983
  %9596 = vmatprep.subr.bf16.mxu0 %v8988
  %9597 = vmatpush1.bf16.msra.mxu0 %v8987
  %9598 = vmatprep.subr.bf16.mxu0 %v8992
  %9599 = vmatpush1.bf16.msra.mxu0 %v8991
  %9600 = vmatprep.subr.bf16.mxu0 %v8996
  %9601 = vmatpush1.bf16.msra.mxu0 %v8995
  %9602 = vmatprep.subr.bf16.mxu0 %v9000
  %9603 = vmatpush1.bf16.msra.mxu0 %v8999
  %9604 = vmatprep.subr.bf16.mxu0 %v9004
  %9605 = vmatpush1.bf16.msra.mxu0 %v9003
  %9606 = vmatprep.subr.bf16.mxu0 %v9008
  %9607 = vmatpush1.bf16.msra.mxu0 %v9007
  %9608 = vmatprep.subr.bf16.mxu0 %v9012
  %9609 = vmatpush1.bf16.msra.mxu0 %v9011
  %9610 = vmatprep.subr.bf16.mxu0 %v9016
  %9611 = vmatpush1.bf16.msra.mxu0 %v9015
  %9612 = vmatprep.subr.bf16.mxu0 %v9020
  %9613 = vmatpush1.bf16.msra.mxu0 %v9019
  %9614 = vmatprep.subr.bf16.mxu0 %v9024
  %9615 = vmatpush1.bf16.msra.mxu0 %v9023
  %9616 = vmatprep.subr.bf16.mxu0 %v9028
  %9617 = vmatpush1.bf16.msra.mxu0 %v9027
  %9618 = vmatprep.mubr.bf16.mxu0 %v48
  %9619 = vmatmul.mubr.bf16.gmra.mrb[0].mxu0 %v47
  %v9620 = vpop.f32.mrb[0].mxu0
  %v9621 = vadd.f32 %v9578, %v9620
  %v9622 = vpop.f32.mrb[0].mxu0
  %v9623 = vadd.f32 %v9580, %v9622
  %v9624 = vpop.f32.mrb[0].mxu0
  %v9625 = vadd.f32 %v9582, %v9624
  %v9626 = vpop.f32.mrb[0].mxu0
  %v9627 = vadd.f32 %v9584, %v9626
  %9628 = vdwg.mxu0
  %9629 = vst [vmem:[%s7] sm:$0xff] %v9449
  %9630 = vst [vmem:[%s7 + $0x8] sm:$0xff] %v9451
  %9631 = vst [vmem:[%s7 + $0x10] sm:$0xff] %v9621
  %9632 = vst [vmem:[%s7 + $0x18] sm:$0xff] %v9623
  %9633 = vst [vmem:[%s7 + $0x20] sm:$0xff] %v9453
  %9634 = vst [vmem:[%s7 + $0x28] sm:$0xff] %v9455
  %9635 = vst [vmem:[%s7 + $0x30] sm:$0xff] %v9625
  %9636 = vst [vmem:[%s7 + $0x38] sm:$0xff] %v9627
  // Predicated region
  $region26: #{pcn_decoder_forward.3} parent=0 // pred_check
    _
  $region27: #{pcn_decoder_forward.3} parent=0 // pred_check_branch
    %9638 = sbr.rel (0) target = $region29
  $region28: #{pcn_decoder_forward.3} parent=0 // pred_region
    _
  $region29: #{pcn_decoder_forward.3} parent=0 // pred_fallthru
    _
  // Predicated region
  $region30: #{pcn_decoder_forward.3} parent=0 // pred_check
    _
  $region31: #{pcn_decoder_forward.3} parent=0 // pred_check_branch
    %9640 = sbr.rel (0) target = $region33
  $region32: #{pcn_decoder_forward.3} parent=0 // pred_region
    _
  $region33: #{pcn_decoder_forward.3} parent=0 // pred_fallthru
    _
  // Predicated region
  $region34: #{pcn_decoder_forward.3} parent=0 // pred_check
    _
  $region35: #{pcn_decoder_forward.3} parent=0 // pred_check_branch
    %9642 = sbr.rel (0) target = $region37
  $region36: #{pcn_decoder_forward.3} parent=0 // pred_region
    _
  $region37: #{pcn_decoder_forward.3} parent=0 // pred_fallthru
    _
  // Predicated region
  $region38: #{pcn_decoder_forward.3} parent=0 // pred_check
    _
  $region39: #{pcn_decoder_forward.3} parent=0 // pred_check_branch
    %9644 = sbr.rel (0) target = $region41
  $region40: #{pcn_decoder_forward.3} parent=0 // pred_region
    _
  $region41: #{pcn_decoder_forward.3} parent=0 // pred_fallthru
    _

// kernel: pcn_decoder_forward.4
$region0: #{pcn_decoder_forward.4}
  #allocation0 [shape = 'u32[]', space=smem, size = 0x4, offset = 0x4, fixed_abs, tag = 'smem constant byte address 0x4 - core index']
  #allocation1 [shape = 'u32[144,128]{1,0:T(1,128)}', space=vmem, size = 0x12000, scoped, tag = 'internal scratch']
  %s0 = inlined_call_operand.vmem [shape: bf16[16,1024], index: 0, kind: input, shape index: {}]
  %s1 = inlined_call_operand.vmem [shape: bf16[1024,128], index: 1, kind: input, shape index: {}]
  %s2 = inlined_call_operand.vmem [shape: f32[1,128], index: 2, kind: input, shape index: {}]
  %s3 = inlined_call_operand.vmem [shape: f32[16,128], index: 3, kind: output, shape index: {}]
  %s4 = sld [smem:[#allocation0]]
  $region22: #{pcn_decoder_forward.4} parent=0
    _
  %s6 = ssub.s32 1, %s4
  %s7 = scalar_select 0, %s6, %s4
  // Predicated region
  $region2: #{pcn_decoder_forward.4} parent=0 // pred_check
    _
  $region3: #{pcn_decoder_forward.4} parent=0 // pred_check_branch
    %9 = sbr.rel (0) target = $region5
  $region4: #{pcn_decoder_forward.4} parent=0 // pred_region
    _
  $region5: #{pcn_decoder_forward.4} parent=0 // pred_fallthru
    _
  // Predicated region
  $region6: #{pcn_decoder_forward.4} parent=0 // pred_check
    _
  $region7: #{pcn_decoder_forward.4} parent=0 // pred_check_branch
    %11 = sbr.rel (0) target = $region9
  $region8: #{pcn_decoder_forward.4} parent=0 // pred_region
    _
  $region9: #{pcn_decoder_forward.4} parent=0 // pred_fallthru
    _
  // Predicated region
  $region10: #{pcn_decoder_forward.4} parent=0 // pred_check
    _
  $region11: #{pcn_decoder_forward.4} parent=0 // pred_check_branch
    %13 = sbr.rel (0) target = $region13
  $region12: #{pcn_decoder_forward.4} parent=0 // pred_region
    _
  $region13: #{pcn_decoder_forward.4} parent=0 // pred_fallthru
    _
  %v15 = vld [vmem:[%s0] sm:$0xff]
  %v16 = vld [vmem:[%s0 + $0x8] sm:$0xff]
  %v17 = vld [vmem:[%s0 + $0x10] sm:$0xff]
  %v18 = vld [vmem:[%s0 + $0x18] sm:$0xff]
  %v19 = vld [vmem:[%s0 + $0x20] sm:$0xff]
  %v20 = vld [vmem:[%s0 + $0x28] sm:$0xff]
  %v21 = vld [vmem:[%s0 + $0x30] sm:$0xff]
  %v22 = vld [vmem:[%s0 + $0x38] sm:$0xff]
  %v23 = vld [vmem:[%s1] sm:$0xf]
  %v24 = vld [vmem:[%s1 + $0x4] sm:$0xf]
  %v25 = vld [vmem:[%s1 + $0x8] sm:$0xf]
  %v26 = vld [vmem:[%s1 + $0xc] sm:$0xf]
  %v27 = vld [vmem:[%s1 + $0x10] sm:$0xf]
  %v28 = vld [vmem:[%s1 + $0x14] sm:$0xf]
  %v29 = vld [vmem:[%s1 + $0x18] sm:$0xf]
  %v30 = vld [vmem:[%s1 + $0x1c] sm:$0xf]
  %v31 = vld [vmem:[%s1 + $0x20] sm:$0xf]
  %v32 = vld [vmem:[%s1 + $0x24] sm:$0xf]
  %v33 = vld [vmem:[%s1 + $0x28] sm:$0xf]
  %v34 = vld [vmem:[%s1 + $0x2c] sm:$0xf]
  %v35 = vld [vmem:[%s1 + $0x30] sm:$0xf]
  %v36 = vld [vmem:[%s1 + $0x34] sm:$0xf]
  %v37 = vld [vmem:[%s1 + $0x38] sm:$0xf]
  %v38 = vld [vmem:[%s1 + $0x3c] sm:$0xf]
  %v39 = vld [vmem:[%s1 + $0x40] sm:$0xf]
  %v40 = vld [vmem:[%s1 + $0x44] sm:$0xf]
  %v41 = vld [vmem:[%s1 + $0x48] sm:$0xf]
  %v42 = vld [vmem:[%s1 + $0x4c] sm:$0xf]
  %v43 = vld [vmem:[%s1 + $0x50] sm:$0xf]
  %v44 = vld [vmem:[%s1 + $0x54] sm:$0xf]
  %v45 = vld [vmem:[%s1 + $0x58] sm:$0xf]
  %v46 = vld [vmem:[%s1 + $0x5c] sm:$0xf]
  %v47 = vld [vmem:[%s1 + $0x60] sm:$0xf]
  %v48 = vld [vmem:[%s1 + $0x64] sm:$0xf]
  %v49 = vld [vmem:[%s1 + $0x68] sm:$0xf]
  %v50 = vld [vmem:[%s1 + $0x6c] sm:$0xf]
  %v51 = vld [vmem:[%s1 + $0x70] sm:$0xf]
  %v52 = vld [vmem:[%s1 + $0x74] sm:$0xf]
  %v53 = vld [vmem:[%s1 + $0x78] sm:$0xf]
  %v54 = vld [vmem:[%s1 + $0x7c] sm:$0xf]
  %v55 = vld [vmem:[%s1 + $0x80] sm:$0xf]
  %v56 = vld [vmem:[%s1 + $0x84] sm:$0xf]
  %v57 = vld [vmem:[%s1 + $0x88] sm:$0xf]
  %v58 = vld [vmem:[%s1 + $0x8c] sm:$0xf]
  %v59 = vld [vmem:[%s1 + $0x90] sm:$0xf]
  %v60 = vld [vmem:[%s1 + $0x94] sm:$0xf]
  %v61 = vld [vmem:[%s1 + $0x98] sm:$0xf]
  %v62 = vld [vmem:[%s1 + $0x9c] sm:$0xf]
  %v63 = vld [vmem:[%s1 + $0xa0] sm:$0xf]
  %v64 = vld [vmem:[%s1 + $0xa4] sm:$0xf]
  %v65 = vld [vmem:[%s1 + $0xa8] sm:$0xf]
  %v66 = vld [vmem:[%s1 + $0xac] sm:$0xf]
  %v67 = vld [vmem:[%s1 + $0xb0] sm:$0xf]
  %v68 = vld [vmem:[%s1 + $0xb4] sm:$0xf]
  %v69 = vld [vmem:[%s1 + $0xb8] sm:$0xf]
  %v70 = vld [vmem:[%s1 + $0xbc] sm:$0xf]
  %v71 = vld [vmem:[%s1 + $0xc0] sm:$0xf]
  %v72 = vld [vmem:[%s1 + $0xc4] sm:$0xf]
  %v73 = vld [vmem:[%s1 + $0xc8] sm:$0xf]
  %v74 = vld [vmem:[%s1 + $0xcc] sm:$0xf]
  %v75 = vld [vmem:[%s1 + $0xd0] sm:$0xf]
  %v76 = vld [vmem:[%s1 + $0xd4] sm:$0xf]
  %v77 = vld [vmem:[%s1 + $0xd8] sm:$0xf]
  %v78 = vld [vmem:[%s1 + $0xdc] sm:$0xf]
  %v79 = vld [vmem:[%s1 + $0xe0] sm:$0xf]
  %v80 = vld [vmem:[%s1 + $0xe4] sm:$0xf]
  %v81 = vld [vmem:[%s1 + $0xe8] sm:$0xf]
  %v82 = vld [vmem:[%s1 + $0xec] sm:$0xf]
  %v83 = vld [vmem:[%s1 + $0xf0] sm:$0xf]
  %v84 = vld [vmem:[%s1 + $0xf4] sm:$0xf]
  %v85 = vld [vmem:[%s1 + $0xf8] sm:$0xf]
  %v86 = vld [vmem:[%s1 + $0xfc] sm:$0xf]
  %v87 = vld [vmem:[%s1 + $0x100] sm:$0xf]
  %v88 = vld [vmem:[%s1 + $0x104] sm:$0xf]
  %v89 = vld [vmem:[%s1 + $0x108] sm:$0xf]
  %v90 = vld [vmem:[%s1 + $0x10c] sm:$0xf]
  %v91 = vld [vmem:[%s1 + $0x110] sm:$0xf]
  %v92 = vld [vmem:[%s1 + $0x114] sm:$0xf]
  %v93 = vld [vmem:[%s1 + $0x118] sm:$0xf]
  %v94 = vld [vmem:[%s1 + $0x11c] sm:$0xf]
  %v95 = vld [vmem:[%s1 + $0x120] sm:$0xf]
  %v96 = vld [vmem:[%s1 + $0x124] sm:$0xf]
  %v97 = vld [vmem:[%s1 + $0x128] sm:$0xf]
  %v98 = vld [vmem:[%s1 + $0x12c] sm:$0xf]
  %v99 = vld [vmem:[%s1 + $0x130] sm:$0xf]
  %v100 = vld [vmem:[%s1 + $0x134] sm:$0xf]
  %v101 = vld [vmem:[%s1 + $0x138] sm:$0xf]
  %v102 = vld [vmem:[%s1 + $0x13c] sm:$0xf]
  %v103 = vld [vmem:[%s1 + $0x140] sm:$0xf]
  %v104 = vld [vmem:[%s1 + $0x144] sm:$0xf]
  %v105 = vld [vmem:[%s1 + $0x148] sm:$0xf]
  %v106 = vld [vmem:[%s1 + $0x14c] sm:$0xf]
  %v107 = vld [vmem:[%s1 + $0x150] sm:$0xf]
  %v108 = vld [vmem:[%s1 + $0x154] sm:$0xf]
  %v109 = vld [vmem:[%s1 + $0x158] sm:$0xf]
  %v110 = vld [vmem:[%s1 + $0x15c] sm:$0xf]
  %v111 = vld [vmem:[%s1 + $0x160] sm:$0xf]
  %v112 = vld [vmem:[%s1 + $0x164] sm:$0xf]
  %v113 = vld [vmem:[%s1 + $0x168] sm:$0xf]
  %v114 = vld [vmem:[%s1 + $0x16c] sm:$0xf]
  %v115 = vld [vmem:[%s1 + $0x170] sm:$0xf]
  %v116 = vld [vmem:[%s1 + $0x174] sm:$0xf]
  %v117 = vld [vmem:[%s1 + $0x178] sm:$0xf]
  %v118 = vld [vmem:[%s1 + $0x17c] sm:$0xf]
  %v119 = vld [vmem:[%s1 + $0x180] sm:$0xf]
  %v120 = vld [vmem:[%s1 + $0x184] sm:$0xf]
  %v121 = vld [vmem:[%s1 + $0x188] sm:$0xf]
  %v122 = vld [vmem:[%s1 + $0x18c] sm:$0xf]
  %v123 = vld [vmem:[%s1 + $0x190] sm:$0xf]
  %v124 = vld [vmem:[%s1 + $0x194] sm:$0xf]
  %v125 = vld [vmem:[%s1 + $0x198] sm:$0xf]
  %v126 = vld [vmem:[%s1 + $0x19c] sm:$0xf]
  %v127 = vld [vmem:[%s1 + $0x1a0] sm:$0xf]
  %v128 = vld [vmem:[%s1 + $0x1a4] sm:$0xf]
  %v129 = vld [vmem:[%s1 + $0x1a8] sm:$0xf]
  %v130 = vld [vmem:[%s1 + $0x1ac] sm:$0xf]
  %v131 = vld [vmem:[%s1 + $0x1b0] sm:$0xf]
  %v132 = vld [vmem:[%s1 + $0x1b4] sm:$0xf]
  %v133 = vld [vmem:[%s1 + $0x1b8] sm:$0xf]
  %v134 = vld [vmem:[%s1 + $0x1bc] sm:$0xf]
  %v135 = vld [vmem:[%s1 + $0x1c0] sm:$0xf]
  %v136 = vld [vmem:[%s1 + $0x1c4] sm:$0xf]
  %v137 = vld [vmem:[%s1 + $0x1c8] sm:$0xf]
  %v138 = vld [vmem:[%s1 + $0x1cc] sm:$0xf]
  %v139 = vld [vmem:[%s1 + $0x1d0] sm:$0xf]
  %v140 = vld [vmem:[%s1 + $0x1d4] sm:$0xf]
  %v141 = vld [vmem:[%s1 + $0x1d8] sm:$0xf]
  %v142 = vld [vmem:[%s1 + $0x1dc] sm:$0xf]
  %v143 = vld [vmem:[%s1 + $0x1e0] sm:$0xf]
  %v144 = vld [vmem:[%s1 + $0x1e4] sm:$0xf]
  %v145 = vld [vmem:[%s1 + $0x1e8] sm:$0xf]
  %v146 = vld [vmem:[%s1 + $0x1ec] sm:$0xf]
  %v147 = vld [vmem:[%s1 + $0x1f0] sm:$0xf]
  %v148 = vld [vmem:[%s1 + $0x1f4] sm:$0xf]
  %v149 = vld [vmem:[%s1 + $0x1f8] sm:$0xf]
  %v150 = vld [vmem:[%s1 + $0x1fc] sm:$0xf]
  %v151 = vld [vmem:[%s2] sm:$0x1]
  %v153 = vlaneseq
  %v154 = vshrl.u32 %v153, 7
  %v155 = vsub.s32 0, %v154
  %v156 = vrot.slane %v151, %v155
  %v166 = vunpack.c.l.b16 %v15
  %v167 = vunpack.c.h.b16 %v15
  %v168 = vunpack.c.l.b16 %v16
  %v169 = vunpack.c.h.b16 %v16
  %v170 = vunpack.c.l.b16 %v17
  %v171 = vunpack.c.h.b16 %v17
  %v172 = vunpack.c.l.b16 %v18
  %v173 = vunpack.c.h.b16 %v18
  %v174 = vunpack.c.l.b16 %v19
  %v175 = vunpack.c.h.b16 %v19
  %v176 = vunpack.c.l.b16 %v20
  %v177 = vunpack.c.h.b16 %v20
  %v178 = vunpack.c.l.b16 %v21
  %v179 = vunpack.c.h.b16 %v21
  %v180 = vunpack.c.l.b16 %v22
  %v181 = vunpack.c.h.b16 %v22
  %v182 = vpack.c.b16 %v174, %v166
  %v183 = vpack.c.b16 %v175, %v167
  %v184 = vpack.c.b16 %v176, %v168
  %v185 = vpack.c.b16 %v177, %v169
  %v186 = vpack.c.b16 %v178, %v170
  %v187 = vpack.c.b16 %v179, %v171
  %v188 = vpack.c.b16 %v180, %v172
  %v189 = vpack.c.b16 %v181, %v173
  %v326 = vunpack.c.l.b16 %v23
  %v327 = vunpack.c.l.b16 %v24
  %v328 = vunpack.c.l.b16 %v25
  %v329 = vunpack.c.l.b16 %v26
  %v330 = vunpack.c.l.b16 %v27
  %v331 = vunpack.c.l.b16 %v28
  %v332 = vunpack.c.l.b16 %v29
  %v333 = vunpack.c.l.b16 %v30
  %v334 = vunpack.c.l.b16 %v31
  %v335 = vunpack.c.l.b16 %v32
  %v336 = vunpack.c.l.b16 %v33
  %v337 = vunpack.c.l.b16 %v34
  %v338 = vunpack.c.l.b16 %v35
  %v339 = vunpack.c.l.b16 %v36
  %v340 = vunpack.c.l.b16 %v37
  %v341 = vunpack.c.l.b16 %v38
  %v342 = vunpack.c.l.b16 %v39
  %v343 = vunpack.c.l.b16 %v40
  %v344 = vunpack.c.l.b16 %v41
  %v345 = vunpack.c.l.b16 %v42
  %v346 = vunpack.c.l.b16 %v43
  %v347 = vunpack.c.l.b16 %v44
  %v348 = vunpack.c.l.b16 %v45
  %v349 = vunpack.c.l.b16 %v46
  %v350 = vunpack.c.l.b16 %v47
  %v351 = vunpack.c.l.b16 %v48
  %v352 = vunpack.c.l.b16 %v49
  %v353 = vunpack.c.l.b16 %v50
  %v354 = vunpack.c.l.b16 %v51
  %v355 = vunpack.c.l.b16 %v52
  %v356 = vunpack.c.l.b16 %v53
  %v357 = vunpack.c.l.b16 %v54
  %v358 = vunpack.c.l.b16 %v55
  %v359 = vunpack.c.l.b16 %v56
  %v360 = vunpack.c.l.b16 %v57
  %v361 = vunpack.c.l.b16 %v58
  %v362 = vunpack.c.l.b16 %v59
  %v363 = vunpack.c.l.b16 %v60
  %v364 = vunpack.c.l.b16 %v61
  %v365 = vunpack.c.l.b16 %v62
  %v366 = vunpack.c.l.b16 %v63
  %v367 = vunpack.c.l.b16 %v64
  %v368 = vunpack.c.l.b16 %v65
  %v369 = vunpack.c.l.b16 %v66
  %v370 = vunpack.c.l.b16 %v67
  %v371 = vunpack.c.l.b16 %v68
  %v372 = vunpack.c.l.b16 %v69
  %v373 = vunpack.c.l.b16 %v70
  %v374 = vunpack.c.l.b16 %v71
  %v375 = vunpack.c.l.b16 %v72
  %v376 = vunpack.c.l.b16 %v73
  %v377 = vunpack.c.l.b16 %v74
  %v378 = vunpack.c.l.b16 %v75
  %v379 = vunpack.c.l.b16 %v76
  %v380 = vunpack.c.l.b16 %v77
  %v381 = vunpack.c.l.b16 %v78
  %v382 = vunpack.c.l.b16 %v79
  %v383 = vunpack.c.l.b16 %v80
  %v384 = vunpack.c.l.b16 %v81
  %v385 = vunpack.c.l.b16 %v82
  %v386 = vunpack.c.l.b16 %v83
  %v387 = vunpack.c.l.b16 %v84
  %v388 = vunpack.c.l.b16 %v85
  %v389 = vunpack.c.l.b16 %v86
  %v390 = vunpack.c.l.b16 %v87
  %v391 = vunpack.c.l.b16 %v88
  %v392 = vunpack.c.l.b16 %v89
  %v393 = vunpack.c.l.b16 %v90
  %v394 = vunpack.c.l.b16 %v91
  %v395 = vunpack.c.l.b16 %v92
  %v396 = vunpack.c.l.b16 %v93
  %v397 = vunpack.c.l.b16 %v94
  %v398 = vunpack.c.l.b16 %v95
  %v399 = vunpack.c.l.b16 %v96
  %v400 = vunpack.c.l.b16 %v97
  %v401 = vunpack.c.l.b16 %v98
  %v402 = vunpack.c.l.b16 %v99
  %v403 = vunpack.c.l.b16 %v100
  %v404 = vunpack.c.l.b16 %v101
  %v405 = vunpack.c.l.b16 %v102
  %v406 = vunpack.c.l.b16 %v103
  %v407 = vunpack.c.l.b16 %v104
  %v408 = vunpack.c.l.b16 %v105
  %v409 = vunpack.c.l.b16 %v106
  %v410 = vunpack.c.l.b16 %v107
  %v411 = vunpack.c.l.b16 %v108
  %v412 = vunpack.c.l.b16 %v109
  %v413 = vunpack.c.l.b16 %v110
  %v414 = vunpack.c.l.b16 %v111
  %v415 = vunpack.c.l.b16 %v112
  %v416 = vunpack.c.l.b16 %v113
  %v417 = vunpack.c.l.b16 %v114
  %v418 = vunpack.c.l.b16 %v115
  %v419 = vunpack.c.l.b16 %v116
  %v420 = vunpack.c.l.b16 %v117
  %v421 = vunpack.c.l.b16 %v118
  %v422 = vunpack.c.l.b16 %v119
  %v423 = vunpack.c.l.b16 %v120
  %v424 = vunpack.c.l.b16 %v121
  %v425 = vunpack.c.l.b16 %v122
  %v426 = vunpack.c.l.b16 %v123
  %v427 = vunpack.c.l.b16 %v124
  %v428 = vunpack.c.l.b16 %v125
  %v429 = vunpack.c.l.b16 %v126
  %v430 = vunpack.c.l.b16 %v127
  %v431 = vunpack.c.l.b16 %v128
  %v432 = vunpack.c.l.b16 %v129
  %v433 = vunpack.c.l.b16 %v130
  %v434 = vunpack.c.l.b16 %v131
  %v435 = vunpack.c.l.b16 %v132
  %v436 = vunpack.c.l.b16 %v133
  %v437 = vunpack.c.l.b16 %v134
  %v438 = vunpack.c.l.b16 %v135
  %v439 = vunpack.c.l.b16 %v136
  %v440 = vunpack.c.l.b16 %v137
  %v441 = vunpack.c.l.b16 %v138
  %v442 = vunpack.c.l.b16 %v139
  %v443 = vunpack.c.l.b16 %v140
  %v444 = vunpack.c.l.b16 %v141
  %v445 = vunpack.c.l.b16 %v142
  %v446 = vunpack.c.l.b16 %v143
  %v447 = vunpack.c.l.b16 %v144
  %v448 = vunpack.c.l.b16 %v145
  %v449 = vunpack.c.l.b16 %v146
  %v450 = vunpack.c.l.b16 %v147
  %v451 = vunpack.c.l.b16 %v148
  %v452 = vunpack.c.l.b16 %v149
  %v453 = vunpack.c.l.b16 %v150
  %v454 = vpack.c.b16 %v327, %v326
  %v455 = vpack.c.b16 %v329, %v328
  %v456 = vpack.c.b16 %v331, %v330
  %v457 = vpack.c.b16 %v333, %v332
  %v458 = vpack.c.b16 %v335, %v334
  %v459 = vpack.c.b16 %v337, %v336
  %v460 = vpack.c.b16 %v339, %v338
  %v461 = vpack.c.b16 %v341, %v340
  %v462 = vpack.c.b16 %v343, %v342
  %v463 = vpack.c.b16 %v345, %v344
  %v464 = vpack.c.b16 %v347, %v346
  %v465 = vpack.c.b16 %v349, %v348
  %v466 = vpack.c.b16 %v351, %v350
  %v467 = vpack.c.b16 %v353, %v352
  %v468 = vpack.c.b16 %v355, %v354
  %v469 = vpack.c.b16 %v357, %v356
  %v470 = vpack.c.b16 %v359, %v358
  %v471 = vpack.c.b16 %v361, %v360
  %v472 = vpack.c.b16 %v363, %v362
  %v473 = vpack.c.b16 %v365, %v364
  %v474 = vpack.c.b16 %v367, %v366
  %v475 = vpack.c.b16 %v369, %v368
  %v476 = vpack.c.b16 %v371, %v370
  %v477 = vpack.c.b16 %v373, %v372
  %v478 = vpack.c.b16 %v375, %v374
  %v479 = vpack.c.b16 %v377, %v376
  %v480 = vpack.c.b16 %v379, %v378
  %v481 = vpack.c.b16 %v381, %v380
  %v482 = vpack.c.b16 %v383, %v382
  %v483 = vpack.c.b16 %v385, %v384
  %v484 = vpack.c.b16 %v387, %v386
  %v485 = vpack.c.b16 %v389, %v388
  %v486 = vpack.c.b16 %v391, %v390
  %v487 = vpack.c.b16 %v393, %v392
  %v488 = vpack.c.b16 %v395, %v394
  %v489 = vpack.c.b16 %v397, %v396
  %v490 = vpack.c.b16 %v399, %v398
  %v491 = vpack.c.b16 %v401, %v400
  %v492 = vpack.c.b16 %v403, %v402
  %v493 = vpack.c.b16 %v405, %v404
  %v494 = vpack.c.b16 %v407, %v406
  %v495 = vpack.c.b16 %v409, %v408
  %v496 = vpack.c.b16 %v411, %v410
  %v497 = vpack.c.b16 %v413, %v412
  %v498 = vpack.c.b16 %v415, %v414
  %v499 = vpack.c.b16 %v417, %v416
  %v500 = vpack.c.b16 %v419, %v418
  %v501 = vpack.c.b16 %v421, %v420
  %v502 = vpack.c.b16 %v423, %v422
  %v503 = vpack.c.b16 %v425, %v424
  %v504 = vpack.c.b16 %v427, %v426
  %v505 = vpack.c.b16 %v429, %v428
  %v506 = vpack.c.b16 %v431, %v430
  %v507 = vpack.c.b16 %v433, %v432
  %v508 = vpack.c.b16 %v435, %v434
  %v509 = vpack.c.b16 %v437, %v436
  %v510 = vpack.c.b16 %v439, %v438
  %v511 = vpack.c.b16 %v441, %v440
  %v512 = vpack.c.b16 %v443, %v442
  %v513 = vpack.c.b16 %v445, %v444
  %v514 = vpack.c.b16 %v447, %v446
  %v515 = vpack.c.b16 %v449, %v448
  %v516 = vpack.c.b16 %v451, %v450
  %v517 = vpack.c.b16 %v453, %v452
  %582 = vmatprep.subr.bf16.mxu0 0
  %583 = vmatpush1.bf16.msra.mxu0 %v454
  %584 = vmatprep.subr.bf16.mxu0 0
  %585 = vmatpush1.bf16.msra.mxu0 %v455
  %586 = vmatprep.subr.bf16.mxu0 0
  %587 = vmatpush1.bf16.msra.mxu0 %v456
  %588 = vmatprep.subr.bf16.mxu0 0
  %589 = vmatpush1.bf16.msra.mxu0 %v457
  %590 = vmatprep.subr.bf16.mxu0 0
  %591 = vmatpush1.bf16.msra.mxu0 %v458
  %592 = vmatprep.subr.bf16.mxu0 0
  %593 = vmatpush1.bf16.msra.mxu0 %v459
  %594 = vmatprep.subr.bf16.mxu0 0
  %595 = vmatpush1.bf16.msra.mxu0 %v460
  %596 = vmatprep.subr.bf16.mxu0 0
  %597 = vmatpush1.bf16.msra.mxu0 %v461
  %598 = vmatprep.subr.bf16.mxu0 0
  %599 = vmatpush1.bf16.msra.mxu0 %v462
  %600 = vmatprep.subr.bf16.mxu0 0
  %601 = vmatpush1.bf16.msra.mxu0 %v463
  %602 = vmatprep.subr.bf16.mxu0 0
  %603 = vmatpush1.bf16.msra.mxu0 %v464
  %604 = vmatprep.subr.bf16.mxu0 0
  %605 = vmatpush1.bf16.msra.mxu0 %v465
  %606 = vmatprep.subr.bf16.mxu0 0
  %607 = vmatpush1.bf16.msra.mxu0 %v466
  %608 = vmatprep.subr.bf16.mxu0 0
  %609 = vmatpush1.bf16.msra.mxu0 %v467
  %610 = vmatprep.subr.bf16.mxu0 0
  %611 = vmatpush1.bf16.msra.mxu0 %v468
  %612 = vmatprep.subr.bf16.mxu0 0
  %613 = vmatpush1.bf16.msra.mxu0 %v469
  %614 = vmatprep.mubr.bf16.mxu0 %v183
  %615 = vmatmul.mubr.bf16.gmra.mrb[0].mxu0 %v182
  %v616 = vpop.f32.mrb[0].mxu0
  %v617 = vadd.f32 %v156, %v616
  %v618 = vpop.f32.mrb[0].mxu0
  %v619 = vpop.f32.mrb[0].mxu0
  %v620 = vadd.f32 %v156, %v619
  %v621 = vpop.f32.mrb[0].mxu0
  %622 = vdwg.mxu0
  %623 = vmatprep.subr.bf16.mxu0 0
  %624 = vmatpush1.bf16.msra.mxu0 %v470
  %625 = vmatprep.subr.bf16.mxu0 0
  %626 = vmatpush1.bf16.msra.mxu0 %v471
  %627 = vmatprep.subr.bf16.mxu0 0
  %628 = vmatpush1.bf16.msra.mxu0 %v472
  %629 = vmatprep.subr.bf16.mxu0 0
  %630 = vmatpush1.bf16.msra.mxu0 %v473
  %631 = vmatprep.subr.bf16.mxu0 0
  %632 = vmatpush1.bf16.msra.mxu0 %v474
  %633 = vmatprep.subr.bf16.mxu0 0
  %634 = vmatpush1.bf16.msra.mxu0 %v475
  %635 = vmatprep.subr.bf16.mxu0 0
  %636 = vmatpush1.bf16.msra.mxu0 %v476
  %637 = vmatprep.subr.bf16.mxu0 0
  %638 = vmatpush1.bf16.msra.mxu0 %v477
  %639 = vmatprep.subr.bf16.mxu0 0
  %640 = vmatpush1.bf16.msra.mxu0 %v478
  %641 = vmatprep.subr.bf16.mxu0 0
  %642 = vmatpush1.bf16.msra.mxu0 %v479
  %643 = vmatprep.subr.bf16.mxu0 0
  %644 = vmatpush1.bf16.msra.mxu0 %v480
  %645 = vmatprep.subr.bf16.mxu0 0
  %646 = vmatpush1.bf16.msra.mxu0 %v481
  %647 = vmatprep.subr.bf16.mxu0 0
  %648 = vmatpush1.bf16.msra.mxu0 %v482
  %649 = vmatprep.subr.bf16.mxu0 0
  %650 = vmatpush1.bf16.msra.mxu0 %v483
  %651 = vmatprep.subr.bf16.mxu0 0
  %652 = vmatpush1.bf16.msra.mxu0 %v484
  %653 = vmatprep.subr.bf16.mxu0 0
  %654 = vmatpush1.bf16.msra.mxu0 %v485
  %655 = vmatprep.mubr.bf16.mxu0 %v185
  %656 = vmatmul.mubr.bf16.gmra.mrb[0].mxu0 %v184
  %v657 = vpop.f32.mrb[0].mxu0
  %v658 = vadd.f32 %v617, %v657
  %v659 = vpop.f32.mrb[0].mxu0
  %v660 = vpop.f32.mrb[0].mxu0
  %v661 = vadd.f32 %v620, %v660
  %v662 = vpop.f32.mrb[0].mxu0
  %663 = vdwg.mxu0
  %664 = vmatprep.subr.bf16.mxu0 0
  %665 = vmatpush1.bf16.msra.mxu0 %v486
  %666 = vmatprep.subr.bf16.mxu0 0
  %667 = vmatpush1.bf16.msra.mxu0 %v487
  %668 = vmatprep.subr.bf16.mxu0 0
  %669 = vmatpush1.bf16.msra.mxu0 %v488
  %670 = vmatprep.subr.bf16.mxu0 0
  %671 = vmatpush1.bf16.msra.mxu0 %v489
  %672 = vmatprep.subr.bf16.mxu0 0
  %673 = vmatpush1.bf16.msra.mxu0 %v490
  %674 = vmatprep.subr.bf16.mxu0 0
  %675 = vmatpush1.bf16.msra.mxu0 %v491
  %676 = vmatprep.subr.bf16.mxu0 0
  %677 = vmatpush1.bf16.msra.mxu0 %v492
  %678 = vmatprep.subr.bf16.mxu0 0
  %679 = vmatpush1.bf16.msra.mxu0 %v493
  %680 = vmatprep.subr.bf16.mxu0 0
  %681 = vmatpush1.bf16.msra.mxu0 %v494
  %682 = vmatprep.subr.bf16.mxu0 0
  %683 = vmatpush1.bf16.msra.mxu0 %v495
  %684 = vmatprep.subr.bf16.mxu0 0
  %685 = vmatpush1.bf16.msra.mxu0 %v496
  %686 = vmatprep.subr.bf16.mxu0 0
  %687 = vmatpush1.bf16.msra.mxu0 %v497
  %688 = vmatprep.subr.bf16.mxu0 0
  %689 = vmatpush1.bf16.msra.mxu0 %v498
  %690 = vmatprep.subr.bf16.mxu0 0
  %691 = vmatpush1.bf16.msra.mxu0 %v499
  %692 = vmatprep.subr.bf16.mxu0 0
  %693 = vmatpush1.bf16.msra.mxu0 %v500
  %694 = vmatprep.subr.bf16.mxu0 0
  %695 = vmatpush1.bf16.msra.mxu0 %v501
  %696 = vmatprep.mubr.bf16.mxu0 %v187
  %697 = vmatmul.mubr.bf16.gmra.mrb[0].mxu0 %v186
  %v698 = vpop.f32.mrb[0].mxu0
  %v699 = vadd.f32 %v658, %v698
  %v700 = vpop.f32.mrb[0].mxu0
  %v701 = vpop.f32.mrb[0].mxu0
  %v702 = vadd.f32 %v661, %v701
  %v703 = vpop.f32.mrb[0].mxu0
  %704 = vdwg.mxu0
  %705 = vmatprep.subr.bf16.mxu0 0
  %706 = vmatpush1.bf16.msra.mxu0 %v502
  %707 = vmatprep.subr.bf16.mxu0 0
  %708 = vmatpush1.bf16.msra.mxu0 %v503
  %709 = vmatprep.subr.bf16.mxu0 0
  %710 = vmatpush1.bf16.msra.mxu0 %v504
  %711 = vmatprep.subr.bf16.mxu0 0
  %712 = vmatpush1.bf16.msra.mxu0 %v505
  %713 = vmatprep.subr.bf16.mxu0 0
  %714 = vmatpush1.bf16.msra.mxu0 %v506
  %715 = vmatprep.subr.bf16.mxu0 0
  %716 = vmatpush1.bf16.msra.mxu0 %v507
  %717 = vmatprep.subr.bf16.mxu0 0
  %718 = vmatpush1.bf16.msra.mxu0 %v508
  %719 = vmatprep.subr.bf16.mxu0 0
  %720 = vmatpush1.bf16.msra.mxu0 %v509
  %721 = vmatprep.subr.bf16.mxu0 0
  %722 = vmatpush1.bf16.msra.mxu0 %v510
  %723 = vmatprep.subr.bf16.mxu0 0
  %724 = vmatpush1.bf16.msra.mxu0 %v511
  %725 = vmatprep.subr.bf16.mxu0 0
  %726 = vmatpush1.bf16.msra.mxu0 %v512
  %727 = vmatprep.subr.bf16.mxu0 0
  %728 = vmatpush1.bf16.msra.mxu0 %v513
  %729 = vmatprep.subr.bf16.mxu0 0
  %730 = vmatpush1.bf16.msra.mxu0 %v514
  %731 = vmatprep.subr.bf16.mxu0 0
  %732 = vmatpush1.bf16.msra.mxu0 %v515
  %733 = vmatprep.subr.bf16.mxu0 0
  %734 = vmatpush1.bf16.msra.mxu0 %v516
  %735 = vmatprep.subr.bf16.mxu0 0
  %736 = vmatpush1.bf16.msra.mxu0 %v517
  %737 = vmatprep.mubr.bf16.mxu0 %v189
  %738 = vmatmul.mubr.bf16.gmra.mrb[0].mxu0 %v188
  %v739 = vpop.f32.mrb[0].mxu0
  %v740 = vadd.f32 %v699, %v739
  %v741 = vpop.f32.mrb[0].mxu0
  %v742 = vpop.f32.mrb[0].mxu0
  %v743 = vadd.f32 %v702, %v742
  %v744 = vpop.f32.mrb[0].mxu0
  %745 = vdwg.mxu0
  %746 = vst [vmem:[%s3] sm:$0xff] %v740
  %747 = vst [vmem:[%s3 + $0x8] sm:$0xff] %v743
  // Predicated region
  $region14: #{pcn_decoder_forward.4} parent=0 // pred_check
    _
  $region15: #{pcn_decoder_forward.4} parent=0 // pred_check_branch
    %749 = sbr.rel (0) target = $region17
  $region16: #{pcn_decoder_forward.4} parent=0 // pred_region
    _
  $region17: #{pcn_decoder_forward.4} parent=0 // pred_fallthru
    _
  // Predicated region
  $region18: #{pcn_decoder_forward.4} parent=0 // pred_check
    _
  $region19: #{pcn_decoder_forward.4} parent=0 // pred_check_branch
    %751 = sbr.rel (0) target = $region21
  $region20: #{pcn_decoder_forward.4} parent=0 // pred_region
    _
  $region21: #{pcn_decoder_forward.4} parent=0 // pred_fallthru
    _

// kernel: pcn_decoder_forward.5
$region0: #{pcn_decoder_forward.5}
  #allocation0 [shape = 'u32[]', space=smem, size = 0x4, offset = 0x4, fixed_abs, tag = 'smem constant byte address 0x4 - core index']
  #allocation1 [shape = 'u32[144,128]{1,0:T(1,128)}', space=vmem, size = 0x12000, scoped, tag = 'internal scratch']
  %s0 = inlined_call_operand.vmem [shape: bf16[2,128,8], index: 0, kind: input, shape index: {}]
  %s1 = inlined_call_operand.vmem [shape: f32[2,1,512], index: 1, kind: input, shape index: {}]
  %s2 = inlined_call_operand.vmem [shape: f32[2,3,128], index: 2, kind: input, shape index: {}]
  %s3 = inlined_call_operand.vmem [shape: bf16[8,512], index: 3, kind: input, shape index: {}]
  %s4 = inlined_call_operand.vmem [shape: f32[1,512], index: 4, kind: input, shape index: {}]
  %s5 = inlined_call_operand.vmem [shape: bf16[512,512], index: 5, kind: input, shape index: {}]
  %s6 = inlined_call_operand.vmem [shape: f32[1,512], index: 6, kind: input, shape index: {}]
  %s7 = inlined_call_operand.vmem [shape: bf16[3,512], index: 7, kind: input, shape index: {}]
  %s8 = inlined_call_operand.vmem [shape: f32[3,1], index: 8, kind: input, shape index: {}]
  %s9 = inlined_call_operand.vmem [shape: f32[2,3,128], index: 9, kind: output, shape index: {}]
  %s10 = sld [smem:[#allocation0]]
  $region69: #{pcn_decoder_forward.5} parent=0
    _
  %s12 = ssub.s32 1, %s10
  %s13 = scalar_select 0, %s12, %s10
  loop: start=0, step=1, limit=4
  $region2: #{pcn_decoder_forward.5} parent=0 // loop_pre_header
    _
  $region3: #{pcn_decoder_forward.5} parent=0 // loop_header
    %s15 = sphi 0, %s19
    %p16 = scmp.ge.s32.totalorder %s15, 4
    %s22 = sphi 0, %s34
    %s23 = sphi 0, %s30
    %s24 = sphi 0, %s22
    %s25 = sphi 0, %s23
    %s26 = sphi 0, %s24
    %s27 = sphi 0, %s25
    %s39 = sphi 0, %s41
    %s42 = sphi 0, %s39
    %s43 = sphi 0, %s42
    %s59 = sphi 0, %s43
    %s65 = sphi 0, %s67
    %s68 = sphi 0, %s65
    %s69 = sphi 0, %s68
    %s85 = sphi 0, %s69
    %s93 = sphi 0, %s95
    %s96 = sphi 0, %s93
    %s97 = sphi 0, %s96
    %s113 = sphi 0, %s97
    %s117 = sphi 0, %s117
    %s119 = sphi 0, %s117
    %s120 = sphi 0, %s119
    %s134 = sphi 0, %s120
    %s138 = sphi 0, %s138
    %s140 = sphi 0, %s138
    %s141 = sphi 0, %s140
    %s155 = sphi 0, %s141
    %s159 = sphi 0, %s159
    %s161 = sphi 0, %s159
    %s162 = sphi 0, %s161
    %s176 = sphi 0, %s162
    %s180 = sphi 0, %s180
    %s182 = sphi 0, %s180
    %s183 = sphi 0, %s182
    %s197 = sphi 0, %s183
    %s201 = sphi 0, %s201
    %s203 = sphi 0, %s201
    %s204 = sphi 0, %s203
    %s218 = sphi 0, %s204
    %s222 = sphi 0, %s222
    %s224 = sphi 0, %s222
    %s225 = sphi 0, %s224
    %s239 = sphi 0, %s225
    %s247 = sphi 0, %s249
    %s250 = sphi 0, %s247
    %s251 = sphi 0, %s250
    %s267 = sphi 0, %s251
  $region4: #{pcn_decoder_forward.5} parent=0 // loop_header_branch
    %18 = sbr.rel (%p16) target = $region8
  $region5: #{pcn_decoder_forward.5} parent=0 // loop_body
    %s20 = ssub.s32 %s15, 1
    %s21 = ssub.s32 %s15, 2
    %s28 = sadd.s32 1, %s23
    %p29 = scmp.ge.s32.totalorder %s28, 1
    %s30 = scalar_select %p29, 0, %s28
    %s31 = sadd.s32 1, %s22
    %s32 = scalar_select %p29, %s31, %s22
    %p33 = scmp.ge.s32.totalorder %s32, 2
    %s34 = scalar_select %p33, 0, %s32
    %s35 = ssub.s32 %s22, %s34
    %s36 = ssub.s32 %s23, %s30
    %s37 = sor.u32 %s35, %s36
    %p38 = scmp.eq.s32.totalorder %s37, 0
    %s40 = sadd.s32 %s39, 1
    %s41 = scalar_select %p38, %s39, %s40
    %p44 = pneg %p38
    %p45 = scmp.eq.s32.totalorder %s15, 1
    %p46 = por %p44, %p45
    %p47 = scmp.ne.s32.totalorder %s39, %s42
    %p48 = scmp.eq.s32.totalorder %s15, 0
    %p49 = por %p47, %p48
    %p50 = scmp.ne.s32.totalorder %s39, %s42
    %p51 = scmp.eq.s32.totalorder %s20, 1
    %p52 = por %p50, %p51
    %p53 = scmp.ne.s32.totalorder %s42, %s43
    %p54 = scmp.eq.s32.totalorder %s20, 0
    %p55 = por %p53, %p54
    %p56 = scmp.ne.s32.totalorder %s42, %s43
    %p57 = scmp.eq.s32.totalorder %s21, 1
    %p58 = por %p56, %p57
    %p60 = scmp.ne.s32.totalorder %s43, %s59
    %p61 = scmp.eq.s32.totalorder %s21, 0
    %p62 = por %p60, %p61
    %s63 = ssub.s32 %s22, %s34
    %p64 = scmp.eq.s32.totalorder %s63, 0
    %s66 = sadd.s32 %s65, 1
    %s67 = scalar_select %p64, %s65, %s66
    %p70 = pneg %p64
    %p71 = scmp.eq.s32.totalorder %s15, 1
    %p72 = por %p70, %p71
    %p73 = scmp.ne.s32.totalorder %s65, %s68
    %p74 = scmp.eq.s32.totalorder %s15, 0
    %p75 = por %p73, %p74
    %p76 = scmp.ne.s32.totalorder %s65, %s68
    %p77 = scmp.eq.s32.totalorder %s20, 1
    %p78 = por %p76, %p77
    %p79 = scmp.ne.s32.totalorder %s68, %s69
    %p80 = scmp.eq.s32.totalorder %s20, 0
    %p81 = por %p79, %p80
    %p82 = scmp.ne.s32.totalorder %s68, %s69
    %p83 = scmp.eq.s32.totalorder %s21, 1
    %p84 = por %p82, %p83
    %p86 = scmp.ne.s32.totalorder %s69, %s85
    %p87 = scmp.eq.s32.totalorder %s21, 0
    %p88 = por %p86, %p87
    %s89 = ssub.s32 %s22, %s34
    %s90 = ssub.s32 %s23, %s30
    %s91 = sor.u32 %s89, %s90
    %p92 = scmp.eq.s32.totalorder %s91, 0
    %s94 = sadd.s32 %s93, 1
    %s95 = scalar_select %p92, %s93, %s94
    %p98 = pneg %p92
    %p99 = scmp.eq.s32.totalorder %s15, 1
    %p100 = por %p98, %p99
    %p101 = scmp.ne.s32.totalorder %s93, %s96
    %p102 = scmp.eq.s32.totalorder %s15, 0
    %p103 = por %p101, %p102
    %p104 = scmp.ne.s32.totalorder %s93, %s96
    %p105 = scmp.eq.s32.totalorder %s20, 1
    %p106 = por %p104, %p105
    %p107 = scmp.ne.s32.totalorder %s96, %s97
    %p108 = scmp.eq.s32.totalorder %s20, 0
    %p109 = por %p107, %p108
    %p110 = scmp.ne.s32.totalorder %s96, %s97
    %p111 = scmp.eq.s32.totalorder %s21, 1
    %p112 = por %p110, %p111
    %p114 = scmp.ne.s32.totalorder %s97, %s113
    %p115 = scmp.eq.s32.totalorder %s21, 0
    %p116 = por %p114, %p115
    %s118 = sadd.s32 %s117, 1
    %p121 = scmp.eq.s32.totalorder %s15, 1
    %p122 = scmp.ne.s32.totalorder %s117, %s119
    %p123 = scmp.eq.s32.totalorder %s15, 0
    %p124 = por %p122, %p123
    %p125 = scmp.ne.s32.totalorder %s117, %s119
    %p126 = scmp.eq.s32.totalorder %s20, 1
    %p127 = por %p125, %p126
    %p128 = scmp.ne.s32.totalorder %s119, %s120
    %p129 = scmp.eq.s32.totalorder %s20, 0
    %p130 = por %p128, %p129
    %p131 = scmp.ne.s32.totalorder %s119, %s120
    %p132 = scmp.eq.s32.totalorder %s21, 1
    %p133 = por %p131, %p132
    %p135 = scmp.ne.s32.totalorder %s120, %s134
    %p136 = scmp.eq.s32.totalorder %s21, 0
    %p137 = por %p135, %p136
    %s139 = sadd.s32 %s138, 1
    %p142 = scmp.eq.s32.totalorder %s15, 1
    %p143 = scmp.ne.s32.totalorder %s138, %s140
    %p144 = scmp.eq.s32.totalorder %s15, 0
    %p145 = por %p143, %p144
    %p146 = scmp.ne.s32.totalorder %s138, %s140
    %p147 = scmp.eq.s32.totalorder %s20, 1
    %p148 = por %p146, %p147
    %p149 = scmp.ne.s32.totalorder %s140, %s141
    %p150 = scmp.eq.s32.totalorder %s20, 0
    %p151 = por %p149, %p150
    %p152 = scmp.ne.s32.totalorder %s140, %s141
    %p153 = scmp.eq.s32.totalorder %s21, 1
    %p154 = por %p152, %p153
    %p156 = scmp.ne.s32.totalorder %s141, %s155
    %p157 = scmp.eq.s32.totalorder %s21, 0
    %p158 = por %p156, %p157
    %s160 = sadd.s32 %s159, 1
    %p163 = scmp.eq.s32.totalorder %s15, 1
    %p164 = scmp.ne.s32.totalorder %s159, %s161
    %p165 = scmp.eq.s32.totalorder %s15, 0
    %p166 = por %p164, %p165
    %p167 = scmp.ne.s32.totalorder %s159, %s161
    %p168 = scmp.eq.s32.totalorder %s20, 1
    %p169 = por %p167, %p168
    %p170 = scmp.ne.s32.totalorder %s161, %s162
    %p171 = scmp.eq.s32.totalorder %s20, 0
    %p172 = por %p170, %p171
    %p173 = scmp.ne.s32.totalorder %s161, %s162
    %p174 = scmp.eq.s32.totalorder %s21, 1
    %p175 = por %p173, %p174
    %p177 = scmp.ne.s32.totalorder %s162, %s176
    %p178 = scmp.eq.s32.totalorder %s21, 0
    %p179 = por %p177, %p178
    %s181 = sadd.s32 %s180, 1
    %p184 = scmp.eq.s32.totalorder %s15, 1
    %p185 = scmp.ne.s32.totalorder %s180, %s182
    %p186 = scmp.eq.s32.totalorder %s15, 0
    %p187 = por %p185, %p186
    %p188 = scmp.ne.s32.totalorder %s180, %s182
    %p189 = scmp.eq.s32.totalorder %s20, 1
    %p190 = por %p188, %p189
    %p191 = scmp.ne.s32.totalorder %s182, %s183
    %p192 = scmp.eq.s32.totalorder %s20, 0
    %p193 = por %p191, %p192
    %p194 = scmp.ne.s32.totalorder %s182, %s183
    %p195 = scmp.eq.s32.totalorder %s21, 1
    %p196 = por %p194, %p195
    %p198 = scmp.ne.s32.totalorder %s183, %s197
    %p199 = scmp.eq.s32.totalorder %s21, 0
    %p200 = por %p198, %p199
    %s202 = sadd.s32 %s201, 1
    %p205 = scmp.eq.s32.totalorder %s15, 1
    %p206 = scmp.ne.s32.totalorder %s201, %s203
    %p207 = scmp.eq.s32.totalorder %s15, 0
    %p208 = por %p206, %p207
    %p209 = scmp.ne.s32.totalorder %s201, %s203
    %p210 = scmp.eq.s32.totalorder %s20, 1
    %p211 = por %p209, %p210
    %p212 = scmp.ne.s32.totalorder %s203, %s204
    %p213 = scmp.eq.s32.totalorder %s20, 0
    %p214 = por %p212, %p213
    %p215 = scmp.ne.s32.totalorder %s203, %s204
    %p216 = scmp.eq.s32.totalorder %s21, 1
    %p217 = por %p215, %p216
    %p219 = scmp.ne.s32.totalorder %s204, %s218
    %p220 = scmp.eq.s32.totalorder %s21, 0
    %p221 = por %p219, %p220
    %s223 = sadd.s32 %s222, 1
    %p226 = scmp.eq.s32.totalorder %s15, 1
    %p227 = scmp.ne.s32.totalorder %s222, %s224
    %p228 = scmp.eq.s32.totalorder %s15, 0
    %p229 = por %p227, %p228
    %p230 = scmp.ne.s32.totalorder %s222, %s224
    %p231 = scmp.eq.s32.totalorder %s20, 1
    %p232 = por %p230, %p231
    %p233 = scmp.ne.s32.totalorder %s224, %s225
    %p234 = scmp.eq.s32.totalorder %s20, 0
    %p235 = por %p233, %p234
    %p236 = scmp.ne.s32.totalorder %s224, %s225
    %p237 = scmp.eq.s32.totalorder %s21, 1
    %p238 = por %p236, %p237
    %p240 = scmp.ne.s32.totalorder %s225, %s239
    %p241 = scmp.eq.s32.totalorder %s21, 0
    %p242 = por %p240, %p241
    %s243 = ssub.s32 %s22, %s34
    %s244 = ssub.s32 %s23, %s30
    %s245 = sor.u32 %s243, %s244
    %p246 = scmp.eq.s32.totalorder %s245, 0
    %s248 = sadd.s32 %s247, 1
    %s249 = scalar_select %p246, %s247, %s248
    %p252 = pneg %p246
    %p253 = scmp.eq.s32.totalorder %s15, 1
    %p254 = por %p252, %p253
    %p255 = scmp.ne.s32.totalorder %s247, %s250
    %p256 = scmp.eq.s32.totalorder %s15, 0
    %p257 = por %p255, %p256
    %p258 = scmp.ne.s32.totalorder %s247, %s250
    %p259 = scmp.eq.s32.totalorder %s20, 1
    %p260 = por %p258, %p259
    %p261 = scmp.ne.s32.totalorder %s250, %s251
    %p262 = scmp.eq.s32.totalorder %s20, 0
    %p263 = por %p261, %p262
    %p264 = scmp.ne.s32.totalorder %s250, %s251
    %p265 = scmp.eq.s32.totalorder %s21, 1
    %p266 = por %p264, %p265
    %p268 = scmp.ne.s32.totalorder %s251, %s267
    %p269 = scmp.eq.s32.totalorder %s21, 0
    %p270 = por %p268, %p269
    %p271 = scmp.le.s32.totalorder 1, %s15
    %p272 = scmp.lt.s32.totalorder %s15, 3
    %p273 = pnand %p271, %p272
    %p274 = pneg %p273
    // Predicated region
    $region9: #{pcn_decoder_forward.5} parent=5 // pred_check
      _
    $region10: #{pcn_decoder_forward.5} parent=5 // pred_check_branch
      %276 = sbr.rel (%p273) target = $region12
    $region11: #{pcn_decoder_forward.5} parent=5 // pred_region
      %s277 = ssub.s32 %s15, 1
      // Predicated region
      $region13: #{pcn_decoder_forward.5} parent=11 // pred_check
        %p278 = pneg %p130
      $region14: #{pcn_decoder_forward.5} parent=11 // pred_check_branch
        %280 = sbr.rel (%p278) target = $region16
      $region15: #{pcn_decoder_forward.5} parent=11 // pred_region
        _
      $region16: #{pcn_decoder_forward.5} parent=11 // pred_fallthru
        _
      // Predicated region
      $region17: #{pcn_decoder_forward.5} parent=11 // pred_check
        %p281 = pneg %p151
      $region18: #{pcn_decoder_forward.5} parent=11 // pred_check_branch
        %283 = sbr.rel (%p281) target = $region20
      $region19: #{pcn_decoder_forward.5} parent=11 // pred_region
        _
      $region20: #{pcn_decoder_forward.5} parent=11 // pred_fallthru
        _
      // Predicated region
      $region21: #{pcn_decoder_forward.5} parent=11 // pred_check
        %p284 = pneg %p172
      $region22: #{pcn_decoder_forward.5} parent=11 // pred_check_branch
        %286 = sbr.rel (%p284) target = $region24
      $region23: #{pcn_decoder_forward.5} parent=11 // pred_region
        _
      $region24: #{pcn_decoder_forward.5} parent=11 // pred_fallthru
        _
      // Predicated region
      $region25: #{pcn_decoder_forward.5} parent=11 // pred_check
        %p287 = pneg %p193
      $region26: #{pcn_decoder_forward.5} parent=11 // pred_check_branch
        %289 = sbr.rel (%p287) target = $region28
      $region27: #{pcn_decoder_forward.5} parent=11 // pred_region
        _
      $region28: #{pcn_decoder_forward.5} parent=11 // pred_fallthru
        _
      // Predicated region
      $region29: #{pcn_decoder_forward.5} parent=11 // pred_check
        %p290 = pneg %p214
      $region30: #{pcn_decoder_forward.5} parent=11 // pred_check_branch
        %292 = sbr.rel (%p290) target = $region32
      $region31: #{pcn_decoder_forward.5} parent=11 // pred_region
        _
      $region32: #{pcn_decoder_forward.5} parent=11 // pred_fallthru
        _
      // Predicated region
      $region33: #{pcn_decoder_forward.5} parent=11 // pred_check
        %p293 = pneg %p235
      $region34: #{pcn_decoder_forward.5} parent=11 // pred_check_branch
        %295 = sbr.rel (%p293) target = $region36
      $region35: #{pcn_decoder_forward.5} parent=11 // pred_region
        _
      $region36: #{pcn_decoder_forward.5} parent=11 // pred_fallthru
        _
    $region12: #{pcn_decoder_forward.5} parent=5 // pred_fallthru
      _
    %p296 = scmp.lt.s32.totalorder %s15, 2
    // Predicated region
    $region37: #{pcn_decoder_forward.5} parent=5 // pred_check
      %p297 = pneg %p296
    $region38: #{pcn_decoder_forward.5} parent=5 // pred_check_branch
      %299 = sbr.rel (%p297) target = $region40
    $region39: #{pcn_decoder_forward.5} parent=5 // pred_region
      // Predicated region
      $region41: #{pcn_decoder_forward.5} parent=39 // pred_check
        %p300 = pneg %p49
      $region42: #{pcn_decoder_forward.5} parent=39 // pred_check_branch
        %302 = sbr.rel (%p300) target = $region44
      $region43: #{pcn_decoder_forward.5} parent=39 // pred_region
        %s303 = smul.u32 16, %s23
        %p304 = scmp.lt.s32.totalorder %s22, 1
        %s305 = scalar_select %p304, %s22, 1
        %p306 = scmp.lt.s32.totalorder %s303, 15
        %s307 = scalar_select %p306, %s303, 15
        %s308 = smul.addr %s305, 16
        %s309 = sadd.s32 %s307, %s308
        %s310 = smul.addr %s309, 4
        %s311 = scalar_lea.vmem %s0, %s310
        %s312 = smul.u32 16, %s23
      $region44: #{pcn_decoder_forward.5} parent=39 // pred_fallthru
        _
      // Predicated region
      $region45: #{pcn_decoder_forward.5} parent=39 // pred_check
        %p313 = pneg %p75
      $region46: #{pcn_decoder_forward.5} parent=39 // pred_check_branch
        %315 = sbr.rel (%p313) target = $region48
      $region47: #{pcn_decoder_forward.5} parent=39 // pred_region
        %p316 = scmp.lt.s32.totalorder %s22, 1
        %s317 = scalar_select %p316, %s22, 1
        %s318 = smul.addr %s317, 4
        %s319 = scalar_lea.vmem %s1, %s318
      $region48: #{pcn_decoder_forward.5} parent=39 // pred_fallthru
        _
      // Predicated region
      $region49: #{pcn_decoder_forward.5} parent=39 // pred_check
        %p320 = pneg %p103
      $region50: #{pcn_decoder_forward.5} parent=39 // pred_check_branch
        %322 = sbr.rel (%p320) target = $region52
      $region51: #{pcn_decoder_forward.5} parent=39 // pred_region
        %p323 = scmp.lt.s32.totalorder %s22, 1
        %s324 = scalar_select %p323, %s22, 1
        %p325 = scmp.lt.s32.totalorder %s23, 0
        %s326 = scalar_select %p325, %s23, 0
        %s327 = sadd.s32 %s326, %s324
        %s328 = smul.addr %s327, 4
        %s329 = scalar_lea.vmem %s2, %s328
      $region52: #{pcn_decoder_forward.5} parent=39 // pred_fallthru
        _
    $region40: #{pcn_decoder_forward.5} parent=5 // pred_fallthru
      _
    %p330 = scmp.le.s32.totalorder 1, %s15
    %p331 = scmp.lt.s32.totalorder %s15, 3
    %p332 = pnand %p330, %p331
    %p333 = pneg %p332
    // Predicated region
    $region53: #{pcn_decoder_forward.5} parent=5 // pred_check
      _
    $region54: #{pcn_decoder_forward.5} parent=5 // pred_check_branch
      %335 = sbr.rel (%p332) target = $region56
    $region55: #{pcn_decoder_forward.5} parent=5 // pred_region
      %s336 = ssub.s32 %s15, 1
      %s337 = smul.u32 16, %s25
      %p338 = scmp.lt.s32.totalorder %s24, 1
      %s339 = scalar_select %p338, %s24, 1
      %p340 = scmp.lt.s32.totalorder %s337, 15
      %s341 = scalar_select %p340, %s337, 15
      %s342 = smul.addr %s339, 16
      %s343 = sadd.s32 %s341, %s342
      %s344 = smul.addr %s343, 4
      %s345 = scalar_lea.vmem %s0, %s344
      %p346 = pneg %p55
      %p347 = pneg %p52
      %p348 = scmp.lt.s32.totalorder %s24, 1
      %s349 = scalar_select %p348, %s24, 1
      %s350 = smul.addr %s349, 4
      %s351 = scalar_lea.vmem %s1, %s350
      %p352 = pneg %p81
      %p353 = pneg %p78
      %p354 = scmp.lt.s32.totalorder %s24, 1
      %s355 = scalar_select %p354, %s24, 1
      %p356 = scmp.lt.s32.totalorder %s25, 0
      %s357 = scalar_select %p356, %s25, 0
      %s358 = sadd.s32 %s357, %s355
      %s359 = smul.addr %s358, 4
      %s360 = scalar_lea.vmem %s2, %s359
      %p361 = pneg %p109
      %p362 = pneg %p106
      %p363 = pneg %p130
      %p364 = pneg %p127
      %p365 = pneg %p151
      %p366 = pneg %p148
      %p367 = pneg %p172
      %p368 = pneg %p169
      %p369 = pneg %p193
      %p370 = pneg %p190
      %p371 = pneg %p214
      %p372 = pneg %p211
      %p373 = pneg %p235
      %p374 = pneg %p232
      %p375 = pneg %p263
      %p376 = pneg %p260
      %p377 = scmp.lt.s32.totalorder %s24, 1
      %s378 = scalar_select %p377, %s24, 1
      %p379 = scmp.lt.s32.totalorder %s25, 0
      %s380 = scalar_select %p379, %s25, 0
      %s381 = sadd.s32 %s380, %s378
      %s382 = smul.addr %s381, 4
      %s383 = scalar_lea.vmem %s9, %s382
      %s384 = smul.u32 16, %s25
      %p385 = scmp.lt.s32.totalorder %s24, 1
      %s386 = scalar_select %p385, %s24, 1
      %p387 = scmp.lt.s32.totalorder %s384, 15
      %s388 = scalar_select %p387, %s384, 15
      %s389 = smul.addr %s386, 16
      %s390 = sadd.s32 %s388, %s389
      %s391 = smul.addr %s390, 4
      %s392 = scalar_lea.vmem %s0, %s391
      %s393 = smul.u32 16, %s25
      %p394 = scmp.lt.s32.totalorder %s24, 1
      %s395 = scalar_select %p394, %s24, 1
      %s396 = smul.addr %s395, 4
      %s397 = scalar_lea.vmem %s1, %s396
      %p398 = scmp.lt.s32.totalorder %s24, 1
      %s399 = scalar_select %p398, %s24, 1
      %p400 = scmp.lt.s32.totalorder %s25, 0
      %s401 = scalar_select %p400, %s25, 0
      %s402 = sadd.s32 %s401, %s399
      %s403 = smul.addr %s402, 4
      %s404 = scalar_lea.vmem %s2, %s403
      %p405 = scmp.lt.s32.totalorder %s24, 1
      %s406 = scalar_select %p405, %s24, 1
      %p407 = scmp.lt.s32.totalorder %s25, 0
      %s408 = scalar_select %p407, %s25, 0
      %s409 = sadd.s32 %s408, %s406
      %s410 = smul.addr %s409, 4
      %s411 = scalar_lea.vmem %s9, %s410
      %v413 = vld [vmem:[%s392] sm:$0xf]
      %v414 = vld [vmem:[%s392 + $0x4] sm:$0xf]
      %v415 = vld [vmem:[%s392 + $0x8] sm:$0xf]
      %v416 = vld [vmem:[%s392 + $0xc] sm:$0xf]
      %v417 = vld [vmem:[%s392 + $0x10] sm:$0xf]
      %v418 = vld [vmem:[%s392 + $0x14] sm:$0xf]
      %v419 = vld [vmem:[%s392 + $0x18] sm:$0xf]
      %v420 = vld [vmem:[%s392 + $0x1c] sm:$0xf]
      %v421 = vld [vmem:[%s392 + $0x20] sm:$0xf]
      %v422 = vld [vmem:[%s392 + $0x24] sm:$0xf]
      %v423 = vld [vmem:[%s392 + $0x28] sm:$0xf]
      %v424 = vld [vmem:[%s392 + $0x2c] sm:$0xf]
      %v425 = vld [vmem:[%s392 + $0x30] sm:$0xf]
      %v426 = vld [vmem:[%s392 + $0x34] sm:$0xf]
      %v427 = vld [vmem:[%s392 + $0x38] sm:$0xf]
      %v428 = vld [vmem:[%s392 + $0x3c] sm:$0xf]
      %v429 = vld [vmem:[%s3] sm:$0xff]
      %v430 = vld [vmem:[%s3 + $0x8] sm:$0xff]
      %v431 = vld [vmem:[%s397] sm:$0xf]
      %v433 = vlaneseq
      %v434 = vshrl.u32 %v433, 7
      %v435 = vsub.s32 0, %v434
      %v436 = vrot.slane %v431, %v435
      %v437 = vlaneseq
      %v438 = vshrl.u32 %v437, 7
      %v439 = vsub.s32 1, %v438
      %v440 = vrot.slane %v431, %v439
      %v441 = vlaneseq
      %v442 = vshrl.u32 %v441, 7
      %v443 = vsub.s32 2, %v442
      %v444 = vrot.slane %v431, %v443
      %v445 = vlaneseq
      %v446 = vshrl.u32 %v445, 7
      %v447 = vsub.s32 3, %v446
      %v448 = vrot.slane %v431, %v447
      %v469 = vunpack.c.l.b16 %v413
      %v470 = vunpack.c.l.b16 %v414
      %v471 = vunpack.c.l.b16 %v415
      %v472 = vunpack.c.l.b16 %v416
      %v473 = vunpack.c.l.b16 %v417
      %v474 = vunpack.c.l.b16 %v418
      %v475 = vunpack.c.l.b16 %v419
      %v476 = vunpack.c.l.b16 %v420
      %v477 = vunpack.c.l.b16 %v421
      %v478 = vunpack.c.l.b16 %v422
      %v479 = vunpack.c.l.b16 %v423
      %v480 = vunpack.c.l.b16 %v424
      %v481 = vunpack.c.l.b16 %v425
      %v482 = vunpack.c.l.b16 %v426
      %v483 = vunpack.c.l.b16 %v427
      %v484 = vunpack.c.l.b16 %v428
      %v485 = vpack.c.b16 %v470, %v469
      %v486 = vpack.c.b16 %v472, %v471
      %v487 = vpack.c.b16 %v474, %v473
      %v488 = vpack.c.b16 %v476, %v475
      %v489 = vpack.c.b16 %v478, %v477
      %v490 = vpack.c.b16 %v480, %v479
      %v491 = vpack.c.b16 %v482, %v481
      %v492 = vpack.c.b16 %v484, %v483
      %v495 = vunpack.c.l.b16 %v429
      %v496 = vunpack.c.h.b16 %v429
      %v497 = vunpack.c.l.b16 %v430
      %v498 = vunpack.c.h.b16 %v430
      %v499 = vpack.c.b16 %v495, %v495
      %v500 = vpack.c.b16 %v496, %v496
      %v501 = vpack.c.b16 %v497, %v497
      %v502 = vpack.c.b16 %v498, %v498
      %vm503 = vcmask 64512
      %v505 = vsel %vm503, %v485, 0
      %v508 = vsel %vm503, %v486, 0
      %v511 = vsel %vm503, %v487, 0
      %v514 = vsel %vm503, %v488, 0
      %v517 = vsel %vm503, %v489, 0
      %v520 = vsel %vm503, %v490, 0
      %v523 = vsel %vm503, %v491, 0
      %v526 = vsel %vm503, %v492, 0
      %vm528 = vcmask 1043456
      %v530 = vsel %vm528, %v499, 0
      %v533 = vsel %vm528, %v500, 0
      %v536 = vsel %vm528, %v501, 0
      %v539 = vsel %vm528, %v502, 0
      %541 = vmatprep.subr.bf16.mxu0 %v533
      %542 = vmatpush1.bf16.msra.mxu0 %v530
      %543 = vmatprep.subr.bf16.mxu0 0
      %544 = vmatpush1.bf16.msra.mxu0 0
      %545 = vmatprep.subr.bf16.mxu0 0
      %546 = vmatpush1.bf16.msra.mxu0 0
      %547 = vmatprep.subr.bf16.mxu0 0
      %548 = vmatpush1.bf16.msra.mxu0 0
      %549 = vmatprep.subr.bf16.mxu0 0
      %550 = vmatpush1.bf16.msra.mxu0 0
      %551 = vmatprep.subr.bf16.mxu0 0
      %552 = vmatpush1.bf16.msra.mxu0 0
      %553 = vmatprep.subr.bf16.mxu0 0
      %554 = vmatpush1.bf16.msra.mxu0 0
      %555 = vmatprep.subr.bf16.mxu0 0
      %556 = vmatpush1.bf16.msra.mxu0 0
      %557 = vmatprep.subr.bf16.mxu0 0
      %558 = vmatpush1.bf16.msra.mxu0 0
      %559 = vmatprep.subr.bf16.mxu0 0
      %560 = vmatpush1.bf16.msra.mxu0 0
      %561 = vmatprep.subr.bf16.mxu0 0
      %562 = vmatpush1.bf16.msra.mxu0 0
      %563 = vmatprep.subr.bf16.mxu0 0
      %564 = vmatpush1.bf16.msra.mxu0 0
      %565 = vmatprep.subr.bf16.mxu0 0
      %566 = vmatpush1.bf16.msra.mxu0 0
      %567 = vmatprep.subr.bf16.mxu0 0
      %568 = vmatpush1.bf16.msra.mxu0 0
      %569 = vmatprep.subr.bf16.mxu0 0
      %570 = vmatpush1.bf16.msra.mxu0 0
      %571 = vmatprep.subr.bf16.mxu0 0
      %572 = vmatpush1.bf16.msra.mxu0 0
      %573 = vmatprep.mubr.bf16.mxu0 0
      %574 = vmatmul.mubr.bf16.gmra.mrb[0].mxu0 %v505
      %v575 = vpop.f32.mrb[0].mxu0
      %v576 = vadd.f32 %v436, %v575
      %v577 = vpop.f32.mrb[0].mxu0
      %v578 = vadd.f32 %v440, %v577
      %v579 = vpop.f32.mrb[0].mxu0
      %v580 = vadd.f32 %v436, %v579
      %v581 = vpop.f32.mrb[0].mxu0
      %v582 = vadd.f32 %v440, %v581
      %583 = vmatprep.mubr.bf16.mxu0 0
      %584 = vmatmul.mubr.bf16.gmra.mrb[0].mxu0 %v508
      %v585 = vpop.f32.mrb[0].mxu0
      %v586 = vadd.f32 %v436, %v585
      %v587 = vpop.f32.mrb[0].mxu0
      %v588 = vadd.f32 %v440, %v587
      %v589 = vpop.f32.mrb[0].mxu0
      %v590 = vadd.f32 %v436, %v589
      %v591 = vpop.f32.mrb[0].mxu0
      %v592 = vadd.f32 %v440, %v591
      %593 = vmatprep.mubr.bf16.mxu0 0
      %594 = vmatmul.mubr.bf16.gmra.mrb[0].mxu0 %v511
      %v595 = vpop.f32.mrb[0].mxu0
      %v596 = vadd.f32 %v436, %v595
      %v597 = vpop.f32.mrb[0].mxu0
      %v598 = vadd.f32 %v440, %v597
      %v599 = vpop.f32.mrb[0].mxu0
      %v600 = vadd.f32 %v436, %v599
      %v601 = vpop.f32.mrb[0].mxu0
      %v602 = vadd.f32 %v440, %v601
      %603 = vmatprep.mubr.bf16.mxu0 0
      %604 = vmatmul.mubr.bf16.gmra.mrb[0].mxu0 %v514
      %v605 = vpop.f32.mrb[0].mxu0
      %v606 = vadd.f32 %v436, %v605
      %v607 = vpop.f32.mrb[0].mxu0
      %v608 = vadd.f32 %v440, %v607
      %v609 = vpop.f32.mrb[0].mxu0
      %v610 = vadd.f32 %v436, %v609
      %v611 = vpop.f32.mrb[0].mxu0
      %v612 = vadd.f32 %v440, %v611
      %613 = vmatprep.mubr.bf16.mxu0 0
      %614 = vmatmul.mubr.bf16.gmra.mrb[0].mxu0 %v517
      %v615 = vpop.f32.mrb[0].mxu0
      %v616 = vadd.f32 %v436, %v615
      %v617 = vpop.f32.mrb[0].mxu0
      %v618 = vadd.f32 %v440, %v617
      %v619 = vpop.f32.mrb[0].mxu0
      %v620 = vadd.f32 %v436, %v619
      %v621 = vpop.f32.mrb[0].mxu0
      %v622 = vadd.f32 %v440, %v621
      %623 = vmatprep.mubr.bf16.mxu0 0
      %624 = vmatmul.mubr.bf16.gmra.mrb[0].mxu0 %v520
      %v625 = vpop.f32.mrb[0].mxu0
      %v626 = vadd.f32 %v436, %v625
      %v627 = vpop.f32.mrb[0].mxu0
      %v628 = vadd.f32 %v440, %v627
      %v629 = vpop.f32.mrb[0].mxu0
      %v630 = vadd.f32 %v436, %v629
      %v631 = vpop.f32.mrb[0].mxu0
      %v632 = vadd.f32 %v440, %v631
      %633 = vmatprep.mubr.bf16.mxu0 0
      %634 = vmatmul.mubr.bf16.gmra.mrb[0].mxu0 %v523
      %v635 = vpop.f32.mrb[0].mxu0
      %v636 = vadd.f32 %v436, %v635
      %v637 = vpop.f32.mrb[0].mxu0
      %v638 = vadd.f32 %v440, %v637
      %v639 = vpop.f32.mrb[0].mxu0
      %v640 = vadd.f32 %v436, %v639
      %v641 = vpop.f32.mrb[0].mxu0
      %v642 = vadd.f32 %v440, %v641
      %643 = vmatprep.mubr.bf16.mxu0 0
      %644 = vmatmul.mubr.bf16.gmra.mrb[0].mxu0 %v526
      %v645 = vpop.f32.mrb[0].mxu0
      %v646 = vadd.f32 %v436, %v645
      %v647 = vpop.f32.mrb[0].mxu0
      %v648 = vadd.f32 %v440, %v647
      %v649 = vpop.f32.mrb[0].mxu0
      %v650 = vadd.f32 %v436, %v649
      %v651 = vpop.f32.mrb[0].mxu0
      %v652 = vadd.f32 %v440, %v651
      %653 = vdwg.mxu0
      %654 = vmatprep.subr.bf16.mxu0 %v539
      %655 = vmatpush1.bf16.msra.mxu0 %v536
      %656 = vmatprep.subr.bf16.mxu0 0
      %657 = vmatpush1.bf16.msra.mxu0 0
      %658 = vmatprep.subr.bf16.mxu0 0
      %659 = vmatpush1.bf16.msra.mxu0 0
      %660 = vmatprep.subr.bf16.mxu0 0
      %661 = vmatpush1.bf16.msra.mxu0 0
      %662 = vmatprep.subr.bf16.mxu0 0
      %663 = vmatpush1.bf16.msra.mxu0 0
      %664 = vmatprep.subr.bf16.mxu0 0
      %665 = vmatpush1.bf16.msra.mxu0 0
      %666 = vmatprep.subr.bf16.mxu0 0
      %667 = vmatpush1.bf16.msra.mxu0 0
      %668 = vmatprep.subr.bf16.mxu0 0
      %669 = vmatpush1.bf16.msra.mxu0 0
      %670 = vmatprep.subr.bf16.mxu0 0
      %671 = vmatpush1.bf16.msra.mxu0 0
      %672 = vmatprep.subr.bf16.mxu0 0
      %673 = vmatpush1.bf16.msra.mxu0 0
      %674 = vmatprep.subr.bf16.mxu0 0
      %675 = vmatpush1.bf16.msra.mxu0 0
      %676 = vmatprep.subr.bf16.mxu0 0
      %677 = vmatpush1.bf16.msra.mxu0 0
      %678 = vmatprep.subr.bf16.mxu0 0
      %679 = vmatpush1.bf16.msra.mxu0 0
      %680 = vmatprep.subr.bf16.mxu0 0
      %681 = vmatpush1.bf16.msra.mxu0 0
      %682 = vmatprep.subr.bf16.mxu0 0
      %683 = vmatpush1.bf16.msra.mxu0 0
      %684 = vmatprep.subr.bf16.mxu0 0
      %685 = vmatpush1.bf16.msra.mxu0 0
      %686 = vmatprep.mubr.bf16.mxu0 0
      %687 = vmatmul.mubr.bf16.gmra.mrb[0].mxu0 %v505
      %v688 = vpop.f32.mrb[0].mxu0
      %v689 = vadd.f32 %v444, %v688
      %v690 = vpop.f32.mrb[0].mxu0
      %v691 = vadd.f32 %v448, %v690
      %v692 = vpop.f32.mrb[0].mxu0
      %v693 = vadd.f32 %v444, %v692
      %v694 = vpop.f32.mrb[0].mxu0
      %v695 = vadd.f32 %v448, %v694
      %696 = vmatprep.mubr.bf16.mxu0 0
      %697 = vmatmul.mubr.bf16.gmra.mrb[0].mxu0 %v508
      %v698 = vpop.f32.mrb[0].mxu0
      %v699 = vadd.f32 %v444, %v698
      %v700 = vpop.f32.mrb[0].mxu0
      %v701 = vadd.f32 %v448, %v700
      %v702 = vpop.f32.mrb[0].mxu0
      %v703 = vadd.f32 %v444, %v702
      %v704 = vpop.f32.mrb[0].mxu0
      %v705 = vadd.f32 %v448, %v704
      %706 = vmatprep.mubr.bf16.mxu0 0
      %707 = vmatmul.mubr.bf16.gmra.mrb[0].mxu0 %v511
      %v708 = vpop.f32.mrb[0].mxu0
      %v709 = vadd.f32 %v444, %v708
      %v710 = vpop.f32.mrb[0].mxu0
      %v711 = vadd.f32 %v448, %v710
      %v712 = vpop.f32.mrb[0].mxu0
      %v713 = vadd.f32 %v444, %v712
      %v714 = vpop.f32.mrb[0].mxu0
      %v715 = vadd.f32 %v448, %v714
      %716 = vmatprep.mubr.bf16.mxu0 0
      %717 = vmatmul.mubr.bf16.gmra.mrb[0].mxu0 %v514
      %v718 = vpop.f32.mrb[0].mxu0
      %v719 = vadd.f32 %v444, %v718
      %v720 = vpop.f32.mrb[0].mxu0
      %v721 = vadd.f32 %v448, %v720
      %v722 = vpop.f32.mrb[0].mxu0
      %v723 = vadd.f32 %v444, %v722
      %v724 = vpop.f32.mrb[0].mxu0
      %v725 = vadd.f32 %v448, %v724
      %726 = vmatprep.mubr.bf16.mxu0 0
      %727 = vmatmul.mubr.bf16.gmra.mrb[0].mxu0 %v517
      %v728 = vpop.f32.mrb[0].mxu0
      %v729 = vadd.f32 %v444, %v728
      %v730 = vpop.f32.mrb[0].mxu0
      %v731 = vadd.f32 %v448, %v730
      %v732 = vpop.f32.mrb[0].mxu0
      %v733 = vadd.f32 %v444, %v732
      %v734 = vpop.f32.mrb[0].mxu0
      %v735 = vadd.f32 %v448, %v734
      %736 = vmatprep.mubr.bf16.mxu0 0
      %737 = vmatmul.mubr.bf16.gmra.mrb[0].mxu0 %v520
      %v738 = vpop.f32.mrb[0].mxu0
      %v739 = vadd.f32 %v444, %v738
      %v740 = vpop.f32.mrb[0].mxu0
      %v741 = vadd.f32 %v448, %v740
      %v742 = vpop.f32.mrb[0].mxu0
      %v743 = vadd.f32 %v444, %v742
      %v744 = vpop.f32.mrb[0].mxu0
      %v745 = vadd.f32 %v448, %v744
      %746 = vmatprep.mubr.bf16.mxu0 0
      %747 = vmatmul.mubr.bf16.gmra.mrb[0].mxu0 %v523
      %v748 = vpop.f32.mrb[0].mxu0
      %v749 = vadd.f32 %v444, %v748
      %v750 = vpop.f32.mrb[0].mxu0
      %v751 = vadd.f32 %v448, %v750
      %v752 = vpop.f32.mrb[0].mxu0
      %v753 = vadd.f32 %v444, %v752
      %v754 = vpop.f32.mrb[0].mxu0
      %v755 = vadd.f32 %v448, %v754
      %756 = vmatprep.mubr.bf16.mxu0 0
      %757 = vmatmul.mubr.bf16.gmra.mrb[0].mxu0 %v526
      %v758 = vpop.f32.mrb[0].mxu0
      %v759 = vadd.f32 %v444, %v758
      %v760 = vpop.f32.mrb[0].mxu0
      %v761 = vadd.f32 %v448, %v760
      %v762 = vpop.f32.mrb[0].mxu0
      %v763 = vadd.f32 %v444, %v762
      %v764 = vpop.f32.mrb[0].mxu0
      %v765 = vadd.f32 %v448, %v764
      %766 = vdwg.mxu0
      %v767 = vld [vmem:[%s4] sm:$0xf]
      %v769 = vlaneseq
      %v770 = vshrl.u32 %v769, 7
      %v771 = vsub.s32 0, %v770
      %v772 = vrot.slane %v767, %v771
      %v773 = vlaneseq
      %v774 = vshrl.u32 %v773, 7
      %v775 = vsub.s32 1, %v774
      %v776 = vrot.slane %v767, %v775
      %v777 = vlaneseq
      %v778 = vshrl.u32 %v777, 7
      %v779 = vsub.s32 2, %v778
      %v780 = vrot.slane %v767, %v779
      %v781 = vlaneseq
      %v782 = vshrl.u32 %v781, 7
      %v783 = vsub.s32 3, %v782
      %v784 = vrot.slane %v767, %v783
      %v789 = vadd.f32 %v576, %v772
      %v790 = vadd.f32 %v578, %v776
      %v791 = vadd.f32 %v689, %v780
      %v792 = vadd.f32 %v691, %v784
      %v793 = vadd.f32 %v580, %v772
      %v794 = vadd.f32 %v582, %v776
      %v795 = vadd.f32 %v693, %v780
      %v796 = vadd.f32 %v695, %v784
      %v797 = vadd.f32 %v586, %v772
      %v798 = vadd.f32 %v588, %v776
      %v799 = vadd.f32 %v699, %v780
      %v800 = vadd.f32 %v701, %v784
      %v801 = vadd.f32 %v590, %v772
      %v802 = vadd.f32 %v592, %v776
      %v803 = vadd.f32 %v703, %v780
      %v804 = vadd.f32 %v705, %v784
      %v805 = vadd.f32 %v596, %v772
      %v806 = vadd.f32 %v598, %v776
      %v807 = vadd.f32 %v709, %v780
      %v808 = vadd.f32 %v711, %v784
      %v809 = vadd.f32 %v600, %v772
      %v810 = vadd.f32 %v602, %v776
      %v811 = vadd.f32 %v713, %v780
      %v812 = vadd.f32 %v715, %v784
      %v813 = vadd.f32 %v606, %v772
      %v814 = vadd.f32 %v608, %v776
      %v815 = vadd.f32 %v719, %v780
      %v816 = vadd.f32 %v721, %v784
      %v817 = vadd.f32 %v610, %v772
      %v818 = vadd.f32 %v612, %v776
      %v819 = vadd.f32 %v723, %v780
      %v820 = vadd.f32 %v725, %v784
      %v821 = vadd.f32 %v616, %v772
      %v822 = vadd.f32 %v618, %v776
      %v823 = vadd.f32 %v729, %v780
      %v824 = vadd.f32 %v731, %v784
      %v825 = vadd.f32 %v620, %v772
      %v826 = vadd.f32 %v622, %v776
      %v827 = vadd.f32 %v733, %v780
      %v828 = vadd.f32 %v735, %v784
      %v829 = vadd.f32 %v626, %v772
      %v830 = vadd.f32 %v628, %v776
      %v831 = vadd.f32 %v739, %v780
      %v832 = vadd.f32 %v741, %v784
      %v833 = vadd.f32 %v630, %v772
      %v834 = vadd.f32 %v632, %v776
      %v835 = vadd.f32 %v743, %v780
      %v836 = vadd.f32 %v745, %v784
      %v837 = vadd.f32 %v636, %v772
      %v838 = vadd.f32 %v638, %v776
      %v839 = vadd.f32 %v749, %v780
      %v840 = vadd.f32 %v751, %v784
      %v841 = vadd.f32 %v640, %v772
      %v842 = vadd.f32 %v642, %v776
      %v843 = vadd.f32 %v753, %v780
      %v844 = vadd.f32 %v755, %v784
      %v845 = vadd.f32 %v646, %v772
      %v846 = vadd.f32 %v648, %v776
      %v847 = vadd.f32 %v759, %v780
      %v848 = vadd.f32 %v761, %v784
      %v849 = vadd.f32 %v650, %v772
      %v850 = vadd.f32 %v652, %v776
      %v851 = vadd.f32 %v763, %v780
      %v852 = vadd.f32 %v765, %v784
      %v853 = vmax.f32 %v789, 0.0
      %v854 = vmax.f32 %v790, 0.0
      %v855 = vmax.f32 %v791, 0.0
      %v856 = vmax.f32 %v792, 0.0
      %v857 = vmax.f32 %v793, 0.0
      %v858 = vmax.f32 %v794, 0.0
      %v859 = vmax.f32 %v795, 0.0
      %v860 = vmax.f32 %v796, 0.0
      %v861 = vmax.f32 %v797, 0.0
      %v862 = vmax.f32 %v798, 0.0
      %v863 = vmax.f32 %v799, 0.0
      %v864 = vmax.f32 %v800, 0.0
      %v865 = vmax.f32 %v801, 0.0
      %v866 = vmax.f32 %v802, 0.0
      %v867 = vmax.f32 %v803, 0.0
      %v868 = vmax.f32 %v804, 0.0
      %v869 = vmax.f32 %v805, 0.0
      %v870 = vmax.f32 %v806, 0.0
      %v871 = vmax.f32 %v807, 0.0
      %v872 = vmax.f32 %v808, 0.0
      %v873 = vmax.f32 %v809, 0.0
      %v874 = vmax.f32 %v810, 0.0
      %v875 = vmax.f32 %v811, 0.0
      %v876 = vmax.f32 %v812, 0.0
      %v877 = vmax.f32 %v813, 0.0
      %v878 = vmax.f32 %v814, 0.0
      %v879 = vmax.f32 %v815, 0.0
      %v880 = vmax.f32 %v816, 0.0
      %v881 = vmax.f32 %v817, 0.0
      %v882 = vmax.f32 %v818, 0.0
      %v883 = vmax.f32 %v819, 0.0
      %v884 = vmax.f32 %v820, 0.0
      %v885 = vmax.f32 %v821, 0.0
      %v886 = vmax.f32 %v822, 0.0
      %v887 = vmax.f32 %v823, 0.0
      %v888 = vmax.f32 %v824, 0.0
      %v889 = vmax.f32 %v825, 0.0
      %v890 = vmax.f32 %v826, 0.0
      %v891 = vmax.f32 %v827, 0.0
      %v892 = vmax.f32 %v828, 0.0
      %v893 = vmax.f32 %v829, 0.0
      %v894 = vmax.f32 %v830, 0.0
      %v895 = vmax.f32 %v831, 0.0
      %v896 = vmax.f32 %v832, 0.0
      %v897 = vmax.f32 %v833, 0.0
      %v898 = vmax.f32 %v834, 0.0
      %v899 = vmax.f32 %v835, 0.0
      %v900 = vmax.f32 %v836, 0.0
      %v901 = vmax.f32 %v837, 0.0
      %v902 = vmax.f32 %v838, 0.0
      %v903 = vmax.f32 %v839, 0.0
      %v904 = vmax.f32 %v840, 0.0
      %v905 = vmax.f32 %v841, 0.0
      %v906 = vmax.f32 %v842, 0.0
      %v907 = vmax.f32 %v843, 0.0
      %v908 = vmax.f32 %v844, 0.0
      %v909 = vmax.f32 %v845, 0.0
      %v910 = vmax.f32 %v846, 0.0
      %v911 = vmax.f32 %v847, 0.0
      %v912 = vmax.f32 %v848, 0.0
      %v913 = vmax.f32 %v849, 0.0
      %v914 = vmax.f32 %v850, 0.0
      %v915 = vmax.f32 %v851, 0.0
      %v916 = vmax.f32 %v852, 0.0
      %v917 = vpack.c.bf16 %v857, %v853
      %v918 = vpack.c.bf16 %v858, %v854
      %v919 = vpack.c.bf16 %v859, %v855
      %v920 = vpack.c.bf16 %v860, %v856
      %v921 = vpack.c.bf16 %v865, %v861
      %v922 = vpack.c.bf16 %v866, %v862
      %v923 = vpack.c.bf16 %v867, %v863
      %v924 = vpack.c.bf16 %v868, %v864
      %v925 = vpack.c.bf16 %v873, %v869
      %v926 = vpack.c.bf16 %v874, %v870
      %v927 = vpack.c.bf16 %v875, %v871
      %v928 = vpack.c.bf16 %v876, %v872
      %v929 = vpack.c.bf16 %v881, %v877
      %v930 = vpack.c.bf16 %v882, %v878
      %v931 = vpack.c.bf16 %v883, %v879
      %v932 = vpack.c.bf16 %v884, %v880
      %v933 = vpack.c.bf16 %v889, %v885
      %v934 = vpack.c.bf16 %v890, %v886
      %v935 = vpack.c.bf16 %v891, %v887
      %v936 = vpack.c.bf16 %v892, %v888
      %v937 = vpack.c.bf16 %v897, %v893
      %v938 = vpack.c.bf16 %v898, %v894
      %v939 = vpack.c.bf16 %v899, %v895
      %v940 = vpack.c.bf16 %v900, %v896
      %v941 = vpack.c.bf16 %v905, %v901
      %v942 = vpack.c.bf16 %v906, %v902
      %v943 = vpack.c.bf16 %v907, %v903
      %v944 = vpack.c.bf16 %v908, %v904
      %v945 = vpack.c.bf16 %v913, %v909
      %v946 = vpack.c.bf16 %v914, %v910
      %v947 = vpack.c.bf16 %v915, %v911
      %v948 = vpack.c.bf16 %v916, %v912
      %v949 = vld [vmem:[%s5] sm:$0xff]
      %v950 = vld [vmem:[%s5 + $0x8] sm:$0xff]
      %v951 = vld [vmem:[%s5 + $0x10] sm:$0xff]
      %v952 = vld [vmem:[%s5 + $0x18] sm:$0xff]
      %v953 = vld [vmem:[%s5 + $0x20] sm:$0xff]
      %v954 = vld [vmem:[%s5 + $0x28] sm:$0xff]
      %v955 = vld [vmem:[%s5 + $0x30] sm:$0xff]
      %v956 = vld [vmem:[%s5 + $0x38] sm:$0xff]
      %v957 = vld [vmem:[%s5 + $0x40] sm:$0xff]
      %v958 = vld [vmem:[%s5 + $0x48] sm:$0xff]
      %v959 = vld [vmem:[%s5 + $0x50] sm:$0xff]
      %v960 = vld [vmem:[%s5 + $0x58] sm:$0xff]
      %v961 = vld [vmem:[%s5 + $0x60] sm:$0xff]
      %v962 = vld [vmem:[%s5 + $0x68] sm:$0xff]
      %v963 = vld [vmem:[%s5 + $0x70] sm:$0xff]
      %v964 = vld [vmem:[%s5 + $0x78] sm:$0xff]
      %v965 = vld [vmem:[%s5 + $0x80] sm:$0xff]
      %v966 = vld [vmem:[%s5 + $0x88] sm:$0xff]
      %v967 = vld [vmem:[%s5 + $0x90] sm:$0xff]
      %v968 = vld [vmem:[%s5 + $0x98] sm:$0xff]
      %v969 = vld [vmem:[%s5 + $0xa0] sm:$0xff]
      %v970 = vld [vmem:[%s5 + $0xa8] sm:$0xff]
      %v971 = vld [vmem:[%s5 + $0xb0] sm:$0xff]
      %v972 = vld [vmem:[%s5 + $0xb8] sm:$0xff]
      %v973 = vld [vmem:[%s5 + $0xc0] sm:$0xff]
      %v974 = vld [vmem:[%s5 + $0xc8] sm:$0xff]
      %v975 = vld [vmem:[%s5 + $0xd0] sm:$0xff]
      %v976 = vld [vmem:[%s5 + $0xd8] sm:$0xff]
      %v977 = vld [vmem:[%s5 + $0xe0] sm:$0xff]
      %v978 = vld [vmem:[%s5 + $0xe8] sm:$0xff]
      %v979 = vld [vmem:[%s5 + $0xf0] sm:$0xff]
      %v980 = vld [vmem:[%s5 + $0xf8] sm:$0xff]
      %v981 = vld [vmem:[%s5 + $0x100] sm:$0xff]
      %v982 = vld [vmem:[%s5 + $0x108] sm:$0xff]
      %v983 = vld [vmem:[%s5 + $0x110] sm:$0xff]
      %v984 = vld [vmem:[%s5 + $0x118] sm:$0xff]
      %v985 = vld [vmem:[%s5 + $0x120] sm:$0xff]
      %v986 = vld [vmem:[%s5 + $0x128] sm:$0xff]
      %v987 = vld [vmem:[%s5 + $0x130] sm:$0xff]
      %v988 = vld [vmem:[%s5 + $0x138] sm:$0xff]
      %v989 = vld [vmem:[%s5 + $0x140] sm:$0xff]
      %v990 = vld [vmem:[%s5 + $0x148] sm:$0xff]
      %v991 = vld [vmem:[%s5 + $0x150] sm:$0xff]
      %v992 = vld [vmem:[%s5 + $0x158] sm:$0xff]
      %v993 = vld [vmem:[%s5 + $0x160] sm:$0xff]
      %v994 = vld [vmem:[%s5 + $0x168] sm:$0xff]
      %v995 = vld [vmem:[%s5 + $0x170] sm:$0xff]
      %v996 = vld [vmem:[%s5 + $0x178] sm:$0xff]
      %v997 = vld [vmem:[%s5 + $0x180] sm:$0xff]
      %v998 = vld [vmem:[%s5 + $0x188] sm:$0xff]
      %v999 = vld [vmem:[%s5 + $0x190] sm:$0xff]
      %v1000 = vld [vmem:[%s5 + $0x198] sm:$0xff]
      %v1001 = vld [vmem:[%s5 + $0x1a0] sm:$0xff]
      %v1002 = vld [vmem:[%s5 + $0x1a8] sm:$0xff]
      %v1003 = vld [vmem:[%s5 + $0x1b0] sm:$0xff]
      %v1004 = vld [vmem:[%s5 + $0x1b8] sm:$0xff]
      %v1005 = vld [vmem:[%s5 + $0x1c0] sm:$0xff]
      %v1006 = vld [vmem:[%s5 + $0x1c8] sm:$0xff]
      %v1007 = vld [vmem:[%s5 + $0x1d0] sm:$0xff]
      %v1008 = vld [vmem:[%s5 + $0x1d8] sm:$0xff]
      %v1009 = vld [vmem:[%s5 + $0x1e0] sm:$0xff]
      %v1010 = vld [vmem:[%s5 + $0x1e8] sm:$0xff]
      %v1011 = vld [vmem:[%s5 + $0x1f0] sm:$0xff]
      %v1012 = vld [vmem:[%s5 + $0x1f8] sm:$0xff]
      %v1013 = vld [vmem:[%s5 + $0x200] sm:$0xff]
      %v1014 = vld [vmem:[%s5 + $0x208] sm:$0xff]
      %v1015 = vld [vmem:[%s5 + $0x210] sm:$0xff]
      %v1016 = vld [vmem:[%s5 + $0x218] sm:$0xff]
      %v1017 = vld [vmem:[%s5 + $0x220] sm:$0xff]
      %v1018 = vld [vmem:[%s5 + $0x228] sm:$0xff]
      %v1019 = vld [vmem:[%s5 + $0x230] sm:$0xff]
      %v1020 = vld [vmem:[%s5 + $0x238] sm:$0xff]
      %v1021 = vld [vmem:[%s5 + $0x240] sm:$0xff]
      %v1022 = vld [vmem:[%s5 + $0x248] sm:$0xff]
      %v1023 = vld [vmem:[%s5 + $0x250] sm:$0xff]
      %v1024 = vld [vmem:[%s5 + $0x258] sm:$0xff]
      %v1025 = vld [vmem:[%s5 + $0x260] sm:$0xff]
      %v1026 = vld [vmem:[%s5 + $0x268] sm:$0xff]
      %v1027 = vld [vmem:[%s5 + $0x270] sm:$0xff]
      %v1028 = vld [vmem:[%s5 + $0x278] sm:$0xff]
      %v1029 = vld [vmem:[%s5 + $0x280] sm:$0xff]
      %v1030 = vld [vmem:[%s5 + $0x288] sm:$0xff]
      %v1031 = vld [vmem:[%s5 + $0x290] sm:$0xff]
      %v1032 = vld [vmem:[%s5 + $0x298] sm:$0xff]
      %v1033 = vld [vmem:[%s5 + $0x2a0] sm:$0xff]
      %v1034 = vld [vmem:[%s5 + $0x2a8] sm:$0xff]
      %v1035 = vld [vmem:[%s5 + $0x2b0] sm:$0xff]
      %v1036 = vld [vmem:[%s5 + $0x2b8] sm:$0xff]
      %v1037 = vld [vmem:[%s5 + $0x2c0] sm:$0xff]
      %v1038 = vld [vmem:[%s5 + $0x2c8] sm:$0xff]
      %v1039 = vld [vmem:[%s5 + $0x2d0] sm:$0xff]
      %v1040 = vld [vmem:[%s5 + $0x2d8] sm:$0xff]
      %v1041 = vld [vmem:[%s5 + $0x2e0] sm:$0xff]
      %v1042 = vld [vmem:[%s5 + $0x2e8] sm:$0xff]
      %v1043 = vld [vmem:[%s5 + $0x2f0] sm:$0xff]
      %v1044 = vld [vmem:[%s5 + $0x2f8] sm:$0xff]
      %v1045 = vld [vmem:[%s5 + $0x300] sm:$0xff]
      %v1046 = vld [vmem:[%s5 + $0x308] sm:$0xff]
      %v1047 = vld [vmem:[%s5 + $0x310] sm:$0xff]
      %v1048 = vld [vmem:[%s5 + $0x318] sm:$0xff]
      %v1049 = vld [vmem:[%s5 + $0x320] sm:$0xff]
      %v1050 = vld [vmem:[%s5 + $0x328] sm:$0xff]
      %v1051 = vld [vmem:[%s5 + $0x330] sm:$0xff]
      %v1052 = vld [vmem:[%s5 + $0x338] sm:$0xff]
      %v1053 = vld [vmem:[%s5 + $0x340] sm:$0xff]
      %v1054 = vld [vmem:[%s5 + $0x348] sm:$0xff]
      %v1055 = vld [vmem:[%s5 + $0x350] sm:$0xff]
      %v1056 = vld [vmem:[%s5 + $0x358] sm:$0xff]
      %v1057 = vld [vmem:[%s5 + $0x360] sm:$0xff]
      %v1058 = vld [vmem:[%s5 + $0x368] sm:$0xff]
      %v1059 = vld [vmem:[%s5 + $0x370] sm:$0xff]
      %v1060 = vld [vmem:[%s5 + $0x378] sm:$0xff]
      %v1061 = vld [vmem:[%s5 + $0x380] sm:$0xff]
      %v1062 = vld [vmem:[%s5 + $0x388] sm:$0xff]
      %v1063 = vld [vmem:[%s5 + $0x390] sm:$0xff]
      %v1064 = vld [vmem:[%s5 + $0x398] sm:$0xff]
      %v1065 = vld [vmem:[%s5 + $0x3a0] sm:$0xff]
      %v1066 = vld [vmem:[%s5 + $0x3a8] sm:$0xff]
      %v1067 = vld [vmem:[%s5 + $0x3b0] sm:$0xff]
      %v1068 = vld [vmem:[%s5 + $0x3b8] sm:$0xff]
      %v1069 = vld [vmem:[%s5 + $0x3c0] sm:$0xff]
      %v1070 = vld [vmem:[%s5 + $0x3c8] sm:$0xff]
      %v1071 = vld [vmem:[%s5 + $0x3d0] sm:$0xff]
      %v1072 = vld [vmem:[%s5 + $0x3d8] sm:$0xff]
      %v1073 = vld [vmem:[%s5 + $0x3e0] sm:$0xff]
      %v1074 = vld [vmem:[%s5 + $0x3e8] sm:$0xff]
      %v1075 = vld [vmem:[%s5 + $0x3f0] sm:$0xff]
      %v1076 = vld [vmem:[%s5 + $0x3f8] sm:$0xff]
      %v1077 = vld [vmem:[%s6] sm:$0xf]
      %v1079 = vlaneseq
      %v1080 = vshrl.u32 %v1079, 7
      %v1081 = vsub.s32 0, %v1080
      %v1082 = vrot.slane %v1077, %v1081
      %v1083 = vlaneseq
      %v1084 = vshrl.u32 %v1083, 7
      %v1085 = vsub.s32 1, %v1084
      %v1086 = vrot.slane %v1077, %v1085
      %v1087 = vlaneseq
      %v1088 = vshrl.u32 %v1087, 7
      %v1089 = vsub.s32 2, %v1088
      %v1090 = vrot.slane %v1077, %v1089
      %v1091 = vlaneseq
      %v1092 = vshrl.u32 %v1091, 7
      %v1093 = vsub.s32 3, %v1092
      %v1094 = vrot.slane %v1077, %v1093
      %v1227 = vunpack.c.l.b16 %v949
      %v1228 = vunpack.c.h.b16 %v949
      %v1229 = vunpack.c.l.b16 %v950
      %v1230 = vunpack.c.h.b16 %v950
      %v1231 = vunpack.c.l.b16 %v951
      %v1232 = vunpack.c.h.b16 %v951
      %v1233 = vunpack.c.l.b16 %v952
      %v1234 = vunpack.c.h.b16 %v952
      %v1235 = vunpack.c.l.b16 %v953
      %v1236 = vunpack.c.h.b16 %v953
      %v1237 = vunpack.c.l.b16 %v954
      %v1238 = vunpack.c.h.b16 %v954
      %v1239 = vunpack.c.l.b16 %v955
      %v1240 = vunpack.c.h.b16 %v955
      %v1241 = vunpack.c.l.b16 %v956
      %v1242 = vunpack.c.h.b16 %v956
      %v1243 = vunpack.c.l.b16 %v957
      %v1244 = vunpack.c.h.b16 %v957
      %v1245 = vunpack.c.l.b16 %v958
      %v1246 = vunpack.c.h.b16 %v958
      %v1247 = vunpack.c.l.b16 %v959
      %v1248 = vunpack.c.h.b16 %v959
      %v1249 = vunpack.c.l.b16 %v960
      %v1250 = vunpack.c.h.b16 %v960
      %v1251 = vunpack.c.l.b16 %v961
      %v1252 = vunpack.c.h.b16 %v961
      %v1253 = vunpack.c.l.b16 %v962
      %v1254 = vunpack.c.h.b16 %v962
      %v1255 = vunpack.c.l.b16 %v963
      %v1256 = vunpack.c.h.b16 %v963
      %v1257 = vunpack.c.l.b16 %v964
      %v1258 = vunpack.c.h.b16 %v964
      %v1259 = vunpack.c.l.b16 %v965
      %v1260 = vunpack.c.h.b16 %v965
      %v1261 = vunpack.c.l.b16 %v966
      %v1262 = vunpack.c.h.b16 %v966
      %v1263 = vunpack.c.l.b16 %v967
      %v1264 = vunpack.c.h.b16 %v967
      %v1265 = vunpack.c.l.b16 %v968
      %v1266 = vunpack.c.h.b16 %v968
      %v1267 = vunpack.c.l.b16 %v969
      %v1268 = vunpack.c.h.b16 %v969
      %v1269 = vunpack.c.l.b16 %v970
      %v1270 = vunpack.c.h.b16 %v970
      %v1271 = vunpack.c.l.b16 %v971
      %v1272 = vunpack.c.h.b16 %v971
      %v1273 = vunpack.c.l.b16 %v972
      %v1274 = vunpack.c.h.b16 %v972
      %v1275 = vunpack.c.l.b16 %v973
      %v1276 = vunpack.c.h.b16 %v973
      %v1277 = vunpack.c.l.b16 %v974
      %v1278 = vunpack.c.h.b16 %v974
      %v1279 = vunpack.c.l.b16 %v975
      %v1280 = vunpack.c.h.b16 %v975
      %v1281 = vunpack.c.l.b16 %v976
      %v1282 = vunpack.c.h.b16 %v976
      %v1283 = vunpack.c.l.b16 %v977
      %v1284 = vunpack.c.h.b16 %v977
      %v1285 = vunpack.c.l.b16 %v978
      %v1286 = vunpack.c.h.b16 %v978
      %v1287 = vunpack.c.l.b16 %v979
      %v1288 = vunpack.c.h.b16 %v979
      %v1289 = vunpack.c.l.b16 %v980
      %v1290 = vunpack.c.h.b16 %v980
      %v1291 = vunpack.c.l.b16 %v981
      %v1292 = vunpack.c.h.b16 %v981
      %v1293 = vunpack.c.l.b16 %v982
      %v1294 = vunpack.c.h.b16 %v982
      %v1295 = vunpack.c.l.b16 %v983
      %v1296 = vunpack.c.h.b16 %v983
      %v1297 = vunpack.c.l.b16 %v984
      %v1298 = vunpack.c.h.b16 %v984
      %v1299 = vunpack.c.l.b16 %v985
      %v1300 = vunpack.c.h.b16 %v985
      %v1301 = vunpack.c.l.b16 %v986
      %v1302 = vunpack.c.h.b16 %v986
      %v1303 = vunpack.c.l.b16 %v987
      %v1304 = vunpack.c.h.b16 %v987
      %v1305 = vunpack.c.l.b16 %v988
      %v1306 = vunpack.c.h.b16 %v988
      %v1307 = vunpack.c.l.b16 %v989
      %v1308 = vunpack.c.h.b16 %v989
      %v1309 = vunpack.c.l.b16 %v990
      %v1310 = vunpack.c.h.b16 %v990
      %v1311 = vunpack.c.l.b16 %v991
      %v1312 = vunpack.c.h.b16 %v991
      %v1313 = vunpack.c.l.b16 %v992
      %v1314 = vunpack.c.h.b16 %v992
      %v1315 = vunpack.c.l.b16 %v993
      %v1316 = vunpack.c.h.b16 %v993
      %v1317 = vunpack.c.l.b16 %v994
      %v1318 = vunpack.c.h.b16 %v994
      %v1319 = vunpack.c.l.b16 %v995
      %v1320 = vunpack.c.h.b16 %v995
      %v1321 = vunpack.c.l.b16 %v996
      %v1322 = vunpack.c.h.b16 %v996
      %v1323 = vunpack.c.l.b16 %v997
      %v1324 = vunpack.c.h.b16 %v997
      %v1325 = vunpack.c.l.b16 %v998
      %v1326 = vunpack.c.h.b16 %v998
      %v1327 = vunpack.c.l.b16 %v999
      %v1328 = vunpack.c.h.b16 %v999
      %v1329 = vunpack.c.l.b16 %v1000
      %v1330 = vunpack.c.h.b16 %v1000
      %v1331 = vunpack.c.l.b16 %v1001
      %v1332 = vunpack.c.h.b16 %v1001
      %v1333 = vunpack.c.l.b16 %v1002
      %v1334 = vunpack.c.h.b16 %v1002
      %v1335 = vunpack.c.l.b16 %v1003
      %v1336 = vunpack.c.h.b16 %v1003
      %v1337 = vunpack.c.l.b16 %v1004
      %v1338 = vunpack.c.h.b16 %v1004
      %v1339 = vunpack.c.l.b16 %v1005
      %v1340 = vunpack.c.h.b16 %v1005
      %v1341 = vunpack.c.l.b16 %v1006
      %v1342 = vunpack.c.h.b16 %v1006
      %v1343 = vunpack.c.l.b16 %v1007
      %v1344 = vunpack.c.h.b16 %v1007
      %v1345 = vunpack.c.l.b16 %v1008
      %v1346 = vunpack.c.h.b16 %v1008
      %v1347 = vunpack.c.l.b16 %v1009
      %v1348 = vunpack.c.h.b16 %v1009
      %v1349 = vunpack.c.l.b16 %v1010
      %v1350 = vunpack.c.h.b16 %v1010
      %v1351 = vunpack.c.l.b16 %v1011
      %v1352 = vunpack.c.h.b16 %v1011
      %v1353 = vunpack.c.l.b16 %v1012
      %v1354 = vunpack.c.h.b16 %v1012
      %v1355 = vunpack.c.l.b16 %v1013
      %v1356 = vunpack.c.h.b16 %v1013
      %v1357 = vunpack.c.l.b16 %v1014
      %v1358 = vunpack.c.h.b16 %v1014
      %v1359 = vunpack.c.l.b16 %v1015
      %v1360 = vunpack.c.h.b16 %v1015
      %v1361 = vunpack.c.l.b16 %v1016
      %v1362 = vunpack.c.h.b16 %v1016
      %v1363 = vunpack.c.l.b16 %v1017
      %v1364 = vunpack.c.h.b16 %v1017
      %v1365 = vunpack.c.l.b16 %v1018
      %v1366 = vunpack.c.h.b16 %v1018
      %v1367 = vunpack.c.l.b16 %v1019
      %v1368 = vunpack.c.h.b16 %v1019
      %v1369 = vunpack.c.l.b16 %v1020
      %v1370 = vunpack.c.h.b16 %v1020
      %v1371 = vunpack.c.l.b16 %v1021
      %v1372 = vunpack.c.h.b16 %v1021
      %v1373 = vunpack.c.l.b16 %v1022
      %v1374 = vunpack.c.h.b16 %v1022
      %v1375 = vunpack.c.l.b16 %v1023
      %v1376 = vunpack.c.h.b16 %v1023
      %v1377 = vunpack.c.l.b16 %v1024
      %v1378 = vunpack.c.h.b16 %v1024
      %v1379 = vunpack.c.l.b16 %v1025
      %v1380 = vunpack.c.h.b16 %v1025
      %v1381 = vunpack.c.l.b16 %v1026
      %v1382 = vunpack.c.h.b16 %v1026
      %v1383 = vunpack.c.l.b16 %v1027
      %v1384 = vunpack.c.h.b16 %v1027
      %v1385 = vunpack.c.l.b16 %v1028
      %v1386 = vunpack.c.h.b16 %v1028
      %v1387 = vunpack.c.l.b16 %v1029
      %v1388 = vunpack.c.h.b16 %v1029
      %v1389 = vunpack.c.l.b16 %v1030
      %v1390 = vunpack.c.h.b16 %v1030
      %v1391 = vunpack.c.l.b16 %v1031
      %v1392 = vunpack.c.h.b16 %v1031
      %v1393 = vunpack.c.l.b16 %v1032
      %v1394 = vunpack.c.h.b16 %v1032
      %v1395 = vunpack.c.l.b16 %v1033
      %v1396 = vunpack.c.h.b16 %v1033
      %v1397 = vunpack.c.l.b16 %v1034
      %v1398 = vunpack.c.h.b16 %v1034
      %v1399 = vunpack.c.l.b16 %v1035
      %v1400 = vunpack.c.h.b16 %v1035
      %v1401 = vunpack.c.l.b16 %v1036
      %v1402 = vunpack.c.h.b16 %v1036
      %v1403 = vunpack.c.l.b16 %v1037
      %v1404 = vunpack.c.h.b16 %v1037
      %v1405 = vunpack.c.l.b16 %v1038
      %v1406 = vunpack.c.h.b16 %v1038
      %v1407 = vunpack.c.l.b16 %v1039
      %v1408 = vunpack.c.h.b16 %v1039
      %v1409 = vunpack.c.l.b16 %v1040
      %v1410 = vunpack.c.h.b16 %v1040
      %v1411 = vunpack.c.l.b16 %v1041
      %v1412 = vunpack.c.h.b16 %v1041
      %v1413 = vunpack.c.l.b16 %v1042
      %v1414 = vunpack.c.h.b16 %v1042
      %v1415 = vunpack.c.l.b16 %v1043
      %v1416 = vunpack.c.h.b16 %v1043
      %v1417 = vunpack.c.l.b16 %v1044
      %v1418 = vunpack.c.h.b16 %v1044
      %v1419 = vunpack.c.l.b16 %v1045
      %v1420 = vunpack.c.h.b16 %v1045
      %v1421 = vunpack.c.l.b16 %v1046
      %v1422 = vunpack.c.h.b16 %v1046
      %v1423 = vunpack.c.l.b16 %v1047
      %v1424 = vunpack.c.h.b16 %v1047
      %v1425 = vunpack.c.l.b16 %v1048
      %v1426 = vunpack.c.h.b16 %v1048
      %v1427 = vunpack.c.l.b16 %v1049
      %v1428 = vunpack.c.h.b16 %v1049
      %v1429 = vunpack.c.l.b16 %v1050
      %v1430 = vunpack.c.h.b16 %v1050
      %v1431 = vunpack.c.l.b16 %v1051
      %v1432 = vunpack.c.h.b16 %v1051
      %v1433 = vunpack.c.l.b16 %v1052
      %v1434 = vunpack.c.h.b16 %v1052
      %v1435 = vunpack.c.l.b16 %v1053
      %v1436 = vunpack.c.h.b16 %v1053
      %v1437 = vunpack.c.l.b16 %v1054
      %v1438 = vunpack.c.h.b16 %v1054
      %v1439 = vunpack.c.l.b16 %v1055
      %v1440 = vunpack.c.h.b16 %v1055
      %v1441 = vunpack.c.l.b16 %v1056
      %v1442 = vunpack.c.h.b16 %v1056
      %v1443 = vunpack.c.l.b16 %v1057
      %v1444 = vunpack.c.h.b16 %v1057
      %v1445 = vunpack.c.l.b16 %v1058
      %v1446 = vunpack.c.h.b16 %v1058
      %v1447 = vunpack.c.l.b16 %v1059
      %v1448 = vunpack.c.h.b16 %v1059
      %v1449 = vunpack.c.l.b16 %v1060
      %v1450 = vunpack.c.h.b16 %v1060
      %v1451 = vunpack.c.l.b16 %v1061
      %v1452 = vunpack.c.h.b16 %v1061
      %v1453 = vunpack.c.l.b16 %v1062
      %v1454 = vunpack.c.h.b16 %v1062
      %v1455 = vunpack.c.l.b16 %v1063
      %v1456 = vunpack.c.h.b16 %v1063
      %v1457 = vunpack.c.l.b16 %v1064
      %v1458 = vunpack.c.h.b16 %v1064
      %v1459 = vunpack.c.l.b16 %v1065
      %v1460 = vunpack.c.h.b16 %v1065
      %v1461 = vunpack.c.l.b16 %v1066
      %v1462 = vunpack.c.h.b16 %v1066
      %v1463 = vunpack.c.l.b16 %v1067
      %v1464 = vunpack.c.h.b16 %v1067
      %v1465 = vunpack.c.l.b16 %v1068
      %v1466 = vunpack.c.h.b16 %v1068
      %v1467 = vunpack.c.l.b16 %v1069
      %v1468 = vunpack.c.h.b16 %v1069
      %v1469 = vunpack.c.l.b16 %v1070
      %v1470 = vunpack.c.h.b16 %v1070
      %v1471 = vunpack.c.l.b16 %v1071
      %v1472 = vunpack.c.h.b16 %v1071
      %v1473 = vunpack.c.l.b16 %v1072
      %v1474 = vunpack.c.h.b16 %v1072
      %v1475 = vunpack.c.l.b16 %v1073
      %v1476 = vunpack.c.h.b16 %v1073
      %v1477 = vunpack.c.l.b16 %v1074
      %v1478 = vunpack.c.h.b16 %v1074
      %v1479 = vunpack.c.l.b16 %v1075
      %v1480 = vunpack.c.h.b16 %v1075
      %v1481 = vunpack.c.l.b16 %v1076
      %v1482 = vunpack.c.h.b16 %v1076
      %v1483 = vpack.c.b16 %v1231, %v1227
      %v1484 = vpack.c.b16 %v1232, %v1228
      %v1485 = vpack.c.b16 %v1233, %v1229
      %v1486 = vpack.c.b16 %v1234, %v1230
      %v1487 = vpack.c.b16 %v1239, %v1235
      %v1488 = vpack.c.b16 %v1240, %v1236
      %v1489 = vpack.c.b16 %v1241, %v1237
      %v1490 = vpack.c.b16 %v1242, %v1238
      %v1491 = vpack.c.b16 %v1247, %v1243
      %v1492 = vpack.c.b16 %v1248, %v1244
      %v1493 = vpack.c.b16 %v1249, %v1245
      %v1494 = vpack.c.b16 %v1250, %v1246
      %v1495 = vpack.c.b16 %v1255, %v1251
      %v1496 = vpack.c.b16 %v1256, %v1252
      %v1497 = vpack.c.b16 %v1257, %v1253
      %v1498 = vpack.c.b16 %v1258, %v1254
      %v1499 = vpack.c.b16 %v1263, %v1259
      %v1500 = vpack.c.b16 %v1264, %v1260
      %v1501 = vpack.c.b16 %v1265, %v1261
      %v1502 = vpack.c.b16 %v1266, %v1262
      %v1503 = vpack.c.b16 %v1271, %v1267
      %v1504 = vpack.c.b16 %v1272, %v1268
      %v1505 = vpack.c.b16 %v1273, %v1269
      %v1506 = vpack.c.b16 %v1274, %v1270
      %v1507 = vpack.c.b16 %v1279, %v1275
      %v1508 = vpack.c.b16 %v1280, %v1276
      %v1509 = vpack.c.b16 %v1281, %v1277
      %v1510 = vpack.c.b16 %v1282, %v1278
      %v1511 = vpack.c.b16 %v1287, %v1283
      %v1512 = vpack.c.b16 %v1288, %v1284
      %v1513 = vpack.c.b16 %v1289, %v1285
      %v1514 = vpack.c.b16 %v1290, %v1286
      %v1515 = vpack.c.b16 %v1295, %v1291
      %v1516 = vpack.c.b16 %v1296, %v1292
      %v1517 = vpack.c.b16 %v1297, %v1293
      %v1518 = vpack.c.b16 %v1298, %v1294
      %v1519 = vpack.c.b16 %v1303, %v1299
      %v1520 = vpack.c.b16 %v1304, %v1300
      %v1521 = vpack.c.b16 %v1305, %v1301
      %v1522 = vpack.c.b16 %v1306, %v1302
      %v1523 = vpack.c.b16 %v1311, %v1307
      %v1524 = vpack.c.b16 %v1312, %v1308
      %v1525 = vpack.c.b16 %v1313, %v1309
      %v1526 = vpack.c.b16 %v1314, %v1310
      %v1527 = vpack.c.b16 %v1319, %v1315
      %v1528 = vpack.c.b16 %v1320, %v1316
      %v1529 = vpack.c.b16 %v1321, %v1317
      %v1530 = vpack.c.b16 %v1322, %v1318
      %v1531 = vpack.c.b16 %v1327, %v1323
      %v1532 = vpack.c.b16 %v1328, %v1324
      %v1533 = vpack.c.b16 %v1329, %v1325
      %v1534 = vpack.c.b16 %v1330, %v1326
      %v1535 = vpack.c.b16 %v1335, %v1331
      %v1536 = vpack.c.b16 %v1336, %v1332
      %v1537 = vpack.c.b16 %v1337, %v1333
      %v1538 = vpack.c.b16 %v1338, %v1334
      %v1539 = vpack.c.b16 %v1343, %v1339
      %v1540 = vpack.c.b16 %v1344, %v1340
      %v1541 = vpack.c.b16 %v1345, %v1341
      %v1542 = vpack.c.b16 %v1346, %v1342
      %v1543 = vpack.c.b16 %v1351, %v1347
      %v1544 = vpack.c.b16 %v1352, %v1348
      %v1545 = vpack.c.b16 %v1353, %v1349
      %v1546 = vpack.c.b16 %v1354, %v1350
      %v1547 = vpack.c.b16 %v1359, %v1355
      %v1548 = vpack.c.b16 %v1360, %v1356
      %v1549 = vpack.c.b16 %v1361, %v1357
      %v1550 = vpack.c.b16 %v1362, %v1358
      %v1551 = vpack.c.b16 %v1367, %v1363
      %v1552 = vpack.c.b16 %v1368, %v1364
      %v1553 = vpack.c.b16 %v1369, %v1365
      %v1554 = vpack.c.b16 %v1370, %v1366
      %v1555 = vpack.c.b16 %v1375, %v1371
      %v1556 = vpack.c.b16 %v1376, %v1372
      %v1557 = vpack.c.b16 %v1377, %v1373
      %v1558 = vpack.c.b16 %v1378, %v1374
      %v1559 = vpack.c.b16 %v1383, %v1379
      %v1560 = vpack.c.b16 %v1384, %v1380
      %v1561 = vpack.c.b16 %v1385, %v1381
      %v1562 = vpack.c.b16 %v1386, %v1382
      %v1563 = vpack.c.b16 %v1391, %v1387
      %v1564 = vpack.c.b16 %v1392, %v1388
      %v1565 = vpack.c.b16 %v1393, %v1389
      %v1566 = vpack.c.b16 %v1394, %v1390
      %v1567 = vpack.c.b16 %v1399, %v1395
      %v1568 = vpack.c.b16 %v1400, %v1396
      %v1569 = vpack.c.b16 %v1401, %v1397
      %v1570 = vpack.c.b16 %v1402, %v1398
      %v1571 = vpack.c.b16 %v1407, %v1403
      %v1572 = vpack.c.b16 %v1408, %v1404
      %v1573 = vpack.c.b16 %v1409, %v1405
      %v1574 = vpack.c.b16 %v1410, %v1406
      %v1575 = vpack.c.b16 %v1415, %v1411
      %v1576 = vpack.c.b16 %v1416, %v1412
      %v1577 = vpack.c.b16 %v1417, %v1413
      %v1578 = vpack.c.b16 %v1418, %v1414
      %v1579 = vpack.c.b16 %v1423, %v1419
      %v1580 = vpack.c.b16 %v1424, %v1420
      %v1581 = vpack.c.b16 %v1425, %v1421
      %v1582 = vpack.c.b16 %v1426, %v1422
      %v1583 = vpack.c.b16 %v1431, %v1427
      %v1584 = vpack.c.b16 %v1432, %v1428
      %v1585 = vpack.c.b16 %v1433, %v1429
      %v1586 = vpack.c.b16 %v1434, %v1430
      %v1587 = vpack.c.b16 %v1439, %v1435
      %v1588 = vpack.c.b16 %v1440, %v1436
      %v1589 = vpack.c.b16 %v1441, %v1437
      %v1590 = vpack.c.b16 %v1442, %v1438
      %v1591 = vpack.c.b16 %v1447, %v1443
      %v1592 = vpack.c.b16 %v1448, %v1444
      %v1593 = vpack.c.b16 %v1449, %v1445
      %v1594 = vpack.c.b16 %v1450, %v1446
      %v1595 = vpack.c.b16 %v1455, %v1451
      %v1596 = vpack.c.b16 %v1456, %v1452
      %v1597 = vpack.c.b16 %v1457, %v1453
      %v1598 = vpack.c.b16 %v1458, %v1454
      %v1599 = vpack.c.b16 %v1463, %v1459
      %v1600 = vpack.c.b16 %v1464, %v1460
      %v1601 = vpack.c.b16 %v1465, %v1461
      %v1602 = vpack.c.b16 %v1466, %v1462
      %v1603 = vpack.c.b16 %v1471, %v1467
      %v1604 = vpack.c.b16 %v1472, %v1468
      %v1605 = vpack.c.b16 %v1473, %v1469
      %v1606 = vpack.c.b16 %v1474, %v1470
      %v1607 = vpack.c.b16 %v1479, %v1475
      %v1608 = vpack.c.b16 %v1480, %v1476
      %v1609 = vpack.c.b16 %v1481, %v1477
      %v1610 = vpack.c.b16 %v1482, %v1478
      %1739 = vmatprep.subr.bf16.mxu0 %v1484
      %1740 = vmatpush1.bf16.msra.mxu0 %v1483
      %1741 = vmatprep.subr.bf16.mxu0 %v1488
      %1742 = vmatpush1.bf16.msra.mxu0 %v1487
      %1743 = vmatprep.subr.bf16.mxu0 %v1492
      %1744 = vmatpush1.bf16.msra.mxu0 %v1491
      %1745 = vmatprep.subr.bf16.mxu0 %v1496
      %1746 = vmatpush1.bf16.msra.mxu0 %v1495
      %1747 = vmatprep.subr.bf16.mxu0 %v1500
      %1748 = vmatpush1.bf16.msra.mxu0 %v1499
      %1749 = vmatprep.subr.bf16.mxu0 %v1504
      %1750 = vmatpush1.bf16.msra.mxu0 %v1503
      %1751 = vmatprep.subr.bf16.mxu0 %v1508
      %1752 = vmatpush1.bf16.msra.mxu0 %v1507
      %1753 = vmatprep.subr.bf16.mxu0 %v1512
      %1754 = vmatpush1.bf16.msra.mxu0 %v1511
      %1755 = vmatprep.subr.bf16.mxu0 %v1516
      %1756 = vmatpush1.bf16.msra.mxu0 %v1515
      %1757 = vmatprep.subr.bf16.mxu0 %v1520
      %1758 = vmatpush1.bf16.msra.mxu0 %v1519
      %1759 = vmatprep.subr.bf16.mxu0 %v1524
      %1760 = vmatpush1.bf16.msra.mxu0 %v1523
      %1761 = vmatprep.subr.bf16.mxu0 %v1528
      %1762 = vmatpush1.bf16.msra.mxu0 %v1527
      %1763 = vmatprep.subr.bf16.mxu0 %v1532
      %1764 = vmatpush1.bf16.msra.mxu0 %v1531
      %1765 = vmatprep.subr.bf16.mxu0 %v1536
      %1766 = vmatpush1.bf16.msra.mxu0 %v1535
      %1767 = vmatprep.subr.bf16.mxu0 %v1540
      %1768 = vmatpush1.bf16.msra.mxu0 %v1539
      %1769 = vmatprep.subr.bf16.mxu0 %v1544
      %1770 = vmatpush1.bf16.msra.mxu0 %v1543
      %1771 = vmatprep.mubr.bf16.mxu0 %v918
      %1772 = vmatmul.mubr.bf16.gmra.mrb[0].mxu0 %v917
      %v1773 = vpop.f32.mrb[0].mxu0
      %v1774 = vadd.f32 %v1082, %v1773
      %v1775 = vpop.f32.mrb[0].mxu0
      %v1776 = vadd.f32 %v1086, %v1775
      %v1777 = vpop.f32.mrb[0].mxu0
      %v1778 = vadd.f32 %v1082, %v1777
      %v1779 = vpop.f32.mrb[0].mxu0
      %v1780 = vadd.f32 %v1086, %v1779
      %1781 = vmatprep.mubr.bf16.mxu0 %v922
      %1782 = vmatmul.mubr.bf16.gmra.mrb[0].mxu0 %v921
      %v1783 = vpop.f32.mrb[0].mxu0
      %v1784 = vadd.f32 %v1082, %v1783
      %v1785 = vpop.f32.mrb[0].mxu0
      %v1786 = vadd.f32 %v1086, %v1785
      %v1787 = vpop.f32.mrb[0].mxu0
      %v1788 = vadd.f32 %v1082, %v1787
      %v1789 = vpop.f32.mrb[0].mxu0
      %v1790 = vadd.f32 %v1086, %v1789
      %1791 = vmatprep.mubr.bf16.mxu0 %v926
      %1792 = vmatmul.mubr.bf16.gmra.mrb[0].mxu0 %v925
      %v1793 = vpop.f32.mrb[0].mxu0
      %v1794 = vadd.f32 %v1082, %v1793
      %v1795 = vpop.f32.mrb[0].mxu0
      %v1796 = vadd.f32 %v1086, %v1795
      %v1797 = vpop.f32.mrb[0].mxu0
      %v1798 = vadd.f32 %v1082, %v1797
      %v1799 = vpop.f32.mrb[0].mxu0
      %v1800 = vadd.f32 %v1086, %v1799
      %1801 = vmatprep.mubr.bf16.mxu0 %v930
      %1802 = vmatmul.mubr.bf16.gmra.mrb[0].mxu0 %v929
      %v1803 = vpop.f32.mrb[0].mxu0
      %v1804 = vadd.f32 %v1082, %v1803
      %v1805 = vpop.f32.mrb[0].mxu0
      %v1806 = vadd.f32 %v1086, %v1805
      %v1807 = vpop.f32.mrb[0].mxu0
      %v1808 = vadd.f32 %v1082, %v1807
      %v1809 = vpop.f32.mrb[0].mxu0
      %v1810 = vadd.f32 %v1086, %v1809
      %1811 = vmatprep.mubr.bf16.mxu0 %v934
      %1812 = vmatmul.mubr.bf16.gmra.mrb[0].mxu0 %v933
      %v1813 = vpop.f32.mrb[0].mxu0
      %v1814 = vadd.f32 %v1082, %v1813
      %v1815 = vpop.f32.mrb[0].mxu0
      %v1816 = vadd.f32 %v1086, %v1815
      %v1817 = vpop.f32.mrb[0].mxu0
      %v1818 = vadd.f32 %v1082, %v1817
      %v1819 = vpop.f32.mrb[0].mxu0
      %v1820 = vadd.f32 %v1086, %v1819
      %1821 = vmatprep.mubr.bf16.mxu0 %v938
      %1822 = vmatmul.mubr.bf16.gmra.mrb[0].mxu0 %v937
      %v1823 = vpop.f32.mrb[0].mxu0
      %v1824 = vadd.f32 %v1082, %v1823
      %v1825 = vpop.f32.mrb[0].mxu0
      %v1826 = vadd.f32 %v1086, %v1825
      %v1827 = vpop.f32.mrb[0].mxu0
      %v1828 = vadd.f32 %v1082, %v1827
      %v1829 = vpop.f32.mrb[0].mxu0
      %v1830 = vadd.f32 %v1086, %v1829
      %1831 = vmatprep.mubr.bf16.mxu0 %v942
      %1832 = vmatmul.mubr.bf16.gmra.mrb[0].mxu0 %v941
      %v1833 = vpop.f32.mrb[0].mxu0
      %v1834 = vadd.f32 %v1082, %v1833
      %v1835 = vpop.f32.mrb[0].mxu0
      %v1836 = vadd.f32 %v1086, %v1835
      %v1837 = vpop.f32.mrb[0].mxu0
      %v1838 = vadd.f32 %v1082, %v1837
      %v1839 = vpop.f32.mrb[0].mxu0
      %v1840 = vadd.f32 %v1086, %v1839
      %1841 = vmatprep.mubr.bf16.mxu0 %v946
      %1842 = vmatmul.mubr.bf16.gmra.mrb[0].mxu0 %v945
      %v1843 = vpop.f32.mrb[0].mxu0
      %v1844 = vadd.f32 %v1082, %v1843
      %v1845 = vpop.f32.mrb[0].mxu0
      %v1846 = vadd.f32 %v1086, %v1845
      %v1847 = vpop.f32.mrb[0].mxu0
      %v1848 = vadd.f32 %v1082, %v1847
      %v1849 = vpop.f32.mrb[0].mxu0
      %v1850 = vadd.f32 %v1086, %v1849
      %1851 = vdwg.mxu0
      %1852 = vmatprep.subr.bf16.mxu0 %v1548
      %1853 = vmatpush1.bf16.msra.mxu0 %v1547
      %1854 = vmatprep.subr.bf16.mxu0 %v1552
      %1855 = vmatpush1.bf16.msra.mxu0 %v1551
      %1856 = vmatprep.subr.bf16.mxu0 %v1556
      %1857 = vmatpush1.bf16.msra.mxu0 %v1555
      %1858 = vmatprep.subr.bf16.mxu0 %v1560
      %1859 = vmatpush1.bf16.msra.mxu0 %v1559
      %1860 = vmatprep.subr.bf16.mxu0 %v1564
      %1861 = vmatpush1.bf16.msra.mxu0 %v1563
      %1862 = vmatprep.subr.bf16.mxu0 %v1568
      %1863 = vmatpush1.bf16.msra.mxu0 %v1567
      %1864 = vmatprep.subr.bf16.mxu0 %v1572
      %1865 = vmatpush1.bf16.msra.mxu0 %v1571
      %1866 = vmatprep.subr.bf16.mxu0 %v1576
      %1867 = vmatpush1.bf16.msra.mxu0 %v1575
      %1868 = vmatprep.subr.bf16.mxu0 %v1580
      %1869 = vmatpush1.bf16.msra.mxu0 %v1579
      %1870 = vmatprep.subr.bf16.mxu0 %v1584
      %1871 = vmatpush1.bf16.msra.mxu0 %v1583
      %1872 = vmatprep.subr.bf16.mxu0 %v1588
      %1873 = vmatpush1.bf16.msra.mxu0 %v1587
      %1874 = vmatprep.subr.bf16.mxu0 %v1592
      %1875 = vmatpush1.bf16.msra.mxu0 %v1591
      %1876 = vmatprep.subr.bf16.mxu0 %v1596
      %1877 = vmatpush1.bf16.msra.mxu0 %v1595
      %1878 = vmatprep.subr.bf16.mxu0 %v1600
      %1879 = vmatpush1.bf16.msra.mxu0 %v1599
      %1880 = vmatprep.subr.bf16.mxu0 %v1604
      %1881 = vmatpush1.bf16.msra.mxu0 %v1603
      %1882 = vmatprep.subr.bf16.mxu0 %v1608
      %1883 = vmatpush1.bf16.msra.mxu0 %v1607
      %1884 = vmatprep.mubr.bf16.mxu0 %v920
      %1885 = vmatmul.mubr.bf16.gmra.mrb[0].mxu0 %v919
      %v1886 = vpop.f32.mrb[0].mxu0
      %v1887 = vadd.f32 %v1774, %v1886
      %v1888 = vpop.f32.mrb[0].mxu0
      %v1889 = vadd.f32 %v1776, %v1888
      %v1890 = vpop.f32.mrb[0].mxu0
      %v1891 = vadd.f32 %v1778, %v1890
      %v1892 = vpop.f32.mrb[0].mxu0
      %v1893 = vadd.f32 %v1780, %v1892
      %1894 = vmatprep.mubr.bf16.mxu0 %v924
      %1895 = vmatmul.mubr.bf16.gmra.mrb[0].mxu0 %v923
      %v1896 = vpop.f32.mrb[0].mxu0
      %v1897 = vadd.f32 %v1784, %v1896
      %v1898 = vpop.f32.mrb[0].mxu0
      %v1899 = vadd.f32 %v1786, %v1898
      %v1900 = vpop.f32.mrb[0].mxu0
      %v1901 = vadd.f32 %v1788, %v1900
      %v1902 = vpop.f32.mrb[0].mxu0
      %v1903 = vadd.f32 %v1790, %v1902
      %1904 = vmatprep.mubr.bf16.mxu0 %v928
      %1905 = vmatmul.mubr.bf16.gmra.mrb[0].mxu0 %v927
      %v1906 = vpop.f32.mrb[0].mxu0
      %v1907 = vadd.f32 %v1794, %v1906
      %v1908 = vpop.f32.mrb[0].mxu0
      %v1909 = vadd.f32 %v1796, %v1908
      %v1910 = vpop.f32.mrb[0].mxu0
      %v1911 = vadd.f32 %v1798, %v1910
      %v1912 = vpop.f32.mrb[0].mxu0
      %v1913 = vadd.f32 %v1800, %v1912
      %1914 = vmatprep.mubr.bf16.mxu0 %v932
      %1915 = vmatmul.mubr.bf16.gmra.mrb[0].mxu0 %v931
      %v1916 = vpop.f32.mrb[0].mxu0
      %v1917 = vadd.f32 %v1804, %v1916
      %v1918 = vpop.f32.mrb[0].mxu0
      %v1919 = vadd.f32 %v1806, %v1918
      %v1920 = vpop.f32.mrb[0].mxu0
      %v1921 = vadd.f32 %v1808, %v1920
      %v1922 = vpop.f32.mrb[0].mxu0
      %v1923 = vadd.f32 %v1810, %v1922
      %1924 = vmatprep.mubr.bf16.mxu0 %v936
      %1925 = vmatmul.mubr.bf16.gmra.mrb[0].mxu0 %v935
      %v1926 = vpop.f32.mrb[0].mxu0
      %v1927 = vadd.f32 %v1814, %v1926
      %v1928 = vpop.f32.mrb[0].mxu0
      %v1929 = vadd.f32 %v1816, %v1928
      %v1930 = vpop.f32.mrb[0].mxu0
      %v1931 = vadd.f32 %v1818, %v1930
      %v1932 = vpop.f32.mrb[0].mxu0
      %v1933 = vadd.f32 %v1820, %v1932
      %1934 = vmatprep.mubr.bf16.mxu0 %v940
      %1935 = vmatmul.mubr.bf16.gmra.mrb[0].mxu0 %v939
      %v1936 = vpop.f32.mrb[0].mxu0
      %v1937 = vadd.f32 %v1824, %v1936
      %v1938 = vpop.f32.mrb[0].mxu0
      %v1939 = vadd.f32 %v1826, %v1938
      %v1940 = vpop.f32.mrb[0].mxu0
      %v1941 = vadd.f32 %v1828, %v1940
      %v1942 = vpop.f32.mrb[0].mxu0
      %v1943 = vadd.f32 %v1830, %v1942
      %1944 = vmatprep.mubr.bf16.mxu0 %v944
      %1945 = vmatmul.mubr.bf16.gmra.mrb[0].mxu0 %v943
      %v1946 = vpop.f32.mrb[0].mxu0
      %v1947 = vadd.f32 %v1834, %v1946
      %v1948 = vpop.f32.mrb[0].mxu0
      %v1949 = vadd.f32 %v1836, %v1948
      %v1950 = vpop.f32.mrb[0].mxu0
      %v1951 = vadd.f32 %v1838, %v1950
      %v1952 = vpop.f32.mrb[0].mxu0
      %v1953 = vadd.f32 %v1840, %v1952
      %1954 = vmatprep.mubr.bf16.mxu0 %v948
      %1955 = vmatmul.mubr.bf16.gmra.mrb[0].mxu0 %v947
      %v1956 = vpop.f32.mrb[0].mxu0
      %v1957 = vadd.f32 %v1844, %v1956
      %v1958 = vpop.f32.mrb[0].mxu0
      %v1959 = vadd.f32 %v1846, %v1958
      %v1960 = vpop.f32.mrb[0].mxu0
      %v1961 = vadd.f32 %v1848, %v1960
      %v1962 = vpop.f32.mrb[0].mxu0
      %v1963 = vadd.f32 %v1850, %v1962
      %1964 = vdwg.mxu0
      %1965 = vmatprep.subr.bf16.mxu0 %v1486
      %1966 = vmatpush1.bf16.msra.mxu0 %v1485
      %1967 = vmatprep.subr.bf16.mxu0 %v1490
      %1968 = vmatpush1.bf16.msra.mxu0 %v1489
      %1969 = vmatprep.subr.bf16.mxu0 %v1494
      %1970 = vmatpush1.bf16.msra.mxu0 %v1493
      %1971 = vmatprep.subr.bf16.mxu0 %v1498
      %1972 = vmatpush1.bf16.msra.mxu0 %v1497
      %1973 = vmatprep.subr.bf16.mxu0 %v1502
      %1974 = vmatpush1.bf16.msra.mxu0 %v1501
      %1975 = vmatprep.subr.bf16.mxu0 %v1506
      %1976 = vmatpush1.bf16.msra.mxu0 %v1505
      %1977 = vmatprep.subr.bf16.mxu0 %v1510
      %1978 = vmatpush1.bf16.msra.mxu0 %v1509
      %1979 = vmatprep.subr.bf16.mxu0 %v1514
      %1980 = vmatpush1.bf16.msra.mxu0 %v1513
      %1981 = vmatprep.subr.bf16.mxu0 %v1518
      %1982 = vmatpush1.bf16.msra.mxu0 %v1517
      %1983 = vmatprep.subr.bf16.mxu0 %v1522
      %1984 = vmatpush1.bf16.msra.mxu0 %v1521
      %1985 = vmatprep.subr.bf16.mxu0 %v1526
      %1986 = vmatpush1.bf16.msra.mxu0 %v1525
      %1987 = vmatprep.subr.bf16.mxu0 %v1530
      %1988 = vmatpush1.bf16.msra.mxu0 %v1529
      %1989 = vmatprep.subr.bf16.mxu0 %v1534
      %1990 = vmatpush1.bf16.msra.mxu0 %v1533
      %1991 = vmatprep.subr.bf16.mxu0 %v1538
      %1992 = vmatpush1.bf16.msra.mxu0 %v1537
      %1993 = vmatprep.subr.bf16.mxu0 %v1542
      %1994 = vmatpush1.bf16.msra.mxu0 %v1541
      %1995 = vmatprep.subr.bf16.mxu0 %v1546
      %1996 = vmatpush1.bf16.msra.mxu0 %v1545
      %1997 = vmatprep.mubr.bf16.mxu0 %v918
      %1998 = vmatmul.mubr.bf16.gmra.mrb[0].mxu0 %v917
      %v1999 = vpop.f32.mrb[0].mxu0
      %v2000 = vadd.f32 %v1090, %v1999
      %v2001 = vpop.f32.mrb[0].mxu0
      %v2002 = vadd.f32 %v1094, %v2001
      %v2003 = vpop.f32.mrb[0].mxu0
      %v2004 = vadd.f32 %v1090, %v2003
      %v2005 = vpop.f32.mrb[0].mxu0
      %v2006 = vadd.f32 %v1094, %v2005
      %2007 = vmatprep.mubr.bf16.mxu0 %v922
      %2008 = vmatmul.mubr.bf16.gmra.mrb[0].mxu0 %v921
      %v2009 = vpop.f32.mrb[0].mxu0
      %v2010 = vadd.f32 %v1090, %v2009
      %v2011 = vpop.f32.mrb[0].mxu0
      %v2012 = vadd.f32 %v1094, %v2011
      %v2013 = vpop.f32.mrb[0].mxu0
      %v2014 = vadd.f32 %v1090, %v2013
      %v2015 = vpop.f32.mrb[0].mxu0
      %v2016 = vadd.f32 %v1094, %v2015
      %2017 = vmatprep.mubr.bf16.mxu0 %v926
      %2018 = vmatmul.mubr.bf16.gmra.mrb[0].mxu0 %v925
      %v2019 = vpop.f32.mrb[0].mxu0
      %v2020 = vadd.f32 %v1090, %v2019
      %v2021 = vpop.f32.mrb[0].mxu0
      %v2022 = vadd.f32 %v1094, %v2021
      %v2023 = vpop.f32.mrb[0].mxu0
      %v2024 = vadd.f32 %v1090, %v2023
      %v2025 = vpop.f32.mrb[0].mxu0
      %v2026 = vadd.f32 %v1094, %v2025
      %2027 = vmatprep.mubr.bf16.mxu0 %v930
      %2028 = vmatmul.mubr.bf16.gmra.mrb[0].mxu0 %v929
      %v2029 = vpop.f32.mrb[0].mxu0
      %v2030 = vadd.f32 %v1090, %v2029
      %v2031 = vpop.f32.mrb[0].mxu0
      %v2032 = vadd.f32 %v1094, %v2031
      %v2033 = vpop.f32.mrb[0].mxu0
      %v2034 = vadd.f32 %v1090, %v2033
      %v2035 = vpop.f32.mrb[0].mxu0
      %v2036 = vadd.f32 %v1094, %v2035
      %2037 = vmatprep.mubr.bf16.mxu0 %v934
      %2038 = vmatmul.mubr.bf16.gmra.mrb[0].mxu0 %v933
      %v2039 = vpop.f32.mrb[0].mxu0
      %v2040 = vadd.f32 %v1090, %v2039
      %v2041 = vpop.f32.mrb[0].mxu0
      %v2042 = vadd.f32 %v1094, %v2041
      %v2043 = vpop.f32.mrb[0].mxu0
      %v2044 = vadd.f32 %v1090, %v2043
      %v2045 = vpop.f32.mrb[0].mxu0
      %v2046 = vadd.f32 %v1094, %v2045
      %2047 = vmatprep.mubr.bf16.mxu0 %v938
      %2048 = vmatmul.mubr.bf16.gmra.mrb[0].mxu0 %v937
      %v2049 = vpop.f32.mrb[0].mxu0
      %v2050 = vadd.f32 %v1090, %v2049
      %v2051 = vpop.f32.mrb[0].mxu0
      %v2052 = vadd.f32 %v1094, %v2051
      %v2053 = vpop.f32.mrb[0].mxu0
      %v2054 = vadd.f32 %v1090, %v2053
      %v2055 = vpop.f32.mrb[0].mxu0
      %v2056 = vadd.f32 %v1094, %v2055
      %2057 = vmatprep.mubr.bf16.mxu0 %v942
      %2058 = vmatmul.mubr.bf16.gmra.mrb[0].mxu0 %v941
      %v2059 = vpop.f32.mrb[0].mxu0
      %v2060 = vadd.f32 %v1090, %v2059
      %v2061 = vpop.f32.mrb[0].mxu0
      %v2062 = vadd.f32 %v1094, %v2061
      %v2063 = vpop.f32.mrb[0].mxu0
      %v2064 = vadd.f32 %v1090, %v2063
      %v2065 = vpop.f32.mrb[0].mxu0
      %v2066 = vadd.f32 %v1094, %v2065
      %2067 = vmatprep.mubr.bf16.mxu0 %v946
      %2068 = vmatmul.mubr.bf16.gmra.mrb[0].mxu0 %v945
      %v2069 = vpop.f32.mrb[0].mxu0
      %v2070 = vadd.f32 %v1090, %v2069
      %v2071 = vpop.f32.mrb[0].mxu0
      %v2072 = vadd.f32 %v1094, %v2071
      %v2073 = vpop.f32.mrb[0].mxu0
      %v2074 = vadd.f32 %v1090, %v2073
      %v2075 = vpop.f32.mrb[0].mxu0
      %v2076 = vadd.f32 %v1094, %v2075
      %2077 = vdwg.mxu0
      %2078 = vmatprep.subr.bf16.mxu0 %v1550
      %2079 = vmatpush1.bf16.msra.mxu0 %v1549
      %2080 = vmatprep.subr.bf16.mxu0 %v1554
      %2081 = vmatpush1.bf16.msra.mxu0 %v1553
      %2082 = vmatprep.subr.bf16.mxu0 %v1558
      %2083 = vmatpush1.bf16.msra.mxu0 %v1557
      %2084 = vmatprep.subr.bf16.mxu0 %v1562
      %2085 = vmatpush1.bf16.msra.mxu0 %v1561
      %2086 = vmatprep.subr.bf16.mxu0 %v1566
      %2087 = vmatpush1.bf16.msra.mxu0 %v1565
      %2088 = vmatprep.subr.bf16.mxu0 %v1570
      %2089 = vmatpush1.bf16.msra.mxu0 %v1569
      %2090 = vmatprep.subr.bf16.mxu0 %v1574
      %2091 = vmatpush1.bf16.msra.mxu0 %v1573
      %2092 = vmatprep.subr.bf16.mxu0 %v1578
      %2093 = vmatpush1.bf16.msra.mxu0 %v1577
      %2094 = vmatprep.subr.bf16.mxu0 %v1582
      %2095 = vmatpush1.bf16.msra.mxu0 %v1581
      %2096 = vmatprep.subr.bf16.mxu0 %v1586
      %2097 = vmatpush1.bf16.msra.mxu0 %v1585
      %2098 = vmatprep.subr.bf16.mxu0 %v1590
      %2099 = vmatpush1.bf16.msra.mxu0 %v1589
      %2100 = vmatprep.subr.bf16.mxu0 %v1594
      %2101 = vmatpush1.bf16.msra.mxu0 %v1593
      %2102 = vmatprep.subr.bf16.mxu0 %v1598
      %2103 = vmatpush1.bf16.msra.mxu0 %v1597
      %2104 = vmatprep.subr.bf16.mxu0 %v1602
      %2105 = vmatpush1.bf16.msra.mxu0 %v1601
      %2106 = vmatprep.subr.bf16.mxu0 %v1606
      %2107 = vmatpush1.bf16.msra.mxu0 %v1605
      %2108 = vmatprep.subr.bf16.mxu0 %v1610
      %2109 = vmatpush1.bf16.msra.mxu0 %v1609
      %2110 = vmatprep.mubr.bf16.mxu0 %v920
      %2111 = vmatmul.mubr.bf16.gmra.mrb[0].mxu0 %v919
      %v2112 = vpop.f32.mrb[0].mxu0
      %v2113 = vadd.f32 %v2000, %v2112
      %v2114 = vpop.f32.mrb[0].mxu0
      %v2115 = vadd.f32 %v2002, %v2114
      %v2116 = vpop.f32.mrb[0].mxu0
      %v2117 = vadd.f32 %v2004, %v2116
      %v2118 = vpop.f32.mrb[0].mxu0
      %v2119 = vadd.f32 %v2006, %v2118
      %2120 = vmatprep.mubr.bf16.mxu0 %v924
      %2121 = vmatmul.mubr.bf16.gmra.mrb[0].mxu0 %v923
      %v2122 = vpop.f32.mrb[0].mxu0
      %v2123 = vadd.f32 %v2010, %v2122
      %v2124 = vpop.f32.mrb[0].mxu0
      %v2125 = vadd.f32 %v2012, %v2124
      %v2126 = vpop.f32.mrb[0].mxu0
      %v2127 = vadd.f32 %v2014, %v2126
      %v2128 = vpop.f32.mrb[0].mxu0
      %v2129 = vadd.f32 %v2016, %v2128
      %2130 = vmatprep.mubr.bf16.mxu0 %v928
      %2131 = vmatmul.mubr.bf16.gmra.mrb[0].mxu0 %v927
      %v2132 = vpop.f32.mrb[0].mxu0
      %v2133 = vadd.f32 %v2020, %v2132
      %v2134 = vpop.f32.mrb[0].mxu0
      %v2135 = vadd.f32 %v2022, %v2134
      %v2136 = vpop.f32.mrb[0].mxu0
      %v2137 = vadd.f32 %v2024, %v2136
      %v2138 = vpop.f32.mrb[0].mxu0
      %v2139 = vadd.f32 %v2026, %v2138
      %2140 = vmatprep.mubr.bf16.mxu0 %v932
      %2141 = vmatmul.mubr.bf16.gmra.mrb[0].mxu0 %v931
      %v2142 = vpop.f32.mrb[0].mxu0
      %v2143 = vadd.f32 %v2030, %v2142
      %v2144 = vpop.f32.mrb[0].mxu0
      %v2145 = vadd.f32 %v2032, %v2144
      %v2146 = vpop.f32.mrb[0].mxu0
      %v2147 = vadd.f32 %v2034, %v2146
      %v2148 = vpop.f32.mrb[0].mxu0
      %v2149 = vadd.f32 %v2036, %v2148
      %2150 = vmatprep.mubr.bf16.mxu0 %v936
      %2151 = vmatmul.mubr.bf16.gmra.mrb[0].mxu0 %v935
      %v2152 = vpop.f32.mrb[0].mxu0
      %v2153 = vadd.f32 %v2040, %v2152
      %v2154 = vpop.f32.mrb[0].mxu0
      %v2155 = vadd.f32 %v2042, %v2154
      %v2156 = vpop.f32.mrb[0].mxu0
      %v2157 = vadd.f32 %v2044, %v2156
      %v2158 = vpop.f32.mrb[0].mxu0
      %v2159 = vadd.f32 %v2046, %v2158
      %2160 = vmatprep.mubr.bf16.mxu0 %v940
      %2161 = vmatmul.mubr.bf16.gmra.mrb[0].mxu0 %v939
      %v2162 = vpop.f32.mrb[0].mxu0
      %v2163 = vadd.f32 %v2050, %v2162
      %v2164 = vpop.f32.mrb[0].mxu0
      %v2165 = vadd.f32 %v2052, %v2164
      %v2166 = vpop.f32.mrb[0].mxu0
      %v2167 = vadd.f32 %v2054, %v2166
      %v2168 = vpop.f32.mrb[0].mxu0
      %v2169 = vadd.f32 %v2056, %v2168
      %2170 = vmatprep.mubr.bf16.mxu0 %v944
      %2171 = vmatmul.mubr.bf16.gmra.mrb[0].mxu0 %v943
      %v2172 = vpop.f32.mrb[0].mxu0
      %v2173 = vadd.f32 %v2060, %v2172
      %v2174 = vpop.f32.mrb[0].mxu0
      %v2175 = vadd.f32 %v2062, %v2174
      %v2176 = vpop.f32.mrb[0].mxu0
      %v2177 = vadd.f32 %v2064, %v2176
      %v2178 = vpop.f32.mrb[0].mxu0
      %v2179 = vadd.f32 %v2066, %v2178
      %2180 = vmatprep.mubr.bf16.mxu0 %v948
      %2181 = vmatmul.mubr.bf16.gmra.mrb[0].mxu0 %v947
      %v2182 = vpop.f32.mrb[0].mxu0
      %v2183 = vadd.f32 %v2070, %v2182
      %v2184 = vpop.f32.mrb[0].mxu0
      %v2185 = vadd.f32 %v2072, %v2184
      %v2186 = vpop.f32.mrb[0].mxu0
      %v2187 = vadd.f32 %v2074, %v2186
      %v2188 = vpop.f32.mrb[0].mxu0
      %v2189 = vadd.f32 %v2076, %v2188
      %2190 = vdwg.mxu0
      %v2191 = vmax.f32 %v1887, 0.0
      %v2192 = vmax.f32 %v1889, 0.0
      %v2193 = vmax.f32 %v2113, 0.0
      %v2194 = vmax.f32 %v2115, 0.0
      %v2195 = vmax.f32 %v1891, 0.0
      %v2196 = vmax.f32 %v1893, 0.0
      %v2197 = vmax.f32 %v2117, 0.0
      %v2198 = vmax.f32 %v2119, 0.0
      %v2199 = vmax.f32 %v1897, 0.0
      %v2200 = vmax.f32 %v1899, 0.0
      %v2201 = vmax.f32 %v2123, 0.0
      %v2202 = vmax.f32 %v2125, 0.0
      %v2203 = vmax.f32 %v1901, 0.0
      %v2204 = vmax.f32 %v1903, 0.0
      %v2205 = vmax.f32 %v2127, 0.0
      %v2206 = vmax.f32 %v2129, 0.0
      %v2207 = vmax.f32 %v1907, 0.0
      %v2208 = vmax.f32 %v1909, 0.0
      %v2209 = vmax.f32 %v2133, 0.0
      %v2210 = vmax.f32 %v2135, 0.0
      %v2211 = vmax.f32 %v1911, 0.0
      %v2212 = vmax.f32 %v1913, 0.0
      %v2213 = vmax.f32 %v2137, 0.0
      %v2214 = vmax.f32 %v2139, 0.0
      %v2215 = vmax.f32 %v1917, 0.0
      %v2216 = vmax.f32 %v1919, 0.0
      %v2217 = vmax.f32 %v2143, 0.0
      %v2218 = vmax.f32 %v2145, 0.0
      %v2219 = vmax.f32 %v1921, 0.0
      %v2220 = vmax.f32 %v1923, 0.0
      %v2221 = vmax.f32 %v2147, 0.0
      %v2222 = vmax.f32 %v2149, 0.0
      %v2223 = vmax.f32 %v1927, 0.0
      %v2224 = vmax.f32 %v1929, 0.0
      %v2225 = vmax.f32 %v2153, 0.0
      %v2226 = vmax.f32 %v2155, 0.0
      %v2227 = vmax.f32 %v1931, 0.0
      %v2228 = vmax.f32 %v1933, 0.0
      %v2229 = vmax.f32 %v2157, 0.0
      %v2230 = vmax.f32 %v2159, 0.0
      %v2231 = vmax.f32 %v1937, 0.0
      %v2232 = vmax.f32 %v1939, 0.0
      %v2233 = vmax.f32 %v2163, 0.0
      %v2234 = vmax.f32 %v2165, 0.0
      %v2235 = vmax.f32 %v1941, 0.0
      %v2236 = vmax.f32 %v1943, 0.0
      %v2237 = vmax.f32 %v2167, 0.0
      %v2238 = vmax.f32 %v2169, 0.0
      %v2239 = vmax.f32 %v1947, 0.0
      %v2240 = vmax.f32 %v1949, 0.0
      %v2241 = vmax.f32 %v2173, 0.0
      %v2242 = vmax.f32 %v2175, 0.0
      %v2243 = vmax.f32 %v1951, 0.0
      %v2244 = vmax.f32 %v1953, 0.0
      %v2245 = vmax.f32 %v2177, 0.0
      %v2246 = vmax.f32 %v2179, 0.0
      %v2247 = vmax.f32 %v1957, 0.0
      %v2248 = vmax.f32 %v1959, 0.0
      %v2249 = vmax.f32 %v2183, 0.0
      %v2250 = vmax.f32 %v2185, 0.0
      %v2251 = vmax.f32 %v1961, 0.0
      %v2252 = vmax.f32 %v1963, 0.0
      %v2253 = vmax.f32 %v2187, 0.0
      %v2254 = vmax.f32 %v2189, 0.0
      %v2255 = vld [vmem:[%s7] sm:$0xff]
      %v2256 = vpack.c.bf16 %v2195, %v2191
      %v2257 = vpack.c.bf16 %v2196, %v2192
      %v2258 = vpack.c.bf16 %v2197, %v2193
      %v2259 = vpack.c.bf16 %v2198, %v2194
      %v2260 = vpack.c.bf16 %v2203, %v2199
      %v2261 = vpack.c.bf16 %v2204, %v2200
      %v2262 = vpack.c.bf16 %v2205, %v2201
      %v2263 = vpack.c.bf16 %v2206, %v2202
      %v2264 = vpack.c.bf16 %v2211, %v2207
      %v2265 = vpack.c.bf16 %v2212, %v2208
      %v2266 = vpack.c.bf16 %v2213, %v2209
      %v2267 = vpack.c.bf16 %v2214, %v2210
      %v2268 = vpack.c.bf16 %v2219, %v2215
      %v2269 = vpack.c.bf16 %v2220, %v2216
      %v2270 = vpack.c.bf16 %v2221, %v2217
      %v2271 = vpack.c.bf16 %v2222, %v2218
      %v2272 = vpack.c.bf16 %v2227, %v2223
      %v2273 = vpack.c.bf16 %v2228, %v2224
      %v2274 = vpack.c.bf16 %v2229, %v2225
      %v2275 = vpack.c.bf16 %v2230, %v2226
      %v2276 = vpack.c.bf16 %v2235, %v2231
      %v2277 = vpack.c.bf16 %v2236, %v2232
      %v2278 = vpack.c.bf16 %v2237, %v2233
      %v2279 = vpack.c.bf16 %v2238, %v2234
      %v2280 = vpack.c.bf16 %v2243, %v2239
      %v2281 = vpack.c.bf16 %v2244, %v2240
      %v2282 = vpack.c.bf16 %v2245, %v2241
      %v2283 = vpack.c.bf16 %v2246, %v2242
      %v2284 = vpack.c.bf16 %v2251, %v2247
      %v2285 = vpack.c.bf16 %v2252, %v2248
      %v2286 = vpack.c.bf16 %v2253, %v2249
      %v2287 = vpack.c.bf16 %v2254, %v2250
      %v2288 = vld [vmem:[%s8] sm:$0x7]
      %2290 = vset.pattern.permute.xlu0 0
      %2291 = vperm.xlu0 %2290, %v2288
      %v2292 = vpop.permute.xlu0 %2291
      %v2295 = vcombine.high %v2255, %v2255
      %v2297 = vunpack.c.l.s4 1983009808
      %v2298 = vunpack.c.0.s8 %v2297
      %v2299 = vlaneseq
      %v2300 = vshrl.u32 %v2299, 7
      %v2301 = vsub.s32 %v2298, %v2300
      %v2302 = vrot.slane %v2255, %v2301
      %v2304 = vunpack.c.l.s4 1983009808
      %v2305 = vunpack.c.0.s8 %v2304
      %v2306 = vlaneseq
      %v2307 = vshrl.u32 %v2306, 7
      %v2308 = vsub.s32 %v2305, %v2307
      %v2309 = vrot.slane %v2295, %v2308
      %v2310 = vcombine.high %v2302, %v2302
      %v2311 = vcombine.high %v2309, %v2309
      %2316 = vmatprep.subr.bf16.mxu0 %v2257
      %2317 = vmatpush1.bf16.xpose.msra.mxu0 %v2256
      %2318 = vmatprep.subr.bf16.mxu0 %v2261
      %2319 = vmatpush1.bf16.xpose.msra.mxu0 %v2260
      %2320 = vmatprep.subr.bf16.mxu0 %v2265
      %2321 = vmatpush1.bf16.xpose.msra.mxu0 %v2264
      %2322 = vmatprep.subr.bf16.mxu0 %v2269
      %2323 = vmatpush1.bf16.xpose.msra.mxu0 %v2268
      %2324 = vmatprep.subr.bf16.mxu0 %v2273
      %2325 = vmatpush1.bf16.xpose.msra.mxu0 %v2272
      %2326 = vmatprep.subr.bf16.mxu0 %v2277
      %2327 = vmatpush1.bf16.xpose.msra.mxu0 %v2276
      %2328 = vmatprep.subr.bf16.mxu0 %v2281
      %2329 = vmatpush1.bf16.xpose.msra.mxu0 %v2280
      %2330 = vmatprep.subr.bf16.mxu0 %v2285
      %2331 = vmatpush1.bf16.xpose.msra.mxu0 %v2284
      %2332 = vmatprep.subr.bf16.mxu0 0
      %2333 = vmatpush1.bf16.xpose.msra.mxu0 0
      %2334 = vmatprep.subr.bf16.mxu0 0
      %2335 = vmatpush1.bf16.xpose.msra.mxu0 0
      %2336 = vmatprep.subr.bf16.mxu0 0
      %2337 = vmatpush1.bf16.xpose.msra.mxu0 0
      %2338 = vmatprep.subr.bf16.mxu0 0
      %2339 = vmatpush1.bf16.xpose.msra.mxu0 0
      %2340 = vmatprep.subr.bf16.mxu0 0
      %2341 = vmatpush1.bf16.xpose.msra.mxu0 0
      %2342 = vmatprep.subr.bf16.mxu0 0
      %2343 = vmatpush1.bf16.xpose.msra.mxu0 0
      %2344 = vmatprep.subr.bf16.mxu0 0
      %2345 = vmatpush1.bf16.xpose.msra.mxu0 0
      %2346 = vmatprep.subr.bf16.mxu0 0
      %2347 = vmatpush1.bf16.xpose.msra.mxu0 0
      %2348 = vmatprep.mubr.bf16.mxu0 %v2310
      %2349 = vmatmul.mubr.bf16.gmra.mrb[0].mxu0 %v2302
      %v2350 = vpop.f32.mrb[0].mxu0
      %v2351 = vadd.f32 %v2292, %v2350
      %v2352 = vpop.f32.mrb[0].mxu0
      %v2353 = vpop.f32.mrb[0].mxu0
      %v2354 = vpop.f32.mrb[0].mxu0
      %2355 = vdwg.mxu0
      %2356 = vmatprep.subr.bf16.mxu0 %v2259
      %2357 = vmatpush1.bf16.xpose.msra.mxu0 %v2258
      %2358 = vmatprep.subr.bf16.mxu0 %v2263
      %2359 = vmatpush1.bf16.xpose.msra.mxu0 %v2262
      %2360 = vmatprep.subr.bf16.mxu0 %v2267
      %2361 = vmatpush1.bf16.xpose.msra.mxu0 %v2266
      %2362 = vmatprep.subr.bf16.mxu0 %v2271
      %2363 = vmatpush1.bf16.xpose.msra.mxu0 %v2270
      %2364 = vmatprep.subr.bf16.mxu0 %v2275
      %2365 = vmatpush1.bf16.xpose.msra.mxu0 %v2274
      %2366 = vmatprep.subr.bf16.mxu0 %v2279
      %2367 = vmatpush1.bf16.xpose.msra.mxu0 %v2278
      %2368 = vmatprep.subr.bf16.mxu0 %v2283
      %2369 = vmatpush1.bf16.xpose.msra.mxu0 %v2282
      %2370 = vmatprep.subr.bf16.mxu0 %v2287
      %2371 = vmatpush1.bf16.xpose.msra.mxu0 %v2286
      %2372 = vmatprep.subr.bf16.mxu0 0
      %2373 = vmatpush1.bf16.xpose.msra.mxu0 0
      %2374 = vmatprep.subr.bf16.mxu0 0
      %2375 = vmatpush1.bf16.xpose.msra.mxu0 0
      %2376 = vmatprep.subr.bf16.mxu0 0
      %2377 = vmatpush1.bf16.xpose.msra.mxu0 0
      %2378 = vmatprep.subr.bf16.mxu0 0
      %2379 = vmatpush1.bf16.xpose.msra.mxu0 0
      %2380 = vmatprep.subr.bf16.mxu0 0
      %2381 = vmatpush1.bf16.xpose.msra.mxu0 0
      %2382 = vmatprep.subr.bf16.mxu0 0
      %2383 = vmatpush1.bf16.xpose.msra.mxu0 0
      %2384 = vmatprep.subr.bf16.mxu0 0
      %2385 = vmatpush1.bf16.xpose.msra.mxu0 0
      %2386 = vmatprep.subr.bf16.mxu0 0
      %2387 = vmatpush1.bf16.xpose.msra.mxu0 0
      %2388 = vmatprep.mubr.bf16.mxu0 %v2311
      %2389 = vmatmul.mubr.bf16.gmra.mrb[0].mxu0 %v2309
      %v2390 = vpop.f32.mrb[0].mxu0
      %v2391 = vadd.f32 %v2351, %v2390
      %v2392 = vpop.f32.mrb[0].mxu0
      %v2393 = vpop.f32.mrb[0].mxu0
      %v2394 = vpop.f32.mrb[0].mxu0
      %2395 = vdwg.mxu0
      %v2396 = vld [vmem:[%s404] sm:$0x7]
      %v2397 = vadd.f32 %v2391, %v2396
      %2398 = vst [vmem:[%s411] sm:$0x7] %v2397
      %p2399 = scmp.lt.s32.totalorder %s24, 1
      %s2400 = scalar_select %p2399, %s24, 1
      %p2401 = scmp.lt.s32.totalorder %s25, 0
      %s2402 = scalar_select %p2401, %s25, 0
      %s2403 = sadd.s32 %s2402, %s2400
      %s2404 = smul.addr %s2403, 4
      %s2405 = scalar_lea.vmem %s9, %s2404
      // Predicated region
      $region57: #{pcn_decoder_forward.5} parent=55 // pred_check
        %p2406 = pneg %p260
      $region58: #{pcn_decoder_forward.5} parent=55 // pred_check_branch
        %2408 = sbr.rel (%p2406) target = $region60
      $region59: #{pcn_decoder_forward.5} parent=55 // pred_region
        _
      $region60: #{pcn_decoder_forward.5} parent=55 // pred_fallthru
        _
    $region56: #{pcn_decoder_forward.5} parent=5 // pred_fallthru
      _
    %p2409 = scmp.le.s32.totalorder 2, %s15
    // Predicated region
    $region61: #{pcn_decoder_forward.5} parent=5 // pred_check
      %p2410 = pneg %p2409
    $region62: #{pcn_decoder_forward.5} parent=5 // pred_check_branch
      %2412 = sbr.rel (%p2410) target = $region64
    $region63: #{pcn_decoder_forward.5} parent=5 // pred_region
      %s2413 = ssub.s32 %s15, 2
      // Predicated region
      $region65: #{pcn_decoder_forward.5} parent=63 // pred_check
        %p2414 = pneg %p266
      $region66: #{pcn_decoder_forward.5} parent=63 // pred_check_branch
        %2416 = sbr.rel (%p2414) target = $region68
      $region67: #{pcn_decoder_forward.5} parent=63 // pred_region
        %p2417 = scmp.lt.s32.totalorder %s26, 1
        %s2418 = scalar_select %p2417, %s26, 1
        %p2419 = scmp.lt.s32.totalorder %s27, 0
        %s2420 = scalar_select %p2419, %s27, 0
        %s2421 = sadd.s32 %s2420, %s2418
        %s2422 = smul.addr %s2421, 4
        %s2423 = scalar_lea.vmem %s9, %s2422
      $region68: #{pcn_decoder_forward.5} parent=63 // pred_fallthru
        _
    $region64: #{pcn_decoder_forward.5} parent=5 // pred_fallthru
      _
  $region6: #{pcn_decoder_forward.5} parent=0 // loop_footer
    %s19 = sadd.s32 1, %s15
  $region7: #{pcn_decoder_forward.5} parent=0 // loop_footer_branch
    %14 = sbr.rel target = $region3
  $region8: #{pcn_decoder_forward.5} parent=0 // loop_exit
    _

</llo_original>
